<compile_context>
chip_gen: v7x
topology: tpu7x:2x2x1
jax: 0.10.0
libtpu: 0.0.40
codegen_flags: <defaults>
</compile_context>

<pallas_src>
import jax
import jax.numpy as jnp
from jax import lax
from jax.experimental import pallas as pl
from jax.experimental.pallas import tpu as pltpu

NEG_SLOPE = 0.2      # GATv2Conv default negative_slope
NEG_BIG = -1e30      # masked-out attention logit


# ----------------------------------------------------------------------------- kernel
def _gatv2_layer(maskT, feat, wl, bl, wr, br, att_blk, one_blk, store_row):
    """One dense GATv2Conv layer; calls store_row(i, [1, H*C] aggregated row of node i)."""
    n = feat.shape[0]
    # Fused source/target transforms for ALL heads: one lane-dense MXU matmul each.
    gl = jnp.dot(feat, wl, preferred_element_type=jnp.float32) + bl   # [N, H*C]
    gr = jnp.dot(feat, wr, preferred_element_type=jnp.float32) + br   # [N, H*C]
    for i in range(n):  # statically unrolled over target nodes; all ops stay 2-D
        s = gr[i:i + 1, :] + gl                                       # [N, H*C]
        s = jnp.where(s >= 0.0, s, NEG_SLOPE * s)                     # leaky_relu(0.2)
        e = jnp.dot(s, att_blk, preferred_element_type=jnp.float32)   # [N, H] scores
        m_col = maskT[:, i:i + 1]                                     # [N, 1] incoming-edge mask
        e = jnp.where(m_col > 0.0, e, NEG_BIG)
        e_max = jnp.max(e, axis=0, keepdims=True)                     # [1, H]
        p = jnp.exp(e - e_max) * m_col                                # [N, H]
        denom = jnp.sum(p, axis=0, keepdims=True)                     # [1, H]
        alpha = p / denom                                             # softmax over sources j
        w = jnp.dot(alpha, one_blk, preferred_element_type=jnp.float32)  # [N, H*C] per-channel alpha
        store_row(i, jnp.sum(w * gl, axis=0, keepdims=True))          # [1, H*C]


def _gyat_kernel(maskT_ref, x_ref,
                 wl1_ref, bl1_ref, wr1_ref, br1_ref, attblk1_ref, oneblk1_ref, bias1_ref,
                 wl2_ref, bl2_ref, wr2_ref, br2_ref, attblk2_ref, oneblk2_ref, bias2_ref,
                 o_ref, h_scr):
    maskT = maskT_ref[...]
    x = x_ref[...]
    # F.dropout(p=0.6) in the reference module is identity in eval mode.
    # TODO(synk): training-mode dropout (on x and on relu(h)) is not implemented.

    # ---- Layer 1: GATv2Conv(dim_in, dim_h, heads=8), concat over heads ----
    def store_h(i, row):
        h_scr[i:i + 1, :] = row

    _gatv2_layer(maskT, x, wl1_ref[...], bl1_ref[...], wr1_ref[...], br1_ref[...],
                 attblk1_ref[...], oneblk1_ref[...], store_h)
    h = jnp.maximum(h_scr[...] + bias1_ref[...], 0.0)   # conv bias + ReLU

    # ---- Layer 2: GATv2Conv(8*dim_h, dim_out, heads=1) ----
    b2 = bias2_ref[...]

    def store_o(i, row):
        o_ref[i:i + 1, :] = row + b2

    _gatv2_layer(maskT, h, wl2_ref[...], bl2_ref[...], wr2_ref[...], br2_ref[...],
                 attblk2_ref[...], oneblk2_ref[...], store_o)


# ----------------------------------------------------------------------------- wrapper
def build_attention_mask_T(edge_index, num_nodes):
    """maskT[src, dst] = 1 for every edge src->dst plus self loops
    (GATv2Conv default add_self_loops=True). Assumes no duplicate edges."""
    src, dst = edge_index[0], edge_index[1]
    m = jnp.zeros((num_nodes, num_nodes), jnp.float32).at[src, dst].set(1.0)
    idx = jnp.arange(num_nodes)
    return m.at[idx, idx].set(1.0)


def head_block_matrices(att):
    """att: [H, C] per-head attention vectors.
    Returns (att_blk [H*C, H] block-diagonal att, one_blk [H, H*C] block-ones)."""
    h, c = att.shape
    one_blk = jnp.repeat(jnp.eye(h, dtype=jnp.float32), c, axis=1)   # [H, H*C]
    att_blk = one_blk.T * att.reshape(-1)[:, None]                   # [H*C, H]
    return att_blk, one_blk


def gyat_forward(x, edge_index, num_nodes, params):
    (wl1, bl1, wr1, br1, att1, bias1,
     wl2, bl2, wr2, br2, att2, bias2) = params
    n, _ = x.shape
    heads1, ch1 = att1.shape
    dout = att2.shape[1]
    hc1 = heads1 * ch1

    maskT = build_attention_mask_T(edge_index, num_nodes)
    att_blk1, one_blk1 = head_block_matrices(att1)
    att_blk2, one_blk2 = head_block_matrices(att2)

    inputs = (maskT, x,
              wl1, bl1, wr1, br1, att_blk1, one_blk1, bias1,
              wl2, bl2, wr2, br2, att_blk2, one_blk2, bias2)

    full = lambda a: pl.BlockSpec(a.shape, lambda: (0,) * a.ndim)

    return pl.pallas_call(
        _gyat_kernel,
        out_shape=jax.ShapeDtypeStruct((n, dout), jnp.float32),
        in_specs=[full(a) for a in inputs],
        out_specs=pl.BlockSpec((n, dout), lambda: (0, 0)),
        scratch_shapes=[pltpu.VMEM((n, hc1), jnp.float32)],
        compiler_params=pltpu.CompilerParams(vmem_limit_bytes=32 << 20),
    )(*inputs)


# ----------------------------------------------------------------------------- pure-JAX reference
def _hi_dot(a, b):
    return jnp.dot(a, b, precision=lax.Precision.HIGHEST)


def reference_gatv2(x, edge_index, wl, bl, wr, br, att, bias, num_nodes):
    """Edge-list GATv2Conv matching PyG semantics (add_self_loops=True)."""
    heads, ch = att.shape
    loops = jnp.arange(num_nodes, dtype=edge_index.dtype)
    src = jnp.concatenate([edge_index[0], loops])
    dst = jnp.concatenate([edge_index[1], loops])
    gl = (_hi_dot(x, wl) + bl).reshape(num_nodes, heads, ch)
    gr = (_hi_dot(x, wr) + br).reshape(num_nodes, heads, ch)
    s = gl[src] + gr[dst]                                # [E, H, C]
    s = jnp.where(s >= 0.0, s, NEG_SLOPE * s)
    e = jnp.sum(s * att[None, :, :], axis=-1)            # [E, H]
    e_max = jax.ops.segment_max(e, dst, num_segments=num_nodes)
    p = jnp.exp(e - e_max[dst])
    denom = jax.ops.segment_sum(p, dst, num_segments=num_nodes)
    alpha = p / denom[dst]                               # [E, H]
    msg = gl[src] * alpha[:, :, None]                    # [E, H, C]
    out = jax.ops.segment_sum(msg, dst, num_segments=num_nodes)
    return out.reshape(num_nodes, heads * ch) + bias


def reference_forward(x, edge_index, num_nodes, params):
    (wl1, bl1, wr1, br1, att1, bias1,
     wl2, bl2, wr2, br2, att2, bias2) = params
    h = reference_gatv2(x, edge_index, wl1, bl1, wr1, br1, att1, bias1, num_nodes)
    h = jnp.maximum(h, 0.0)
    return reference_gatv2(h, edge_index, wl2, bl2, wr2, br2, att2, bias2, num_nodes)


# ----------------------------------------------------------------------------- test harness
if __name__ == "__main__":
    N, DIM_IN, DIM_H, HEADS, DIM_OUT = 16, 8, 8, 8, 4
    HC = HEADS * DIM_H

    # Deterministic small graph: undirected ring + a few chords (both directions).
    src_list, dst_list = [], []
    for i in range(N):
        j = (i + 1) % N
        src_list += [i, j]
        dst_list += [j, i]
    for (i, j) in [(0, 8), (3, 11), (5, 13)]:
        src_list += [i, j]
        dst_list += [j, i]
    edge_index = jnp.array([src_list, dst_list], dtype=jnp.int32)

    key = jax.random.PRNGKey(0)
    ks = jax.random.split(key, 13)
    sc = 0.2
    x     = jax.random.normal(ks[0], (N, DIM_IN), jnp.float32)
    wl1   = jax.random.normal(ks[1], (DIM_IN, HC), jnp.float32) * sc
    bl1   = jax.random.normal(ks[2], (1, HC), jnp.float32) * sc
    wr1   = jax.random.normal(ks[3], (DIM_IN, HC), jnp.float32) * sc
    br1   = jax.random.normal(ks[4], (1, HC), jnp.float32) * sc
    att1  = jax.random.normal(ks[5], (HEADS, DIM_H), jnp.float32) * sc
    bias1 = jax.random.normal(ks[6], (1, HC), jnp.float32) * sc
    wl2   = jax.random.normal(ks[7], (HC, DIM_OUT), jnp.float32) * sc
    bl2   = jax.random.normal(ks[8], (1, DIM_OUT), jnp.float32) * sc
    wr2   = jax.random.normal(ks[9], (HC, DIM_OUT), jnp.float32) * sc
    br2   = jax.random.normal(ks[10], (1, DIM_OUT), jnp.float32) * sc
    att2  = jax.random.normal(ks[11], (1, DIM_OUT), jnp.float32) * sc
    bias2 = jax.random.normal(ks[12], (1, DIM_OUT), jnp.float32) * sc

    params = (wl1, bl1, wr1, br1, att1, bias1,
              wl2, bl2, wr2, br2, att2, bias2)

    out = gyat_forward(x, edge_index, N, params)
    out = jax.block_until_ready(out)

    ref = reference_forward(x, edge_index, N, params)
    assert out.shape == (N, DIM_OUT)
    assert jnp.allclose(out, ref, atol=5e-4, rtol=5e-4), "mismatch vs JAX reference"

    print("KERNEL_OK")
</pallas_src>

<mosaic_0001>
module attributes {stable_mosaic.version = 11 : i64} {
  func.func @_gyat_kernel(%arg0: memref<16x16xf32, #tpu.memory_space<vmem>>, %arg1: memref<16x8xf32, #tpu.memory_space<vmem>>, %arg2: memref<8x64xf32, #tpu.memory_space<vmem>>, %arg3: memref<1x64xf32, #tpu.memory_space<vmem>>, %arg4: memref<8x64xf32, #tpu.memory_space<vmem>>, %arg5: memref<1x64xf32, #tpu.memory_space<vmem>>, %arg6: memref<64x8xf32, #tpu.memory_space<vmem>>, %arg7: memref<8x64xf32, #tpu.memory_space<vmem>>, %arg8: memref<1x64xf32, #tpu.memory_space<vmem>>, %arg9: memref<64x4xf32, #tpu.memory_space<vmem>>, %arg10: memref<1x4xf32, #tpu.memory_space<vmem>>, %arg11: memref<64x4xf32, #tpu.memory_space<vmem>>, %arg12: memref<1x4xf32, #tpu.memory_space<vmem>>, %arg13: memref<4x1xf32, #tpu.memory_space<vmem>>, %arg14: memref<1x4xf32, #tpu.memory_space<vmem>>, %arg15: memref<1x4xf32, #tpu.memory_space<vmem>>, %arg16: memref<16x4xf32, #tpu.memory_space<vmem>>, %arg17: memref<16x64xf32, #tpu.memory_space<vmem>>) attributes {dimension_semantics = [], scalar_prefetch = 0 : i64, scratch_operands = 1 : i64, tpu.core_type = #tpu.core_type<tc>} {
    %c0 = arith.constant 0 : index
    %c0_0 = arith.constant 0 : index
    %0 = vector.load %arg0[%c0, %c0_0] : memref<16x16xf32, #tpu.memory_space<vmem>>, vector<16x16xf32>
    %c0_1 = arith.constant 0 : index
    %c0_2 = arith.constant 0 : index
    %1 = vector.load %arg1[%c0_1, %c0_2] : memref<16x8xf32, #tpu.memory_space<vmem>>, vector<16x8xf32>
    %c0_3 = arith.constant 0 : index
    %c0_4 = arith.constant 0 : index
    %2 = vector.load %arg2[%c0_3, %c0_4] : memref<8x64xf32, #tpu.memory_space<vmem>>, vector<8x64xf32>
    %c0_5 = arith.constant 0 : index
    %c0_6 = arith.constant 0 : index
    %3 = vector.load %arg3[%c0_5, %c0_6] : memref<1x64xf32, #tpu.memory_space<vmem>>, vector<1x64xf32>
    %c0_7 = arith.constant 0 : index
    %c0_8 = arith.constant 0 : index
    %4 = vector.load %arg4[%c0_7, %c0_8] : memref<8x64xf32, #tpu.memory_space<vmem>>, vector<8x64xf32>
    %c0_9 = arith.constant 0 : index
    %c0_10 = arith.constant 0 : index
    %5 = vector.load %arg5[%c0_9, %c0_10] : memref<1x64xf32, #tpu.memory_space<vmem>>, vector<1x64xf32>
    %c0_11 = arith.constant 0 : index
    %c0_12 = arith.constant 0 : index
    %6 = vector.load %arg6[%c0_11, %c0_12] : memref<64x8xf32, #tpu.memory_space<vmem>>, vector<64x8xf32>
    %c0_13 = arith.constant 0 : index
    %c0_14 = arith.constant 0 : index
    %7 = vector.load %arg7[%c0_13, %c0_14] : memref<8x64xf32, #tpu.memory_space<vmem>>, vector<8x64xf32>
    %cst = arith.constant dense<0.000000e+00> : vector<16x64xf32>
    %8 = tpu.matmul %1, %2, %cst {dimension_numbers = #tpu.dot_dimension_numbers<[1], [0], [0], [1], [0, 0, 1, 1], [], []>} : vector<16x8xf32>, vector<8x64xf32>, vector<16x64xf32> -> vector<16x64xf32>
    %9 = vector.broadcast %3 : vector<1x64xf32> to vector<16x64xf32>
    %10 = arith.addf %8, %9 : vector<16x64xf32>
    %cst_15 = arith.constant dense<0.000000e+00> : vector<16x64xf32>
    %11 = tpu.matmul %1, %4, %cst_15 {dimension_numbers = #tpu.dot_dimension_numbers<[1], [0], [0], [1], [0, 0, 1, 1], [], []>} : vector<16x8xf32>, vector<8x64xf32>, vector<16x64xf32> -> vector<16x64xf32>
    %12 = vector.broadcast %5 : vector<1x64xf32> to vector<16x64xf32>
    %13 = arith.addf %11, %12 : vector<16x64xf32>
    %14 = vector.extract_strided_slice %13 {offsets = [0, 0], sizes = [1, 64], strides = [1, 1]} : vector<16x64xf32> to vector<1x64xf32>
    %15 = vector.broadcast %14 : vector<1x64xf32> to vector<16x64xf32>
    %16 = arith.addf %15, %10 : vector<16x64xf32>
    %cst_16 = arith.constant 0.000000e+00 : f32
    %17 = vector.broadcast %cst_16 : f32 to vector<16x64xf32>
    %18 = arith.cmpf oge, %16, %17 : vector<16x64xf32>
    %cst_17 = arith.constant 2.000000e-01 : f32
    %19 = vector.broadcast %cst_17 : f32 to vector<16x64xf32>
    %20 = arith.mulf %19, %16 : vector<16x64xf32>
    %21 = arith.select %18, %16, %20 : vector<16x64xi1>, vector<16x64xf32>
    %cst_18 = arith.constant dense<0.000000e+00> : vector<16x8xf32>
    %22 = tpu.matmul %21, %6, %cst_18 {dimension_numbers = #tpu.dot_dimension_numbers<[1], [0], [0], [1], [0, 0, 1, 1], [], []>} : vector<16x64xf32>, vector<64x8xf32>, vector<16x8xf32> -> vector<16x8xf32>
    %23 = vector.extract_strided_slice %0 {offsets = [0, 0], sizes = [16, 1], strides = [1, 1]} : vector<16x16xf32> to vector<16x1xf32>
    %cst_19 = arith.constant 0.000000e+00 : f32
    %24 = vector.broadcast %cst_19 : f32 to vector<16x1xf32>
    %25 = arith.cmpf ogt, %23, %24 : vector<16x1xf32>
    %cst_20 = arith.constant -1.000000e+30 : f32
    %26 = vector.shape_cast %25 : vector<16x1xi1> to vector<16x1xi1>
    %27 = vector.broadcast %26 : vector<16x1xi1> to vector<16x8xi1>
    %28 = vector.broadcast %cst_20 : f32 to vector<16x8xf32>
    %29 = arith.select %27, %22, %28 : vector<16x8xi1>, vector<16x8xf32>
    %cst_21 = arith.constant dense<0xFF800000> : vector<8xf32>
    %30 = vector.multi_reduction <maximumf>, %29, %cst_21 [0] : vector<16x8xf32> to vector<8xf32>
    %31 = vector.shape_cast %30 : vector<8xf32> to vector<1x8xf32>
    %32 = vector.broadcast %31 : vector<1x8xf32> to vector<16x8xf32>
    %33 = arith.subf %29, %32 : vector<16x8xf32>
    %34 = math.exp %33 : vector<16x8xf32>
    %35 = vector.broadcast %23 : vector<16x1xf32> to vector<16x8xf32>
    %36 = arith.mulf %34, %35 : vector<16x8xf32>
    %cst_22 = arith.constant dense<0.000000e+00> : vector<8xf32>
    %37 = vector.multi_reduction <add>, %36, %cst_22 [0] : vector<16x8xf32> to vector<8xf32>
    %38 = vector.shape_cast %37 : vector<8xf32> to vector<1x8xf32>
    %39 = vector.broadcast %38 : vector<1x8xf32> to vector<16x8xf32>
    %40 = arith.divf %36, %39 : vector<16x8xf32>
    %cst_23 = arith.constant dense<0.000000e+00> : vector<16x64xf32>
    %41 = tpu.matmul %40, %7, %cst_23 {dimension_numbers = #tpu.dot_dimension_numbers<[1], [0], [0], [1], [0, 0, 1, 1], [], []>} : vector<16x8xf32>, vector<8x64xf32>, vector<16x64xf32> -> vector<16x64xf32>
    %42 = arith.mulf %41, %10 : vector<16x64xf32>
    %cst_24 = arith.constant dense<0.000000e+00> : vector<64xf32>
    %43 = vector.multi_reduction <add>, %42, %cst_24 [0] : vector<16x64xf32> to vector<64xf32>
    %44 = vector.shape_cast %43 : vector<64xf32> to vector<1x64xf32>
    %c0_25 = arith.constant 0 : index
    %c0_26 = arith.constant 0 : index
    %45 = vector.load %arg17[%c0_25, %c0_26] : memref<16x64xf32, #tpu.memory_space<vmem>>, vector<1x64xf32>
    tpu.vector_store %arg17[%c0_25, %c0_26], %44 {strides = array<i32>} : memref<16x64xf32, #tpu.memory_space<vmem>>, vector<1x64xf32>,
    %46 = vector.extract_strided_slice %13 {offsets = [1, 0], sizes = [1, 64], strides = [1, 1]} : vector<16x64xf32> to vector<1x64xf32>
    %47 = vector.broadcast %46 : vector<1x64xf32> to vector<16x64xf32>
    %48 = arith.addf %47, %10 : vector<16x64xf32>
    %cst_27 = arith.constant 0.000000e+00 : f32
    %49 = vector.broadcast %cst_27 : f32 to vector<16x64xf32>
    %50 = arith.cmpf oge, %48, %49 : vector<16x64xf32>
    %cst_28 = arith.constant 2.000000e-01 : f32
    %51 = vector.broadcast %cst_28 : f32 to vector<16x64xf32>
    %52 = arith.mulf %51, %48 : vector<16x64xf32>
    %53 = arith.select %50, %48, %52 : vector<16x64xi1>, vector<16x64xf32>
    %cst_29 = arith.constant dense<0.000000e+00> : vector<16x8xf32>
    %54 = tpu.matmul %53, %6, %cst_29 {dimension_numbers = #tpu.dot_dimension_numbers<[1], [0], [0], [1], [0, 0, 1, 1], [], []>} : vector<16x64xf32>, vector<64x8xf32>, vector<16x8xf32> -> vector<16x8xf32>
    %55 = vector.extract_strided_slice %0 {offsets = [0, 1], sizes = [16, 1], strides = [1, 1]} : vector<16x16xf32> to vector<16x1xf32>
    %cst_30 = arith.constant 0.000000e+00 : f32
    %56 = vector.broadcast %cst_30 : f32 to vector<16x1xf32>
    %57 = arith.cmpf ogt, %55, %56 : vector<16x1xf32>
    %cst_31 = arith.constant -1.000000e+30 : f32
    %58 = vector.shape_cast %57 : vector<16x1xi1> to vector<16x1xi1>
    %59 = vector.broadcast %58 : vector<16x1xi1> to vector<16x8xi1>
    %60 = vector.broadcast %cst_31 : f32 to vector<16x8xf32>
    %61 = arith.select %59, %54, %60 : vector<16x8xi1>, vector<16x8xf32>
    %cst_32 = arith.constant dense<0xFF800000> : vector<8xf32>
    %62 = vector.multi_reduction <maximumf>, %61, %cst_32 [0] : vector<16x8xf32> to vector<8xf32>
    %63 = vector.shape_cast %62 : vector<8xf32> to vector<1x8xf32>
    %64 = vector.broadcast %63 : vector<1x8xf32> to vector<16x8xf32>
    %65 = arith.subf %61, %64 : vector<16x8xf32>
    %66 = math.exp %65 : vector<16x8xf32>
    %67 = vector.broadcast %55 : vector<16x1xf32> to vector<16x8xf32>
    %68 = arith.mulf %66, %67 : vector<16x8xf32>
    %cst_33 = arith.constant dense<0.000000e+00> : vector<8xf32>
    %69 = vector.multi_reduction <add>, %68, %cst_33 [0] : vector<16x8xf32> to vector<8xf32>
    %70 = vector.shape_cast %69 : vector<8xf32> to vector<1x8xf32>
    %71 = vector.broadcast %70 : vector<1x8xf32> to vector<16x8xf32>
    %72 = arith.divf %68, %71 : vector<16x8xf32>
    %cst_34 = arith.constant dense<0.000000e+00> : vector<16x64xf32>
    %73 = tpu.matmul %72, %7, %cst_34 {dimension_numbers = #tpu.dot_dimension_numbers<[1], [0], [0], [1], [0, 0, 1, 1], [], []>} : vector<16x8xf32>, vector<8x64xf32>, vector<16x64xf32> -> vector<16x64xf32>
    %74 = arith.mulf %73, %10 : vector<16x64xf32>
    %cst_35 = arith.constant dense<0.000000e+00> : vector<64xf32>
    %75 = vector.multi_reduction <add>, %74, %cst_35 [0] : vector<16x64xf32> to vector<64xf32>
    %76 = vector.shape_cast %75 : vector<64xf32> to vector<1x64xf32>
    %c1 = arith.constant 1 : index
    %c0_36 = arith.constant 0 : index
    %77 = vector.load %arg17[%c1, %c0_36] : memref<16x64xf32, #tpu.memory_space<vmem>>, vector<1x64xf32>
    tpu.vector_store %arg17[%c1, %c0_36], %76 {strides = array<i32>} : memref<16x64xf32, #tpu.memory_space<vmem>>, vector<1x64xf32>,
    %78 = vector.extract_strided_slice %13 {offsets = [2, 0], sizes = [1, 64], strides = [1, 1]} : vector<16x64xf32> to vector<1x64xf32>
    %79 = vector.broadcast %78 : vector<1x64xf32> to vector<16x64xf32>
    %80 = arith.addf %79, %10 : vector<16x64xf32>
    %cst_37 = arith.constant 0.000000e+00 : f32
    %81 = vector.broadcast %cst_37 : f32 to vector<16x64xf32>
    %82 = arith.cmpf oge, %80, %81 : vector<16x64xf32>
    %cst_38 = arith.constant 2.000000e-01 : f32
    %83 = vector.broadcast %cst_38 : f32 to vector<16x64xf32>
    %84 = arith.mulf %83, %80 : vector<16x64xf32>
    %85 = arith.select %82, %80, %84 : vector<16x64xi1>, vector<16x64xf32>
    %cst_39 = arith.constant dense<0.000000e+00> : vector<16x8xf32>
    %86 = tpu.matmul %85, %6, %cst_39 {dimension_numbers = #tpu.dot_dimension_numbers<[1], [0], [0], [1], [0, 0, 1, 1], [], []>} : vector<16x64xf32>, vector<64x8xf32>, vector<16x8xf32> -> vector<16x8xf32>
    %87 = vector.extract_strided_slice %0 {offsets = [0, 2], sizes = [16, 1], strides = [1, 1]} : vector<16x16xf32> to vector<16x1xf32>
    %cst_40 = arith.constant 0.000000e+00 : f32
    %88 = vector.broadcast %cst_40 : f32 to vector<16x1xf32>
    %89 = arith.cmpf ogt, %87, %88 : vector<16x1xf32>
    %cst_41 = arith.constant -1.000000e+30 : f32
    %90 = vector.shape_cast %89 : vector<16x1xi1> to vector<16x1xi1>
    %91 = vector.broadcast %90 : vector<16x1xi1> to vector<16x8xi1>
    %92 = vector.broadcast %cst_41 : f32 to vector<16x8xf32>
    %93 = arith.select %91, %86, %92 : vector<16x8xi1>, vector<16x8xf32>
    %cst_42 = arith.constant dense<0xFF800000> : vector<8xf32>
    %94 = vector.multi_reduction <maximumf>, %93, %cst_42 [0] : vector<16x8xf32> to vector<8xf32>
    %95 = vector.shape_cast %94 : vector<8xf32> to vector<1x8xf32>
    %96 = vector.broadcast %95 : vector<1x8xf32> to vector<16x8xf32>
    %97 = arith.subf %93, %96 : vector<16x8xf32>
    %98 = math.exp %97 : vector<16x8xf32>
    %99 = vector.broadcast %87 : vector<16x1xf32> to vector<16x8xf32>
    %100 = arith.mulf %98, %99 : vector<16x8xf32>
    %cst_43 = arith.constant dense<0.000000e+00> : vector<8xf32>
    %101 = vector.multi_reduction <add>, %100, %cst_43 [0] : vector<16x8xf32> to vector<8xf32>
    %102 = vector.shape_cast %101 : vector<8xf32> to vector<1x8xf32>
    %103 = vector.broadcast %102 : vector<1x8xf32> to vector<16x8xf32>
    %104 = arith.divf %100, %103 : vector<16x8xf32>
    %cst_44 = arith.constant dense<0.000000e+00> : vector<16x64xf32>
    %105 = tpu.matmul %104, %7, %cst_44 {dimension_numbers = #tpu.dot_dimension_numbers<[1], [0], [0], [1], [0, 0, 1, 1], [], []>} : vector<16x8xf32>, vector<8x64xf32>, vector<16x64xf32> -> vector<16x64xf32>
    %106 = arith.mulf %105, %10 : vector<16x64xf32>
    %cst_45 = arith.constant dense<0.000000e+00> : vector<64xf32>
    %107 = vector.multi_reduction <add>, %106, %cst_45 [0] : vector<16x64xf32> to vector<64xf32>
    %108 = vector.shape_cast %107 : vector<64xf32> to vector<1x64xf32>
    %c2 = arith.constant 2 : index
    %c0_46 = arith.constant 0 : index
    %109 = vector.load %arg17[%c2, %c0_46] : memref<16x64xf32, #tpu.memory_space<vmem>>, vector<1x64xf32>
    tpu.vector_store %arg17[%c2, %c0_46], %108 {strides = array<i32>} : memref<16x64xf32, #tpu.memory_space<vmem>>, vector<1x64xf32>,
    %110 = vector.extract_strided_slice %13 {offsets = [3, 0], sizes = [1, 64], strides = [1, 1]} : vector<16x64xf32> to vector<1x64xf32>
    %111 = vector.broadcast %110 : vector<1x64xf32> to vector<16x64xf32>
    %112 = arith.addf %111, %10 : vector<16x64xf32>
    %cst_47 = arith.constant 0.000000e+00 : f32
    %113 = vector.broadcast %cst_47 : f32 to vector<16x64xf32>
    %114 = arith.cmpf oge, %112, %113 : vector<16x64xf32>
    %cst_48 = arith.constant 2.000000e-01 : f32
    %115 = vector.broadcast %cst_48 : f32 to vector<16x64xf32>
    %116 = arith.mulf %115, %112 : vector<16x64xf32>
    %117 = arith.select %114, %112, %116 : vector<16x64xi1>, vector<16x64xf32>
    %cst_49 = arith.constant dense<0.000000e+00> : vector<16x8xf32>
    %118 = tpu.matmul %117, %6, %cst_49 {dimension_numbers = #tpu.dot_dimension_numbers<[1], [0], [0], [1], [0, 0, 1, 1], [], []>} : vector<16x64xf32>, vector<64x8xf32>, vector<16x8xf32> -> vector<16x8xf32>
    %119 = vector.extract_strided_slice %0 {offsets = [0, 3], sizes = [16, 1], strides = [1, 1]} : vector<16x16xf32> to vector<16x1xf32>
    %cst_50 = arith.constant 0.000000e+00 : f32
    %120 = vector.broadcast %cst_50 : f32 to vector<16x1xf32>
    %121 = arith.cmpf ogt, %119, %120 : vector<16x1xf32>
    %cst_51 = arith.constant -1.000000e+30 : f32
    %122 = vector.shape_cast %121 : vector<16x1xi1> to vector<16x1xi1>
    %123 = vector.broadcast %122 : vector<16x1xi1> to vector<16x8xi1>
    %124 = vector.broadcast %cst_51 : f32 to vector<16x8xf32>
    %125 = arith.select %123, %118, %124 : vector<16x8xi1>, vector<16x8xf32>
    %cst_52 = arith.constant dense<0xFF800000> : vector<8xf32>
    %126 = vector.multi_reduction <maximumf>, %125, %cst_52 [0] : vector<16x8xf32> to vector<8xf32>
    %127 = vector.shape_cast %126 : vector<8xf32> to vector<1x8xf32>
    %128 = vector.broadcast %127 : vector<1x8xf32> to vector<16x8xf32>
    %129 = arith.subf %125, %128 : vector<16x8xf32>
    %130 = math.exp %129 : vector<16x8xf32>
    %131 = vector.broadcast %119 : vector<16x1xf32> to vector<16x8xf32>
    %132 = arith.mulf %130, %131 : vector<16x8xf32>
    %cst_53 = arith.constant dense<0.000000e+00> : vector<8xf32>
    %133 = vector.multi_reduction <add>, %132, %cst_53 [0] : vector<16x8xf32> to vector<8xf32>
    %134 = vector.shape_cast %133 : vector<8xf32> to vector<1x8xf32>
    %135 = vector.broadcast %134 : vector<1x8xf32> to vector<16x8xf32>
    %136 = arith.divf %132, %135 : vector<16x8xf32>
    %cst_54 = arith.constant dense<0.000000e+00> : vector<16x64xf32>
    %137 = tpu.matmul %136, %7, %cst_54 {dimension_numbers = #tpu.dot_dimension_numbers<[1], [0], [0], [1], [0, 0, 1, 1], [], []>} : vector<16x8xf32>, vector<8x64xf32>, vector<16x64xf32> -> vector<16x64xf32>
    %138 = arith.mulf %137, %10 : vector<16x64xf32>
    %cst_55 = arith.constant dense<0.000000e+00> : vector<64xf32>
    %139 = vector.multi_reduction <add>, %138, %cst_55 [0] : vector<16x64xf32> to vector<64xf32>
    %140 = vector.shape_cast %139 : vector<64xf32> to vector<1x64xf32>
    %c3 = arith.constant 3 : index
    %c0_56 = arith.constant 0 : index
    %141 = vector.load %arg17[%c3, %c0_56] : memref<16x64xf32, #tpu.memory_space<vmem>>, vector<1x64xf32>
    tpu.vector_store %arg17[%c3, %c0_56], %140 {strides = array<i32>} : memref<16x64xf32, #tpu.memory_space<vmem>>, vector<1x64xf32>,
    %142 = vector.extract_strided_slice %13 {offsets = [4, 0], sizes = [1, 64], strides = [1, 1]} : vector<16x64xf32> to vector<1x64xf32>
    %143 = vector.broadcast %142 : vector<1x64xf32> to vector<16x64xf32>
    %144 = arith.addf %143, %10 : vector<16x64xf32>
    %cst_57 = arith.constant 0.000000e+00 : f32
    %145 = vector.broadcast %cst_57 : f32 to vector<16x64xf32>
    %146 = arith.cmpf oge, %144, %145 : vector<16x64xf32>
    %cst_58 = arith.constant 2.000000e-01 : f32
    %147 = vector.broadcast %cst_58 : f32 to vector<16x64xf32>
    %148 = arith.mulf %147, %144 : vector<16x64xf32>
    %149 = arith.select %146, %144, %148 : vector<16x64xi1>, vector<16x64xf32>
    %cst_59 = arith.constant dense<0.000000e+00> : vector<16x8xf32>
    %150 = tpu.matmul %149, %6, %cst_59 {dimension_numbers = #tpu.dot_dimension_numbers<[1], [0], [0], [1], [0, 0, 1, 1], [], []>} : vector<16x64xf32>, vector<64x8xf32>, vector<16x8xf32> -> vector<16x8xf32>
    %151 = vector.extract_strided_slice %0 {offsets = [0, 4], sizes = [16, 1], strides = [1, 1]} : vector<16x16xf32> to vector<16x1xf32>
    %cst_60 = arith.constant 0.000000e+00 : f32
    %152 = vector.broadcast %cst_60 : f32 to vector<16x1xf32>
    %153 = arith.cmpf ogt, %151, %152 : vector<16x1xf32>
    %cst_61 = arith.constant -1.000000e+30 : f32
    %154 = vector.shape_cast %153 : vector<16x1xi1> to vector<16x1xi1>
    %155 = vector.broadcast %154 : vector<16x1xi1> to vector<16x8xi1>
    %156 = vector.broadcast %cst_61 : f32 to vector<16x8xf32>
    %157 = arith.select %155, %150, %156 : vector<16x8xi1>, vector<16x8xf32>
    %cst_62 = arith.constant dense<0xFF800000> : vector<8xf32>
    %158 = vector.multi_reduction <maximumf>, %157, %cst_62 [0] : vector<16x8xf32> to vector<8xf32>
    %159 = vector.shape_cast %158 : vector<8xf32> to vector<1x8xf32>
    %160 = vector.broadcast %159 : vector<1x8xf32> to vector<16x8xf32>
    %161 = arith.subf %157, %160 : vector<16x8xf32>
    %162 = math.exp %161 : vector<16x8xf32>
    %163 = vector.broadcast %151 : vector<16x1xf32> to vector<16x8xf32>
    %164 = arith.mulf %162, %163 : vector<16x8xf32>
    %cst_63 = arith.constant dense<0.000000e+00> : vector<8xf32>
    %165 = vector.multi_reduction <add>, %164, %cst_63 [0] : vector<16x8xf32> to vector<8xf32>
    %166 = vector.shape_cast %165 : vector<8xf32> to vector<1x8xf32>
    %167 = vector.broadcast %166 : vector<1x8xf32> to vector<16x8xf32>
    %168 = arith.divf %164, %167 : vector<16x8xf32>
    %cst_64 = arith.constant dense<0.000000e+00> : vector<16x64xf32>
    %169 = tpu.matmul %168, %7, %cst_64 {dimension_numbers = #tpu.dot_dimension_numbers<[1], [0], [0], [1], [0, 0, 1, 1], [], []>} : vector<16x8xf32>, vector<8x64xf32>, vector<16x64xf32> -> vector<16x64xf32>
    %170 = arith.mulf %169, %10 : vector<16x64xf32>
    %cst_65 = arith.constant dense<0.000000e+00> : vector<64xf32>
    %171 = vector.multi_reduction <add>, %170, %cst_65 [0] : vector<16x64xf32> to vector<64xf32>
    %172 = vector.shape_cast %171 : vector<64xf32> to vector<1x64xf32>
    %c4 = arith.constant 4 : index
    %c0_66 = arith.constant 0 : index
    %173 = vector.load %arg17[%c4, %c0_66] : memref<16x64xf32, #tpu.memory_space<vmem>>, vector<1x64xf32>
    tpu.vector_store %arg17[%c4, %c0_66], %172 {strides = array<i32>} : memref<16x64xf32, #tpu.memory_space<vmem>>, vector<1x64xf32>,
    %174 = vector.extract_strided_slice %13 {offsets = [5, 0], sizes = [1, 64], strides = [1, 1]} : vector<16x64xf32> to vector<1x64xf32>
    %175 = vector.broadcast %174 : vector<1x64xf32> to vector<16x64xf32>
    %176 = arith.addf %175, %10 : vector<16x64xf32>
    %cst_67 = arith.constant 0.000000e+00 : f32
    %177 = vector.broadcast %cst_67 : f32 to vector<16x64xf32>
    %178 = arith.cmpf oge, %176, %177 : vector<16x64xf32>
    %cst_68 = arith.constant 2.000000e-01 : f32
    %179 = vector.broadcast %cst_68 : f32 to vector<16x64xf32>
    %180 = arith.mulf %179, %176 : vector<16x64xf32>
    %181 = arith.select %178, %176, %180 : vector<16x64xi1>, vector<16x64xf32>
    %cst_69 = arith.constant dense<0.000000e+00> : vector<16x8xf32>
    %182 = tpu.matmul %181, %6, %cst_69 {dimension_numbers = #tpu.dot_dimension_numbers<[1], [0], [0], [1], [0, 0, 1, 1], [], []>} : vector<16x64xf32>, vector<64x8xf32>, vector<16x8xf32> -> vector<16x8xf32>
    %183 = vector.extract_strided_slice %0 {offsets = [0, 5], sizes = [16, 1], strides = [1, 1]} : vector<16x16xf32> to vector<16x1xf32>
    %cst_70 = arith.constant 0.000000e+00 : f32
    %184 = vector.broadcast %cst_70 : f32 to vector<16x1xf32>
    %185 = arith.cmpf ogt, %183, %184 : vector<16x1xf32>
    %cst_71 = arith.constant -1.000000e+30 : f32
    %186 = vector.shape_cast %185 : vector<16x1xi1> to vector<16x1xi1>
    %187 = vector.broadcast %186 : vector<16x1xi1> to vector<16x8xi1>
    %188 = vector.broadcast %cst_71 : f32 to vector<16x8xf32>
    %189 = arith.select %187, %182, %188 : vector<16x8xi1>, vector<16x8xf32>
    %cst_72 = arith.constant dense<0xFF800000> : vector<8xf32>
    %190 = vector.multi_reduction <maximumf>, %189, %cst_72 [0] : vector<16x8xf32> to vector<8xf32>
    %191 = vector.shape_cast %190 : vector<8xf32> to vector<1x8xf32>
    %192 = vector.broadcast %191 : vector<1x8xf32> to vector<16x8xf32>
    %193 = arith.subf %189, %192 : vector<16x8xf32>
    %194 = math.exp %193 : vector<16x8xf32>
    %195 = vector.broadcast %183 : vector<16x1xf32> to vector<16x8xf32>
    %196 = arith.mulf %194, %195 : vector<16x8xf32>
    %cst_73 = arith.constant dense<0.000000e+00> : vector<8xf32>
    %197 = vector.multi_reduction <add>, %196, %cst_73 [0] : vector<16x8xf32> to vector<8xf32>
    %198 = vector.shape_cast %197 : vector<8xf32> to vector<1x8xf32>
    %199 = vector.broadcast %198 : vector<1x8xf32> to vector<16x8xf32>
    %200 = arith.divf %196, %199 : vector<16x8xf32>
    %cst_74 = arith.constant dense<0.000000e+00> : vector<16x64xf32>
    %201 = tpu.matmul %200, %7, %cst_74 {dimension_numbers = #tpu.dot_dimension_numbers<[1], [0], [0], [1], [0, 0, 1, 1], [], []>} : vector<16x8xf32>, vector<8x64xf32>, vector<16x64xf32> -> vector<16x64xf32>
    %202 = arith.mulf %201, %10 : vector<16x64xf32>
    %cst_75 = arith.constant dense<0.000000e+00> : vector<64xf32>
    %203 = vector.multi_reduction <add>, %202, %cst_75 [0] : vector<16x64xf32> to vector<64xf32>
    %204 = vector.shape_cast %203 : vector<64xf32> to vector<1x64xf32>
    %c5 = arith.constant 5 : index
    %c0_76 = arith.constant 0 : index
    %205 = vector.load %arg17[%c5, %c0_76] : memref<16x64xf32, #tpu.memory_space<vmem>>, vector<1x64xf32>
    tpu.vector_store %arg17[%c5, %c0_76], %204 {strides = array<i32>} : memref<16x64xf32, #tpu.memory_space<vmem>>, vector<1x64xf32>,
    %206 = vector.extract_strided_slice %13 {offsets = [6, 0], sizes = [1, 64], strides = [1, 1]} : vector<16x64xf32> to vector<1x64xf32>
    %207 = vector.broadcast %206 : vector<1x64xf32> to vector<16x64xf32>
    %208 = arith.addf %207, %10 : vector<16x64xf32>
    %cst_77 = arith.constant 0.000000e+00 : f32
    %209 = vector.broadcast %cst_77 : f32 to vector<16x64xf32>
    %210 = arith.cmpf oge, %208, %209 : vector<16x64xf32>
    %cst_78 = arith.constant 2.000000e-01 : f32
    %211 = vector.broadcast %cst_78 : f32 to vector<16x64xf32>
    %212 = arith.mulf %211, %208 : vector<16x64xf32>
    %213 = arith.select %210, %208, %212 : vector<16x64xi1>, vector<16x64xf32>
    %cst_79 = arith.constant dense<0.000000e+00> : vector<16x8xf32>
    %214 = tpu.matmul %213, %6, %cst_79 {dimension_numbers = #tpu.dot_dimension_numbers<[1], [0], [0], [1], [0, 0, 1, 1], [], []>} : vector<16x64xf32>, vector<64x8xf32>, vector<16x8xf32> -> vector<16x8xf32>
    %215 = vector.extract_strided_slice %0 {offsets = [0, 6], sizes = [16, 1], strides = [1, 1]} : vector<16x16xf32> to vector<16x1xf32>
    %cst_80 = arith.constant 0.000000e+00 : f32
    %216 = vector.broadcast %cst_80 : f32 to vector<16x1xf32>
    %217 = arith.cmpf ogt, %215, %216 : vector<16x1xf32>
    %cst_81 = arith.constant -1.000000e+30 : f32
    %218 = vector.shape_cast %217 : vector<16x1xi1> to vector<16x1xi1>
    %219 = vector.broadcast %218 : vector<16x1xi1> to vector<16x8xi1>
    %220 = vector.broadcast %cst_81 : f32 to vector<16x8xf32>
    %221 = arith.select %219, %214, %220 : vector<16x8xi1>, vector<16x8xf32>
    %cst_82 = arith.constant dense<0xFF800000> : vector<8xf32>
    %222 = vector.multi_reduction <maximumf>, %221, %cst_82 [0] : vector<16x8xf32> to vector<8xf32>
    %223 = vector.shape_cast %222 : vector<8xf32> to vector<1x8xf32>
    %224 = vector.broadcast %223 : vector<1x8xf32> to vector<16x8xf32>
    %225 = arith.subf %221, %224 : vector<16x8xf32>
    %226 = math.exp %225 : vector<16x8xf32>
    %227 = vector.broadcast %215 : vector<16x1xf32> to vector<16x8xf32>
    %228 = arith.mulf %226, %227 : vector<16x8xf32>
    %cst_83 = arith.constant dense<0.000000e+00> : vector<8xf32>
    %229 = vector.multi_reduction <add>, %228, %cst_83 [0] : vector<16x8xf32> to vector<8xf32>
    %230 = vector.shape_cast %229 : vector<8xf32> to vector<1x8xf32>
    %231 = vector.broadcast %230 : vector<1x8xf32> to vector<16x8xf32>
    %232 = arith.divf %228, %231 : vector<16x8xf32>
    %cst_84 = arith.constant dense<0.000000e+00> : vector<16x64xf32>
    %233 = tpu.matmul %232, %7, %cst_84 {dimension_numbers = #tpu.dot_dimension_numbers<[1], [0], [0], [1], [0, 0, 1, 1], [], []>} : vector<16x8xf32>, vector<8x64xf32>, vector<16x64xf32> -> vector<16x64xf32>
    %234 = arith.mulf %233, %10 : vector<16x64xf32>
    %cst_85 = arith.constant dense<0.000000e+00> : vector<64xf32>
    %235 = vector.multi_reduction <add>, %234, %cst_85 [0] : vector<16x64xf32> to vector<64xf32>
    %236 = vector.shape_cast %235 : vector<64xf32> to vector<1x64xf32>
    %c6 = arith.constant 6 : index
    %c0_86 = arith.constant 0 : index
    %237 = vector.load %arg17[%c6, %c0_86] : memref<16x64xf32, #tpu.memory_space<vmem>>, vector<1x64xf32>
    tpu.vector_store %arg17[%c6, %c0_86], %236 {strides = array<i32>} : memref<16x64xf32, #tpu.memory_space<vmem>>, vector<1x64xf32>,
    %238 = vector.extract_strided_slice %13 {offsets = [7, 0], sizes = [1, 64], strides = [1, 1]} : vector<16x64xf32> to vector<1x64xf32>
    %239 = vector.broadcast %238 : vector<1x64xf32> to vector<16x64xf32>
    %240 = arith.addf %239, %10 : vector<16x64xf32>
    %cst_87 = arith.constant 0.000000e+00 : f32
    %241 = vector.broadcast %cst_87 : f32 to vector<16x64xf32>
    %242 = arith.cmpf oge, %240, %241 : vector<16x64xf32>
    %cst_88 = arith.constant 2.000000e-01 : f32
    %243 = vector.broadcast %cst_88 : f32 to vector<16x64xf32>
    %244 = arith.mulf %243, %240 : vector<16x64xf32>
    %245 = arith.select %242, %240, %244 : vector<16x64xi1>, vector<16x64xf32>
    %cst_89 = arith.constant dense<0.000000e+00> : vector<16x8xf32>
    %246 = tpu.matmul %245, %6, %cst_89 {dimension_numbers = #tpu.dot_dimension_numbers<[1], [0], [0], [1], [0, 0, 1, 1], [], []>} : vector<16x64xf32>, vector<64x8xf32>, vector<16x8xf32> -> vector<16x8xf32>
    %247 = vector.extract_strided_slice %0 {offsets = [0, 7], sizes = [16, 1], strides = [1, 1]} : vector<16x16xf32> to vector<16x1xf32>
    %cst_90 = arith.constant 0.000000e+00 : f32
    %248 = vector.broadcast %cst_90 : f32 to vector<16x1xf32>
    %249 = arith.cmpf ogt, %247, %248 : vector<16x1xf32>
    %cst_91 = arith.constant -1.000000e+30 : f32
    %250 = vector.shape_cast %249 : vector<16x1xi1> to vector<16x1xi1>
    %251 = vector.broadcast %250 : vector<16x1xi1> to vector<16x8xi1>
    %252 = vector.broadcast %cst_91 : f32 to vector<16x8xf32>
    %253 = arith.select %251, %246, %252 : vector<16x8xi1>, vector<16x8xf32>
    %cst_92 = arith.constant dense<0xFF800000> : vector<8xf32>
    %254 = vector.multi_reduction <maximumf>, %253, %cst_92 [0] : vector<16x8xf32> to vector<8xf32>
    %255 = vector.shape_cast %254 : vector<8xf32> to vector<1x8xf32>
    %256 = vector.broadcast %255 : vector<1x8xf32> to vector<16x8xf32>
    %257 = arith.subf %253, %256 : vector<16x8xf32>
    %258 = math.exp %257 : vector<16x8xf32>
    %259 = vector.broadcast %247 : vector<16x1xf32> to vector<16x8xf32>
    %260 = arith.mulf %258, %259 : vector<16x8xf32>
    %cst_93 = arith.constant dense<0.000000e+00> : vector<8xf32>
    %261 = vector.multi_reduction <add>, %260, %cst_93 [0] : vector<16x8xf32> to vector<8xf32>
    %262 = vector.shape_cast %261 : vector<8xf32> to vector<1x8xf32>
    %263 = vector.broadcast %262 : vector<1x8xf32> to vector<16x8xf32>
    %264 = arith.divf %260, %263 : vector<16x8xf32>
    %cst_94 = arith.constant dense<0.000000e+00> : vector<16x64xf32>
    %265 = tpu.matmul %264, %7, %cst_94 {dimension_numbers = #tpu.dot_dimension_numbers<[1], [0], [0], [1], [0, 0, 1, 1], [], []>} : vector<16x8xf32>, vector<8x64xf32>, vector<16x64xf32> -> vector<16x64xf32>
    %266 = arith.mulf %265, %10 : vector<16x64xf32>
    %cst_95 = arith.constant dense<0.000000e+00> : vector<64xf32>
    %267 = vector.multi_reduction <add>, %266, %cst_95 [0] : vector<16x64xf32> to vector<64xf32>
    %268 = vector.shape_cast %267 : vector<64xf32> to vector<1x64xf32>
    %c7 = arith.constant 7 : index
    %c0_96 = arith.constant 0 : index
    %269 = vector.load %arg17[%c7, %c0_96] : memref<16x64xf32, #tpu.memory_space<vmem>>, vector<1x64xf32>
    tpu.vector_store %arg17[%c7, %c0_96], %268 {strides = array<i32>} : memref<16x64xf32, #tpu.memory_space<vmem>>, vector<1x64xf32>,
    %270 = vector.extract_strided_slice %13 {offsets = [8, 0], sizes = [1, 64], strides = [1, 1]} : vector<16x64xf32> to vector<1x64xf32>
    %271 = vector.broadcast %270 : vector<1x64xf32> to vector<16x64xf32>
    %272 = arith.addf %271, %10 : vector<16x64xf32>
    %cst_97 = arith.constant 0.000000e+00 : f32
    %273 = vector.broadcast %cst_97 : f32 to vector<16x64xf32>
    %274 = arith.cmpf oge, %272, %273 : vector<16x64xf32>
    %cst_98 = arith.constant 2.000000e-01 : f32
    %275 = vector.broadcast %cst_98 : f32 to vector<16x64xf32>
    %276 = arith.mulf %275, %272 : vector<16x64xf32>
    %277 = arith.select %274, %272, %276 : vector<16x64xi1>, vector<16x64xf32>
    %cst_99 = arith.constant dense<0.000000e+00> : vector<16x8xf32>
    %278 = tpu.matmul %277, %6, %cst_99 {dimension_numbers = #tpu.dot_dimension_numbers<[1], [0], [0], [1], [0, 0, 1, 1], [], []>} : vector<16x64xf32>, vector<64x8xf32>, vector<16x8xf32> -> vector<16x8xf32>
    %279 = vector.extract_strided_slice %0 {offsets = [0, 8], sizes = [16, 1], strides = [1, 1]} : vector<16x16xf32> to vector<16x1xf32>
    %cst_100 = arith.constant 0.000000e+00 : f32
    %280 = vector.broadcast %cst_100 : f32 to vector<16x1xf32>
    %281 = arith.cmpf ogt, %279, %280 : vector<16x1xf32>
    %cst_101 = arith.constant -1.000000e+30 : f32
    %282 = vector.shape_cast %281 : vector<16x1xi1> to vector<16x1xi1>
    %283 = vector.broadcast %282 : vector<16x1xi1> to vector<16x8xi1>
    %284 = vector.broadcast %cst_101 : f32 to vector<16x8xf32>
    %285 = arith.select %283, %278, %284 : vector<16x8xi1>, vector<16x8xf32>
    %cst_102 = arith.constant dense<0xFF800000> : vector<8xf32>
    %286 = vector.multi_reduction <maximumf>, %285, %cst_102 [0] : vector<16x8xf32> to vector<8xf32>
    %287 = vector.shape_cast %286 : vector<8xf32> to vector<1x8xf32>
    %288 = vector.broadcast %287 : vector<1x8xf32> to vector<16x8xf32>
    %289 = arith.subf %285, %288 : vector<16x8xf32>
    %290 = math.exp %289 : vector<16x8xf32>
    %291 = vector.broadcast %279 : vector<16x1xf32> to vector<16x8xf32>
    %292 = arith.mulf %290, %291 : vector<16x8xf32>
    %cst_103 = arith.constant dense<0.000000e+00> : vector<8xf32>
    %293 = vector.multi_reduction <add>, %292, %cst_103 [0] : vector<16x8xf32> to vector<8xf32>
    %294 = vector.shape_cast %293 : vector<8xf32> to vector<1x8xf32>
    %295 = vector.broadcast %294 : vector<1x8xf32> to vector<16x8xf32>
    %296 = arith.divf %292, %295 : vector<16x8xf32>
    %cst_104 = arith.constant dense<0.000000e+00> : vector<16x64xf32>
    %297 = tpu.matmul %296, %7, %cst_104 {dimension_numbers = #tpu.dot_dimension_numbers<[1], [0], [0], [1], [0, 0, 1, 1], [], []>} : vector<16x8xf32>, vector<8x64xf32>, vector<16x64xf32> -> vector<16x64xf32>
    %298 = arith.mulf %297, %10 : vector<16x64xf32>
    %cst_105 = arith.constant dense<0.000000e+00> : vector<64xf32>
    %299 = vector.multi_reduction <add>, %298, %cst_105 [0] : vector<16x64xf32> to vector<64xf32>
    %300 = vector.shape_cast %299 : vector<64xf32> to vector<1x64xf32>
    %c8 = arith.constant 8 : index
    %c0_106 = arith.constant 0 : index
    %301 = vector.load %arg17[%c8, %c0_106] : memref<16x64xf32, #tpu.memory_space<vmem>>, vector<1x64xf32>
    tpu.vector_store %arg17[%c8, %c0_106], %300 {strides = array<i32>} : memref<16x64xf32, #tpu.memory_space<vmem>>, vector<1x64xf32>,
    %302 = vector.extract_strided_slice %13 {offsets = [9, 0], sizes = [1, 64], strides = [1, 1]} : vector<16x64xf32> to vector<1x64xf32>
    %303 = vector.broadcast %302 : vector<1x64xf32> to vector<16x64xf32>
    %304 = arith.addf %303, %10 : vector<16x64xf32>
    %cst_107 = arith.constant 0.000000e+00 : f32
    %305 = vector.broadcast %cst_107 : f32 to vector<16x64xf32>
    %306 = arith.cmpf oge, %304, %305 : vector<16x64xf32>
    %cst_108 = arith.constant 2.000000e-01 : f32
    %307 = vector.broadcast %cst_108 : f32 to vector<16x64xf32>
    %308 = arith.mulf %307, %304 : vector<16x64xf32>
    %309 = arith.select %306, %304, %308 : vector<16x64xi1>, vector<16x64xf32>
    %cst_109 = arith.constant dense<0.000000e+00> : vector<16x8xf32>
    %310 = tpu.matmul %309, %6, %cst_109 {dimension_numbers = #tpu.dot_dimension_numbers<[1], [0], [0], [1], [0, 0, 1, 1], [], []>} : vector<16x64xf32>, vector<64x8xf32>, vector<16x8xf32> -> vector<16x8xf32>
    %311 = vector.extract_strided_slice %0 {offsets = [0, 9], sizes = [16, 1], strides = [1, 1]} : vector<16x16xf32> to vector<16x1xf32>
    %cst_110 = arith.constant 0.000000e+00 : f32
    %312 = vector.broadcast %cst_110 : f32 to vector<16x1xf32>
    %313 = arith.cmpf ogt, %311, %312 : vector<16x1xf32>
    %cst_111 = arith.constant -1.000000e+30 : f32
    %314 = vector.shape_cast %313 : vector<16x1xi1> to vector<16x1xi1>
    %315 = vector.broadcast %314 : vector<16x1xi1> to vector<16x8xi1>
    %316 = vector.broadcast %cst_111 : f32 to vector<16x8xf32>
    %317 = arith.select %315, %310, %316 : vector<16x8xi1>, vector<16x8xf32>
    %cst_112 = arith.constant dense<0xFF800000> : vector<8xf32>
    %318 = vector.multi_reduction <maximumf>, %317, %cst_112 [0] : vector<16x8xf32> to vector<8xf32>
    %319 = vector.shape_cast %318 : vector<8xf32> to vector<1x8xf32>
    %320 = vector.broadcast %319 : vector<1x8xf32> to vector<16x8xf32>
    %321 = arith.subf %317, %320 : vector<16x8xf32>
    %322 = math.exp %321 : vector<16x8xf32>
    %323 = vector.broadcast %311 : vector<16x1xf32> to vector<16x8xf32>
    %324 = arith.mulf %322, %323 : vector<16x8xf32>
    %cst_113 = arith.constant dense<0.000000e+00> : vector<8xf32>
    %325 = vector.multi_reduction <add>, %324, %cst_113 [0] : vector<16x8xf32> to vector<8xf32>
    %326 = vector.shape_cast %325 : vector<8xf32> to vector<1x8xf32>
    %327 = vector.broadcast %326 : vector<1x8xf32> to vector<16x8xf32>
    %328 = arith.divf %324, %327 : vector<16x8xf32>
    %cst_114 = arith.constant dense<0.000000e+00> : vector<16x64xf32>
    %329 = tpu.matmul %328, %7, %cst_114 {dimension_numbers = #tpu.dot_dimension_numbers<[1], [0], [0], [1], [0, 0, 1, 1], [], []>} : vector<16x8xf32>, vector<8x64xf32>, vector<16x64xf32> -> vector<16x64xf32>
    %330 = arith.mulf %329, %10 : vector<16x64xf32>
    %cst_115 = arith.constant dense<0.000000e+00> : vector<64xf32>
    %331 = vector.multi_reduction <add>, %330, %cst_115 [0] : vector<16x64xf32> to vector<64xf32>
    %332 = vector.shape_cast %331 : vector<64xf32> to vector<1x64xf32>
    %c9 = arith.constant 9 : index
    %c0_116 = arith.constant 0 : index
    %333 = vector.load %arg17[%c9, %c0_116] : memref<16x64xf32, #tpu.memory_space<vmem>>, vector<1x64xf32>
    tpu.vector_store %arg17[%c9, %c0_116], %332 {strides = array<i32>} : memref<16x64xf32, #tpu.memory_space<vmem>>, vector<1x64xf32>,
    %334 = vector.extract_strided_slice %13 {offsets = [10, 0], sizes = [1, 64], strides = [1, 1]} : vector<16x64xf32> to vector<1x64xf32>
    %335 = vector.broadcast %334 : vector<1x64xf32> to vector<16x64xf32>
    %336 = arith.addf %335, %10 : vector<16x64xf32>
    %cst_117 = arith.constant 0.000000e+00 : f32
    %337 = vector.broadcast %cst_117 : f32 to vector<16x64xf32>
    %338 = arith.cmpf oge, %336, %337 : vector<16x64xf32>
    %cst_118 = arith.constant 2.000000e-01 : f32
    %339 = vector.broadcast %cst_118 : f32 to vector<16x64xf32>
    %340 = arith.mulf %339, %336 : vector<16x64xf32>
    %341 = arith.select %338, %336, %340 : vector<16x64xi1>, vector<16x64xf32>
    %cst_119 = arith.constant dense<0.000000e+00> : vector<16x8xf32>
    %342 = tpu.matmul %341, %6, %cst_119 {dimension_numbers = #tpu.dot_dimension_numbers<[1], [0], [0], [1], [0, 0, 1, 1], [], []>} : vector<16x64xf32>, vector<64x8xf32>, vector<16x8xf32> -> vector<16x8xf32>
    %343 = vector.extract_strided_slice %0 {offsets = [0, 10], sizes = [16, 1], strides = [1, 1]} : vector<16x16xf32> to vector<16x1xf32>
    %cst_120 = arith.constant 0.000000e+00 : f32
    %344 = vector.broadcast %cst_120 : f32 to vector<16x1xf32>
    %345 = arith.cmpf ogt, %343, %344 : vector<16x1xf32>
    %cst_121 = arith.constant -1.000000e+30 : f32
    %346 = vector.shape_cast %345 : vector<16x1xi1> to vector<16x1xi1>
    %347 = vector.broadcast %346 : vector<16x1xi1> to vector<16x8xi1>
    %348 = vector.broadcast %cst_121 : f32 to vector<16x8xf32>
    %349 = arith.select %347, %342, %348 : vector<16x8xi1>, vector<16x8xf32>
    %cst_122 = arith.constant dense<0xFF800000> : vector<8xf32>
    %350 = vector.multi_reduction <maximumf>, %349, %cst_122 [0] : vector<16x8xf32> to vector<8xf32>
    %351 = vector.shape_cast %350 : vector<8xf32> to vector<1x8xf32>
    %352 = vector.broadcast %351 : vector<1x8xf32> to vector<16x8xf32>
    %353 = arith.subf %349, %352 : vector<16x8xf32>
    %354 = math.exp %353 : vector<16x8xf32>
    %355 = vector.broadcast %343 : vector<16x1xf32> to vector<16x8xf32>
    %356 = arith.mulf %354, %355 : vector<16x8xf32>
    %cst_123 = arith.constant dense<0.000000e+00> : vector<8xf32>
    %357 = vector.multi_reduction <add>, %356, %cst_123 [0] : vector<16x8xf32> to vector<8xf32>
    %358 = vector.shape_cast %357 : vector<8xf32> to vector<1x8xf32>
    %359 = vector.broadcast %358 : vector<1x8xf32> to vector<16x8xf32>
    %360 = arith.divf %356, %359 : vector<16x8xf32>
    %cst_124 = arith.constant dense<0.000000e+00> : vector<16x64xf32>
    %361 = tpu.matmul %360, %7, %cst_124 {dimension_numbers = #tpu.dot_dimension_numbers<[1], [0], [0], [1], [0, 0, 1, 1], [], []>} : vector<16x8xf32>, vector<8x64xf32>, vector<16x64xf32> -> vector<16x64xf32>
    %362 = arith.mulf %361, %10 : vector<16x64xf32>
    %cst_125 = arith.constant dense<0.000000e+00> : vector<64xf32>
    %363 = vector.multi_reduction <add>, %362, %cst_125 [0] : vector<16x64xf32> to vector<64xf32>
    %364 = vector.shape_cast %363 : vector<64xf32> to vector<1x64xf32>
    %c10 = arith.constant 10 : index
    %c0_126 = arith.constant 0 : index
    %365 = vector.load %arg17[%c10, %c0_126] : memref<16x64xf32, #tpu.memory_space<vmem>>, vector<1x64xf32>
    tpu.vector_store %arg17[%c10, %c0_126], %364 {strides = array<i32>} : memref<16x64xf32, #tpu.memory_space<vmem>>, vector<1x64xf32>,
    %366 = vector.extract_strided_slice %13 {offsets = [11, 0], sizes = [1, 64], strides = [1, 1]} : vector<16x64xf32> to vector<1x64xf32>
    %367 = vector.broadcast %366 : vector<1x64xf32> to vector<16x64xf32>
    %368 = arith.addf %367, %10 : vector<16x64xf32>
    %cst_127 = arith.constant 0.000000e+00 : f32
    %369 = vector.broadcast %cst_127 : f32 to vector<16x64xf32>
    %370 = arith.cmpf oge, %368, %369 : vector<16x64xf32>
    %cst_128 = arith.constant 2.000000e-01 : f32
    %371 = vector.broadcast %cst_128 : f32 to vector<16x64xf32>
    %372 = arith.mulf %371, %368 : vector<16x64xf32>
    %373 = arith.select %370, %368, %372 : vector<16x64xi1>, vector<16x64xf32>
    %cst_129 = arith.constant dense<0.000000e+00> : vector<16x8xf32>
    %374 = tpu.matmul %373, %6, %cst_129 {dimension_numbers = #tpu.dot_dimension_numbers<[1], [0], [0], [1], [0, 0, 1, 1], [], []>} : vector<16x64xf32>, vector<64x8xf32>, vector<16x8xf32> -> vector<16x8xf32>
    %375 = vector.extract_strided_slice %0 {offsets = [0, 11], sizes = [16, 1], strides = [1, 1]} : vector<16x16xf32> to vector<16x1xf32>
    %cst_130 = arith.constant 0.000000e+00 : f32
    %376 = vector.broadcast %cst_130 : f32 to vector<16x1xf32>
    %377 = arith.cmpf ogt, %375, %376 : vector<16x1xf32>
    %cst_131 = arith.constant -1.000000e+30 : f32
    %378 = vector.shape_cast %377 : vector<16x1xi1> to vector<16x1xi1>
    %379 = vector.broadcast %378 : vector<16x1xi1> to vector<16x8xi1>
    %380 = vector.broadcast %cst_131 : f32 to vector<16x8xf32>
    %381 = arith.select %379, %374, %380 : vector<16x8xi1>, vector<16x8xf32>
    %cst_132 = arith.constant dense<0xFF800000> : vector<8xf32>
    %382 = vector.multi_reduction <maximumf>, %381, %cst_132 [0] : vector<16x8xf32> to vector<8xf32>
    %383 = vector.shape_cast %382 : vector<8xf32> to vector<1x8xf32>
    %384 = vector.broadcast %383 : vector<1x8xf32> to vector<16x8xf32>
    %385 = arith.subf %381, %384 : vector<16x8xf32>
    %386 = math.exp %385 : vector<16x8xf32>
    %387 = vector.broadcast %375 : vector<16x1xf32> to vector<16x8xf32>
    %388 = arith.mulf %386, %387 : vector<16x8xf32>
    %cst_133 = arith.constant dense<0.000000e+00> : vector<8xf32>
    %389 = vector.multi_reduction <add>, %388, %cst_133 [0] : vector<16x8xf32> to vector<8xf32>
    %390 = vector.shape_cast %389 : vector<8xf32> to vector<1x8xf32>
    %391 = vector.broadcast %390 : vector<1x8xf32> to vector<16x8xf32>
    %392 = arith.divf %388, %391 : vector<16x8xf32>
    %cst_134 = arith.constant dense<0.000000e+00> : vector<16x64xf32>
    %393 = tpu.matmul %392, %7, %cst_134 {dimension_numbers = #tpu.dot_dimension_numbers<[1], [0], [0], [1], [0, 0, 1, 1], [], []>} : vector<16x8xf32>, vector<8x64xf32>, vector<16x64xf32> -> vector<16x64xf32>
    %394 = arith.mulf %393, %10 : vector<16x64xf32>
    %cst_135 = arith.constant dense<0.000000e+00> : vector<64xf32>
    %395 = vector.multi_reduction <add>, %394, %cst_135 [0] : vector<16x64xf32> to vector<64xf32>
    %396 = vector.shape_cast %395 : vector<64xf32> to vector<1x64xf32>
    %c11 = arith.constant 11 : index
    %c0_136 = arith.constant 0 : index
    %397 = vector.load %arg17[%c11, %c0_136] : memref<16x64xf32, #tpu.memory_space<vmem>>, vector<1x64xf32>
    tpu.vector_store %arg17[%c11, %c0_136], %396 {strides = array<i32>} : memref<16x64xf32, #tpu.memory_space<vmem>>, vector<1x64xf32>,
    %398 = vector.extract_strided_slice %13 {offsets = [12, 0], sizes = [1, 64], strides = [1, 1]} : vector<16x64xf32> to vector<1x64xf32>
    %399 = vector.broadcast %398 : vector<1x64xf32> to vector<16x64xf32>
    %400 = arith.addf %399, %10 : vector<16x64xf32>
    %cst_137 = arith.constant 0.000000e+00 : f32
    %401 = vector.broadcast %cst_137 : f32 to vector<16x64xf32>
    %402 = arith.cmpf oge, %400, %401 : vector<16x64xf32>
    %cst_138 = arith.constant 2.000000e-01 : f32
    %403 = vector.broadcast %cst_138 : f32 to vector<16x64xf32>
    %404 = arith.mulf %403, %400 : vector<16x64xf32>
    %405 = arith.select %402, %400, %404 : vector<16x64xi1>, vector<16x64xf32>
    %cst_139 = arith.constant dense<0.000000e+00> : vector<16x8xf32>
    %406 = tpu.matmul %405, %6, %cst_139 {dimension_numbers = #tpu.dot_dimension_numbers<[1], [0], [0], [1], [0, 0, 1, 1], [], []>} : vector<16x64xf32>, vector<64x8xf32>, vector<16x8xf32> -> vector<16x8xf32>
    %407 = vector.extract_strided_slice %0 {offsets = [0, 12], sizes = [16, 1], strides = [1, 1]} : vector<16x16xf32> to vector<16x1xf32>
    %cst_140 = arith.constant 0.000000e+00 : f32
    %408 = vector.broadcast %cst_140 : f32 to vector<16x1xf32>
    %409 = arith.cmpf ogt, %407, %408 : vector<16x1xf32>
    %cst_141 = arith.constant -1.000000e+30 : f32
    %410 = vector.shape_cast %409 : vector<16x1xi1> to vector<16x1xi1>
    %411 = vector.broadcast %410 : vector<16x1xi1> to vector<16x8xi1>
    %412 = vector.broadcast %cst_141 : f32 to vector<16x8xf32>
    %413 = arith.select %411, %406, %412 : vector<16x8xi1>, vector<16x8xf32>
    %cst_142 = arith.constant dense<0xFF800000> : vector<8xf32>
    %414 = vector.multi_reduction <maximumf>, %413, %cst_142 [0] : vector<16x8xf32> to vector<8xf32>
    %415 = vector.shape_cast %414 : vector<8xf32> to vector<1x8xf32>
    %416 = vector.broadcast %415 : vector<1x8xf32> to vector<16x8xf32>
    %417 = arith.subf %413, %416 : vector<16x8xf32>
    %418 = math.exp %417 : vector<16x8xf32>
    %419 = vector.broadcast %407 : vector<16x1xf32> to vector<16x8xf32>
    %420 = arith.mulf %418, %419 : vector<16x8xf32>
    %cst_143 = arith.constant dense<0.000000e+00> : vector<8xf32>
    %421 = vector.multi_reduction <add>, %420, %cst_143 [0] : vector<16x8xf32> to vector<8xf32>
    %422 = vector.shape_cast %421 : vector<8xf32> to vector<1x8xf32>
    %423 = vector.broadcast %422 : vector<1x8xf32> to vector<16x8xf32>
    %424 = arith.divf %420, %423 : vector<16x8xf32>
    %cst_144 = arith.constant dense<0.000000e+00> : vector<16x64xf32>
    %425 = tpu.matmul %424, %7, %cst_144 {dimension_numbers = #tpu.dot_dimension_numbers<[1], [0], [0], [1], [0, 0, 1, 1], [], []>} : vector<16x8xf32>, vector<8x64xf32>, vector<16x64xf32> -> vector<16x64xf32>
    %426 = arith.mulf %425, %10 : vector<16x64xf32>
    %cst_145 = arith.constant dense<0.000000e+00> : vector<64xf32>
    %427 = vector.multi_reduction <add>, %426, %cst_145 [0] : vector<16x64xf32> to vector<64xf32>
    %428 = vector.shape_cast %427 : vector<64xf32> to vector<1x64xf32>
    %c12 = arith.constant 12 : index
    %c0_146 = arith.constant 0 : index
    %429 = vector.load %arg17[%c12, %c0_146] : memref<16x64xf32, #tpu.memory_space<vmem>>, vector<1x64xf32>
    tpu.vector_store %arg17[%c12, %c0_146], %428 {strides = array<i32>} : memref<16x64xf32, #tpu.memory_space<vmem>>, vector<1x64xf32>,
    %430 = vector.extract_strided_slice %13 {offsets = [13, 0], sizes = [1, 64], strides = [1, 1]} : vector<16x64xf32> to vector<1x64xf32>
    %431 = vector.broadcast %430 : vector<1x64xf32> to vector<16x64xf32>
    %432 = arith.addf %431, %10 : vector<16x64xf32>
    %cst_147 = arith.constant 0.000000e+00 : f32
    %433 = vector.broadcast %cst_147 : f32 to vector<16x64xf32>
    %434 = arith.cmpf oge, %432, %433 : vector<16x64xf32>
    %cst_148 = arith.constant 2.000000e-01 : f32
    %435 = vector.broadcast %cst_148 : f32 to vector<16x64xf32>
    %436 = arith.mulf %435, %432 : vector<16x64xf32>
    %437 = arith.select %434, %432, %436 : vector<16x64xi1>, vector<16x64xf32>
    %cst_149 = arith.constant dense<0.000000e+00> : vector<16x8xf32>
    %438 = tpu.matmul %437, %6, %cst_149 {dimension_numbers = #tpu.dot_dimension_numbers<[1], [0], [0], [1], [0, 0, 1, 1], [], []>} : vector<16x64xf32>, vector<64x8xf32>, vector<16x8xf32> -> vector<16x8xf32>
    %439 = vector.extract_strided_slice %0 {offsets = [0, 13], sizes = [16, 1], strides = [1, 1]} : vector<16x16xf32> to vector<16x1xf32>
    %cst_150 = arith.constant 0.000000e+00 : f32
    %440 = vector.broadcast %cst_150 : f32 to vector<16x1xf32>
    %441 = arith.cmpf ogt, %439, %440 : vector<16x1xf32>
    %cst_151 = arith.constant -1.000000e+30 : f32
    %442 = vector.shape_cast %441 : vector<16x1xi1> to vector<16x1xi1>
    %443 = vector.broadcast %442 : vector<16x1xi1> to vector<16x8xi1>
    %444 = vector.broadcast %cst_151 : f32 to vector<16x8xf32>
    %445 = arith.select %443, %438, %444 : vector<16x8xi1>, vector<16x8xf32>
    %cst_152 = arith.constant dense<0xFF800000> : vector<8xf32>
    %446 = vector.multi_reduction <maximumf>, %445, %cst_152 [0] : vector<16x8xf32> to vector<8xf32>
    %447 = vector.shape_cast %446 : vector<8xf32> to vector<1x8xf32>
    %448 = vector.broadcast %447 : vector<1x8xf32> to vector<16x8xf32>
    %449 = arith.subf %445, %448 : vector<16x8xf32>
    %450 = math.exp %449 : vector<16x8xf32>
    %451 = vector.broadcast %439 : vector<16x1xf32> to vector<16x8xf32>
    %452 = arith.mulf %450, %451 : vector<16x8xf32>
    %cst_153 = arith.constant dense<0.000000e+00> : vector<8xf32>
    %453 = vector.multi_reduction <add>, %452, %cst_153 [0] : vector<16x8xf32> to vector<8xf32>
    %454 = vector.shape_cast %453 : vector<8xf32> to vector<1x8xf32>
    %455 = vector.broadcast %454 : vector<1x8xf32> to vector<16x8xf32>
    %456 = arith.divf %452, %455 : vector<16x8xf32>
    %cst_154 = arith.constant dense<0.000000e+00> : vector<16x64xf32>
    %457 = tpu.matmul %456, %7, %cst_154 {dimension_numbers = #tpu.dot_dimension_numbers<[1], [0], [0], [1], [0, 0, 1, 1], [], []>} : vector<16x8xf32>, vector<8x64xf32>, vector<16x64xf32> -> vector<16x64xf32>
    %458 = arith.mulf %457, %10 : vector<16x64xf32>
    %cst_155 = arith.constant dense<0.000000e+00> : vector<64xf32>
    %459 = vector.multi_reduction <add>, %458, %cst_155 [0] : vector<16x64xf32> to vector<64xf32>
    %460 = vector.shape_cast %459 : vector<64xf32> to vector<1x64xf32>
    %c13 = arith.constant 13 : index
    %c0_156 = arith.constant 0 : index
    %461 = vector.load %arg17[%c13, %c0_156] : memref<16x64xf32, #tpu.memory_space<vmem>>, vector<1x64xf32>
    tpu.vector_store %arg17[%c13, %c0_156], %460 {strides = array<i32>} : memref<16x64xf32, #tpu.memory_space<vmem>>, vector<1x64xf32>,
    %462 = vector.extract_strided_slice %13 {offsets = [14, 0], sizes = [1, 64], strides = [1, 1]} : vector<16x64xf32> to vector<1x64xf32>
    %463 = vector.broadcast %462 : vector<1x64xf32> to vector<16x64xf32>
    %464 = arith.addf %463, %10 : vector<16x64xf32>
    %cst_157 = arith.constant 0.000000e+00 : f32
    %465 = vector.broadcast %cst_157 : f32 to vector<16x64xf32>
    %466 = arith.cmpf oge, %464, %465 : vector<16x64xf32>
    %cst_158 = arith.constant 2.000000e-01 : f32
    %467 = vector.broadcast %cst_158 : f32 to vector<16x64xf32>
    %468 = arith.mulf %467, %464 : vector<16x64xf32>
    %469 = arith.select %466, %464, %468 : vector<16x64xi1>, vector<16x64xf32>
    %cst_159 = arith.constant dense<0.000000e+00> : vector<16x8xf32>
    %470 = tpu.matmul %469, %6, %cst_159 {dimension_numbers = #tpu.dot_dimension_numbers<[1], [0], [0], [1], [0, 0, 1, 1], [], []>} : vector<16x64xf32>, vector<64x8xf32>, vector<16x8xf32> -> vector<16x8xf32>
    %471 = vector.extract_strided_slice %0 {offsets = [0, 14], sizes = [16, 1], strides = [1, 1]} : vector<16x16xf32> to vector<16x1xf32>
    %cst_160 = arith.constant 0.000000e+00 : f32
    %472 = vector.broadcast %cst_160 : f32 to vector<16x1xf32>
    %473 = arith.cmpf ogt, %471, %472 : vector<16x1xf32>
    %cst_161 = arith.constant -1.000000e+30 : f32
    %474 = vector.shape_cast %473 : vector<16x1xi1> to vector<16x1xi1>
    %475 = vector.broadcast %474 : vector<16x1xi1> to vector<16x8xi1>
    %476 = vector.broadcast %cst_161 : f32 to vector<16x8xf32>
    %477 = arith.select %475, %470, %476 : vector<16x8xi1>, vector<16x8xf32>
    %cst_162 = arith.constant dense<0xFF800000> : vector<8xf32>
    %478 = vector.multi_reduction <maximumf>, %477, %cst_162 [0] : vector<16x8xf32> to vector<8xf32>
    %479 = vector.shape_cast %478 : vector<8xf32> to vector<1x8xf32>
    %480 = vector.broadcast %479 : vector<1x8xf32> to vector<16x8xf32>
    %481 = arith.subf %477, %480 : vector<16x8xf32>
    %482 = math.exp %481 : vector<16x8xf32>
    %483 = vector.broadcast %471 : vector<16x1xf32> to vector<16x8xf32>
    %484 = arith.mulf %482, %483 : vector<16x8xf32>
    %cst_163 = arith.constant dense<0.000000e+00> : vector<8xf32>
    %485 = vector.multi_reduction <add>, %484, %cst_163 [0] : vector<16x8xf32> to vector<8xf32>
    %486 = vector.shape_cast %485 : vector<8xf32> to vector<1x8xf32>
    %487 = vector.broadcast %486 : vector<1x8xf32> to vector<16x8xf32>
    %488 = arith.divf %484, %487 : vector<16x8xf32>
    %cst_164 = arith.constant dense<0.000000e+00> : vector<16x64xf32>
    %489 = tpu.matmul %488, %7, %cst_164 {dimension_numbers = #tpu.dot_dimension_numbers<[1], [0], [0], [1], [0, 0, 1, 1], [], []>} : vector<16x8xf32>, vector<8x64xf32>, vector<16x64xf32> -> vector<16x64xf32>
    %490 = arith.mulf %489, %10 : vector<16x64xf32>
    %cst_165 = arith.constant dense<0.000000e+00> : vector<64xf32>
    %491 = vector.multi_reduction <add>, %490, %cst_165 [0] : vector<16x64xf32> to vector<64xf32>
    %492 = vector.shape_cast %491 : vector<64xf32> to vector<1x64xf32>
    %c14 = arith.constant 14 : index
    %c0_166 = arith.constant 0 : index
    %493 = vector.load %arg17[%c14, %c0_166] : memref<16x64xf32, #tpu.memory_space<vmem>>, vector<1x64xf32>
    tpu.vector_store %arg17[%c14, %c0_166], %492 {strides = array<i32>} : memref<16x64xf32, #tpu.memory_space<vmem>>, vector<1x64xf32>,
    %494 = vector.extract_strided_slice %13 {offsets = [15, 0], sizes = [1, 64], strides = [1, 1]} : vector<16x64xf32> to vector<1x64xf32>
    %495 = vector.broadcast %494 : vector<1x64xf32> to vector<16x64xf32>
    %496 = arith.addf %495, %10 : vector<16x64xf32>
    %cst_167 = arith.constant 0.000000e+00 : f32
    %497 = vector.broadcast %cst_167 : f32 to vector<16x64xf32>
    %498 = arith.cmpf oge, %496, %497 : vector<16x64xf32>
    %cst_168 = arith.constant 2.000000e-01 : f32
    %499 = vector.broadcast %cst_168 : f32 to vector<16x64xf32>
    %500 = arith.mulf %499, %496 : vector<16x64xf32>
    %501 = arith.select %498, %496, %500 : vector<16x64xi1>, vector<16x64xf32>
    %cst_169 = arith.constant dense<0.000000e+00> : vector<16x8xf32>
    %502 = tpu.matmul %501, %6, %cst_169 {dimension_numbers = #tpu.dot_dimension_numbers<[1], [0], [0], [1], [0, 0, 1, 1], [], []>} : vector<16x64xf32>, vector<64x8xf32>, vector<16x8xf32> -> vector<16x8xf32>
    %503 = vector.extract_strided_slice %0 {offsets = [0, 15], sizes = [16, 1], strides = [1, 1]} : vector<16x16xf32> to vector<16x1xf32>
    %cst_170 = arith.constant 0.000000e+00 : f32
    %504 = vector.broadcast %cst_170 : f32 to vector<16x1xf32>
    %505 = arith.cmpf ogt, %503, %504 : vector<16x1xf32>
    %cst_171 = arith.constant -1.000000e+30 : f32
    %506 = vector.shape_cast %505 : vector<16x1xi1> to vector<16x1xi1>
    %507 = vector.broadcast %506 : vector<16x1xi1> to vector<16x8xi1>
    %508 = vector.broadcast %cst_171 : f32 to vector<16x8xf32>
    %509 = arith.select %507, %502, %508 : vector<16x8xi1>, vector<16x8xf32>
    %cst_172 = arith.constant dense<0xFF800000> : vector<8xf32>
    %510 = vector.multi_reduction <maximumf>, %509, %cst_172 [0] : vector<16x8xf32> to vector<8xf32>
    %511 = vector.shape_cast %510 : vector<8xf32> to vector<1x8xf32>
    %512 = vector.broadcast %511 : vector<1x8xf32> to vector<16x8xf32>
    %513 = arith.subf %509, %512 : vector<16x8xf32>
    %514 = math.exp %513 : vector<16x8xf32>
    %515 = vector.broadcast %503 : vector<16x1xf32> to vector<16x8xf32>
    %516 = arith.mulf %514, %515 : vector<16x8xf32>
    %cst_173 = arith.constant dense<0.000000e+00> : vector<8xf32>
    %517 = vector.multi_reduction <add>, %516, %cst_173 [0] : vector<16x8xf32> to vector<8xf32>
    %518 = vector.shape_cast %517 : vector<8xf32> to vector<1x8xf32>
    %519 = vector.broadcast %518 : vector<1x8xf32> to vector<16x8xf32>
    %520 = arith.divf %516, %519 : vector<16x8xf32>
    %cst_174 = arith.constant dense<0.000000e+00> : vector<16x64xf32>
    %521 = tpu.matmul %520, %7, %cst_174 {dimension_numbers = #tpu.dot_dimension_numbers<[1], [0], [0], [1], [0, 0, 1, 1], [], []>} : vector<16x8xf32>, vector<8x64xf32>, vector<16x64xf32> -> vector<16x64xf32>
    %522 = arith.mulf %521, %10 : vector<16x64xf32>
    %cst_175 = arith.constant dense<0.000000e+00> : vector<64xf32>
    %523 = vector.multi_reduction <add>, %522, %cst_175 [0] : vector<16x64xf32> to vector<64xf32>
    %524 = vector.shape_cast %523 : vector<64xf32> to vector<1x64xf32>
    %c15 = arith.constant 15 : index
    %c0_176 = arith.constant 0 : index
    %525 = vector.load %arg17[%c15, %c0_176] : memref<16x64xf32, #tpu.memory_space<vmem>>, vector<1x64xf32>
    tpu.vector_store %arg17[%c15, %c0_176], %524 {strides = array<i32>} : memref<16x64xf32, #tpu.memory_space<vmem>>, vector<1x64xf32>,
    %c0_177 = arith.constant 0 : index
    %c0_178 = arith.constant 0 : index
    %526 = vector.load %arg17[%c0_177, %c0_178] : memref<16x64xf32, #tpu.memory_space<vmem>>, vector<16x64xf32>
    %c0_179 = arith.constant 0 : index
    %c0_180 = arith.constant 0 : index
    %527 = vector.load %arg8[%c0_179, %c0_180] : memref<1x64xf32, #tpu.memory_space<vmem>>, vector<1x64xf32>
    %528 = vector.broadcast %527 : vector<1x64xf32> to vector<16x64xf32>
    %529 = arith.addf %526, %528 : vector<16x64xf32>
    %cst_181 = arith.constant 0.000000e+00 : f32
    %530 = vector.broadcast %cst_181 : f32 to vector<16x64xf32>
    %531 = arith.maximumf %529, %530 : vector<16x64xf32>
    %c0_182 = arith.constant 0 : index
    %c0_183 = arith.constant 0 : index
    %532 = vector.load %arg15[%c0_182, %c0_183] : memref<1x4xf32, #tpu.memory_space<vmem>>, vector<1x4xf32>
    %c0_184 = arith.constant 0 : index
    %c0_185 = arith.constant 0 : index
    %533 = vector.load %arg9[%c0_184, %c0_185] : memref<64x4xf32, #tpu.memory_space<vmem>>, vector<64x4xf32>
    %c0_186 = arith.constant 0 : index
    %c0_187 = arith.constant 0 : index
    %534 = vector.load %arg10[%c0_186, %c0_187] : memref<1x4xf32, #tpu.memory_space<vmem>>, vector<1x4xf32>
    %c0_188 = arith.constant 0 : index
    %c0_189 = arith.constant 0 : index
    %535 = vector.load %arg11[%c0_188, %c0_189] : memref<64x4xf32, #tpu.memory_space<vmem>>, vector<64x4xf32>
    %c0_190 = arith.constant 0 : index
    %c0_191 = arith.constant 0 : index
    %536 = vector.load %arg12[%c0_190, %c0_191] : memref<1x4xf32, #tpu.memory_space<vmem>>, vector<1x4xf32>
    %c0_192 = arith.constant 0 : index
    %c0_193 = arith.constant 0 : index
    %537 = vector.load %arg13[%c0_192, %c0_193] : memref<4x1xf32, #tpu.memory_space<vmem>>, vector<4x1xf32>
    %c0_194 = arith.constant 0 : index
    %c0_195 = arith.constant 0 : index
    %538 = vector.load %arg14[%c0_194, %c0_195] : memref<1x4xf32, #tpu.memory_space<vmem>>, vector<1x4xf32>
    %cst_196 = arith.constant dense<0.000000e+00> : vector<16x4xf32>
    %539 = tpu.matmul %531, %533, %cst_196 {dimension_numbers = #tpu.dot_dimension_numbers<[1], [0], [0], [1], [0, 0, 1, 1], [], []>} : vector<16x64xf32>, vector<64x4xf32>, vector<16x4xf32> -> vector<16x4xf32>
    %540 = vector.broadcast %534 : vector<1x4xf32> to vector<16x4xf32>
    %541 = arith.addf %539, %540 : vector<16x4xf32>
    %cst_197 = arith.constant dense<0.000000e+00> : vector<16x4xf32>
    %542 = tpu.matmul %531, %535, %cst_197 {dimension_numbers = #tpu.dot_dimension_numbers<[1], [0], [0], [1], [0, 0, 1, 1], [], []>} : vector<16x64xf32>, vector<64x4xf32>, vector<16x4xf32> -> vector<16x4xf32>
    %543 = vector.broadcast %536 : vector<1x4xf32> to vector<16x4xf32>
    %544 = arith.addf %542, %543 : vector<16x4xf32>
    %545 = vector.extract_strided_slice %544 {offsets = [0, 0], sizes = [1, 4], strides = [1, 1]} : vector<16x4xf32> to vector<1x4xf32>
    %546 = vector.broadcast %545 : vector<1x4xf32> to vector<16x4xf32>
    %547 = arith.addf %546, %541 : vector<16x4xf32>
    %cst_198 = arith.constant 0.000000e+00 : f32
    %548 = vector.broadcast %cst_198 : f32 to vector<16x4xf32>
    %549 = arith.cmpf oge, %547, %548 : vector<16x4xf32>
    %cst_199 = arith.constant 2.000000e-01 : f32
    %550 = vector.broadcast %cst_199 : f32 to vector<16x4xf32>
    %551 = arith.mulf %550, %547 : vector<16x4xf32>
    %552 = arith.select %549, %547, %551 : vector<16x4xi1>, vector<16x4xf32>
    %cst_200 = arith.constant dense<0.000000e+00> : vector<16x1xf32>
    %553 = tpu.matmul %552, %537, %cst_200 {dimension_numbers = #tpu.dot_dimension_numbers<[1], [0], [0], [1], [0, 0, 1, 1], [], []>} : vector<16x4xf32>, vector<4x1xf32>, vector<16x1xf32> -> vector<16x1xf32>
    %554 = vector.extract_strided_slice %0 {offsets = [0, 0], sizes = [16, 1], strides = [1, 1]} : vector<16x16xf32> to vector<16x1xf32>
    %cst_201 = arith.constant 0.000000e+00 : f32
    %555 = vector.broadcast %cst_201 : f32 to vector<16x1xf32>
    %556 = arith.cmpf ogt, %554, %555 : vector<16x1xf32>
    %cst_202 = arith.constant -1.000000e+30 : f32
    %557 = vector.broadcast %cst_202 : f32 to vector<16x1xf32>
    %558 = arith.select %556, %553, %557 : vector<16x1xi1>, vector<16x1xf32>
    %cst_203 = arith.constant dense<0xFF800000> : vector<1xf32>
    %559 = vector.multi_reduction <maximumf>, %558, %cst_203 [0] : vector<16x1xf32> to vector<1xf32>
    %560 = vector.shape_cast %559 : vector<1xf32> to vector<1x1xf32>
    %561 = vector.broadcast %560 : vector<1x1xf32> to vector<16x1xf32>
    %562 = arith.subf %558, %561 : vector<16x1xf32>
    %563 = math.exp %562 : vector<16x1xf32>
    %564 = arith.mulf %563, %554 : vector<16x1xf32>
    %cst_204 = arith.constant dense<0.000000e+00> : vector<1xf32>
    %565 = vector.multi_reduction <add>, %564, %cst_204 [0] : vector<16x1xf32> to vector<1xf32>
    %566 = vector.shape_cast %565 : vector<1xf32> to vector<1x1xf32>
    %567 = vector.broadcast %566 : vector<1x1xf32> to vector<16x1xf32>
    %568 = arith.divf %564, %567 : vector<16x1xf32>
    %cst_205 = arith.constant dense<0.000000e+00> : vector<16x4xf32>
    %569 = tpu.matmul %568, %538, %cst_205 {dimension_numbers = #tpu.dot_dimension_numbers<[1], [0], [0], [1], [0, 0, 1, 1], [], []>} : vector<16x1xf32>, vector<1x4xf32>, vector<16x4xf32> -> vector<16x4xf32>
    %570 = arith.mulf %569, %541 : vector<16x4xf32>
    %cst_206 = arith.constant dense<0.000000e+00> : vector<4xf32>
    %571 = vector.multi_reduction <add>, %570, %cst_206 [0] : vector<16x4xf32> to vector<4xf32>
    %572 = vector.shape_cast %571 : vector<4xf32> to vector<1x4xf32>
    %573 = arith.addf %572, %532 : vector<1x4xf32>
    %c0_207 = arith.constant 0 : index
    %c0_208 = arith.constant 0 : index
    %574 = vector.load %arg16[%c0_207, %c0_208] : memref<16x4xf32, #tpu.memory_space<vmem>>, vector<1x4xf32>
    tpu.vector_store %arg16[%c0_207, %c0_208], %573 {strides = array<i32>} : memref<16x4xf32, #tpu.memory_space<vmem>>, vector<1x4xf32>,
    %575 = vector.extract_strided_slice %544 {offsets = [1, 0], sizes = [1, 4], strides = [1, 1]} : vector<16x4xf32> to vector<1x4xf32>
    %576 = vector.broadcast %575 : vector<1x4xf32> to vector<16x4xf32>
    %577 = arith.addf %576, %541 : vector<16x4xf32>
    %cst_209 = arith.constant 0.000000e+00 : f32
    %578 = vector.broadcast %cst_209 : f32 to vector<16x4xf32>
    %579 = arith.cmpf oge, %577, %578 : vector<16x4xf32>
    %cst_210 = arith.constant 2.000000e-01 : f32
    %580 = vector.broadcast %cst_210 : f32 to vector<16x4xf32>
    %581 = arith.mulf %580, %577 : vector<16x4xf32>
    %582 = arith.select %579, %577, %581 : vector<16x4xi1>, vector<16x4xf32>
    %cst_211 = arith.constant dense<0.000000e+00> : vector<16x1xf32>
    %583 = tpu.matmul %582, %537, %cst_211 {dimension_numbers = #tpu.dot_dimension_numbers<[1], [0], [0], [1], [0, 0, 1, 1], [], []>} : vector<16x4xf32>, vector<4x1xf32>, vector<16x1xf32> -> vector<16x1xf32>
    %584 = vector.extract_strided_slice %0 {offsets = [0, 1], sizes = [16, 1], strides = [1, 1]} : vector<16x16xf32> to vector<16x1xf32>
    %cst_212 = arith.constant 0.000000e+00 : f32
    %585 = vector.broadcast %cst_212 : f32 to vector<16x1xf32>
    %586 = arith.cmpf ogt, %584, %585 : vector<16x1xf32>
    %cst_213 = arith.constant -1.000000e+30 : f32
    %587 = vector.broadcast %cst_213 : f32 to vector<16x1xf32>
    %588 = arith.select %586, %583, %587 : vector<16x1xi1>, vector<16x1xf32>
    %cst_214 = arith.constant dense<0xFF800000> : vector<1xf32>
    %589 = vector.multi_reduction <maximumf>, %588, %cst_214 [0] : vector<16x1xf32> to vector<1xf32>
    %590 = vector.shape_cast %589 : vector<1xf32> to vector<1x1xf32>
    %591 = vector.broadcast %590 : vector<1x1xf32> to vector<16x1xf32>
    %592 = arith.subf %588, %591 : vector<16x1xf32>
    %593 = math.exp %592 : vector<16x1xf32>
    %594 = arith.mulf %593, %584 : vector<16x1xf32>
    %cst_215 = arith.constant dense<0.000000e+00> : vector<1xf32>
    %595 = vector.multi_reduction <add>, %594, %cst_215 [0] : vector<16x1xf32> to vector<1xf32>
    %596 = vector.shape_cast %595 : vector<1xf32> to vector<1x1xf32>
    %597 = vector.broadcast %596 : vector<1x1xf32> to vector<16x1xf32>
    %598 = arith.divf %594, %597 : vector<16x1xf32>
    %cst_216 = arith.constant dense<0.000000e+00> : vector<16x4xf32>
    %599 = tpu.matmul %598, %538, %cst_216 {dimension_numbers = #tpu.dot_dimension_numbers<[1], [0], [0], [1], [0, 0, 1, 1], [], []>} : vector<16x1xf32>, vector<1x4xf32>, vector<16x4xf32> -> vector<16x4xf32>
    %600 = arith.mulf %599, %541 : vector<16x4xf32>
    %cst_217 = arith.constant dense<0.000000e+00> : vector<4xf32>
    %601 = vector.multi_reduction <add>, %600, %cst_217 [0] : vector<16x4xf32> to vector<4xf32>
    %602 = vector.shape_cast %601 : vector<4xf32> to vector<1x4xf32>
    %603 = arith.addf %602, %532 : vector<1x4xf32>
    %c1_218 = arith.constant 1 : index
    %c0_219 = arith.constant 0 : index
    %604 = vector.load %arg16[%c1_218, %c0_219] : memref<16x4xf32, #tpu.memory_space<vmem>>, vector<1x4xf32>
    tpu.vector_store %arg16[%c1_218, %c0_219], %603 {strides = array<i32>} : memref<16x4xf32, #tpu.memory_space<vmem>>, vector<1x4xf32>,
    %605 = vector.extract_strided_slice %544 {offsets = [2, 0], sizes = [1, 4], strides = [1, 1]} : vector<16x4xf32> to vector<1x4xf32>
    %606 = vector.broadcast %605 : vector<1x4xf32> to vector<16x4xf32>
    %607 = arith.addf %606, %541 : vector<16x4xf32>
    %cst_220 = arith.constant 0.000000e+00 : f32
    %608 = vector.broadcast %cst_220 : f32 to vector<16x4xf32>
    %609 = arith.cmpf oge, %607, %608 : vector<16x4xf32>
    %cst_221 = arith.constant 2.000000e-01 : f32
    %610 = vector.broadcast %cst_221 : f32 to vector<16x4xf32>
    %611 = arith.mulf %610, %607 : vector<16x4xf32>
    %612 = arith.select %609, %607, %611 : vector<16x4xi1>, vector<16x4xf32>
    %cst_222 = arith.constant dense<0.000000e+00> : vector<16x1xf32>
    %613 = tpu.matmul %612, %537, %cst_222 {dimension_numbers = #tpu.dot_dimension_numbers<[1], [0], [0], [1], [0, 0, 1, 1], [], []>} : vector<16x4xf32>, vector<4x1xf32>, vector<16x1xf32> -> vector<16x1xf32>
    %614 = vector.extract_strided_slice %0 {offsets = [0, 2], sizes = [16, 1], strides = [1, 1]} : vector<16x16xf32> to vector<16x1xf32>
    %cst_223 = arith.constant 0.000000e+00 : f32
    %615 = vector.broadcast %cst_223 : f32 to vector<16x1xf32>
    %616 = arith.cmpf ogt, %614, %615 : vector<16x1xf32>
    %cst_224 = arith.constant -1.000000e+30 : f32
    %617 = vector.broadcast %cst_224 : f32 to vector<16x1xf32>
    %618 = arith.select %616, %613, %617 : vector<16x1xi1>, vector<16x1xf32>
    %cst_225 = arith.constant dense<0xFF800000> : vector<1xf32>
    %619 = vector.multi_reduction <maximumf>, %618, %cst_225 [0] : vector<16x1xf32> to vector<1xf32>
    %620 = vector.shape_cast %619 : vector<1xf32> to vector<1x1xf32>
    %621 = vector.broadcast %620 : vector<1x1xf32> to vector<16x1xf32>
    %622 = arith.subf %618, %621 : vector<16x1xf32>
    %623 = math.exp %622 : vector<16x1xf32>
    %624 = arith.mulf %623, %614 : vector<16x1xf32>
    %cst_226 = arith.constant dense<0.000000e+00> : vector<1xf32>
    %625 = vector.multi_reduction <add>, %624, %cst_226 [0] : vector<16x1xf32> to vector<1xf32>
    %626 = vector.shape_cast %625 : vector<1xf32> to vector<1x1xf32>
    %627 = vector.broadcast %626 : vector<1x1xf32> to vector<16x1xf32>
    %628 = arith.divf %624, %627 : vector<16x1xf32>
    %cst_227 = arith.constant dense<0.000000e+00> : vector<16x4xf32>
    %629 = tpu.matmul %628, %538, %cst_227 {dimension_numbers = #tpu.dot_dimension_numbers<[1], [0], [0], [1], [0, 0, 1, 1], [], []>} : vector<16x1xf32>, vector<1x4xf32>, vector<16x4xf32> -> vector<16x4xf32>
    %630 = arith.mulf %629, %541 : vector<16x4xf32>
    %cst_228 = arith.constant dense<0.000000e+00> : vector<4xf32>
    %631 = vector.multi_reduction <add>, %630, %cst_228 [0] : vector<16x4xf32> to vector<4xf32>
    %632 = vector.shape_cast %631 : vector<4xf32> to vector<1x4xf32>
    %633 = arith.addf %632, %532 : vector<1x4xf32>
    %c2_229 = arith.constant 2 : index
    %c0_230 = arith.constant 0 : index
    %634 = vector.load %arg16[%c2_229, %c0_230] : memref<16x4xf32, #tpu.memory_space<vmem>>, vector<1x4xf32>
    tpu.vector_store %arg16[%c2_229, %c0_230], %633 {strides = array<i32>} : memref<16x4xf32, #tpu.memory_space<vmem>>, vector<1x4xf32>,
    %635 = vector.extract_strided_slice %544 {offsets = [3, 0], sizes = [1, 4], strides = [1, 1]} : vector<16x4xf32> to vector<1x4xf32>
    %636 = vector.broadcast %635 : vector<1x4xf32> to vector<16x4xf32>
    %637 = arith.addf %636, %541 : vector<16x4xf32>
    %cst_231 = arith.constant 0.000000e+00 : f32
    %638 = vector.broadcast %cst_231 : f32 to vector<16x4xf32>
    %639 = arith.cmpf oge, %637, %638 : vector<16x4xf32>
    %cst_232 = arith.constant 2.000000e-01 : f32
    %640 = vector.broadcast %cst_232 : f32 to vector<16x4xf32>
    %641 = arith.mulf %640, %637 : vector<16x4xf32>
    %642 = arith.select %639, %637, %641 : vector<16x4xi1>, vector<16x4xf32>
    %cst_233 = arith.constant dense<0.000000e+00> : vector<16x1xf32>
    %643 = tpu.matmul %642, %537, %cst_233 {dimension_numbers = #tpu.dot_dimension_numbers<[1], [0], [0], [1], [0, 0, 1, 1], [], []>} : vector<16x4xf32>, vector<4x1xf32>, vector<16x1xf32> -> vector<16x1xf32>
    %644 = vector.extract_strided_slice %0 {offsets = [0, 3], sizes = [16, 1], strides = [1, 1]} : vector<16x16xf32> to vector<16x1xf32>
    %cst_234 = arith.constant 0.000000e+00 : f32
    %645 = vector.broadcast %cst_234 : f32 to vector<16x1xf32>
    %646 = arith.cmpf ogt, %644, %645 : vector<16x1xf32>
    %cst_235 = arith.constant -1.000000e+30 : f32
    %647 = vector.broadcast %cst_235 : f32 to vector<16x1xf32>
    %648 = arith.select %646, %643, %647 : vector<16x1xi1>, vector<16x1xf32>
    %cst_236 = arith.constant dense<0xFF800000> : vector<1xf32>
    %649 = vector.multi_reduction <maximumf>, %648, %cst_236 [0] : vector<16x1xf32> to vector<1xf32>
    %650 = vector.shape_cast %649 : vector<1xf32> to vector<1x1xf32>
    %651 = vector.broadcast %650 : vector<1x1xf32> to vector<16x1xf32>
    %652 = arith.subf %648, %651 : vector<16x1xf32>
    %653 = math.exp %652 : vector<16x1xf32>
    %654 = arith.mulf %653, %644 : vector<16x1xf32>
    %cst_237 = arith.constant dense<0.000000e+00> : vector<1xf32>
    %655 = vector.multi_reduction <add>, %654, %cst_237 [0] : vector<16x1xf32> to vector<1xf32>
    %656 = vector.shape_cast %655 : vector<1xf32> to vector<1x1xf32>
    %657 = vector.broadcast %656 : vector<1x1xf32> to vector<16x1xf32>
    %658 = arith.divf %654, %657 : vector<16x1xf32>
    %cst_238 = arith.constant dense<0.000000e+00> : vector<16x4xf32>
    %659 = tpu.matmul %658, %538, %cst_238 {dimension_numbers = #tpu.dot_dimension_numbers<[1], [0], [0], [1], [0, 0, 1, 1], [], []>} : vector<16x1xf32>, vector<1x4xf32>, vector<16x4xf32> -> vector<16x4xf32>
    %660 = arith.mulf %659, %541 : vector<16x4xf32>
    %cst_239 = arith.constant dense<0.000000e+00> : vector<4xf32>
    %661 = vector.multi_reduction <add>, %660, %cst_239 [0] : vector<16x4xf32> to vector<4xf32>
    %662 = vector.shape_cast %661 : vector<4xf32> to vector<1x4xf32>
    %663 = arith.addf %662, %532 : vector<1x4xf32>
    %c3_240 = arith.constant 3 : index
    %c0_241 = arith.constant 0 : index
    %664 = vector.load %arg16[%c3_240, %c0_241] : memref<16x4xf32, #tpu.memory_space<vmem>>, vector<1x4xf32>
    tpu.vector_store %arg16[%c3_240, %c0_241], %663 {strides = array<i32>} : memref<16x4xf32, #tpu.memory_space<vmem>>, vector<1x4xf32>,
    %665 = vector.extract_strided_slice %544 {offsets = [4, 0], sizes = [1, 4], strides = [1, 1]} : vector<16x4xf32> to vector<1x4xf32>
    %666 = vector.broadcast %665 : vector<1x4xf32> to vector<16x4xf32>
    %667 = arith.addf %666, %541 : vector<16x4xf32>
    %cst_242 = arith.constant 0.000000e+00 : f32
    %668 = vector.broadcast %cst_242 : f32 to vector<16x4xf32>
    %669 = arith.cmpf oge, %667, %668 : vector<16x4xf32>
    %cst_243 = arith.constant 2.000000e-01 : f32
    %670 = vector.broadcast %cst_243 : f32 to vector<16x4xf32>
    %671 = arith.mulf %670, %667 : vector<16x4xf32>
    %672 = arith.select %669, %667, %671 : vector<16x4xi1>, vector<16x4xf32>
    %cst_244 = arith.constant dense<0.000000e+00> : vector<16x1xf32>
    %673 = tpu.matmul %672, %537, %cst_244 {dimension_numbers = #tpu.dot_dimension_numbers<[1], [0], [0], [1], [0, 0, 1, 1], [], []>} : vector<16x4xf32>, vector<4x1xf32>, vector<16x1xf32> -> vector<16x1xf32>
    %674 = vector.extract_strided_slice %0 {offsets = [0, 4], sizes = [16, 1], strides = [1, 1]} : vector<16x16xf32> to vector<16x1xf32>
    %cst_245 = arith.constant 0.000000e+00 : f32
    %675 = vector.broadcast %cst_245 : f32 to vector<16x1xf32>
    %676 = arith.cmpf ogt, %674, %675 : vector<16x1xf32>
    %cst_246 = arith.constant -1.000000e+30 : f32
    %677 = vector.broadcast %cst_246 : f32 to vector<16x1xf32>
    %678 = arith.select %676, %673, %677 : vector<16x1xi1>, vector<16x1xf32>
    %cst_247 = arith.constant dense<0xFF800000> : vector<1xf32>
    %679 = vector.multi_reduction <maximumf>, %678, %cst_247 [0] : vector<16x1xf32> to vector<1xf32>
    %680 = vector.shape_cast %679 : vector<1xf32> to vector<1x1xf32>
    %681 = vector.broadcast %680 : vector<1x1xf32> to vector<16x1xf32>
    %682 = arith.subf %678, %681 : vector<16x1xf32>
    %683 = math.exp %682 : vector<16x1xf32>
    %684 = arith.mulf %683, %674 : vector<16x1xf32>
    %cst_248 = arith.constant dense<0.000000e+00> : vector<1xf32>
    %685 = vector.multi_reduction <add>, %684, %cst_248 [0] : vector<16x1xf32> to vector<1xf32>
    %686 = vector.shape_cast %685 : vector<1xf32> to vector<1x1xf32>
    %687 = vector.broadcast %686 : vector<1x1xf32> to vector<16x1xf32>
    %688 = arith.divf %684, %687 : vector<16x1xf32>
    %cst_249 = arith.constant dense<0.000000e+00> : vector<16x4xf32>
    %689 = tpu.matmul %688, %538, %cst_249 {dimension_numbers = #tpu.dot_dimension_numbers<[1], [0], [0], [1], [0, 0, 1, 1], [], []>} : vector<16x1xf32>, vector<1x4xf32>, vector<16x4xf32> -> vector<16x4xf32>
    %690 = arith.mulf %689, %541 : vector<16x4xf32>
    %cst_250 = arith.constant dense<0.000000e+00> : vector<4xf32>
    %691 = vector.multi_reduction <add>, %690, %cst_250 [0] : vector<16x4xf32> to vector<4xf32>
    %692 = vector.shape_cast %691 : vector<4xf32> to vector<1x4xf32>
    %693 = arith.addf %692, %532 : vector<1x4xf32>
    %c4_251 = arith.constant 4 : index
    %c0_252 = arith.constant 0 : index
    %694 = vector.load %arg16[%c4_251, %c0_252] : memref<16x4xf32, #tpu.memory_space<vmem>>, vector<1x4xf32>
    tpu.vector_store %arg16[%c4_251, %c0_252], %693 {strides = array<i32>} : memref<16x4xf32, #tpu.memory_space<vmem>>, vector<1x4xf32>,
    %695 = vector.extract_strided_slice %544 {offsets = [5, 0], sizes = [1, 4], strides = [1, 1]} : vector<16x4xf32> to vector<1x4xf32>
    %696 = vector.broadcast %695 : vector<1x4xf32> to vector<16x4xf32>
    %697 = arith.addf %696, %541 : vector<16x4xf32>
    %cst_253 = arith.constant 0.000000e+00 : f32
    %698 = vector.broadcast %cst_253 : f32 to vector<16x4xf32>
    %699 = arith.cmpf oge, %697, %698 : vector<16x4xf32>
    %cst_254 = arith.constant 2.000000e-01 : f32
    %700 = vector.broadcast %cst_254 : f32 to vector<16x4xf32>
    %701 = arith.mulf %700, %697 : vector<16x4xf32>
    %702 = arith.select %699, %697, %701 : vector<16x4xi1>, vector<16x4xf32>
    %cst_255 = arith.constant dense<0.000000e+00> : vector<16x1xf32>
    %703 = tpu.matmul %702, %537, %cst_255 {dimension_numbers = #tpu.dot_dimension_numbers<[1], [0], [0], [1], [0, 0, 1, 1], [], []>} : vector<16x4xf32>, vector<4x1xf32>, vector<16x1xf32> -> vector<16x1xf32>
    %704 = vector.extract_strided_slice %0 {offsets = [0, 5], sizes = [16, 1], strides = [1, 1]} : vector<16x16xf32> to vector<16x1xf32>
    %cst_256 = arith.constant 0.000000e+00 : f32
    %705 = vector.broadcast %cst_256 : f32 to vector<16x1xf32>
    %706 = arith.cmpf ogt, %704, %705 : vector<16x1xf32>
    %cst_257 = arith.constant -1.000000e+30 : f32
    %707 = vector.broadcast %cst_257 : f32 to vector<16x1xf32>
    %708 = arith.select %706, %703, %707 : vector<16x1xi1>, vector<16x1xf32>
    %cst_258 = arith.constant dense<0xFF800000> : vector<1xf32>
    %709 = vector.multi_reduction <maximumf>, %708, %cst_258 [0] : vector<16x1xf32> to vector<1xf32>
    %710 = vector.shape_cast %709 : vector<1xf32> to vector<1x1xf32>
    %711 = vector.broadcast %710 : vector<1x1xf32> to vector<16x1xf32>
    %712 = arith.subf %708, %711 : vector<16x1xf32>
    %713 = math.exp %712 : vector<16x1xf32>
    %714 = arith.mulf %713, %704 : vector<16x1xf32>
    %cst_259 = arith.constant dense<0.000000e+00> : vector<1xf32>
    %715 = vector.multi_reduction <add>, %714, %cst_259 [0] : vector<16x1xf32> to vector<1xf32>
    %716 = vector.shape_cast %715 : vector<1xf32> to vector<1x1xf32>
    %717 = vector.broadcast %716 : vector<1x1xf32> to vector<16x1xf32>
    %718 = arith.divf %714, %717 : vector<16x1xf32>
    %cst_260 = arith.constant dense<0.000000e+00> : vector<16x4xf32>
    %719 = tpu.matmul %718, %538, %cst_260 {dimension_numbers = #tpu.dot_dimension_numbers<[1], [0], [0], [1], [0, 0, 1, 1], [], []>} : vector<16x1xf32>, vector<1x4xf32>, vector<16x4xf32> -> vector<16x4xf32>
    %720 = arith.mulf %719, %541 : vector<16x4xf32>
    %cst_261 = arith.constant dense<0.000000e+00> : vector<4xf32>
    %721 = vector.multi_reduction <add>, %720, %cst_261 [0] : vector<16x4xf32> to vector<4xf32>
    %722 = vector.shape_cast %721 : vector<4xf32> to vector<1x4xf32>
    %723 = arith.addf %722, %532 : vector<1x4xf32>
    %c5_262 = arith.constant 5 : index
    %c0_263 = arith.constant 0 : index
    %724 = vector.load %arg16[%c5_262, %c0_263] : memref<16x4xf32, #tpu.memory_space<vmem>>, vector<1x4xf32>
    tpu.vector_store %arg16[%c5_262, %c0_263], %723 {strides = array<i32>} : memref<16x4xf32, #tpu.memory_space<vmem>>, vector<1x4xf32>,
    %725 = vector.extract_strided_slice %544 {offsets = [6, 0], sizes = [1, 4], strides = [1, 1]} : vector<16x4xf32> to vector<1x4xf32>
    %726 = vector.broadcast %725 : vector<1x4xf32> to vector<16x4xf32>
    %727 = arith.addf %726, %541 : vector<16x4xf32>
    %cst_264 = arith.constant 0.000000e+00 : f32
    %728 = vector.broadcast %cst_264 : f32 to vector<16x4xf32>
    %729 = arith.cmpf oge, %727, %728 : vector<16x4xf32>
    %cst_265 = arith.constant 2.000000e-01 : f32
    %730 = vector.broadcast %cst_265 : f32 to vector<16x4xf32>
    %731 = arith.mulf %730, %727 : vector<16x4xf32>
    %732 = arith.select %729, %727, %731 : vector<16x4xi1>, vector<16x4xf32>
    %cst_266 = arith.constant dense<0.000000e+00> : vector<16x1xf32>
    %733 = tpu.matmul %732, %537, %cst_266 {dimension_numbers = #tpu.dot_dimension_numbers<[1], [0], [0], [1], [0, 0, 1, 1], [], []>} : vector<16x4xf32>, vector<4x1xf32>, vector<16x1xf32> -> vector<16x1xf32>
    %734 = vector.extract_strided_slice %0 {offsets = [0, 6], sizes = [16, 1], strides = [1, 1]} : vector<16x16xf32> to vector<16x1xf32>
    %cst_267 = arith.constant 0.000000e+00 : f32
    %735 = vector.broadcast %cst_267 : f32 to vector<16x1xf32>
    %736 = arith.cmpf ogt, %734, %735 : vector<16x1xf32>
    %cst_268 = arith.constant -1.000000e+30 : f32
    %737 = vector.broadcast %cst_268 : f32 to vector<16x1xf32>
    %738 = arith.select %736, %733, %737 : vector<16x1xi1>, vector<16x1xf32>
    %cst_269 = arith.constant dense<0xFF800000> : vector<1xf32>
    %739 = vector.multi_reduction <maximumf>, %738, %cst_269 [0] : vector<16x1xf32> to vector<1xf32>
    %740 = vector.shape_cast %739 : vector<1xf32> to vector<1x1xf32>
    %741 = vector.broadcast %740 : vector<1x1xf32> to vector<16x1xf32>
    %742 = arith.subf %738, %741 : vector<16x1xf32>
    %743 = math.exp %742 : vector<16x1xf32>
    %744 = arith.mulf %743, %734 : vector<16x1xf32>
    %cst_270 = arith.constant dense<0.000000e+00> : vector<1xf32>
    %745 = vector.multi_reduction <add>, %744, %cst_270 [0] : vector<16x1xf32> to vector<1xf32>
    %746 = vector.shape_cast %745 : vector<1xf32> to vector<1x1xf32>
    %747 = vector.broadcast %746 : vector<1x1xf32> to vector<16x1xf32>
    %748 = arith.divf %744, %747 : vector<16x1xf32>
    %cst_271 = arith.constant dense<0.000000e+00> : vector<16x4xf32>
    %749 = tpu.matmul %748, %538, %cst_271 {dimension_numbers = #tpu.dot_dimension_numbers<[1], [0], [0], [1], [0, 0, 1, 1], [], []>} : vector<16x1xf32>, vector<1x4xf32>, vector<16x4xf32> -> vector<16x4xf32>
    %750 = arith.mulf %749, %541 : vector<16x4xf32>
    %cst_272 = arith.constant dense<0.000000e+00> : vector<4xf32>
    %751 = vector.multi_reduction <add>, %750, %cst_272 [0] : vector<16x4xf32> to vector<4xf32>
    %752 = vector.shape_cast %751 : vector<4xf32> to vector<1x4xf32>
    %753 = arith.addf %752, %532 : vector<1x4xf32>
    %c6_273 = arith.constant 6 : index
    %c0_274 = arith.constant 0 : index
    %754 = vector.load %arg16[%c6_273, %c0_274] : memref<16x4xf32, #tpu.memory_space<vmem>>, vector<1x4xf32>
    tpu.vector_store %arg16[%c6_273, %c0_274], %753 {strides = array<i32>} : memref<16x4xf32, #tpu.memory_space<vmem>>, vector<1x4xf32>,
    %755 = vector.extract_strided_slice %544 {offsets = [7, 0], sizes = [1, 4], strides = [1, 1]} : vector<16x4xf32> to vector<1x4xf32>
    %756 = vector.broadcast %755 : vector<1x4xf32> to vector<16x4xf32>
    %757 = arith.addf %756, %541 : vector<16x4xf32>
    %cst_275 = arith.constant 0.000000e+00 : f32
    %758 = vector.broadcast %cst_275 : f32 to vector<16x4xf32>
    %759 = arith.cmpf oge, %757, %758 : vector<16x4xf32>
    %cst_276 = arith.constant 2.000000e-01 : f32
    %760 = vector.broadcast %cst_276 : f32 to vector<16x4xf32>
    %761 = arith.mulf %760, %757 : vector<16x4xf32>
    %762 = arith.select %759, %757, %761 : vector<16x4xi1>, vector<16x4xf32>
    %cst_277 = arith.constant dense<0.000000e+00> : vector<16x1xf32>
    %763 = tpu.matmul %762, %537, %cst_277 {dimension_numbers = #tpu.dot_dimension_numbers<[1], [0], [0], [1], [0, 0, 1, 1], [], []>} : vector<16x4xf32>, vector<4x1xf32>, vector<16x1xf32> -> vector<16x1xf32>
    %764 = vector.extract_strided_slice %0 {offsets = [0, 7], sizes = [16, 1], strides = [1, 1]} : vector<16x16xf32> to vector<16x1xf32>
    %cst_278 = arith.constant 0.000000e+00 : f32
    %765 = vector.broadcast %cst_278 : f32 to vector<16x1xf32>
    %766 = arith.cmpf ogt, %764, %765 : vector<16x1xf32>
    %cst_279 = arith.constant -1.000000e+30 : f32
    %767 = vector.broadcast %cst_279 : f32 to vector<16x1xf32>
    %768 = arith.select %766, %763, %767 : vector<16x1xi1>, vector<16x1xf32>
    %cst_280 = arith.constant dense<0xFF800000> : vector<1xf32>
    %769 = vector.multi_reduction <maximumf>, %768, %cst_280 [0] : vector<16x1xf32> to vector<1xf32>
    %770 = vector.shape_cast %769 : vector<1xf32> to vector<1x1xf32>
    %771 = vector.broadcast %770 : vector<1x1xf32> to vector<16x1xf32>
    %772 = arith.subf %768, %771 : vector<16x1xf32>
    %773 = math.exp %772 : vector<16x1xf32>
    %774 = arith.mulf %773, %764 : vector<16x1xf32>
    %cst_281 = arith.constant dense<0.000000e+00> : vector<1xf32>
    %775 = vector.multi_reduction <add>, %774, %cst_281 [0] : vector<16x1xf32> to vector<1xf32>
    %776 = vector.shape_cast %775 : vector<1xf32> to vector<1x1xf32>
    %777 = vector.broadcast %776 : vector<1x1xf32> to vector<16x1xf32>
    %778 = arith.divf %774, %777 : vector<16x1xf32>
    %cst_282 = arith.constant dense<0.000000e+00> : vector<16x4xf32>
    %779 = tpu.matmul %778, %538, %cst_282 {dimension_numbers = #tpu.dot_dimension_numbers<[1], [0], [0], [1], [0, 0, 1, 1], [], []>} : vector<16x1xf32>, vector<1x4xf32>, vector<16x4xf32> -> vector<16x4xf32>
    %780 = arith.mulf %779, %541 : vector<16x4xf32>
    %cst_283 = arith.constant dense<0.000000e+00> : vector<4xf32>
    %781 = vector.multi_reduction <add>, %780, %cst_283 [0] : vector<16x4xf32> to vector<4xf32>
    %782 = vector.shape_cast %781 : vector<4xf32> to vector<1x4xf32>
    %783 = arith.addf %782, %532 : vector<1x4xf32>
    %c7_284 = arith.constant 7 : index
    %c0_285 = arith.constant 0 : index
    %784 = vector.load %arg16[%c7_284, %c0_285] : memref<16x4xf32, #tpu.memory_space<vmem>>, vector<1x4xf32>
    tpu.vector_store %arg16[%c7_284, %c0_285], %783 {strides = array<i32>} : memref<16x4xf32, #tpu.memory_space<vmem>>, vector<1x4xf32>,
    %785 = vector.extract_strided_slice %544 {offsets = [8, 0], sizes = [1, 4], strides = [1, 1]} : vector<16x4xf32> to vector<1x4xf32>
    %786 = vector.broadcast %785 : vector<1x4xf32> to vector<16x4xf32>
    %787 = arith.addf %786, %541 : vector<16x4xf32>
    %cst_286 = arith.constant 0.000000e+00 : f32
    %788 = vector.broadcast %cst_286 : f32 to vector<16x4xf32>
    %789 = arith.cmpf oge, %787, %788 : vector<16x4xf32>
    %cst_287 = arith.constant 2.000000e-01 : f32
    %790 = vector.broadcast %cst_287 : f32 to vector<16x4xf32>
    %791 = arith.mulf %790, %787 : vector<16x4xf32>
    %792 = arith.select %789, %787, %791 : vector<16x4xi1>, vector<16x4xf32>
    %cst_288 = arith.constant dense<0.000000e+00> : vector<16x1xf32>
    %793 = tpu.matmul %792, %537, %cst_288 {dimension_numbers = #tpu.dot_dimension_numbers<[1], [0], [0], [1], [0, 0, 1, 1], [], []>} : vector<16x4xf32>, vector<4x1xf32>, vector<16x1xf32> -> vector<16x1xf32>
    %794 = vector.extract_strided_slice %0 {offsets = [0, 8], sizes = [16, 1], strides = [1, 1]} : vector<16x16xf32> to vector<16x1xf32>
    %cst_289 = arith.constant 0.000000e+00 : f32
    %795 = vector.broadcast %cst_289 : f32 to vector<16x1xf32>
    %796 = arith.cmpf ogt, %794, %795 : vector<16x1xf32>
    %cst_290 = arith.constant -1.000000e+30 : f32
    %797 = vector.broadcast %cst_290 : f32 to vector<16x1xf32>
    %798 = arith.select %796, %793, %797 : vector<16x1xi1>, vector<16x1xf32>
    %cst_291 = arith.constant dense<0xFF800000> : vector<1xf32>
    %799 = vector.multi_reduction <maximumf>, %798, %cst_291 [0] : vector<16x1xf32> to vector<1xf32>
    %800 = vector.shape_cast %799 : vector<1xf32> to vector<1x1xf32>
    %801 = vector.broadcast %800 : vector<1x1xf32> to vector<16x1xf32>
    %802 = arith.subf %798, %801 : vector<16x1xf32>
    %803 = math.exp %802 : vector<16x1xf32>
    %804 = arith.mulf %803, %794 : vector<16x1xf32>
    %cst_292 = arith.constant dense<0.000000e+00> : vector<1xf32>
    %805 = vector.multi_reduction <add>, %804, %cst_292 [0] : vector<16x1xf32> to vector<1xf32>
    %806 = vector.shape_cast %805 : vector<1xf32> to vector<1x1xf32>
    %807 = vector.broadcast %806 : vector<1x1xf32> to vector<16x1xf32>
    %808 = arith.divf %804, %807 : vector<16x1xf32>
    %cst_293 = arith.constant dense<0.000000e+00> : vector<16x4xf32>
    %809 = tpu.matmul %808, %538, %cst_293 {dimension_numbers = #tpu.dot_dimension_numbers<[1], [0], [0], [1], [0, 0, 1, 1], [], []>} : vector<16x1xf32>, vector<1x4xf32>, vector<16x4xf32> -> vector<16x4xf32>
    %810 = arith.mulf %809, %541 : vector<16x4xf32>
    %cst_294 = arith.constant dense<0.000000e+00> : vector<4xf32>
    %811 = vector.multi_reduction <add>, %810, %cst_294 [0] : vector<16x4xf32> to vector<4xf32>
    %812 = vector.shape_cast %811 : vector<4xf32> to vector<1x4xf32>
    %813 = arith.addf %812, %532 : vector<1x4xf32>
    %c8_295 = arith.constant 8 : index
    %c0_296 = arith.constant 0 : index
    %814 = vector.load %arg16[%c8_295, %c0_296] : memref<16x4xf32, #tpu.memory_space<vmem>>, vector<1x4xf32>
    tpu.vector_store %arg16[%c8_295, %c0_296], %813 {strides = array<i32>} : memref<16x4xf32, #tpu.memory_space<vmem>>, vector<1x4xf32>,
    %815 = vector.extract_strided_slice %544 {offsets = [9, 0], sizes = [1, 4], strides = [1, 1]} : vector<16x4xf32> to vector<1x4xf32>
    %816 = vector.broadcast %815 : vector<1x4xf32> to vector<16x4xf32>
    %817 = arith.addf %816, %541 : vector<16x4xf32>
    %cst_297 = arith.constant 0.000000e+00 : f32
    %818 = vector.broadcast %cst_297 : f32 to vector<16x4xf32>
    %819 = arith.cmpf oge, %817, %818 : vector<16x4xf32>
    %cst_298 = arith.constant 2.000000e-01 : f32
    %820 = vector.broadcast %cst_298 : f32 to vector<16x4xf32>
    %821 = arith.mulf %820, %817 : vector<16x4xf32>
    %822 = arith.select %819, %817, %821 : vector<16x4xi1>, vector<16x4xf32>
    %cst_299 = arith.constant dense<0.000000e+00> : vector<16x1xf32>
    %823 = tpu.matmul %822, %537, %cst_299 {dimension_numbers = #tpu.dot_dimension_numbers<[1], [0], [0], [1], [0, 0, 1, 1], [], []>} : vector<16x4xf32>, vector<4x1xf32>, vector<16x1xf32> -> vector<16x1xf32>
    %824 = vector.extract_strided_slice %0 {offsets = [0, 9], sizes = [16, 1], strides = [1, 1]} : vector<16x16xf32> to vector<16x1xf32>
    %cst_300 = arith.constant 0.000000e+00 : f32
    %825 = vector.broadcast %cst_300 : f32 to vector<16x1xf32>
    %826 = arith.cmpf ogt, %824, %825 : vector<16x1xf32>
    %cst_301 = arith.constant -1.000000e+30 : f32
    %827 = vector.broadcast %cst_301 : f32 to vector<16x1xf32>
    %828 = arith.select %826, %823, %827 : vector<16x1xi1>, vector<16x1xf32>
    %cst_302 = arith.constant dense<0xFF800000> : vector<1xf32>
    %829 = vector.multi_reduction <maximumf>, %828, %cst_302 [0] : vector<16x1xf32> to vector<1xf32>
    %830 = vector.shape_cast %829 : vector<1xf32> to vector<1x1xf32>
    %831 = vector.broadcast %830 : vector<1x1xf32> to vector<16x1xf32>
    %832 = arith.subf %828, %831 : vector<16x1xf32>
    %833 = math.exp %832 : vector<16x1xf32>
    %834 = arith.mulf %833, %824 : vector<16x1xf32>
    %cst_303 = arith.constant dense<0.000000e+00> : vector<1xf32>
    %835 = vector.multi_reduction <add>, %834, %cst_303 [0] : vector<16x1xf32> to vector<1xf32>
    %836 = vector.shape_cast %835 : vector<1xf32> to vector<1x1xf32>
    %837 = vector.broadcast %836 : vector<1x1xf32> to vector<16x1xf32>
    %838 = arith.divf %834, %837 : vector<16x1xf32>
    %cst_304 = arith.constant dense<0.000000e+00> : vector<16x4xf32>
    %839 = tpu.matmul %838, %538, %cst_304 {dimension_numbers = #tpu.dot_dimension_numbers<[1], [0], [0], [1], [0, 0, 1, 1], [], []>} : vector<16x1xf32>, vector<1x4xf32>, vector<16x4xf32> -> vector<16x4xf32>
    %840 = arith.mulf %839, %541 : vector<16x4xf32>
    %cst_305 = arith.constant dense<0.000000e+00> : vector<4xf32>
    %841 = vector.multi_reduction <add>, %840, %cst_305 [0] : vector<16x4xf32> to vector<4xf32>
    %842 = vector.shape_cast %841 : vector<4xf32> to vector<1x4xf32>
    %843 = arith.addf %842, %532 : vector<1x4xf32>
    %c9_306 = arith.constant 9 : index
    %c0_307 = arith.constant 0 : index
    %844 = vector.load %arg16[%c9_306, %c0_307] : memref<16x4xf32, #tpu.memory_space<vmem>>, vector<1x4xf32>
    tpu.vector_store %arg16[%c9_306, %c0_307], %843 {strides = array<i32>} : memref<16x4xf32, #tpu.memory_space<vmem>>, vector<1x4xf32>,
    %845 = vector.extract_strided_slice %544 {offsets = [10, 0], sizes = [1, 4], strides = [1, 1]} : vector<16x4xf32> to vector<1x4xf32>
    %846 = vector.broadcast %845 : vector<1x4xf32> to vector<16x4xf32>
    %847 = arith.addf %846, %541 : vector<16x4xf32>
    %cst_308 = arith.constant 0.000000e+00 : f32
    %848 = vector.broadcast %cst_308 : f32 to vector<16x4xf32>
    %849 = arith.cmpf oge, %847, %848 : vector<16x4xf32>
    %cst_309 = arith.constant 2.000000e-01 : f32
    %850 = vector.broadcast %cst_309 : f32 to vector<16x4xf32>
    %851 = arith.mulf %850, %847 : vector<16x4xf32>
    %852 = arith.select %849, %847, %851 : vector<16x4xi1>, vector<16x4xf32>
    %cst_310 = arith.constant dense<0.000000e+00> : vector<16x1xf32>
    %853 = tpu.matmul %852, %537, %cst_310 {dimension_numbers = #tpu.dot_dimension_numbers<[1], [0], [0], [1], [0, 0, 1, 1], [], []>} : vector<16x4xf32>, vector<4x1xf32>, vector<16x1xf32> -> vector<16x1xf32>
    %854 = vector.extract_strided_slice %0 {offsets = [0, 10], sizes = [16, 1], strides = [1, 1]} : vector<16x16xf32> to vector<16x1xf32>
    %cst_311 = arith.constant 0.000000e+00 : f32
    %855 = vector.broadcast %cst_311 : f32 to vector<16x1xf32>
    %856 = arith.cmpf ogt, %854, %855 : vector<16x1xf32>
    %cst_312 = arith.constant -1.000000e+30 : f32
    %857 = vector.broadcast %cst_312 : f32 to vector<16x1xf32>
    %858 = arith.select %856, %853, %857 : vector<16x1xi1>, vector<16x1xf32>
    %cst_313 = arith.constant dense<0xFF800000> : vector<1xf32>
    %859 = vector.multi_reduction <maximumf>, %858, %cst_313 [0] : vector<16x1xf32> to vector<1xf32>
    %860 = vector.shape_cast %859 : vector<1xf32> to vector<1x1xf32>
    %861 = vector.broadcast %860 : vector<1x1xf32> to vector<16x1xf32>
    %862 = arith.subf %858, %861 : vector<16x1xf32>
    %863 = math.exp %862 : vector<16x1xf32>
    %864 = arith.mulf %863, %854 : vector<16x1xf32>
    %cst_314 = arith.constant dense<0.000000e+00> : vector<1xf32>
    %865 = vector.multi_reduction <add>, %864, %cst_314 [0] : vector<16x1xf32> to vector<1xf32>
    %866 = vector.shape_cast %865 : vector<1xf32> to vector<1x1xf32>
    %867 = vector.broadcast %866 : vector<1x1xf32> to vector<16x1xf32>
    %868 = arith.divf %864, %867 : vector<16x1xf32>
    %cst_315 = arith.constant dense<0.000000e+00> : vector<16x4xf32>
    %869 = tpu.matmul %868, %538, %cst_315 {dimension_numbers = #tpu.dot_dimension_numbers<[1], [0], [0], [1], [0, 0, 1, 1], [], []>} : vector<16x1xf32>, vector<1x4xf32>, vector<16x4xf32> -> vector<16x4xf32>
    %870 = arith.mulf %869, %541 : vector<16x4xf32>
    %cst_316 = arith.constant dense<0.000000e+00> : vector<4xf32>
    %871 = vector.multi_reduction <add>, %870, %cst_316 [0] : vector<16x4xf32> to vector<4xf32>
    %872 = vector.shape_cast %871 : vector<4xf32> to vector<1x4xf32>
    %873 = arith.addf %872, %532 : vector<1x4xf32>
    %c10_317 = arith.constant 10 : index
    %c0_318 = arith.constant 0 : index
    %874 = vector.load %arg16[%c10_317, %c0_318] : memref<16x4xf32, #tpu.memory_space<vmem>>, vector<1x4xf32>
    tpu.vector_store %arg16[%c10_317, %c0_318], %873 {strides = array<i32>} : memref<16x4xf32, #tpu.memory_space<vmem>>, vector<1x4xf32>,
    %875 = vector.extract_strided_slice %544 {offsets = [11, 0], sizes = [1, 4], strides = [1, 1]} : vector<16x4xf32> to vector<1x4xf32>
    %876 = vector.broadcast %875 : vector<1x4xf32> to vector<16x4xf32>
    %877 = arith.addf %876, %541 : vector<16x4xf32>
    %cst_319 = arith.constant 0.000000e+00 : f32
    %878 = vector.broadcast %cst_319 : f32 to vector<16x4xf32>
    %879 = arith.cmpf oge, %877, %878 : vector<16x4xf32>
    %cst_320 = arith.constant 2.000000e-01 : f32
    %880 = vector.broadcast %cst_320 : f32 to vector<16x4xf32>
    %881 = arith.mulf %880, %877 : vector<16x4xf32>
    %882 = arith.select %879, %877, %881 : vector<16x4xi1>, vector<16x4xf32>
    %cst_321 = arith.constant dense<0.000000e+00> : vector<16x1xf32>
    %883 = tpu.matmul %882, %537, %cst_321 {dimension_numbers = #tpu.dot_dimension_numbers<[1], [0], [0], [1], [0, 0, 1, 1], [], []>} : vector<16x4xf32>, vector<4x1xf32>, vector<16x1xf32> -> vector<16x1xf32>
    %884 = vector.extract_strided_slice %0 {offsets = [0, 11], sizes = [16, 1], strides = [1, 1]} : vector<16x16xf32> to vector<16x1xf32>
    %cst_322 = arith.constant 0.000000e+00 : f32
    %885 = vector.broadcast %cst_322 : f32 to vector<16x1xf32>
    %886 = arith.cmpf ogt, %884, %885 : vector<16x1xf32>
    %cst_323 = arith.constant -1.000000e+30 : f32
    %887 = vector.broadcast %cst_323 : f32 to vector<16x1xf32>
    %888 = arith.select %886, %883, %887 : vector<16x1xi1>, vector<16x1xf32>
    %cst_324 = arith.constant dense<0xFF800000> : vector<1xf32>
    %889 = vector.multi_reduction <maximumf>, %888, %cst_324 [0] : vector<16x1xf32> to vector<1xf32>
    %890 = vector.shape_cast %889 : vector<1xf32> to vector<1x1xf32>
    %891 = vector.broadcast %890 : vector<1x1xf32> to vector<16x1xf32>
    %892 = arith.subf %888, %891 : vector<16x1xf32>
    %893 = math.exp %892 : vector<16x1xf32>
    %894 = arith.mulf %893, %884 : vector<16x1xf32>
    %cst_325 = arith.constant dense<0.000000e+00> : vector<1xf32>
    %895 = vector.multi_reduction <add>, %894, %cst_325 [0] : vector<16x1xf32> to vector<1xf32>
    %896 = vector.shape_cast %895 : vector<1xf32> to vector<1x1xf32>
    %897 = vector.broadcast %896 : vector<1x1xf32> to vector<16x1xf32>
    %898 = arith.divf %894, %897 : vector<16x1xf32>
    %cst_326 = arith.constant dense<0.000000e+00> : vector<16x4xf32>
    %899 = tpu.matmul %898, %538, %cst_326 {dimension_numbers = #tpu.dot_dimension_numbers<[1], [0], [0], [1], [0, 0, 1, 1], [], []>} : vector<16x1xf32>, vector<1x4xf32>, vector<16x4xf32> -> vector<16x4xf32>
    %900 = arith.mulf %899, %541 : vector<16x4xf32>
    %cst_327 = arith.constant dense<0.000000e+00> : vector<4xf32>
    %901 = vector.multi_reduction <add>, %900, %cst_327 [0] : vector<16x4xf32> to vector<4xf32>
    %902 = vector.shape_cast %901 : vector<4xf32> to vector<1x4xf32>
    %903 = arith.addf %902, %532 : vector<1x4xf32>
    %c11_328 = arith.constant 11 : index
    %c0_329 = arith.constant 0 : index
    %904 = vector.load %arg16[%c11_328, %c0_329] : memref<16x4xf32, #tpu.memory_space<vmem>>, vector<1x4xf32>
    tpu.vector_store %arg16[%c11_328, %c0_329], %903 {strides = array<i32>} : memref<16x4xf32, #tpu.memory_space<vmem>>, vector<1x4xf32>,
    %905 = vector.extract_strided_slice %544 {offsets = [12, 0], sizes = [1, 4], strides = [1, 1]} : vector<16x4xf32> to vector<1x4xf32>
    %906 = vector.broadcast %905 : vector<1x4xf32> to vector<16x4xf32>
    %907 = arith.addf %906, %541 : vector<16x4xf32>
    %cst_330 = arith.constant 0.000000e+00 : f32
    %908 = vector.broadcast %cst_330 : f32 to vector<16x4xf32>
    %909 = arith.cmpf oge, %907, %908 : vector<16x4xf32>
    %cst_331 = arith.constant 2.000000e-01 : f32
    %910 = vector.broadcast %cst_331 : f32 to vector<16x4xf32>
    %911 = arith.mulf %910, %907 : vector<16x4xf32>
    %912 = arith.select %909, %907, %911 : vector<16x4xi1>, vector<16x4xf32>
    %cst_332 = arith.constant dense<0.000000e+00> : vector<16x1xf32>
    %913 = tpu.matmul %912, %537, %cst_332 {dimension_numbers = #tpu.dot_dimension_numbers<[1], [0], [0], [1], [0, 0, 1, 1], [], []>} : vector<16x4xf32>, vector<4x1xf32>, vector<16x1xf32> -> vector<16x1xf32>
    %914 = vector.extract_strided_slice %0 {offsets = [0, 12], sizes = [16, 1], strides = [1, 1]} : vector<16x16xf32> to vector<16x1xf32>
    %cst_333 = arith.constant 0.000000e+00 : f32
    %915 = vector.broadcast %cst_333 : f32 to vector<16x1xf32>
    %916 = arith.cmpf ogt, %914, %915 : vector<16x1xf32>
    %cst_334 = arith.constant -1.000000e+30 : f32
    %917 = vector.broadcast %cst_334 : f32 to vector<16x1xf32>
    %918 = arith.select %916, %913, %917 : vector<16x1xi1>, vector<16x1xf32>
    %cst_335 = arith.constant dense<0xFF800000> : vector<1xf32>
    %919 = vector.multi_reduction <maximumf>, %918, %cst_335 [0] : vector<16x1xf32> to vector<1xf32>
    %920 = vector.shape_cast %919 : vector<1xf32> to vector<1x1xf32>
    %921 = vector.broadcast %920 : vector<1x1xf32> to vector<16x1xf32>
    %922 = arith.subf %918, %921 : vector<16x1xf32>
    %923 = math.exp %922 : vector<16x1xf32>
    %924 = arith.mulf %923, %914 : vector<16x1xf32>
    %cst_336 = arith.constant dense<0.000000e+00> : vector<1xf32>
    %925 = vector.multi_reduction <add>, %924, %cst_336 [0] : vector<16x1xf32> to vector<1xf32>
    %926 = vector.shape_cast %925 : vector<1xf32> to vector<1x1xf32>
    %927 = vector.broadcast %926 : vector<1x1xf32> to vector<16x1xf32>
    %928 = arith.divf %924, %927 : vector<16x1xf32>
    %cst_337 = arith.constant dense<0.000000e+00> : vector<16x4xf32>
    %929 = tpu.matmul %928, %538, %cst_337 {dimension_numbers = #tpu.dot_dimension_numbers<[1], [0], [0], [1], [0, 0, 1, 1], [], []>} : vector<16x1xf32>, vector<1x4xf32>, vector<16x4xf32> -> vector<16x4xf32>
    %930 = arith.mulf %929, %541 : vector<16x4xf32>
    %cst_338 = arith.constant dense<0.000000e+00> : vector<4xf32>
    %931 = vector.multi_reduction <add>, %930, %cst_338 [0] : vector<16x4xf32> to vector<4xf32>
    %932 = vector.shape_cast %931 : vector<4xf32> to vector<1x4xf32>
    %933 = arith.addf %932, %532 : vector<1x4xf32>
    %c12_339 = arith.constant 12 : index
    %c0_340 = arith.constant 0 : index
    %934 = vector.load %arg16[%c12_339, %c0_340] : memref<16x4xf32, #tpu.memory_space<vmem>>, vector<1x4xf32>
    tpu.vector_store %arg16[%c12_339, %c0_340], %933 {strides = array<i32>} : memref<16x4xf32, #tpu.memory_space<vmem>>, vector<1x4xf32>,
    %935 = vector.extract_strided_slice %544 {offsets = [13, 0], sizes = [1, 4], strides = [1, 1]} : vector<16x4xf32> to vector<1x4xf32>
    %936 = vector.broadcast %935 : vector<1x4xf32> to vector<16x4xf32>
    %937 = arith.addf %936, %541 : vector<16x4xf32>
    %cst_341 = arith.constant 0.000000e+00 : f32
    %938 = vector.broadcast %cst_341 : f32 to vector<16x4xf32>
    %939 = arith.cmpf oge, %937, %938 : vector<16x4xf32>
    %cst_342 = arith.constant 2.000000e-01 : f32
    %940 = vector.broadcast %cst_342 : f32 to vector<16x4xf32>
    %941 = arith.mulf %940, %937 : vector<16x4xf32>
    %942 = arith.select %939, %937, %941 : vector<16x4xi1>, vector<16x4xf32>
    %cst_343 = arith.constant dense<0.000000e+00> : vector<16x1xf32>
    %943 = tpu.matmul %942, %537, %cst_343 {dimension_numbers = #tpu.dot_dimension_numbers<[1], [0], [0], [1], [0, 0, 1, 1], [], []>} : vector<16x4xf32>, vector<4x1xf32>, vector<16x1xf32> -> vector<16x1xf32>
    %944 = vector.extract_strided_slice %0 {offsets = [0, 13], sizes = [16, 1], strides = [1, 1]} : vector<16x16xf32> to vector<16x1xf32>
    %cst_344 = arith.constant 0.000000e+00 : f32
    %945 = vector.broadcast %cst_344 : f32 to vector<16x1xf32>
    %946 = arith.cmpf ogt, %944, %945 : vector<16x1xf32>
    %cst_345 = arith.constant -1.000000e+30 : f32
    %947 = vector.broadcast %cst_345 : f32 to vector<16x1xf32>
    %948 = arith.select %946, %943, %947 : vector<16x1xi1>, vector<16x1xf32>
    %cst_346 = arith.constant dense<0xFF800000> : vector<1xf32>
    %949 = vector.multi_reduction <maximumf>, %948, %cst_346 [0] : vector<16x1xf32> to vector<1xf32>
    %950 = vector.shape_cast %949 : vector<1xf32> to vector<1x1xf32>
    %951 = vector.broadcast %950 : vector<1x1xf32> to vector<16x1xf32>
    %952 = arith.subf %948, %951 : vector<16x1xf32>
    %953 = math.exp %952 : vector<16x1xf32>
    %954 = arith.mulf %953, %944 : vector<16x1xf32>
    %cst_347 = arith.constant dense<0.000000e+00> : vector<1xf32>
    %955 = vector.multi_reduction <add>, %954, %cst_347 [0] : vector<16x1xf32> to vector<1xf32>
    %956 = vector.shape_cast %955 : vector<1xf32> to vector<1x1xf32>
    %957 = vector.broadcast %956 : vector<1x1xf32> to vector<16x1xf32>
    %958 = arith.divf %954, %957 : vector<16x1xf32>
    %cst_348 = arith.constant dense<0.000000e+00> : vector<16x4xf32>
    %959 = tpu.matmul %958, %538, %cst_348 {dimension_numbers = #tpu.dot_dimension_numbers<[1], [0], [0], [1], [0, 0, 1, 1], [], []>} : vector<16x1xf32>, vector<1x4xf32>, vector<16x4xf32> -> vector<16x4xf32>
    %960 = arith.mulf %959, %541 : vector<16x4xf32>
    %cst_349 = arith.constant dense<0.000000e+00> : vector<4xf32>
    %961 = vector.multi_reduction <add>, %960, %cst_349 [0] : vector<16x4xf32> to vector<4xf32>
    %962 = vector.shape_cast %961 : vector<4xf32> to vector<1x4xf32>
    %963 = arith.addf %962, %532 : vector<1x4xf32>
    %c13_350 = arith.constant 13 : index
    %c0_351 = arith.constant 0 : index
    %964 = vector.load %arg16[%c13_350, %c0_351] : memref<16x4xf32, #tpu.memory_space<vmem>>, vector<1x4xf32>
    tpu.vector_store %arg16[%c13_350, %c0_351], %963 {strides = array<i32>} : memref<16x4xf32, #tpu.memory_space<vmem>>, vector<1x4xf32>,
    %965 = vector.extract_strided_slice %544 {offsets = [14, 0], sizes = [1, 4], strides = [1, 1]} : vector<16x4xf32> to vector<1x4xf32>
    %966 = vector.broadcast %965 : vector<1x4xf32> to vector<16x4xf32>
    %967 = arith.addf %966, %541 : vector<16x4xf32>
    %cst_352 = arith.constant 0.000000e+00 : f32
    %968 = vector.broadcast %cst_352 : f32 to vector<16x4xf32>
    %969 = arith.cmpf oge, %967, %968 : vector<16x4xf32>
    %cst_353 = arith.constant 2.000000e-01 : f32
    %970 = vector.broadcast %cst_353 : f32 to vector<16x4xf32>
    %971 = arith.mulf %970, %967 : vector<16x4xf32>
    %972 = arith.select %969, %967, %971 : vector<16x4xi1>, vector<16x4xf32>
    %cst_354 = arith.constant dense<0.000000e+00> : vector<16x1xf32>
    %973 = tpu.matmul %972, %537, %cst_354 {dimension_numbers = #tpu.dot_dimension_numbers<[1], [0], [0], [1], [0, 0, 1, 1], [], []>} : vector<16x4xf32>, vector<4x1xf32>, vector<16x1xf32> -> vector<16x1xf32>
    %974 = vector.extract_strided_slice %0 {offsets = [0, 14], sizes = [16, 1], strides = [1, 1]} : vector<16x16xf32> to vector<16x1xf32>
    %cst_355 = arith.constant 0.000000e+00 : f32
    %975 = vector.broadcast %cst_355 : f32 to vector<16x1xf32>
    %976 = arith.cmpf ogt, %974, %975 : vector<16x1xf32>
    %cst_356 = arith.constant -1.000000e+30 : f32
    %977 = vector.broadcast %cst_356 : f32 to vector<16x1xf32>
    %978 = arith.select %976, %973, %977 : vector<16x1xi1>, vector<16x1xf32>
    %cst_357 = arith.constant dense<0xFF800000> : vector<1xf32>
    %979 = vector.multi_reduction <maximumf>, %978, %cst_357 [0] : vector<16x1xf32> to vector<1xf32>
    %980 = vector.shape_cast %979 : vector<1xf32> to vector<1x1xf32>
    %981 = vector.broadcast %980 : vector<1x1xf32> to vector<16x1xf32>
    %982 = arith.subf %978, %981 : vector<16x1xf32>
    %983 = math.exp %982 : vector<16x1xf32>
    %984 = arith.mulf %983, %974 : vector<16x1xf32>
    %cst_358 = arith.constant dense<0.000000e+00> : vector<1xf32>
    %985 = vector.multi_reduction <add>, %984, %cst_358 [0] : vector<16x1xf32> to vector<1xf32>
    %986 = vector.shape_cast %985 : vector<1xf32> to vector<1x1xf32>
    %987 = vector.broadcast %986 : vector<1x1xf32> to vector<16x1xf32>
    %988 = arith.divf %984, %987 : vector<16x1xf32>
    %cst_359 = arith.constant dense<0.000000e+00> : vector<16x4xf32>
    %989 = tpu.matmul %988, %538, %cst_359 {dimension_numbers = #tpu.dot_dimension_numbers<[1], [0], [0], [1], [0, 0, 1, 1], [], []>} : vector<16x1xf32>, vector<1x4xf32>, vector<16x4xf32> -> vector<16x4xf32>
    %990 = arith.mulf %989, %541 : vector<16x4xf32>
    %cst_360 = arith.constant dense<0.000000e+00> : vector<4xf32>
    %991 = vector.multi_reduction <add>, %990, %cst_360 [0] : vector<16x4xf32> to vector<4xf32>
    %992 = vector.shape_cast %991 : vector<4xf32> to vector<1x4xf32>
    %993 = arith.addf %992, %532 : vector<1x4xf32>
    %c14_361 = arith.constant 14 : index
    %c0_362 = arith.constant 0 : index
    %994 = vector.load %arg16[%c14_361, %c0_362] : memref<16x4xf32, #tpu.memory_space<vmem>>, vector<1x4xf32>
    tpu.vector_store %arg16[%c14_361, %c0_362], %993 {strides = array<i32>} : memref<16x4xf32, #tpu.memory_space<vmem>>, vector<1x4xf32>,
    %995 = vector.extract_strided_slice %544 {offsets = [15, 0], sizes = [1, 4], strides = [1, 1]} : vector<16x4xf32> to vector<1x4xf32>
    %996 = vector.broadcast %995 : vector<1x4xf32> to vector<16x4xf32>
    %997 = arith.addf %996, %541 : vector<16x4xf32>
    %cst_363 = arith.constant 0.000000e+00 : f32
    %998 = vector.broadcast %cst_363 : f32 to vector<16x4xf32>
    %999 = arith.cmpf oge, %997, %998 : vector<16x4xf32>
    %cst_364 = arith.constant 2.000000e-01 : f32
    %1000 = vector.broadcast %cst_364 : f32 to vector<16x4xf32>
    %1001 = arith.mulf %1000, %997 : vector<16x4xf32>
    %1002 = arith.select %999, %997, %1001 : vector<16x4xi1>, vector<16x4xf32>
    %cst_365 = arith.constant dense<0.000000e+00> : vector<16x1xf32>
    %1003 = tpu.matmul %1002, %537, %cst_365 {dimension_numbers = #tpu.dot_dimension_numbers<[1], [0], [0], [1], [0, 0, 1, 1], [], []>} : vector<16x4xf32>, vector<4x1xf32>, vector<16x1xf32> -> vector<16x1xf32>
    %1004 = vector.extract_strided_slice %0 {offsets = [0, 15], sizes = [16, 1], strides = [1, 1]} : vector<16x16xf32> to vector<16x1xf32>
    %cst_366 = arith.constant 0.000000e+00 : f32
    %1005 = vector.broadcast %cst_366 : f32 to vector<16x1xf32>
    %1006 = arith.cmpf ogt, %1004, %1005 : vector<16x1xf32>
    %cst_367 = arith.constant -1.000000e+30 : f32
    %1007 = vector.broadcast %cst_367 : f32 to vector<16x1xf32>
    %1008 = arith.select %1006, %1003, %1007 : vector<16x1xi1>, vector<16x1xf32>
    %cst_368 = arith.constant dense<0xFF800000> : vector<1xf32>
    %1009 = vector.multi_reduction <maximumf>, %1008, %cst_368 [0] : vector<16x1xf32> to vector<1xf32>
    %1010 = vector.shape_cast %1009 : vector<1xf32> to vector<1x1xf32>
    %1011 = vector.broadcast %1010 : vector<1x1xf32> to vector<16x1xf32>
    %1012 = arith.subf %1008, %1011 : vector<16x1xf32>
    %1013 = math.exp %1012 : vector<16x1xf32>
    %1014 = arith.mulf %1013, %1004 : vector<16x1xf32>
    %cst_369 = arith.constant dense<0.000000e+00> : vector<1xf32>
    %1015 = vector.multi_reduction <add>, %1014, %cst_369 [0] : vector<16x1xf32> to vector<1xf32>
    %1016 = vector.shape_cast %1015 : vector<1xf32> to vector<1x1xf32>
    %1017 = vector.broadcast %1016 : vector<1x1xf32> to vector<16x1xf32>
    %1018 = arith.divf %1014, %1017 : vector<16x1xf32>
    %cst_370 = arith.constant dense<0.000000e+00> : vector<16x4xf32>
    %1019 = tpu.matmul %1018, %538, %cst_370 {dimension_numbers = #tpu.dot_dimension_numbers<[1], [0], [0], [1], [0, 0, 1, 1], [], []>} : vector<16x1xf32>, vector<1x4xf32>, vector<16x4xf32> -> vector<16x4xf32>
    %1020 = arith.mulf %1019, %541 : vector<16x4xf32>
    %cst_371 = arith.constant dense<0.000000e+00> : vector<4xf32>
    %1021 = vector.multi_reduction <add>, %1020, %cst_371 [0] : vector<16x4xf32> to vector<4xf32>
    %1022 = vector.shape_cast %1021 : vector<4xf32> to vector<1x4xf32>
    %1023 = arith.addf %1022, %532 : vector<1x4xf32>
    %c15_372 = arith.constant 15 : index
    %c0_373 = arith.constant 0 : index
    %1024 = vector.load %arg16[%c15_372, %c0_373] : memref<16x4xf32, #tpu.memory_space<vmem>>, vector<1x4xf32>
    tpu.vector_store %arg16[%c15_372, %c0_373], %1023 {strides = array<i32>} : memref<16x4xf32, #tpu.memory_space<vmem>>, vector<1x4xf32>,
    return
  }
}

</mosaic_0001>

<llo_original>
// kernel: tpu_custom_call.1
$region0: #{tpu_custom_call.1}
  #allocation0 [shape = 'u32[]', space=smem, size = 0x4, offset = 0x4, fixed_abs, tag = 'smem constant byte address 0x4 - core index']
  #allocation1 [shape = 'u32[144,128]{1,0:T(1,128)}', space=vmem, size = 0x12000, scoped, tag = 'internal scratch']
  #allocation2 [shape = 'f32[16,64]{1,0:T(8,128)}', space=vmem, size = 0x2000, scoped, tag = 'scratch operand']
  %s0 = inlined_call_operand.vmem [shape: f32[16,16], index: 0, kind: input, shape index: {}]
  %s1 = inlined_call_operand.vmem [shape: f32[16,8], index: 1, kind: input, shape index: {}]
  %s2 = inlined_call_operand.vmem [shape: f32[8,64], index: 2, kind: input, shape index: {}]
  %s3 = inlined_call_operand.vmem [shape: f32[1,64], index: 3, kind: input, shape index: {}]
  %s4 = inlined_call_operand.vmem [shape: f32[8,64], index: 4, kind: input, shape index: {}]
  %s5 = inlined_call_operand.vmem [shape: f32[1,64], index: 5, kind: input, shape index: {}]
  %s6 = inlined_call_operand.vmem [shape: f32[64,8], index: 6, kind: input, shape index: {}]
  %s7 = inlined_call_operand.vmem [shape: f32[8,64], index: 7, kind: input, shape index: {}]
  %s8 = inlined_call_operand.vmem [shape: f32[1,64], index: 8, kind: input, shape index: {}]
  %s9 = inlined_call_operand.vmem [shape: f32[64,4], index: 9, kind: input, shape index: {}]
  %s10 = inlined_call_operand.vmem [shape: f32[1,4], index: 10, kind: input, shape index: {}]
  %s11 = inlined_call_operand.vmem [shape: f32[64,4], index: 11, kind: input, shape index: {}]
  %s12 = inlined_call_operand.vmem [shape: f32[1,4], index: 12, kind: input, shape index: {}]
  %s13 = inlined_call_operand.vmem [shape: f32[4,1], index: 13, kind: input, shape index: {}]
  %s14 = inlined_call_operand.vmem [shape: f32[1,4], index: 14, kind: input, shape index: {}]
  %s15 = inlined_call_operand.vmem [shape: f32[1,4], index: 15, kind: input, shape index: {}]
  %s16 = inlined_call_operand.vmem [shape: f32[16,4], index: 16, kind: output, shape index: {}]
  %s17 = sld [smem:[#allocation0]]
  $region74: #{tpu_custom_call.1} parent=0
    _
  %s19 = ssub.s32 1, %s17
  %s20 = scalar_select 0, %s19, %s17
  // Predicated region
  $region2: #{tpu_custom_call.1} parent=0 // pred_check
    _
  $region3: #{tpu_custom_call.1} parent=0 // pred_check_branch
    %22 = sbr.rel (0) target = $region5
  $region4: #{tpu_custom_call.1} parent=0 // pred_region
    _
  $region5: #{tpu_custom_call.1} parent=0 // pred_fallthru
    _
  // Predicated region
  $region6: #{tpu_custom_call.1} parent=0 // pred_check
    _
  $region7: #{tpu_custom_call.1} parent=0 // pred_check_branch
    %24 = sbr.rel (0) target = $region9
  $region8: #{tpu_custom_call.1} parent=0 // pred_region
    _
  $region9: #{tpu_custom_call.1} parent=0 // pred_fallthru
    _
  // Predicated region
  $region10: #{tpu_custom_call.1} parent=0 // pred_check
    _
  $region11: #{tpu_custom_call.1} parent=0 // pred_check_branch
    %26 = sbr.rel (0) target = $region13
  $region12: #{tpu_custom_call.1} parent=0 // pred_region
    _
  $region13: #{tpu_custom_call.1} parent=0 // pred_fallthru
    _
  // Predicated region
  $region14: #{tpu_custom_call.1} parent=0 // pred_check
    _
  $region15: #{tpu_custom_call.1} parent=0 // pred_check_branch
    %28 = sbr.rel (0) target = $region17
  $region16: #{tpu_custom_call.1} parent=0 // pred_region
    _
  $region17: #{tpu_custom_call.1} parent=0 // pred_fallthru
    _
  // Predicated region
  $region18: #{tpu_custom_call.1} parent=0 // pred_check
    _
  $region19: #{tpu_custom_call.1} parent=0 // pred_check_branch
    %30 = sbr.rel (0) target = $region21
  $region20: #{tpu_custom_call.1} parent=0 // pred_region
    _
  $region21: #{tpu_custom_call.1} parent=0 // pred_fallthru
    _
  // Predicated region
  $region22: #{tpu_custom_call.1} parent=0 // pred_check
    _
  $region23: #{tpu_custom_call.1} parent=0 // pred_check_branch
    %32 = sbr.rel (0) target = $region25
  $region24: #{tpu_custom_call.1} parent=0 // pred_region
    _
  $region25: #{tpu_custom_call.1} parent=0 // pred_fallthru
    _
  // Predicated region
  $region26: #{tpu_custom_call.1} parent=0 // pred_check
    _
  $region27: #{tpu_custom_call.1} parent=0 // pred_check_branch
    %34 = sbr.rel (0) target = $region29
  $region28: #{tpu_custom_call.1} parent=0 // pred_region
    _
  $region29: #{tpu_custom_call.1} parent=0 // pred_fallthru
    _
  // Predicated region
  $region30: #{tpu_custom_call.1} parent=0 // pred_check
    _
  $region31: #{tpu_custom_call.1} parent=0 // pred_check_branch
    %36 = sbr.rel (0) target = $region33
  $region32: #{tpu_custom_call.1} parent=0 // pred_region
    _
  $region33: #{tpu_custom_call.1} parent=0 // pred_fallthru
    _
  // Predicated region
  $region34: #{tpu_custom_call.1} parent=0 // pred_check
    _
  $region35: #{tpu_custom_call.1} parent=0 // pred_check_branch
    %38 = sbr.rel (0) target = $region37
  $region36: #{tpu_custom_call.1} parent=0 // pred_region
    _
  $region37: #{tpu_custom_call.1} parent=0 // pred_fallthru
    _
  // Predicated region
  $region38: #{tpu_custom_call.1} parent=0 // pred_check
    _
  $region39: #{tpu_custom_call.1} parent=0 // pred_check_branch
    %40 = sbr.rel (0) target = $region41
  $region40: #{tpu_custom_call.1} parent=0 // pred_region
    _
  $region41: #{tpu_custom_call.1} parent=0 // pred_fallthru
    _
  // Predicated region
  $region42: #{tpu_custom_call.1} parent=0 // pred_check
    _
  $region43: #{tpu_custom_call.1} parent=0 // pred_check_branch
    %42 = sbr.rel (0) target = $region45
  $region44: #{tpu_custom_call.1} parent=0 // pred_region
    _
  $region45: #{tpu_custom_call.1} parent=0 // pred_fallthru
    _
  // Predicated region
  $region46: #{tpu_custom_call.1} parent=0 // pred_check
    _
  $region47: #{tpu_custom_call.1} parent=0 // pred_check_branch
    %44 = sbr.rel (0) target = $region49
  $region48: #{tpu_custom_call.1} parent=0 // pred_region
    _
  $region49: #{tpu_custom_call.1} parent=0 // pred_fallthru
    _
  // Predicated region
  $region50: #{tpu_custom_call.1} parent=0 // pred_check
    _
  $region51: #{tpu_custom_call.1} parent=0 // pred_check_branch
    %46 = sbr.rel (0) target = $region53
  $region52: #{tpu_custom_call.1} parent=0 // pred_region
    _
  $region53: #{tpu_custom_call.1} parent=0 // pred_fallthru
    _
  // Predicated region
  $region54: #{tpu_custom_call.1} parent=0 // pred_check
    _
  $region55: #{tpu_custom_call.1} parent=0 // pred_check_branch
    %48 = sbr.rel (0) target = $region57
  $region56: #{tpu_custom_call.1} parent=0 // pred_region
    _
  $region57: #{tpu_custom_call.1} parent=0 // pred_fallthru
    _
  // Predicated region
  $region58: #{tpu_custom_call.1} parent=0 // pred_check
    _
  $region59: #{tpu_custom_call.1} parent=0 // pred_check_branch
    %50 = sbr.rel (0) target = $region61
  $region60: #{tpu_custom_call.1} parent=0 // pred_region
    _
  $region61: #{tpu_custom_call.1} parent=0 // pred_fallthru
    _
  // Predicated region
  $region62: #{tpu_custom_call.1} parent=0 // pred_check
    _
  $region63: #{tpu_custom_call.1} parent=0 // pred_check_branch
    %52 = sbr.rel (0) target = $region65
  $region64: #{tpu_custom_call.1} parent=0 // pred_region
    _
  $region65: #{tpu_custom_call.1} parent=0 // pred_fallthru
    _
  %v53 = vld [vmem:[%s0] sm:$0xff]
  %v54 = vld [vmem:[%s0 + $0x8] sm:$0xff]
  %v55 = vld [vmem:[%s1] sm:$0xff]
  %v56 = vld [vmem:[%s1 + $0x8] sm:$0xff]
  %v57 = vld [vmem:[%s2] sm:$0xff]
  %v58 = vld [vmem:[%s3] sm:$0x1]
  %v59 = vld [vmem:[%s4] sm:$0xff]
  %v60 = vld [vmem:[%s5] sm:$0x1]
  %v61 = vld [vmem:[%s6] sm:$0xff]
  %v62 = vld [vmem:[%s6 + $0x8] sm:$0xff]
  %v63 = vld [vmem:[%s6 + $0x10] sm:$0xff]
  %v64 = vld [vmem:[%s6 + $0x18] sm:$0xff]
  %v65 = vld [vmem:[%s6 + $0x20] sm:$0xff]
  %v66 = vld [vmem:[%s6 + $0x28] sm:$0xff]
  %v67 = vld [vmem:[%s6 + $0x30] sm:$0xff]
  %v68 = vld [vmem:[%s6 + $0x38] sm:$0xff]
  %v69 = vld [vmem:[%s7] sm:$0xff]
  %v71 = vlaneseq
  %v72 = vshrl.u32 %v71, 7
  %v73 = vsub.s32 0, %v72
  %v74 = vrot.slane %v58, %v73
  %vm76 = vcmask 64512
  %v78 = vsel %vm76, %v55, 0
  %v81 = vsel %vm76, %v56, 0
  %83 = vmatprep.subr.mxu0 0.0
  %84 = vmatpush1.msra.mxu0 %v57
  %85 = vmatprep.subr.mxu0 0.0
  %86 = vmatpush1.msra.mxu0 0.0
  %87 = vmatprep.subr.mxu0 0.0
  %88 = vmatpush1.msra.mxu0 0.0
  %89 = vmatprep.subr.mxu0 0.0
  %90 = vmatpush1.msra.mxu0 0.0
  %91 = vmatprep.subr.mxu0 0.0
  %92 = vmatpush1.msra.mxu0 0.0
  %93 = vmatprep.subr.mxu0 0.0
  %94 = vmatpush1.msra.mxu0 0.0
  %95 = vmatprep.subr.mxu0 0.0
  %96 = vmatpush1.msra.mxu0 0.0
  %97 = vmatprep.subr.mxu0 0.0
  %98 = vmatpush1.msra.mxu0 0.0
  %99 = vmatprep.subr.mxu0 0.0
  %100 = vmatpush1.msra.mxu0 0.0
  %101 = vmatprep.subr.mxu0 0.0
  %102 = vmatpush1.msra.mxu0 0.0
  %103 = vmatprep.subr.mxu0 0.0
  %104 = vmatpush1.msra.mxu0 0.0
  %105 = vmatprep.subr.mxu0 0.0
  %106 = vmatpush1.msra.mxu0 0.0
  %107 = vmatprep.subr.mxu0 0.0
  %108 = vmatpush1.msra.mxu0 0.0
  %109 = vmatprep.subr.mxu0 0.0
  %110 = vmatpush1.msra.mxu0 0.0
  %111 = vmatprep.subr.mxu0 0.0
  %112 = vmatpush1.msra.mxu0 0.0
  %113 = vmatprep.subr.mxu0 0.0
  %114 = vmatpush1.msra.mxu0 0.0
  %115 = vmatprep.subr.mxu0 0.0
  %116 = vmatpush1.msra.mxu0 0.0
  %117 = vmatprep.subr.mxu0 0.0
  %118 = vmatpush1.msra.mxu0 0.0
  %119 = vmatprep.subr.mxu0 0.0
  %120 = vmatpush1.msra.mxu0 0.0
  %121 = vmatprep.subr.mxu0 0.0
  %122 = vmatpush1.msra.mxu0 0.0
  %123 = vmatprep.subr.mxu0 0.0
  %124 = vmatpush1.msra.mxu0 0.0
  %125 = vmatprep.subr.mxu0 0.0
  %126 = vmatpush1.msra.mxu0 0.0
  %127 = vmatprep.subr.mxu0 0.0
  %128 = vmatpush1.msra.mxu0 0.0
  %129 = vmatprep.subr.mxu0 0.0
  %130 = vmatpush1.msra.mxu0 0.0
  %131 = vmatprep.subr.mxu0 0.0
  %132 = vmatpush1.msra.mxu0 0.0
  %133 = vmatprep.subr.mxu0 0.0
  %134 = vmatpush1.msra.mxu0 0.0
  %135 = vmatprep.subr.mxu0 0.0
  %136 = vmatpush1.msra.mxu0 0.0
  %137 = vmatprep.subr.mxu0 0.0
  %138 = vmatpush1.msra.mxu0 0.0
  %139 = vmatprep.subr.mxu0 0.0
  %140 = vmatpush1.msra.mxu0 0.0
  %141 = vmatprep.subr.mxu0 0.0
  %142 = vmatpush1.msra.mxu0 0.0
  %143 = vmatprep.subr.mxu0 0.0
  %144 = vmatpush1.msra.mxu0 0.0
  %145 = vmatprep.subr.mxu0 0.0
  %146 = vmatpush1.msra.mxu0 0.0
  %147 = vmatprep.mubr.f32.mxu0 0.0
  %148 = vmatmul.mubr.f32.gmra.mrb[0].mxu0 %v78
  %v149 = vpop.f32.mrb[0].mxu0
  %v150 = vadd.f32 %v74, %v149
  %v151 = vpop.f32.mrb[0].mxu0
  %152 = vmatprep.mubr.f32.mxu0 0.0
  %153 = vmatmul.mubr.f32.gmra.mrb[0].mxu0 %v81
  %v154 = vpop.f32.mrb[0].mxu0
  %v155 = vadd.f32 %v74, %v154
  %v156 = vpop.f32.mrb[0].mxu0
  %157 = vdwg.mxu0
  %v159 = vlaneseq
  %v160 = vshrl.u32 %v159, 7
  %v161 = vsub.s32 0, %v160
  %v162 = vrot.slane %v60, %v161
  %164 = vmatprep.subr.mxu0 0.0
  %165 = vmatpush1.msra.mxu0 %v59
  %166 = vmatprep.subr.mxu0 0.0
  %167 = vmatpush1.msra.mxu0 0.0
  %168 = vmatprep.subr.mxu0 0.0
  %169 = vmatpush1.msra.mxu0 0.0
  %170 = vmatprep.subr.mxu0 0.0
  %171 = vmatpush1.msra.mxu0 0.0
  %172 = vmatprep.subr.mxu0 0.0
  %173 = vmatpush1.msra.mxu0 0.0
  %174 = vmatprep.subr.mxu0 0.0
  %175 = vmatpush1.msra.mxu0 0.0
  %176 = vmatprep.subr.mxu0 0.0
  %177 = vmatpush1.msra.mxu0 0.0
  %178 = vmatprep.subr.mxu0 0.0
  %179 = vmatpush1.msra.mxu0 0.0
  %180 = vmatprep.subr.mxu0 0.0
  %181 = vmatpush1.msra.mxu0 0.0
  %182 = vmatprep.subr.mxu0 0.0
  %183 = vmatpush1.msra.mxu0 0.0
  %184 = vmatprep.subr.mxu0 0.0
  %185 = vmatpush1.msra.mxu0 0.0
  %186 = vmatprep.subr.mxu0 0.0
  %187 = vmatpush1.msra.mxu0 0.0
  %188 = vmatprep.subr.mxu0 0.0
  %189 = vmatpush1.msra.mxu0 0.0
  %190 = vmatprep.subr.mxu0 0.0
  %191 = vmatpush1.msra.mxu0 0.0
  %192 = vmatprep.subr.mxu0 0.0
  %193 = vmatpush1.msra.mxu0 0.0
  %194 = vmatprep.subr.mxu0 0.0
  %195 = vmatpush1.msra.mxu0 0.0
  %196 = vmatprep.subr.mxu0 0.0
  %197 = vmatpush1.msra.mxu0 0.0
  %198 = vmatprep.subr.mxu0 0.0
  %199 = vmatpush1.msra.mxu0 0.0
  %200 = vmatprep.subr.mxu0 0.0
  %201 = vmatpush1.msra.mxu0 0.0
  %202 = vmatprep.subr.mxu0 0.0
  %203 = vmatpush1.msra.mxu0 0.0
  %204 = vmatprep.subr.mxu0 0.0
  %205 = vmatpush1.msra.mxu0 0.0
  %206 = vmatprep.subr.mxu0 0.0
  %207 = vmatpush1.msra.mxu0 0.0
  %208 = vmatprep.subr.mxu0 0.0
  %209 = vmatpush1.msra.mxu0 0.0
  %210 = vmatprep.subr.mxu0 0.0
  %211 = vmatpush1.msra.mxu0 0.0
  %212 = vmatprep.subr.mxu0 0.0
  %213 = vmatpush1.msra.mxu0 0.0
  %214 = vmatprep.subr.mxu0 0.0
  %215 = vmatpush1.msra.mxu0 0.0
  %216 = vmatprep.subr.mxu0 0.0
  %217 = vmatpush1.msra.mxu0 0.0
  %218 = vmatprep.subr.mxu0 0.0
  %219 = vmatpush1.msra.mxu0 0.0
  %220 = vmatprep.subr.mxu0 0.0
  %221 = vmatpush1.msra.mxu0 0.0
  %222 = vmatprep.subr.mxu0 0.0
  %223 = vmatpush1.msra.mxu0 0.0
  %224 = vmatprep.subr.mxu0 0.0
  %225 = vmatpush1.msra.mxu0 0.0
  %226 = vmatprep.subr.mxu0 0.0
  %227 = vmatpush1.msra.mxu0 0.0
  %228 = vmatprep.mubr.f32.mxu0 0.0
  %229 = vmatmul.mubr.f32.gmra.mrb[0].mxu0 %v78
  %v230 = vpop.f32.mrb[0].mxu0
  %v231 = vadd.f32 %v162, %v230
  %v232 = vpop.f32.mrb[0].mxu0
  %233 = vmatprep.mubr.f32.mxu0 0.0
  %234 = vmatmul.mubr.f32.gmra.mrb[0].mxu0 %v81
  %v235 = vpop.f32.mrb[0].mxu0
  %v236 = vadd.f32 %v162, %v235
  %v237 = vpop.f32.mrb[0].mxu0
  %238 = vdwg.mxu0
  %v239 = vlaneseq
  %v240 = vshrl.u32 %v239, 7
  %v241 = vsub.s32 0, %v240
  %v242 = vrot.slane %v231, %v241
  %v243 = vadd.f32 %v242, %v150
  %v244 = vadd.f32 %v242, %v155
  %vm245 = vcmp.ge.f32.partialorder %v243, 0.0
  %vm246 = vcmp.ge.f32.partialorder %v244, 0.0
  %v247 = vmul.f32 %v243, 0.2
  %v248 = vmul.f32 %v244, 0.2
  %v249 = vsel %vm245, %v243, %v247
  %v250 = vsel %vm246, %v244, %v248
  %vm251 = vcmask 523264
  %v253 = vsel %vm251, %v249, 0
  %v256 = vsel %vm251, %v250, 0
  %258 = vmatprep.subr.mxu0 0.0
  %259 = vmatpush1.msra.mxu0 %v61
  %260 = vmatprep.subr.mxu0 0.0
  %261 = vmatpush1.msra.mxu0 %v62
  %262 = vmatprep.subr.mxu0 0.0
  %263 = vmatpush1.msra.mxu0 %v63
  %264 = vmatprep.subr.mxu0 0.0
  %265 = vmatpush1.msra.mxu0 %v64
  %266 = vmatprep.subr.mxu0 0.0
  %267 = vmatpush1.msra.mxu0 %v65
  %268 = vmatprep.subr.mxu0 0.0
  %269 = vmatpush1.msra.mxu0 %v66
  %270 = vmatprep.subr.mxu0 0.0
  %271 = vmatpush1.msra.mxu0 %v67
  %272 = vmatprep.subr.mxu0 0.0
  %273 = vmatpush1.msra.mxu0 %v68
  %274 = vmatprep.subr.mxu0 0.0
  %275 = vmatpush1.msra.mxu0 0.0
  %276 = vmatprep.subr.mxu0 0.0
  %277 = vmatpush1.msra.mxu0 0.0
  %278 = vmatprep.subr.mxu0 0.0
  %279 = vmatpush1.msra.mxu0 0.0
  %280 = vmatprep.subr.mxu0 0.0
  %281 = vmatpush1.msra.mxu0 0.0
  %282 = vmatprep.subr.mxu0 0.0
  %283 = vmatpush1.msra.mxu0 0.0
  %284 = vmatprep.subr.mxu0 0.0
  %285 = vmatpush1.msra.mxu0 0.0
  %286 = vmatprep.subr.mxu0 0.0
  %287 = vmatpush1.msra.mxu0 0.0
  %288 = vmatprep.subr.mxu0 0.0
  %289 = vmatpush1.msra.mxu0 0.0
  %290 = vmatprep.subr.mxu0 0.0
  %291 = vmatpush1.msra.mxu0 0.0
  %292 = vmatprep.subr.mxu0 0.0
  %293 = vmatpush1.msra.mxu0 0.0
  %294 = vmatprep.subr.mxu0 0.0
  %295 = vmatpush1.msra.mxu0 0.0
  %296 = vmatprep.subr.mxu0 0.0
  %297 = vmatpush1.msra.mxu0 0.0
  %298 = vmatprep.subr.mxu0 0.0
  %299 = vmatpush1.msra.mxu0 0.0
  %300 = vmatprep.subr.mxu0 0.0
  %301 = vmatpush1.msra.mxu0 0.0
  %302 = vmatprep.subr.mxu0 0.0
  %303 = vmatpush1.msra.mxu0 0.0
  %304 = vmatprep.subr.mxu0 0.0
  %305 = vmatpush1.msra.mxu0 0.0
  %306 = vmatprep.subr.mxu0 0.0
  %307 = vmatpush1.msra.mxu0 0.0
  %308 = vmatprep.subr.mxu0 0.0
  %309 = vmatpush1.msra.mxu0 0.0
  %310 = vmatprep.subr.mxu0 0.0
  %311 = vmatpush1.msra.mxu0 0.0
  %312 = vmatprep.subr.mxu0 0.0
  %313 = vmatpush1.msra.mxu0 0.0
  %314 = vmatprep.subr.mxu0 0.0
  %315 = vmatpush1.msra.mxu0 0.0
  %316 = vmatprep.subr.mxu0 0.0
  %317 = vmatpush1.msra.mxu0 0.0
  %318 = vmatprep.subr.mxu0 0.0
  %319 = vmatpush1.msra.mxu0 0.0
  %320 = vmatprep.subr.mxu0 0.0
  %321 = vmatpush1.msra.mxu0 0.0
  %322 = vmatprep.mubr.f32.mxu0 0.0
  %323 = vmatmul.mubr.f32.gmra.mrb[0].mxu0 %v253
  %v324 = vpop.f32.mrb[0].mxu0
  %v325 = vadd.f32 0.0, %v324
  %v326 = vpop.f32.mrb[0].mxu0
  %327 = vmatprep.mubr.f32.mxu0 0.0
  %328 = vmatmul.mubr.f32.gmra.mrb[0].mxu0 %v256
  %v329 = vpop.f32.mrb[0].mxu0
  %v330 = vadd.f32 0.0, %v329
  %v331 = vpop.f32.mrb[0].mxu0
  %332 = vdwg.mxu0
  %vm333 = vcmp.gt.f32.partialorder %v53, 0.0
  %vm334 = vcmp.gt.f32.partialorder %v54, 0.0
  %v335 = vsel %vm333, 1, 0
  %v336 = vsel %vm334, 1, 0
  %337 = vset.pattern.permute.xlu0 0
  %338 = vperm.xlu0 %337, %v335
  %v339 = vpop.permute.xlu0 %338
  %340 = vset.pattern.permute.xlu0 0
  %341 = vperm.xlu0 %340, %v336
  %v342 = vpop.permute.xlu0 %341
  %vm343 = vcmp.eq.s32.totalorder %v339, 1
  %vm344 = vcmp.eq.s32.totalorder %v342, 1
  %v345 = vsel %vm343, %v325, -1e+30
  %v346 = vsel %vm344, %v330, -1e+30
  %v347 = vsel %vm76, %v345, -inf
  %v348 = vsel %vm76, %v346, -inf
  %v349 = vmax.f32 %v347, %v348
  %v350 = vrot.slane %v349, 4
  %v351 = vmax.f32 %v349, %v350
  %v352 = vrot.slane %v351, 2
  %v353 = vmax.f32 %v351, %v352
  %v354 = vrot.slane %v353, 1
  %v355 = vmax.f32 %v353, %v354
  %v356 = vsub.f32 %v345, %v355
  %v357 = vsub.f32 %v346, %v355
  %v358 = vmul.f32 %v356, 1.442695
  %v359 = vpow.pop %v358
  %v360 = vmul.f32 %v357, 1.442695
  %v361 = vpow.pop %v360
  %363 = vset.pattern.permute.xlu0 0
  %364 = vperm.xlu0 %363, %v53
  %v365 = vpop.permute.xlu0 %364
  %368 = vset.pattern.permute.xlu0 0
  %369 = vperm.xlu0 %368, %v54
  %v370 = vpop.permute.xlu0 %369
  %v372 = vmul.f32 %v359, %v365
  %v373 = vmul.f32 %v361, %v370
  %v374 = vsel %vm76, %v372, 0.0
  %v375 = vsel %vm76, %v373, 0.0
  %v376 = vadd.f32 %v374, %v375
  %v377 = vrot.slane %v376, 4
  %v378 = vadd.f32 %v376, %v377
  %v379 = vrot.slane %v378, 2
  %v380 = vadd.f32 %v378, %v379
  %v381 = vrot.slane %v380, 1
  %v382 = vadd.f32 %v380, %v381
  %v383 = vrcp.pop %v382
  %v384 = vmul.f32 %v372, %v383
  %v385 = vmul.f32 %v373, %v383
  %v387 = vsel %vm76, %v384, 0
  %v390 = vsel %vm76, %v385, 0
  %392 = vmatprep.subr.mxu0 0.0
  %393 = vmatpush1.msra.mxu0 %v69
  %394 = vmatprep.subr.mxu0 0.0
  %395 = vmatpush1.msra.mxu0 0.0
  %396 = vmatprep.subr.mxu0 0.0
  %397 = vmatpush1.msra.mxu0 0.0
  %398 = vmatprep.subr.mxu0 0.0
  %399 = vmatpush1.msra.mxu0 0.0
  %400 = vmatprep.subr.mxu0 0.0
  %401 = vmatpush1.msra.mxu0 0.0
  %402 = vmatprep.subr.mxu0 0.0
  %403 = vmatpush1.msra.mxu0 0.0
  %404 = vmatprep.subr.mxu0 0.0
  %405 = vmatpush1.msra.mxu0 0.0
  %406 = vmatprep.subr.mxu0 0.0
  %407 = vmatpush1.msra.mxu0 0.0
  %408 = vmatprep.subr.mxu0 0.0
  %409 = vmatpush1.msra.mxu0 0.0
  %410 = vmatprep.subr.mxu0 0.0
  %411 = vmatpush1.msra.mxu0 0.0
  %412 = vmatprep.subr.mxu0 0.0
  %413 = vmatpush1.msra.mxu0 0.0
  %414 = vmatprep.subr.mxu0 0.0
  %415 = vmatpush1.msra.mxu0 0.0
  %416 = vmatprep.subr.mxu0 0.0
  %417 = vmatpush1.msra.mxu0 0.0
  %418 = vmatprep.subr.mxu0 0.0
  %419 = vmatpush1.msra.mxu0 0.0
  %420 = vmatprep.subr.mxu0 0.0
  %421 = vmatpush1.msra.mxu0 0.0
  %422 = vmatprep.subr.mxu0 0.0
  %423 = vmatpush1.msra.mxu0 0.0
  %424 = vmatprep.subr.mxu0 0.0
  %425 = vmatpush1.msra.mxu0 0.0
  %426 = vmatprep.subr.mxu0 0.0
  %427 = vmatpush1.msra.mxu0 0.0
  %428 = vmatprep.subr.mxu0 0.0
  %429 = vmatpush1.msra.mxu0 0.0
  %430 = vmatprep.subr.mxu0 0.0
  %431 = vmatpush1.msra.mxu0 0.0
  %432 = vmatprep.subr.mxu0 0.0
  %433 = vmatpush1.msra.mxu0 0.0
  %434 = vmatprep.subr.mxu0 0.0
  %435 = vmatpush1.msra.mxu0 0.0
  %436 = vmatprep.subr.mxu0 0.0
  %437 = vmatpush1.msra.mxu0 0.0
  %438 = vmatprep.subr.mxu0 0.0
  %439 = vmatpush1.msra.mxu0 0.0
  %440 = vmatprep.subr.mxu0 0.0
  %441 = vmatpush1.msra.mxu0 0.0
  %442 = vmatprep.subr.mxu0 0.0
  %443 = vmatpush1.msra.mxu0 0.0
  %444 = vmatprep.subr.mxu0 0.0
  %445 = vmatpush1.msra.mxu0 0.0
  %446 = vmatprep.subr.mxu0 0.0
  %447 = vmatpush1.msra.mxu0 0.0
  %448 = vmatprep.subr.mxu0 0.0
  %449 = vmatpush1.msra.mxu0 0.0
  %450 = vmatprep.subr.mxu0 0.0
  %451 = vmatpush1.msra.mxu0 0.0
  %452 = vmatprep.subr.mxu0 0.0
  %453 = vmatpush1.msra.mxu0 0.0
  %454 = vmatprep.subr.mxu0 0.0
  %455 = vmatpush1.msra.mxu0 0.0
  %456 = vmatprep.mubr.f32.mxu0 0.0
  %457 = vmatmul.mubr.f32.gmra.mrb[0].mxu0 %v387
  %v458 = vpop.f32.mrb[0].mxu0
  %v459 = vadd.f32 0.0, %v458
  %v460 = vpop.f32.mrb[0].mxu0
  %461 = vmatprep.mubr.f32.mxu0 0.0
  %462 = vmatmul.mubr.f32.gmra.mrb[0].mxu0 %v390
  %v463 = vpop.f32.mrb[0].mxu0
  %v464 = vadd.f32 0.0, %v463
  %v465 = vpop.f32.mrb[0].mxu0
  %466 = vdwg.mxu0
  %v467 = vmul.f32 %v459, %v150
  %v468 = vmul.f32 %v464, %v155
  %v469 = vsel %vm251, %v467, 0.0
  %v470 = vsel %vm251, %v468, 0.0
  %v471 = vadd.f32 %v469, %v470
  %v472 = vrot.slane %v471, 4
  %v473 = vadd.f32 %v471, %v472
  %v474 = vrot.slane %v473, 2
  %v475 = vadd.f32 %v473, %v474
  %v476 = vrot.slane %v475, 1
  %v477 = vadd.f32 %v475, %v476
  %vm478 = vcmask 516096
  %479 = vst.msk [vmem:[#allocation2] sm:$0x1] %vm478, %v477
  %v480 = vlaneseq
  %v481 = vshrl.u32 %v480, 7
  %v482 = vsub.s32 1, %v481
  %v483 = vrot.slane %v231, %v482
  %v484 = vadd.f32 %v483, %v150
  %v485 = vadd.f32 %v483, %v155
  %vm486 = vcmp.ge.f32.partialorder %v484, 0.0
  %vm487 = vcmp.ge.f32.partialorder %v485, 0.0
  %v488 = vmul.f32 %v484, 0.2
  %v489 = vmul.f32 %v485, 0.2
  %v490 = vsel %vm486, %v484, %v488
  %v491 = vsel %vm487, %v485, %v489
  %v493 = vsel %vm251, %v490, 0
  %v496 = vsel %vm251, %v491, 0
  %498 = vmatprep.subr.mxu0 0.0
  %499 = vmatpush1.msra.mxu0 %v61
  %500 = vmatprep.subr.mxu0 0.0
  %501 = vmatpush1.msra.mxu0 %v62
  %502 = vmatprep.subr.mxu0 0.0
  %503 = vmatpush1.msra.mxu0 %v63
  %504 = vmatprep.subr.mxu0 0.0
  %505 = vmatpush1.msra.mxu0 %v64
  %506 = vmatprep.subr.mxu0 0.0
  %507 = vmatpush1.msra.mxu0 %v65
  %508 = vmatprep.subr.mxu0 0.0
  %509 = vmatpush1.msra.mxu0 %v66
  %510 = vmatprep.subr.mxu0 0.0
  %511 = vmatpush1.msra.mxu0 %v67
  %512 = vmatprep.subr.mxu0 0.0
  %513 = vmatpush1.msra.mxu0 %v68
  %514 = vmatprep.subr.mxu0 0.0
  %515 = vmatpush1.msra.mxu0 0.0
  %516 = vmatprep.subr.mxu0 0.0
  %517 = vmatpush1.msra.mxu0 0.0
  %518 = vmatprep.subr.mxu0 0.0
  %519 = vmatpush1.msra.mxu0 0.0
  %520 = vmatprep.subr.mxu0 0.0
  %521 = vmatpush1.msra.mxu0 0.0
  %522 = vmatprep.subr.mxu0 0.0
  %523 = vmatpush1.msra.mxu0 0.0
  %524 = vmatprep.subr.mxu0 0.0
  %525 = vmatpush1.msra.mxu0 0.0
  %526 = vmatprep.subr.mxu0 0.0
  %527 = vmatpush1.msra.mxu0 0.0
  %528 = vmatprep.subr.mxu0 0.0
  %529 = vmatpush1.msra.mxu0 0.0
  %530 = vmatprep.subr.mxu0 0.0
  %531 = vmatpush1.msra.mxu0 0.0
  %532 = vmatprep.subr.mxu0 0.0
  %533 = vmatpush1.msra.mxu0 0.0
  %534 = vmatprep.subr.mxu0 0.0
  %535 = vmatpush1.msra.mxu0 0.0
  %536 = vmatprep.subr.mxu0 0.0
  %537 = vmatpush1.msra.mxu0 0.0
  %538 = vmatprep.subr.mxu0 0.0
  %539 = vmatpush1.msra.mxu0 0.0
  %540 = vmatprep.subr.mxu0 0.0
  %541 = vmatpush1.msra.mxu0 0.0
  %542 = vmatprep.subr.mxu0 0.0
  %543 = vmatpush1.msra.mxu0 0.0
  %544 = vmatprep.subr.mxu0 0.0
  %545 = vmatpush1.msra.mxu0 0.0
  %546 = vmatprep.subr.mxu0 0.0
  %547 = vmatpush1.msra.mxu0 0.0
  %548 = vmatprep.subr.mxu0 0.0
  %549 = vmatpush1.msra.mxu0 0.0
  %550 = vmatprep.subr.mxu0 0.0
  %551 = vmatpush1.msra.mxu0 0.0
  %552 = vmatprep.subr.mxu0 0.0
  %553 = vmatpush1.msra.mxu0 0.0
  %554 = vmatprep.subr.mxu0 0.0
  %555 = vmatpush1.msra.mxu0 0.0
  %556 = vmatprep.subr.mxu0 0.0
  %557 = vmatpush1.msra.mxu0 0.0
  %558 = vmatprep.subr.mxu0 0.0
  %559 = vmatpush1.msra.mxu0 0.0
  %560 = vmatprep.subr.mxu0 0.0
  %561 = vmatpush1.msra.mxu0 0.0
  %562 = vmatprep.mubr.f32.mxu0 0.0
  %563 = vmatmul.mubr.f32.gmra.mrb[0].mxu0 %v493
  %v564 = vpop.f32.mrb[0].mxu0
  %v565 = vadd.f32 0.0, %v564
  %v566 = vpop.f32.mrb[0].mxu0
  %567 = vmatprep.mubr.f32.mxu0 0.0
  %568 = vmatmul.mubr.f32.gmra.mrb[0].mxu0 %v496
  %v569 = vpop.f32.mrb[0].mxu0
  %v570 = vadd.f32 0.0, %v569
  %v571 = vpop.f32.mrb[0].mxu0
  %572 = vdwg.mxu0
  %573 = vset.pattern.permute.xlu0 1
  %574 = vperm.xlu0 %573, %v335
  %v575 = vpop.permute.xlu0 %574
  %576 = vset.pattern.permute.xlu0 1
  %577 = vperm.xlu0 %576, %v336
  %v578 = vpop.permute.xlu0 %577
  %vm579 = vcmp.eq.s32.totalorder %v575, 1
  %vm580 = vcmp.eq.s32.totalorder %v578, 1
  %v581 = vsel %vm579, %v565, -1e+30
  %v582 = vsel %vm580, %v570, -1e+30
  %v583 = vsel %vm76, %v581, -inf
  %v584 = vsel %vm76, %v582, -inf
  %v585 = vmax.f32 %v583, %v584
  %v586 = vrot.slane %v585, 4
  %v587 = vmax.f32 %v585, %v586
  %v588 = vrot.slane %v587, 2
  %v589 = vmax.f32 %v587, %v588
  %v590 = vrot.slane %v589, 1
  %v591 = vmax.f32 %v589, %v590
  %v592 = vsub.f32 %v581, %v591
  %v593 = vsub.f32 %v582, %v591
  %v594 = vmul.f32 %v592, 1.442695
  %v595 = vpow.pop %v594
  %v596 = vmul.f32 %v593, 1.442695
  %v597 = vpow.pop %v596
  %598 = vset.pattern.permute.xlu0 1
  %599 = vperm.xlu0 %598, %v53
  %v600 = vpop.permute.xlu0 %599
  %602 = vset.pattern.permute.xlu0 1
  %603 = vperm.xlu0 %602, %v54
  %v604 = vpop.permute.xlu0 %603
  %v606 = vmul.f32 %v595, %v600
  %v607 = vmul.f32 %v597, %v604
  %v608 = vsel %vm76, %v606, 0.0
  %v609 = vsel %vm76, %v607, 0.0
  %v610 = vadd.f32 %v608, %v609
  %v611 = vrot.slane %v610, 4
  %v612 = vadd.f32 %v610, %v611
  %v613 = vrot.slane %v612, 2
  %v614 = vadd.f32 %v612, %v613
  %v615 = vrot.slane %v614, 1
  %v616 = vadd.f32 %v614, %v615
  %v617 = vrcp.pop %v616
  %v618 = vmul.f32 %v606, %v617
  %v619 = vmul.f32 %v607, %v617
  %v621 = vsel %vm76, %v618, 0
  %v624 = vsel %vm76, %v619, 0
  %626 = vmatprep.subr.mxu0 0.0
  %627 = vmatpush1.msra.mxu0 %v69
  %628 = vmatprep.subr.mxu0 0.0
  %629 = vmatpush1.msra.mxu0 0.0
  %630 = vmatprep.subr.mxu0 0.0
  %631 = vmatpush1.msra.mxu0 0.0
  %632 = vmatprep.subr.mxu0 0.0
  %633 = vmatpush1.msra.mxu0 0.0
  %634 = vmatprep.subr.mxu0 0.0
  %635 = vmatpush1.msra.mxu0 0.0
  %636 = vmatprep.subr.mxu0 0.0
  %637 = vmatpush1.msra.mxu0 0.0
  %638 = vmatprep.subr.mxu0 0.0
  %639 = vmatpush1.msra.mxu0 0.0
  %640 = vmatprep.subr.mxu0 0.0
  %641 = vmatpush1.msra.mxu0 0.0
  %642 = vmatprep.subr.mxu0 0.0
  %643 = vmatpush1.msra.mxu0 0.0
  %644 = vmatprep.subr.mxu0 0.0
  %645 = vmatpush1.msra.mxu0 0.0
  %646 = vmatprep.subr.mxu0 0.0
  %647 = vmatpush1.msra.mxu0 0.0
  %648 = vmatprep.subr.mxu0 0.0
  %649 = vmatpush1.msra.mxu0 0.0
  %650 = vmatprep.subr.mxu0 0.0
  %651 = vmatpush1.msra.mxu0 0.0
  %652 = vmatprep.subr.mxu0 0.0
  %653 = vmatpush1.msra.mxu0 0.0
  %654 = vmatprep.subr.mxu0 0.0
  %655 = vmatpush1.msra.mxu0 0.0
  %656 = vmatprep.subr.mxu0 0.0
  %657 = vmatpush1.msra.mxu0 0.0
  %658 = vmatprep.subr.mxu0 0.0
  %659 = vmatpush1.msra.mxu0 0.0
  %660 = vmatprep.subr.mxu0 0.0
  %661 = vmatpush1.msra.mxu0 0.0
  %662 = vmatprep.subr.mxu0 0.0
  %663 = vmatpush1.msra.mxu0 0.0
  %664 = vmatprep.subr.mxu0 0.0
  %665 = vmatpush1.msra.mxu0 0.0
  %666 = vmatprep.subr.mxu0 0.0
  %667 = vmatpush1.msra.mxu0 0.0
  %668 = vmatprep.subr.mxu0 0.0
  %669 = vmatpush1.msra.mxu0 0.0
  %670 = vmatprep.subr.mxu0 0.0
  %671 = vmatpush1.msra.mxu0 0.0
  %672 = vmatprep.subr.mxu0 0.0
  %673 = vmatpush1.msra.mxu0 0.0
  %674 = vmatprep.subr.mxu0 0.0
  %675 = vmatpush1.msra.mxu0 0.0
  %676 = vmatprep.subr.mxu0 0.0
  %677 = vmatpush1.msra.mxu0 0.0
  %678 = vmatprep.subr.mxu0 0.0
  %679 = vmatpush1.msra.mxu0 0.0
  %680 = vmatprep.subr.mxu0 0.0
  %681 = vmatpush1.msra.mxu0 0.0
  %682 = vmatprep.subr.mxu0 0.0
  %683 = vmatpush1.msra.mxu0 0.0
  %684 = vmatprep.subr.mxu0 0.0
  %685 = vmatpush1.msra.mxu0 0.0
  %686 = vmatprep.subr.mxu0 0.0
  %687 = vmatpush1.msra.mxu0 0.0
  %688 = vmatprep.subr.mxu0 0.0
  %689 = vmatpush1.msra.mxu0 0.0
  %690 = vmatprep.mubr.f32.mxu0 0.0
  %691 = vmatmul.mubr.f32.gmra.mrb[0].mxu0 %v621
  %v692 = vpop.f32.mrb[0].mxu0
  %v693 = vadd.f32 0.0, %v692
  %v694 = vpop.f32.mrb[0].mxu0
  %695 = vmatprep.mubr.f32.mxu0 0.0
  %696 = vmatmul.mubr.f32.gmra.mrb[0].mxu0 %v624
  %v697 = vpop.f32.mrb[0].mxu0
  %v698 = vadd.f32 0.0, %v697
  %v699 = vpop.f32.mrb[0].mxu0
  %700 = vdwg.mxu0
  %v701 = vmul.f32 %v693, %v150
  %v702 = vmul.f32 %v698, %v155
  %v703 = vsel %vm251, %v701, 0.0
  %v704 = vsel %vm251, %v702, 0.0
  %v705 = vadd.f32 %v703, %v704
  %v706 = vrot.slane %v705, 4
  %v707 = vadd.f32 %v705, %v706
  %v708 = vrot.slane %v707, 2
  %v709 = vadd.f32 %v707, %v708
  %v710 = vrot.slane %v709, 1
  %v711 = vadd.f32 %v709, %v710
  %712 = vst.msk [vmem:[#allocation2 + $0x1] sm:$0x1] %vm478, %v711
  %v713 = vlaneseq
  %v714 = vshrl.u32 %v713, 7
  %v715 = vsub.s32 2, %v714
  %v716 = vrot.slane %v231, %v715
  %v717 = vadd.f32 %v716, %v150
  %v718 = vadd.f32 %v716, %v155
  %vm719 = vcmp.ge.f32.partialorder %v717, 0.0
  %vm720 = vcmp.ge.f32.partialorder %v718, 0.0
  %v721 = vmul.f32 %v717, 0.2
  %v722 = vmul.f32 %v718, 0.2
  %v723 = vsel %vm719, %v717, %v721
  %v724 = vsel %vm720, %v718, %v722
  %v726 = vsel %vm251, %v723, 0
  %v729 = vsel %vm251, %v724, 0
  %731 = vmatprep.subr.mxu0 0.0
  %732 = vmatpush1.msra.mxu0 %v61
  %733 = vmatprep.subr.mxu0 0.0
  %734 = vmatpush1.msra.mxu0 %v62
  %735 = vmatprep.subr.mxu0 0.0
  %736 = vmatpush1.msra.mxu0 %v63
  %737 = vmatprep.subr.mxu0 0.0
  %738 = vmatpush1.msra.mxu0 %v64
  %739 = vmatprep.subr.mxu0 0.0
  %740 = vmatpush1.msra.mxu0 %v65
  %741 = vmatprep.subr.mxu0 0.0
  %742 = vmatpush1.msra.mxu0 %v66
  %743 = vmatprep.subr.mxu0 0.0
  %744 = vmatpush1.msra.mxu0 %v67
  %745 = vmatprep.subr.mxu0 0.0
  %746 = vmatpush1.msra.mxu0 %v68
  %747 = vmatprep.subr.mxu0 0.0
  %748 = vmatpush1.msra.mxu0 0.0
  %749 = vmatprep.subr.mxu0 0.0
  %750 = vmatpush1.msra.mxu0 0.0
  %751 = vmatprep.subr.mxu0 0.0
  %752 = vmatpush1.msra.mxu0 0.0
  %753 = vmatprep.subr.mxu0 0.0
  %754 = vmatpush1.msra.mxu0 0.0
  %755 = vmatprep.subr.mxu0 0.0
  %756 = vmatpush1.msra.mxu0 0.0
  %757 = vmatprep.subr.mxu0 0.0
  %758 = vmatpush1.msra.mxu0 0.0
  %759 = vmatprep.subr.mxu0 0.0
  %760 = vmatpush1.msra.mxu0 0.0
  %761 = vmatprep.subr.mxu0 0.0
  %762 = vmatpush1.msra.mxu0 0.0
  %763 = vmatprep.subr.mxu0 0.0
  %764 = vmatpush1.msra.mxu0 0.0
  %765 = vmatprep.subr.mxu0 0.0
  %766 = vmatpush1.msra.mxu0 0.0
  %767 = vmatprep.subr.mxu0 0.0
  %768 = vmatpush1.msra.mxu0 0.0
  %769 = vmatprep.subr.mxu0 0.0
  %770 = vmatpush1.msra.mxu0 0.0
  %771 = vmatprep.subr.mxu0 0.0
  %772 = vmatpush1.msra.mxu0 0.0
  %773 = vmatprep.subr.mxu0 0.0
  %774 = vmatpush1.msra.mxu0 0.0
  %775 = vmatprep.subr.mxu0 0.0
  %776 = vmatpush1.msra.mxu0 0.0
  %777 = vmatprep.subr.mxu0 0.0
  %778 = vmatpush1.msra.mxu0 0.0
  %779 = vmatprep.subr.mxu0 0.0
  %780 = vmatpush1.msra.mxu0 0.0
  %781 = vmatprep.subr.mxu0 0.0
  %782 = vmatpush1.msra.mxu0 0.0
  %783 = vmatprep.subr.mxu0 0.0
  %784 = vmatpush1.msra.mxu0 0.0
  %785 = vmatprep.subr.mxu0 0.0
  %786 = vmatpush1.msra.mxu0 0.0
  %787 = vmatprep.subr.mxu0 0.0
  %788 = vmatpush1.msra.mxu0 0.0
  %789 = vmatprep.subr.mxu0 0.0
  %790 = vmatpush1.msra.mxu0 0.0
  %791 = vmatprep.subr.mxu0 0.0
  %792 = vmatpush1.msra.mxu0 0.0
  %793 = vmatprep.subr.mxu0 0.0
  %794 = vmatpush1.msra.mxu0 0.0
  %795 = vmatprep.mubr.f32.mxu0 0.0
  %796 = vmatmul.mubr.f32.gmra.mrb[0].mxu0 %v726
  %v797 = vpop.f32.mrb[0].mxu0
  %v798 = vadd.f32 0.0, %v797
  %v799 = vpop.f32.mrb[0].mxu0
  %800 = vmatprep.mubr.f32.mxu0 0.0
  %801 = vmatmul.mubr.f32.gmra.mrb[0].mxu0 %v729
  %v802 = vpop.f32.mrb[0].mxu0
  %v803 = vadd.f32 0.0, %v802
  %v804 = vpop.f32.mrb[0].mxu0
  %805 = vdwg.mxu0
  %806 = vset.pattern.permute.xlu0 2
  %807 = vperm.xlu0 %806, %v335
  %v808 = vpop.permute.xlu0 %807
  %809 = vset.pattern.permute.xlu0 2
  %810 = vperm.xlu0 %809, %v336
  %v811 = vpop.permute.xlu0 %810
  %vm812 = vcmp.eq.s32.totalorder %v808, 1
  %vm813 = vcmp.eq.s32.totalorder %v811, 1
  %v814 = vsel %vm812, %v798, -1e+30
  %v815 = vsel %vm813, %v803, -1e+30
  %v816 = vsel %vm76, %v814, -inf
  %v817 = vsel %vm76, %v815, -inf
  %v818 = vmax.f32 %v816, %v817
  %v819 = vrot.slane %v818, 4
  %v820 = vmax.f32 %v818, %v819
  %v821 = vrot.slane %v820, 2
  %v822 = vmax.f32 %v820, %v821
  %v823 = vrot.slane %v822, 1
  %v824 = vmax.f32 %v822, %v823
  %v825 = vsub.f32 %v814, %v824
  %v826 = vsub.f32 %v815, %v824
  %v827 = vmul.f32 %v825, 1.442695
  %v828 = vpow.pop %v827
  %v829 = vmul.f32 %v826, 1.442695
  %v830 = vpow.pop %v829
  %831 = vset.pattern.permute.xlu0 2
  %832 = vperm.xlu0 %831, %v53
  %v833 = vpop.permute.xlu0 %832
  %835 = vset.pattern.permute.xlu0 2
  %836 = vperm.xlu0 %835, %v54
  %v837 = vpop.permute.xlu0 %836
  %v839 = vmul.f32 %v828, %v833
  %v840 = vmul.f32 %v830, %v837
  %v841 = vsel %vm76, %v839, 0.0
  %v842 = vsel %vm76, %v840, 0.0
  %v843 = vadd.f32 %v841, %v842
  %v844 = vrot.slane %v843, 4
  %v845 = vadd.f32 %v843, %v844
  %v846 = vrot.slane %v845, 2
  %v847 = vadd.f32 %v845, %v846
  %v848 = vrot.slane %v847, 1
  %v849 = vadd.f32 %v847, %v848
  %v850 = vrcp.pop %v849
  %v851 = vmul.f32 %v839, %v850
  %v852 = vmul.f32 %v840, %v850
  %v854 = vsel %vm76, %v851, 0
  %v857 = vsel %vm76, %v852, 0
  %859 = vmatprep.subr.mxu0 0.0
  %860 = vmatpush1.msra.mxu0 %v69
  %861 = vmatprep.subr.mxu0 0.0
  %862 = vmatpush1.msra.mxu0 0.0
  %863 = vmatprep.subr.mxu0 0.0
  %864 = vmatpush1.msra.mxu0 0.0
  %865 = vmatprep.subr.mxu0 0.0
  %866 = vmatpush1.msra.mxu0 0.0
  %867 = vmatprep.subr.mxu0 0.0
  %868 = vmatpush1.msra.mxu0 0.0
  %869 = vmatprep.subr.mxu0 0.0
  %870 = vmatpush1.msra.mxu0 0.0
  %871 = vmatprep.subr.mxu0 0.0
  %872 = vmatpush1.msra.mxu0 0.0
  %873 = vmatprep.subr.mxu0 0.0
  %874 = vmatpush1.msra.mxu0 0.0
  %875 = vmatprep.subr.mxu0 0.0
  %876 = vmatpush1.msra.mxu0 0.0
  %877 = vmatprep.subr.mxu0 0.0
  %878 = vmatpush1.msra.mxu0 0.0
  %879 = vmatprep.subr.mxu0 0.0
  %880 = vmatpush1.msra.mxu0 0.0
  %881 = vmatprep.subr.mxu0 0.0
  %882 = vmatpush1.msra.mxu0 0.0
  %883 = vmatprep.subr.mxu0 0.0
  %884 = vmatpush1.msra.mxu0 0.0
  %885 = vmatprep.subr.mxu0 0.0
  %886 = vmatpush1.msra.mxu0 0.0
  %887 = vmatprep.subr.mxu0 0.0
  %888 = vmatpush1.msra.mxu0 0.0
  %889 = vmatprep.subr.mxu0 0.0
  %890 = vmatpush1.msra.mxu0 0.0
  %891 = vmatprep.subr.mxu0 0.0
  %892 = vmatpush1.msra.mxu0 0.0
  %893 = vmatprep.subr.mxu0 0.0
  %894 = vmatpush1.msra.mxu0 0.0
  %895 = vmatprep.subr.mxu0 0.0
  %896 = vmatpush1.msra.mxu0 0.0
  %897 = vmatprep.subr.mxu0 0.0
  %898 = vmatpush1.msra.mxu0 0.0
  %899 = vmatprep.subr.mxu0 0.0
  %900 = vmatpush1.msra.mxu0 0.0
  %901 = vmatprep.subr.mxu0 0.0
  %902 = vmatpush1.msra.mxu0 0.0
  %903 = vmatprep.subr.mxu0 0.0
  %904 = vmatpush1.msra.mxu0 0.0
  %905 = vmatprep.subr.mxu0 0.0
  %906 = vmatpush1.msra.mxu0 0.0
  %907 = vmatprep.subr.mxu0 0.0
  %908 = vmatpush1.msra.mxu0 0.0
  %909 = vmatprep.subr.mxu0 0.0
  %910 = vmatpush1.msra.mxu0 0.0
  %911 = vmatprep.subr.mxu0 0.0
  %912 = vmatpush1.msra.mxu0 0.0
  %913 = vmatprep.subr.mxu0 0.0
  %914 = vmatpush1.msra.mxu0 0.0
  %915 = vmatprep.subr.mxu0 0.0
  %916 = vmatpush1.msra.mxu0 0.0
  %917 = vmatprep.subr.mxu0 0.0
  %918 = vmatpush1.msra.mxu0 0.0
  %919 = vmatprep.subr.mxu0 0.0
  %920 = vmatpush1.msra.mxu0 0.0
  %921 = vmatprep.subr.mxu0 0.0
  %922 = vmatpush1.msra.mxu0 0.0
  %923 = vmatprep.mubr.f32.mxu0 0.0
  %924 = vmatmul.mubr.f32.gmra.mrb[0].mxu0 %v854
  %v925 = vpop.f32.mrb[0].mxu0
  %v926 = vadd.f32 0.0, %v925
  %v927 = vpop.f32.mrb[0].mxu0
  %928 = vmatprep.mubr.f32.mxu0 0.0
  %929 = vmatmul.mubr.f32.gmra.mrb[0].mxu0 %v857
  %v930 = vpop.f32.mrb[0].mxu0
  %v931 = vadd.f32 0.0, %v930
  %v932 = vpop.f32.mrb[0].mxu0
  %933 = vdwg.mxu0
  %v934 = vmul.f32 %v926, %v150
  %v935 = vmul.f32 %v931, %v155
  %v936 = vsel %vm251, %v934, 0.0
  %v937 = vsel %vm251, %v935, 0.0
  %v938 = vadd.f32 %v936, %v937
  %v939 = vrot.slane %v938, 4
  %v940 = vadd.f32 %v938, %v939
  %v941 = vrot.slane %v940, 2
  %v942 = vadd.f32 %v940, %v941
  %v943 = vrot.slane %v942, 1
  %v944 = vadd.f32 %v942, %v943
  %945 = vst.msk [vmem:[#allocation2 + $0x2] sm:$0x1] %vm478, %v944
  %v946 = vlaneseq
  %v947 = vshrl.u32 %v946, 7
  %v948 = vsub.s32 3, %v947
  %v949 = vrot.slane %v231, %v948
  %v950 = vadd.f32 %v949, %v150
  %v951 = vadd.f32 %v949, %v155
  %vm952 = vcmp.ge.f32.partialorder %v950, 0.0
  %vm953 = vcmp.ge.f32.partialorder %v951, 0.0
  %v954 = vmul.f32 %v950, 0.2
  %v955 = vmul.f32 %v951, 0.2
  %v956 = vsel %vm952, %v950, %v954
  %v957 = vsel %vm953, %v951, %v955
  %v959 = vsel %vm251, %v956, 0
  %v962 = vsel %vm251, %v957, 0
  %964 = vmatprep.subr.mxu0 0.0
  %965 = vmatpush1.msra.mxu0 %v61
  %966 = vmatprep.subr.mxu0 0.0
  %967 = vmatpush1.msra.mxu0 %v62
  %968 = vmatprep.subr.mxu0 0.0
  %969 = vmatpush1.msra.mxu0 %v63
  %970 = vmatprep.subr.mxu0 0.0
  %971 = vmatpush1.msra.mxu0 %v64
  %972 = vmatprep.subr.mxu0 0.0
  %973 = vmatpush1.msra.mxu0 %v65
  %974 = vmatprep.subr.mxu0 0.0
  %975 = vmatpush1.msra.mxu0 %v66
  %976 = vmatprep.subr.mxu0 0.0
  %977 = vmatpush1.msra.mxu0 %v67
  %978 = vmatprep.subr.mxu0 0.0
  %979 = vmatpush1.msra.mxu0 %v68
  %980 = vmatprep.subr.mxu0 0.0
  %981 = vmatpush1.msra.mxu0 0.0
  %982 = vmatprep.subr.mxu0 0.0
  %983 = vmatpush1.msra.mxu0 0.0
  %984 = vmatprep.subr.mxu0 0.0
  %985 = vmatpush1.msra.mxu0 0.0
  %986 = vmatprep.subr.mxu0 0.0
  %987 = vmatpush1.msra.mxu0 0.0
  %988 = vmatprep.subr.mxu0 0.0
  %989 = vmatpush1.msra.mxu0 0.0
  %990 = vmatprep.subr.mxu0 0.0
  %991 = vmatpush1.msra.mxu0 0.0
  %992 = vmatprep.subr.mxu0 0.0
  %993 = vmatpush1.msra.mxu0 0.0
  %994 = vmatprep.subr.mxu0 0.0
  %995 = vmatpush1.msra.mxu0 0.0
  %996 = vmatprep.subr.mxu0 0.0
  %997 = vmatpush1.msra.mxu0 0.0
  %998 = vmatprep.subr.mxu0 0.0
  %999 = vmatpush1.msra.mxu0 0.0
  %1000 = vmatprep.subr.mxu0 0.0
  %1001 = vmatpush1.msra.mxu0 0.0
  %1002 = vmatprep.subr.mxu0 0.0
  %1003 = vmatpush1.msra.mxu0 0.0
  %1004 = vmatprep.subr.mxu0 0.0
  %1005 = vmatpush1.msra.mxu0 0.0
  %1006 = vmatprep.subr.mxu0 0.0
  %1007 = vmatpush1.msra.mxu0 0.0
  %1008 = vmatprep.subr.mxu0 0.0
  %1009 = vmatpush1.msra.mxu0 0.0
  %1010 = vmatprep.subr.mxu0 0.0
  %1011 = vmatpush1.msra.mxu0 0.0
  %1012 = vmatprep.subr.mxu0 0.0
  %1013 = vmatpush1.msra.mxu0 0.0
  %1014 = vmatprep.subr.mxu0 0.0
  %1015 = vmatpush1.msra.mxu0 0.0
  %1016 = vmatprep.subr.mxu0 0.0
  %1017 = vmatpush1.msra.mxu0 0.0
  %1018 = vmatprep.subr.mxu0 0.0
  %1019 = vmatpush1.msra.mxu0 0.0
  %1020 = vmatprep.subr.mxu0 0.0
  %1021 = vmatpush1.msra.mxu0 0.0
  %1022 = vmatprep.subr.mxu0 0.0
  %1023 = vmatpush1.msra.mxu0 0.0
  %1024 = vmatprep.subr.mxu0 0.0
  %1025 = vmatpush1.msra.mxu0 0.0
  %1026 = vmatprep.subr.mxu0 0.0
  %1027 = vmatpush1.msra.mxu0 0.0
  %1028 = vmatprep.mubr.f32.mxu0 0.0
  %1029 = vmatmul.mubr.f32.gmra.mrb[0].mxu0 %v959
  %v1030 = vpop.f32.mrb[0].mxu0
  %v1031 = vadd.f32 0.0, %v1030
  %v1032 = vpop.f32.mrb[0].mxu0
  %1033 = vmatprep.mubr.f32.mxu0 0.0
  %1034 = vmatmul.mubr.f32.gmra.mrb[0].mxu0 %v962
  %v1035 = vpop.f32.mrb[0].mxu0
  %v1036 = vadd.f32 0.0, %v1035
  %v1037 = vpop.f32.mrb[0].mxu0
  %1038 = vdwg.mxu0
  %1039 = vset.pattern.permute.xlu0 3
  %1040 = vperm.xlu0 %1039, %v335
  %v1041 = vpop.permute.xlu0 %1040
  %1042 = vset.pattern.permute.xlu0 3
  %1043 = vperm.xlu0 %1042, %v336
  %v1044 = vpop.permute.xlu0 %1043
  %vm1045 = vcmp.eq.s32.totalorder %v1041, 1
  %vm1046 = vcmp.eq.s32.totalorder %v1044, 1
  %v1047 = vsel %vm1045, %v1031, -1e+30
  %v1048 = vsel %vm1046, %v1036, -1e+30
  %v1049 = vsel %vm76, %v1047, -inf
  %v1050 = vsel %vm76, %v1048, -inf
  %v1051 = vmax.f32 %v1049, %v1050
  %v1052 = vrot.slane %v1051, 4
  %v1053 = vmax.f32 %v1051, %v1052
  %v1054 = vrot.slane %v1053, 2
  %v1055 = vmax.f32 %v1053, %v1054
  %v1056 = vrot.slane %v1055, 1
  %v1057 = vmax.f32 %v1055, %v1056
  %v1058 = vsub.f32 %v1047, %v1057
  %v1059 = vsub.f32 %v1048, %v1057
  %v1060 = vmul.f32 %v1058, 1.442695
  %v1061 = vpow.pop %v1060
  %v1062 = vmul.f32 %v1059, 1.442695
  %v1063 = vpow.pop %v1062
  %1064 = vset.pattern.permute.xlu0 3
  %1065 = vperm.xlu0 %1064, %v53
  %v1066 = vpop.permute.xlu0 %1065
  %1068 = vset.pattern.permute.xlu0 3
  %1069 = vperm.xlu0 %1068, %v54
  %v1070 = vpop.permute.xlu0 %1069
  %v1072 = vmul.f32 %v1061, %v1066
  %v1073 = vmul.f32 %v1063, %v1070
  %v1074 = vsel %vm76, %v1072, 0.0
  %v1075 = vsel %vm76, %v1073, 0.0
  %v1076 = vadd.f32 %v1074, %v1075
  %v1077 = vrot.slane %v1076, 4
  %v1078 = vadd.f32 %v1076, %v1077
  %v1079 = vrot.slane %v1078, 2
  %v1080 = vadd.f32 %v1078, %v1079
  %v1081 = vrot.slane %v1080, 1
  %v1082 = vadd.f32 %v1080, %v1081
  %v1083 = vrcp.pop %v1082
  %v1084 = vmul.f32 %v1072, %v1083
  %v1085 = vmul.f32 %v1073, %v1083
  %v1087 = vsel %vm76, %v1084, 0
  %v1090 = vsel %vm76, %v1085, 0
  %1092 = vmatprep.subr.mxu0 0.0
  %1093 = vmatpush1.msra.mxu0 %v69
  %1094 = vmatprep.subr.mxu0 0.0
  %1095 = vmatpush1.msra.mxu0 0.0
  %1096 = vmatprep.subr.mxu0 0.0
  %1097 = vmatpush1.msra.mxu0 0.0
  %1098 = vmatprep.subr.mxu0 0.0
  %1099 = vmatpush1.msra.mxu0 0.0
  %1100 = vmatprep.subr.mxu0 0.0
  %1101 = vmatpush1.msra.mxu0 0.0
  %1102 = vmatprep.subr.mxu0 0.0
  %1103 = vmatpush1.msra.mxu0 0.0
  %1104 = vmatprep.subr.mxu0 0.0
  %1105 = vmatpush1.msra.mxu0 0.0
  %1106 = vmatprep.subr.mxu0 0.0
  %1107 = vmatpush1.msra.mxu0 0.0
  %1108 = vmatprep.subr.mxu0 0.0
  %1109 = vmatpush1.msra.mxu0 0.0
  %1110 = vmatprep.subr.mxu0 0.0
  %1111 = vmatpush1.msra.mxu0 0.0
  %1112 = vmatprep.subr.mxu0 0.0
  %1113 = vmatpush1.msra.mxu0 0.0
  %1114 = vmatprep.subr.mxu0 0.0
  %1115 = vmatpush1.msra.mxu0 0.0
  %1116 = vmatprep.subr.mxu0 0.0
  %1117 = vmatpush1.msra.mxu0 0.0
  %1118 = vmatprep.subr.mxu0 0.0
  %1119 = vmatpush1.msra.mxu0 0.0
  %1120 = vmatprep.subr.mxu0 0.0
  %1121 = vmatpush1.msra.mxu0 0.0
  %1122 = vmatprep.subr.mxu0 0.0
  %1123 = vmatpush1.msra.mxu0 0.0
  %1124 = vmatprep.subr.mxu0 0.0
  %1125 = vmatpush1.msra.mxu0 0.0
  %1126 = vmatprep.subr.mxu0 0.0
  %1127 = vmatpush1.msra.mxu0 0.0
  %1128 = vmatprep.subr.mxu0 0.0
  %1129 = vmatpush1.msra.mxu0 0.0
  %1130 = vmatprep.subr.mxu0 0.0
  %1131 = vmatpush1.msra.mxu0 0.0
  %1132 = vmatprep.subr.mxu0 0.0
  %1133 = vmatpush1.msra.mxu0 0.0
  %1134 = vmatprep.subr.mxu0 0.0
  %1135 = vmatpush1.msra.mxu0 0.0
  %1136 = vmatprep.subr.mxu0 0.0
  %1137 = vmatpush1.msra.mxu0 0.0
  %1138 = vmatprep.subr.mxu0 0.0
  %1139 = vmatpush1.msra.mxu0 0.0
  %1140 = vmatprep.subr.mxu0 0.0
  %1141 = vmatpush1.msra.mxu0 0.0
  %1142 = vmatprep.subr.mxu0 0.0
  %1143 = vmatpush1.msra.mxu0 0.0
  %1144 = vmatprep.subr.mxu0 0.0
  %1145 = vmatpush1.msra.mxu0 0.0
  %1146 = vmatprep.subr.mxu0 0.0
  %1147 = vmatpush1.msra.mxu0 0.0
  %1148 = vmatprep.subr.mxu0 0.0
  %1149 = vmatpush1.msra.mxu0 0.0
  %1150 = vmatprep.subr.mxu0 0.0
  %1151 = vmatpush1.msra.mxu0 0.0
  %1152 = vmatprep.subr.mxu0 0.0
  %1153 = vmatpush1.msra.mxu0 0.0
  %1154 = vmatprep.subr.mxu0 0.0
  %1155 = vmatpush1.msra.mxu0 0.0
  %1156 = vmatprep.mubr.f32.mxu0 0.0
  %1157 = vmatmul.mubr.f32.gmra.mrb[0].mxu0 %v1087
  %v1158 = vpop.f32.mrb[0].mxu0
  %v1159 = vadd.f32 0.0, %v1158
  %v1160 = vpop.f32.mrb[0].mxu0
  %1161 = vmatprep.mubr.f32.mxu0 0.0
  %1162 = vmatmul.mubr.f32.gmra.mrb[0].mxu0 %v1090
  %v1163 = vpop.f32.mrb[0].mxu0
  %v1164 = vadd.f32 0.0, %v1163
  %v1165 = vpop.f32.mrb[0].mxu0
  %1166 = vdwg.mxu0
  %v1167 = vmul.f32 %v1159, %v150
  %v1168 = vmul.f32 %v1164, %v155
  %v1169 = vsel %vm251, %v1167, 0.0
  %v1170 = vsel %vm251, %v1168, 0.0
  %v1171 = vadd.f32 %v1169, %v1170
  %v1172 = vrot.slane %v1171, 4
  %v1173 = vadd.f32 %v1171, %v1172
  %v1174 = vrot.slane %v1173, 2
  %v1175 = vadd.f32 %v1173, %v1174
  %v1176 = vrot.slane %v1175, 1
  %v1177 = vadd.f32 %v1175, %v1176
  %1178 = vst.msk [vmem:[#allocation2 + $0x3] sm:$0x1] %vm478, %v1177
  %v1179 = vlaneseq
  %v1180 = vshrl.u32 %v1179, 7
  %v1181 = vsub.s32 4, %v1180
  %v1182 = vrot.slane %v231, %v1181
  %v1183 = vadd.f32 %v1182, %v150
  %v1184 = vadd.f32 %v1182, %v155
  %vm1185 = vcmp.ge.f32.partialorder %v1183, 0.0
  %vm1186 = vcmp.ge.f32.partialorder %v1184, 0.0
  %v1187 = vmul.f32 %v1183, 0.2
  %v1188 = vmul.f32 %v1184, 0.2
  %v1189 = vsel %vm1185, %v1183, %v1187
  %v1190 = vsel %vm1186, %v1184, %v1188
  %v1192 = vsel %vm251, %v1189, 0
  %v1195 = vsel %vm251, %v1190, 0
  %1197 = vmatprep.subr.mxu0 0.0
  %1198 = vmatpush1.msra.mxu0 %v61
  %1199 = vmatprep.subr.mxu0 0.0
  %1200 = vmatpush1.msra.mxu0 %v62
  %1201 = vmatprep.subr.mxu0 0.0
  %1202 = vmatpush1.msra.mxu0 %v63
  %1203 = vmatprep.subr.mxu0 0.0
  %1204 = vmatpush1.msra.mxu0 %v64
  %1205 = vmatprep.subr.mxu0 0.0
  %1206 = vmatpush1.msra.mxu0 %v65
  %1207 = vmatprep.subr.mxu0 0.0
  %1208 = vmatpush1.msra.mxu0 %v66
  %1209 = vmatprep.subr.mxu0 0.0
  %1210 = vmatpush1.msra.mxu0 %v67
  %1211 = vmatprep.subr.mxu0 0.0
  %1212 = vmatpush1.msra.mxu0 %v68
  %1213 = vmatprep.subr.mxu0 0.0
  %1214 = vmatpush1.msra.mxu0 0.0
  %1215 = vmatprep.subr.mxu0 0.0
  %1216 = vmatpush1.msra.mxu0 0.0
  %1217 = vmatprep.subr.mxu0 0.0
  %1218 = vmatpush1.msra.mxu0 0.0
  %1219 = vmatprep.subr.mxu0 0.0
  %1220 = vmatpush1.msra.mxu0 0.0
  %1221 = vmatprep.subr.mxu0 0.0
  %1222 = vmatpush1.msra.mxu0 0.0
  %1223 = vmatprep.subr.mxu0 0.0
  %1224 = vmatpush1.msra.mxu0 0.0
  %1225 = vmatprep.subr.mxu0 0.0
  %1226 = vmatpush1.msra.mxu0 0.0
  %1227 = vmatprep.subr.mxu0 0.0
  %1228 = vmatpush1.msra.mxu0 0.0
  %1229 = vmatprep.subr.mxu0 0.0
  %1230 = vmatpush1.msra.mxu0 0.0
  %1231 = vmatprep.subr.mxu0 0.0
  %1232 = vmatpush1.msra.mxu0 0.0
  %1233 = vmatprep.subr.mxu0 0.0
  %1234 = vmatpush1.msra.mxu0 0.0
  %1235 = vmatprep.subr.mxu0 0.0
  %1236 = vmatpush1.msra.mxu0 0.0
  %1237 = vmatprep.subr.mxu0 0.0
  %1238 = vmatpush1.msra.mxu0 0.0
  %1239 = vmatprep.subr.mxu0 0.0
  %1240 = vmatpush1.msra.mxu0 0.0
  %1241 = vmatprep.subr.mxu0 0.0
  %1242 = vmatpush1.msra.mxu0 0.0
  %1243 = vmatprep.subr.mxu0 0.0
  %1244 = vmatpush1.msra.mxu0 0.0
  %1245 = vmatprep.subr.mxu0 0.0
  %1246 = vmatpush1.msra.mxu0 0.0
  %1247 = vmatprep.subr.mxu0 0.0
  %1248 = vmatpush1.msra.mxu0 0.0
  %1249 = vmatprep.subr.mxu0 0.0
  %1250 = vmatpush1.msra.mxu0 0.0
  %1251 = vmatprep.subr.mxu0 0.0
  %1252 = vmatpush1.msra.mxu0 0.0
  %1253 = vmatprep.subr.mxu0 0.0
  %1254 = vmatpush1.msra.mxu0 0.0
  %1255 = vmatprep.subr.mxu0 0.0
  %1256 = vmatpush1.msra.mxu0 0.0
  %1257 = vmatprep.subr.mxu0 0.0
  %1258 = vmatpush1.msra.mxu0 0.0
  %1259 = vmatprep.subr.mxu0 0.0
  %1260 = vmatpush1.msra.mxu0 0.0
  %1261 = vmatprep.mubr.f32.mxu0 0.0
  %1262 = vmatmul.mubr.f32.gmra.mrb[0].mxu0 %v1192
  %v1263 = vpop.f32.mrb[0].mxu0
  %v1264 = vadd.f32 0.0, %v1263
  %v1265 = vpop.f32.mrb[0].mxu0
  %1266 = vmatprep.mubr.f32.mxu0 0.0
  %1267 = vmatmul.mubr.f32.gmra.mrb[0].mxu0 %v1195
  %v1268 = vpop.f32.mrb[0].mxu0
  %v1269 = vadd.f32 0.0, %v1268
  %v1270 = vpop.f32.mrb[0].mxu0
  %1271 = vdwg.mxu0
  %1272 = vset.pattern.permute.xlu0 4
  %1273 = vperm.xlu0 %1272, %v335
  %v1274 = vpop.permute.xlu0 %1273
  %1275 = vset.pattern.permute.xlu0 4
  %1276 = vperm.xlu0 %1275, %v336
  %v1277 = vpop.permute.xlu0 %1276
  %vm1278 = vcmp.eq.s32.totalorder %v1274, 1
  %vm1279 = vcmp.eq.s32.totalorder %v1277, 1
  %v1280 = vsel %vm1278, %v1264, -1e+30
  %v1281 = vsel %vm1279, %v1269, -1e+30
  %v1282 = vsel %vm76, %v1280, -inf
  %v1283 = vsel %vm76, %v1281, -inf
  %v1284 = vmax.f32 %v1282, %v1283
  %v1285 = vrot.slane %v1284, 4
  %v1286 = vmax.f32 %v1284, %v1285
  %v1287 = vrot.slane %v1286, 2
  %v1288 = vmax.f32 %v1286, %v1287
  %v1289 = vrot.slane %v1288, 1
  %v1290 = vmax.f32 %v1288, %v1289
  %v1291 = vsub.f32 %v1280, %v1290
  %v1292 = vsub.f32 %v1281, %v1290
  %v1293 = vmul.f32 %v1291, 1.442695
  %v1294 = vpow.pop %v1293
  %v1295 = vmul.f32 %v1292, 1.442695
  %v1296 = vpow.pop %v1295
  %1297 = vset.pattern.permute.xlu0 4
  %1298 = vperm.xlu0 %1297, %v53
  %v1299 = vpop.permute.xlu0 %1298
  %1301 = vset.pattern.permute.xlu0 4
  %1302 = vperm.xlu0 %1301, %v54
  %v1303 = vpop.permute.xlu0 %1302
  %v1305 = vmul.f32 %v1294, %v1299
  %v1306 = vmul.f32 %v1296, %v1303
  %v1307 = vsel %vm76, %v1305, 0.0
  %v1308 = vsel %vm76, %v1306, 0.0
  %v1309 = vadd.f32 %v1307, %v1308
  %v1310 = vrot.slane %v1309, 4
  %v1311 = vadd.f32 %v1309, %v1310
  %v1312 = vrot.slane %v1311, 2
  %v1313 = vadd.f32 %v1311, %v1312
  %v1314 = vrot.slane %v1313, 1
  %v1315 = vadd.f32 %v1313, %v1314
  %v1316 = vrcp.pop %v1315
  %v1317 = vmul.f32 %v1305, %v1316
  %v1318 = vmul.f32 %v1306, %v1316
  %v1320 = vsel %vm76, %v1317, 0
  %v1323 = vsel %vm76, %v1318, 0
  %1325 = vmatprep.subr.mxu0 0.0
  %1326 = vmatpush1.msra.mxu0 %v69
  %1327 = vmatprep.subr.mxu0 0.0
  %1328 = vmatpush1.msra.mxu0 0.0
  %1329 = vmatprep.subr.mxu0 0.0
  %1330 = vmatpush1.msra.mxu0 0.0
  %1331 = vmatprep.subr.mxu0 0.0
  %1332 = vmatpush1.msra.mxu0 0.0
  %1333 = vmatprep.subr.mxu0 0.0
  %1334 = vmatpush1.msra.mxu0 0.0
  %1335 = vmatprep.subr.mxu0 0.0
  %1336 = vmatpush1.msra.mxu0 0.0
  %1337 = vmatprep.subr.mxu0 0.0
  %1338 = vmatpush1.msra.mxu0 0.0
  %1339 = vmatprep.subr.mxu0 0.0
  %1340 = vmatpush1.msra.mxu0 0.0
  %1341 = vmatprep.subr.mxu0 0.0
  %1342 = vmatpush1.msra.mxu0 0.0
  %1343 = vmatprep.subr.mxu0 0.0
  %1344 = vmatpush1.msra.mxu0 0.0
  %1345 = vmatprep.subr.mxu0 0.0
  %1346 = vmatpush1.msra.mxu0 0.0
  %1347 = vmatprep.subr.mxu0 0.0
  %1348 = vmatpush1.msra.mxu0 0.0
  %1349 = vmatprep.subr.mxu0 0.0
  %1350 = vmatpush1.msra.mxu0 0.0
  %1351 = vmatprep.subr.mxu0 0.0
  %1352 = vmatpush1.msra.mxu0 0.0
  %1353 = vmatprep.subr.mxu0 0.0
  %1354 = vmatpush1.msra.mxu0 0.0
  %1355 = vmatprep.subr.mxu0 0.0
  %1356 = vmatpush1.msra.mxu0 0.0
  %1357 = vmatprep.subr.mxu0 0.0
  %1358 = vmatpush1.msra.mxu0 0.0
  %1359 = vmatprep.subr.mxu0 0.0
  %1360 = vmatpush1.msra.mxu0 0.0
  %1361 = vmatprep.subr.mxu0 0.0
  %1362 = vmatpush1.msra.mxu0 0.0
  %1363 = vmatprep.subr.mxu0 0.0
  %1364 = vmatpush1.msra.mxu0 0.0
  %1365 = vmatprep.subr.mxu0 0.0
  %1366 = vmatpush1.msra.mxu0 0.0
  %1367 = vmatprep.subr.mxu0 0.0
  %1368 = vmatpush1.msra.mxu0 0.0
  %1369 = vmatprep.subr.mxu0 0.0
  %1370 = vmatpush1.msra.mxu0 0.0
  %1371 = vmatprep.subr.mxu0 0.0
  %1372 = vmatpush1.msra.mxu0 0.0
  %1373 = vmatprep.subr.mxu0 0.0
  %1374 = vmatpush1.msra.mxu0 0.0
  %1375 = vmatprep.subr.mxu0 0.0
  %1376 = vmatpush1.msra.mxu0 0.0
  %1377 = vmatprep.subr.mxu0 0.0
  %1378 = vmatpush1.msra.mxu0 0.0
  %1379 = vmatprep.subr.mxu0 0.0
  %1380 = vmatpush1.msra.mxu0 0.0
  %1381 = vmatprep.subr.mxu0 0.0
  %1382 = vmatpush1.msra.mxu0 0.0
  %1383 = vmatprep.subr.mxu0 0.0
  %1384 = vmatpush1.msra.mxu0 0.0
  %1385 = vmatprep.subr.mxu0 0.0
  %1386 = vmatpush1.msra.mxu0 0.0
  %1387 = vmatprep.subr.mxu0 0.0
  %1388 = vmatpush1.msra.mxu0 0.0
  %1389 = vmatprep.mubr.f32.mxu0 0.0
  %1390 = vmatmul.mubr.f32.gmra.mrb[0].mxu0 %v1320
  %v1391 = vpop.f32.mrb[0].mxu0
  %v1392 = vadd.f32 0.0, %v1391
  %v1393 = vpop.f32.mrb[0].mxu0
  %1394 = vmatprep.mubr.f32.mxu0 0.0
  %1395 = vmatmul.mubr.f32.gmra.mrb[0].mxu0 %v1323
  %v1396 = vpop.f32.mrb[0].mxu0
  %v1397 = vadd.f32 0.0, %v1396
  %v1398 = vpop.f32.mrb[0].mxu0
  %1399 = vdwg.mxu0
  %v1400 = vmul.f32 %v1392, %v150
  %v1401 = vmul.f32 %v1397, %v155
  %v1402 = vsel %vm251, %v1400, 0.0
  %v1403 = vsel %vm251, %v1401, 0.0
  %v1404 = vadd.f32 %v1402, %v1403
  %v1405 = vrot.slane %v1404, 4
  %v1406 = vadd.f32 %v1404, %v1405
  %v1407 = vrot.slane %v1406, 2
  %v1408 = vadd.f32 %v1406, %v1407
  %v1409 = vrot.slane %v1408, 1
  %v1410 = vadd.f32 %v1408, %v1409
  %1411 = vst.msk [vmem:[#allocation2 + $0x4] sm:$0x1] %vm478, %v1410
  %v1412 = vlaneseq
  %v1413 = vshrl.u32 %v1412, 7
  %v1414 = vsub.s32 5, %v1413
  %v1415 = vrot.slane %v231, %v1414
  %v1416 = vadd.f32 %v1415, %v150
  %v1417 = vadd.f32 %v1415, %v155
  %vm1418 = vcmp.ge.f32.partialorder %v1416, 0.0
  %vm1419 = vcmp.ge.f32.partialorder %v1417, 0.0
  %v1420 = vmul.f32 %v1416, 0.2
  %v1421 = vmul.f32 %v1417, 0.2
  %v1422 = vsel %vm1418, %v1416, %v1420
  %v1423 = vsel %vm1419, %v1417, %v1421
  %v1425 = vsel %vm251, %v1422, 0
  %v1428 = vsel %vm251, %v1423, 0
  %1430 = vmatprep.subr.mxu0 0.0
  %1431 = vmatpush1.msra.mxu0 %v61
  %1432 = vmatprep.subr.mxu0 0.0
  %1433 = vmatpush1.msra.mxu0 %v62
  %1434 = vmatprep.subr.mxu0 0.0
  %1435 = vmatpush1.msra.mxu0 %v63
  %1436 = vmatprep.subr.mxu0 0.0
  %1437 = vmatpush1.msra.mxu0 %v64
  %1438 = vmatprep.subr.mxu0 0.0
  %1439 = vmatpush1.msra.mxu0 %v65
  %1440 = vmatprep.subr.mxu0 0.0
  %1441 = vmatpush1.msra.mxu0 %v66
  %1442 = vmatprep.subr.mxu0 0.0
  %1443 = vmatpush1.msra.mxu0 %v67
  %1444 = vmatprep.subr.mxu0 0.0
  %1445 = vmatpush1.msra.mxu0 %v68
  %1446 = vmatprep.subr.mxu0 0.0
  %1447 = vmatpush1.msra.mxu0 0.0
  %1448 = vmatprep.subr.mxu0 0.0
  %1449 = vmatpush1.msra.mxu0 0.0
  %1450 = vmatprep.subr.mxu0 0.0
  %1451 = vmatpush1.msra.mxu0 0.0
  %1452 = vmatprep.subr.mxu0 0.0
  %1453 = vmatpush1.msra.mxu0 0.0
  %1454 = vmatprep.subr.mxu0 0.0
  %1455 = vmatpush1.msra.mxu0 0.0
  %1456 = vmatprep.subr.mxu0 0.0
  %1457 = vmatpush1.msra.mxu0 0.0
  %1458 = vmatprep.subr.mxu0 0.0
  %1459 = vmatpush1.msra.mxu0 0.0
  %1460 = vmatprep.subr.mxu0 0.0
  %1461 = vmatpush1.msra.mxu0 0.0
  %1462 = vmatprep.subr.mxu0 0.0
  %1463 = vmatpush1.msra.mxu0 0.0
  %1464 = vmatprep.subr.mxu0 0.0
  %1465 = vmatpush1.msra.mxu0 0.0
  %1466 = vmatprep.subr.mxu0 0.0
  %1467 = vmatpush1.msra.mxu0 0.0
  %1468 = vmatprep.subr.mxu0 0.0
  %1469 = vmatpush1.msra.mxu0 0.0
  %1470 = vmatprep.subr.mxu0 0.0
  %1471 = vmatpush1.msra.mxu0 0.0
  %1472 = vmatprep.subr.mxu0 0.0
  %1473 = vmatpush1.msra.mxu0 0.0
  %1474 = vmatprep.subr.mxu0 0.0
  %1475 = vmatpush1.msra.mxu0 0.0
  %1476 = vmatprep.subr.mxu0 0.0
  %1477 = vmatpush1.msra.mxu0 0.0
  %1478 = vmatprep.subr.mxu0 0.0
  %1479 = vmatpush1.msra.mxu0 0.0
  %1480 = vmatprep.subr.mxu0 0.0
  %1481 = vmatpush1.msra.mxu0 0.0
  %1482 = vmatprep.subr.mxu0 0.0
  %1483 = vmatpush1.msra.mxu0 0.0
  %1484 = vmatprep.subr.mxu0 0.0
  %1485 = vmatpush1.msra.mxu0 0.0
  %1486 = vmatprep.subr.mxu0 0.0
  %1487 = vmatpush1.msra.mxu0 0.0
  %1488 = vmatprep.subr.mxu0 0.0
  %1489 = vmatpush1.msra.mxu0 0.0
  %1490 = vmatprep.subr.mxu0 0.0
  %1491 = vmatpush1.msra.mxu0 0.0
  %1492 = vmatprep.subr.mxu0 0.0
  %1493 = vmatpush1.msra.mxu0 0.0
  %1494 = vmatprep.mubr.f32.mxu0 0.0
  %1495 = vmatmul.mubr.f32.gmra.mrb[0].mxu0 %v1425
  %v1496 = vpop.f32.mrb[0].mxu0
  %v1497 = vadd.f32 0.0, %v1496
  %v1498 = vpop.f32.mrb[0].mxu0
  %1499 = vmatprep.mubr.f32.mxu0 0.0
  %1500 = vmatmul.mubr.f32.gmra.mrb[0].mxu0 %v1428
  %v1501 = vpop.f32.mrb[0].mxu0
  %v1502 = vadd.f32 0.0, %v1501
  %v1503 = vpop.f32.mrb[0].mxu0
  %1504 = vdwg.mxu0
  %1505 = vset.pattern.permute.xlu0 5
  %1506 = vperm.xlu0 %1505, %v335
  %v1507 = vpop.permute.xlu0 %1506
  %1508 = vset.pattern.permute.xlu0 5
  %1509 = vperm.xlu0 %1508, %v336
  %v1510 = vpop.permute.xlu0 %1509
  %vm1511 = vcmp.eq.s32.totalorder %v1507, 1
  %vm1512 = vcmp.eq.s32.totalorder %v1510, 1
  %v1513 = vsel %vm1511, %v1497, -1e+30
  %v1514 = vsel %vm1512, %v1502, -1e+30
  %v1515 = vsel %vm76, %v1513, -inf
  %v1516 = vsel %vm76, %v1514, -inf
  %v1517 = vmax.f32 %v1515, %v1516
  %v1518 = vrot.slane %v1517, 4
  %v1519 = vmax.f32 %v1517, %v1518
  %v1520 = vrot.slane %v1519, 2
  %v1521 = vmax.f32 %v1519, %v1520
  %v1522 = vrot.slane %v1521, 1
  %v1523 = vmax.f32 %v1521, %v1522
  %v1524 = vsub.f32 %v1513, %v1523
  %v1525 = vsub.f32 %v1514, %v1523
  %v1526 = vmul.f32 %v1524, 1.442695
  %v1527 = vpow.pop %v1526
  %v1528 = vmul.f32 %v1525, 1.442695
  %v1529 = vpow.pop %v1528
  %1530 = vset.pattern.permute.xlu0 5
  %1531 = vperm.xlu0 %1530, %v53
  %v1532 = vpop.permute.xlu0 %1531
  %1534 = vset.pattern.permute.xlu0 5
  %1535 = vperm.xlu0 %1534, %v54
  %v1536 = vpop.permute.xlu0 %1535
  %v1538 = vmul.f32 %v1527, %v1532
  %v1539 = vmul.f32 %v1529, %v1536
  %v1540 = vsel %vm76, %v1538, 0.0
  %v1541 = vsel %vm76, %v1539, 0.0
  %v1542 = vadd.f32 %v1540, %v1541
  %v1543 = vrot.slane %v1542, 4
  %v1544 = vadd.f32 %v1542, %v1543
  %v1545 = vrot.slane %v1544, 2
  %v1546 = vadd.f32 %v1544, %v1545
  %v1547 = vrot.slane %v1546, 1
  %v1548 = vadd.f32 %v1546, %v1547
  %v1549 = vrcp.pop %v1548
  %v1550 = vmul.f32 %v1538, %v1549
  %v1551 = vmul.f32 %v1539, %v1549
  %v1553 = vsel %vm76, %v1550, 0
  %v1556 = vsel %vm76, %v1551, 0
  %1558 = vmatprep.subr.mxu0 0.0
  %1559 = vmatpush1.msra.mxu0 %v69
  %1560 = vmatprep.subr.mxu0 0.0
  %1561 = vmatpush1.msra.mxu0 0.0
  %1562 = vmatprep.subr.mxu0 0.0
  %1563 = vmatpush1.msra.mxu0 0.0
  %1564 = vmatprep.subr.mxu0 0.0
  %1565 = vmatpush1.msra.mxu0 0.0
  %1566 = vmatprep.subr.mxu0 0.0
  %1567 = vmatpush1.msra.mxu0 0.0
  %1568 = vmatprep.subr.mxu0 0.0
  %1569 = vmatpush1.msra.mxu0 0.0
  %1570 = vmatprep.subr.mxu0 0.0
  %1571 = vmatpush1.msra.mxu0 0.0
  %1572 = vmatprep.subr.mxu0 0.0
  %1573 = vmatpush1.msra.mxu0 0.0
  %1574 = vmatprep.subr.mxu0 0.0
  %1575 = vmatpush1.msra.mxu0 0.0
  %1576 = vmatprep.subr.mxu0 0.0
  %1577 = vmatpush1.msra.mxu0 0.0
  %1578 = vmatprep.subr.mxu0 0.0
  %1579 = vmatpush1.msra.mxu0 0.0
  %1580 = vmatprep.subr.mxu0 0.0
  %1581 = vmatpush1.msra.mxu0 0.0
  %1582 = vmatprep.subr.mxu0 0.0
  %1583 = vmatpush1.msra.mxu0 0.0
  %1584 = vmatprep.subr.mxu0 0.0
  %1585 = vmatpush1.msra.mxu0 0.0
  %1586 = vmatprep.subr.mxu0 0.0
  %1587 = vmatpush1.msra.mxu0 0.0
  %1588 = vmatprep.subr.mxu0 0.0
  %1589 = vmatpush1.msra.mxu0 0.0
  %1590 = vmatprep.subr.mxu0 0.0
  %1591 = vmatpush1.msra.mxu0 0.0
  %1592 = vmatprep.subr.mxu0 0.0
  %1593 = vmatpush1.msra.mxu0 0.0
  %1594 = vmatprep.subr.mxu0 0.0
  %1595 = vmatpush1.msra.mxu0 0.0
  %1596 = vmatprep.subr.mxu0 0.0
  %1597 = vmatpush1.msra.mxu0 0.0
  %1598 = vmatprep.subr.mxu0 0.0
  %1599 = vmatpush1.msra.mxu0 0.0
  %1600 = vmatprep.subr.mxu0 0.0
  %1601 = vmatpush1.msra.mxu0 0.0
  %1602 = vmatprep.subr.mxu0 0.0
  %1603 = vmatpush1.msra.mxu0 0.0
  %1604 = vmatprep.subr.mxu0 0.0
  %1605 = vmatpush1.msra.mxu0 0.0
  %1606 = vmatprep.subr.mxu0 0.0
  %1607 = vmatpush1.msra.mxu0 0.0
  %1608 = vmatprep.subr.mxu0 0.0
  %1609 = vmatpush1.msra.mxu0 0.0
  %1610 = vmatprep.subr.mxu0 0.0
  %1611 = vmatpush1.msra.mxu0 0.0
  %1612 = vmatprep.subr.mxu0 0.0
  %1613 = vmatpush1.msra.mxu0 0.0
  %1614 = vmatprep.subr.mxu0 0.0
  %1615 = vmatpush1.msra.mxu0 0.0
  %1616 = vmatprep.subr.mxu0 0.0
  %1617 = vmatpush1.msra.mxu0 0.0
  %1618 = vmatprep.subr.mxu0 0.0
  %1619 = vmatpush1.msra.mxu0 0.0
  %1620 = vmatprep.subr.mxu0 0.0
  %1621 = vmatpush1.msra.mxu0 0.0
  %1622 = vmatprep.mubr.f32.mxu0 0.0
  %1623 = vmatmul.mubr.f32.gmra.mrb[0].mxu0 %v1553
  %v1624 = vpop.f32.mrb[0].mxu0
  %v1625 = vadd.f32 0.0, %v1624
  %v1626 = vpop.f32.mrb[0].mxu0
  %1627 = vmatprep.mubr.f32.mxu0 0.0
  %1628 = vmatmul.mubr.f32.gmra.mrb[0].mxu0 %v1556
  %v1629 = vpop.f32.mrb[0].mxu0
  %v1630 = vadd.f32 0.0, %v1629
  %v1631 = vpop.f32.mrb[0].mxu0
  %1632 = vdwg.mxu0
  %v1633 = vmul.f32 %v1625, %v150
  %v1634 = vmul.f32 %v1630, %v155
  %v1635 = vsel %vm251, %v1633, 0.0
  %v1636 = vsel %vm251, %v1634, 0.0
  %v1637 = vadd.f32 %v1635, %v1636
  %v1638 = vrot.slane %v1637, 4
  %v1639 = vadd.f32 %v1637, %v1638
  %v1640 = vrot.slane %v1639, 2
  %v1641 = vadd.f32 %v1639, %v1640
  %v1642 = vrot.slane %v1641, 1
  %v1643 = vadd.f32 %v1641, %v1642
  %1644 = vst.msk [vmem:[#allocation2 + $0x5] sm:$0x1] %vm478, %v1643
  %v1645 = vlaneseq
  %v1646 = vshrl.u32 %v1645, 7
  %v1647 = vsub.s32 6, %v1646
  %v1648 = vrot.slane %v231, %v1647
  %v1649 = vadd.f32 %v1648, %v150
  %v1650 = vadd.f32 %v1648, %v155
  %vm1651 = vcmp.ge.f32.partialorder %v1649, 0.0
  %vm1652 = vcmp.ge.f32.partialorder %v1650, 0.0
  %v1653 = vmul.f32 %v1649, 0.2
  %v1654 = vmul.f32 %v1650, 0.2
  %v1655 = vsel %vm1651, %v1649, %v1653
  %v1656 = vsel %vm1652, %v1650, %v1654
  %v1658 = vsel %vm251, %v1655, 0
  %v1661 = vsel %vm251, %v1656, 0
  %1663 = vmatprep.subr.mxu0 0.0
  %1664 = vmatpush1.msra.mxu0 %v61
  %1665 = vmatprep.subr.mxu0 0.0
  %1666 = vmatpush1.msra.mxu0 %v62
  %1667 = vmatprep.subr.mxu0 0.0
  %1668 = vmatpush1.msra.mxu0 %v63
  %1669 = vmatprep.subr.mxu0 0.0
  %1670 = vmatpush1.msra.mxu0 %v64
  %1671 = vmatprep.subr.mxu0 0.0
  %1672 = vmatpush1.msra.mxu0 %v65
  %1673 = vmatprep.subr.mxu0 0.0
  %1674 = vmatpush1.msra.mxu0 %v66
  %1675 = vmatprep.subr.mxu0 0.0
  %1676 = vmatpush1.msra.mxu0 %v67
  %1677 = vmatprep.subr.mxu0 0.0
  %1678 = vmatpush1.msra.mxu0 %v68
  %1679 = vmatprep.subr.mxu0 0.0
  %1680 = vmatpush1.msra.mxu0 0.0
  %1681 = vmatprep.subr.mxu0 0.0
  %1682 = vmatpush1.msra.mxu0 0.0
  %1683 = vmatprep.subr.mxu0 0.0
  %1684 = vmatpush1.msra.mxu0 0.0
  %1685 = vmatprep.subr.mxu0 0.0
  %1686 = vmatpush1.msra.mxu0 0.0
  %1687 = vmatprep.subr.mxu0 0.0
  %1688 = vmatpush1.msra.mxu0 0.0
  %1689 = vmatprep.subr.mxu0 0.0
  %1690 = vmatpush1.msra.mxu0 0.0
  %1691 = vmatprep.subr.mxu0 0.0
  %1692 = vmatpush1.msra.mxu0 0.0
  %1693 = vmatprep.subr.mxu0 0.0
  %1694 = vmatpush1.msra.mxu0 0.0
  %1695 = vmatprep.subr.mxu0 0.0
  %1696 = vmatpush1.msra.mxu0 0.0
  %1697 = vmatprep.subr.mxu0 0.0
  %1698 = vmatpush1.msra.mxu0 0.0
  %1699 = vmatprep.subr.mxu0 0.0
  %1700 = vmatpush1.msra.mxu0 0.0
  %1701 = vmatprep.subr.mxu0 0.0
  %1702 = vmatpush1.msra.mxu0 0.0
  %1703 = vmatprep.subr.mxu0 0.0
  %1704 = vmatpush1.msra.mxu0 0.0
  %1705 = vmatprep.subr.mxu0 0.0
  %1706 = vmatpush1.msra.mxu0 0.0
  %1707 = vmatprep.subr.mxu0 0.0
  %1708 = vmatpush1.msra.mxu0 0.0
  %1709 = vmatprep.subr.mxu0 0.0
  %1710 = vmatpush1.msra.mxu0 0.0
  %1711 = vmatprep.subr.mxu0 0.0
  %1712 = vmatpush1.msra.mxu0 0.0
  %1713 = vmatprep.subr.mxu0 0.0
  %1714 = vmatpush1.msra.mxu0 0.0
  %1715 = vmatprep.subr.mxu0 0.0
  %1716 = vmatpush1.msra.mxu0 0.0
  %1717 = vmatprep.subr.mxu0 0.0
  %1718 = vmatpush1.msra.mxu0 0.0
  %1719 = vmatprep.subr.mxu0 0.0
  %1720 = vmatpush1.msra.mxu0 0.0
  %1721 = vmatprep.subr.mxu0 0.0
  %1722 = vmatpush1.msra.mxu0 0.0
  %1723 = vmatprep.subr.mxu0 0.0
  %1724 = vmatpush1.msra.mxu0 0.0
  %1725 = vmatprep.subr.mxu0 0.0
  %1726 = vmatpush1.msra.mxu0 0.0
  %1727 = vmatprep.mubr.f32.mxu0 0.0
  %1728 = vmatmul.mubr.f32.gmra.mrb[0].mxu0 %v1658
  %v1729 = vpop.f32.mrb[0].mxu0
  %v1730 = vadd.f32 0.0, %v1729
  %v1731 = vpop.f32.mrb[0].mxu0
  %1732 = vmatprep.mubr.f32.mxu0 0.0
  %1733 = vmatmul.mubr.f32.gmra.mrb[0].mxu0 %v1661
  %v1734 = vpop.f32.mrb[0].mxu0
  %v1735 = vadd.f32 0.0, %v1734
  %v1736 = vpop.f32.mrb[0].mxu0
  %1737 = vdwg.mxu0
  %1738 = vset.pattern.permute.xlu0 6
  %1739 = vperm.xlu0 %1738, %v335
  %v1740 = vpop.permute.xlu0 %1739
  %1741 = vset.pattern.permute.xlu0 6
  %1742 = vperm.xlu0 %1741, %v336
  %v1743 = vpop.permute.xlu0 %1742
  %vm1744 = vcmp.eq.s32.totalorder %v1740, 1
  %vm1745 = vcmp.eq.s32.totalorder %v1743, 1
  %v1746 = vsel %vm1744, %v1730, -1e+30
  %v1747 = vsel %vm1745, %v1735, -1e+30
  %v1748 = vsel %vm76, %v1746, -inf
  %v1749 = vsel %vm76, %v1747, -inf
  %v1750 = vmax.f32 %v1748, %v1749
  %v1751 = vrot.slane %v1750, 4
  %v1752 = vmax.f32 %v1750, %v1751
  %v1753 = vrot.slane %v1752, 2
  %v1754 = vmax.f32 %v1752, %v1753
  %v1755 = vrot.slane %v1754, 1
  %v1756 = vmax.f32 %v1754, %v1755
  %v1757 = vsub.f32 %v1746, %v1756
  %v1758 = vsub.f32 %v1747, %v1756
  %v1759 = vmul.f32 %v1757, 1.442695
  %v1760 = vpow.pop %v1759
  %v1761 = vmul.f32 %v1758, 1.442695
  %v1762 = vpow.pop %v1761
  %1763 = vset.pattern.permute.xlu0 6
  %1764 = vperm.xlu0 %1763, %v53
  %v1765 = vpop.permute.xlu0 %1764
  %1767 = vset.pattern.permute.xlu0 6
  %1768 = vperm.xlu0 %1767, %v54
  %v1769 = vpop.permute.xlu0 %1768
  %v1771 = vmul.f32 %v1760, %v1765
  %v1772 = vmul.f32 %v1762, %v1769
  %v1773 = vsel %vm76, %v1771, 0.0
  %v1774 = vsel %vm76, %v1772, 0.0
  %v1775 = vadd.f32 %v1773, %v1774
  %v1776 = vrot.slane %v1775, 4
  %v1777 = vadd.f32 %v1775, %v1776
  %v1778 = vrot.slane %v1777, 2
  %v1779 = vadd.f32 %v1777, %v1778
  %v1780 = vrot.slane %v1779, 1
  %v1781 = vadd.f32 %v1779, %v1780
  %v1782 = vrcp.pop %v1781
  %v1783 = vmul.f32 %v1771, %v1782
  %v1784 = vmul.f32 %v1772, %v1782
  %v1786 = vsel %vm76, %v1783, 0
  %v1789 = vsel %vm76, %v1784, 0
  %1791 = vmatprep.subr.mxu0 0.0
  %1792 = vmatpush1.msra.mxu0 %v69
  %1793 = vmatprep.subr.mxu0 0.0
  %1794 = vmatpush1.msra.mxu0 0.0
  %1795 = vmatprep.subr.mxu0 0.0
  %1796 = vmatpush1.msra.mxu0 0.0
  %1797 = vmatprep.subr.mxu0 0.0
  %1798 = vmatpush1.msra.mxu0 0.0
  %1799 = vmatprep.subr.mxu0 0.0
  %1800 = vmatpush1.msra.mxu0 0.0
  %1801 = vmatprep.subr.mxu0 0.0
  %1802 = vmatpush1.msra.mxu0 0.0
  %1803 = vmatprep.subr.mxu0 0.0
  %1804 = vmatpush1.msra.mxu0 0.0
  %1805 = vmatprep.subr.mxu0 0.0
  %1806 = vmatpush1.msra.mxu0 0.0
  %1807 = vmatprep.subr.mxu0 0.0
  %1808 = vmatpush1.msra.mxu0 0.0
  %1809 = vmatprep.subr.mxu0 0.0
  %1810 = vmatpush1.msra.mxu0 0.0
  %1811 = vmatprep.subr.mxu0 0.0
  %1812 = vmatpush1.msra.mxu0 0.0
  %1813 = vmatprep.subr.mxu0 0.0
  %1814 = vmatpush1.msra.mxu0 0.0
  %1815 = vmatprep.subr.mxu0 0.0
  %1816 = vmatpush1.msra.mxu0 0.0
  %1817 = vmatprep.subr.mxu0 0.0
  %1818 = vmatpush1.msra.mxu0 0.0
  %1819 = vmatprep.subr.mxu0 0.0
  %1820 = vmatpush1.msra.mxu0 0.0
  %1821 = vmatprep.subr.mxu0 0.0
  %1822 = vmatpush1.msra.mxu0 0.0
  %1823 = vmatprep.subr.mxu0 0.0
  %1824 = vmatpush1.msra.mxu0 0.0
  %1825 = vmatprep.subr.mxu0 0.0
  %1826 = vmatpush1.msra.mxu0 0.0
  %1827 = vmatprep.subr.mxu0 0.0
  %1828 = vmatpush1.msra.mxu0 0.0
  %1829 = vmatprep.subr.mxu0 0.0
  %1830 = vmatpush1.msra.mxu0 0.0
  %1831 = vmatprep.subr.mxu0 0.0
  %1832 = vmatpush1.msra.mxu0 0.0
  %1833 = vmatprep.subr.mxu0 0.0
  %1834 = vmatpush1.msra.mxu0 0.0
  %1835 = vmatprep.subr.mxu0 0.0
  %1836 = vmatpush1.msra.mxu0 0.0
  %1837 = vmatprep.subr.mxu0 0.0
  %1838 = vmatpush1.msra.mxu0 0.0
  %1839 = vmatprep.subr.mxu0 0.0
  %1840 = vmatpush1.msra.mxu0 0.0
  %1841 = vmatprep.subr.mxu0 0.0
  %1842 = vmatpush1.msra.mxu0 0.0
  %1843 = vmatprep.subr.mxu0 0.0
  %1844 = vmatpush1.msra.mxu0 0.0
  %1845 = vmatprep.subr.mxu0 0.0
  %1846 = vmatpush1.msra.mxu0 0.0
  %1847 = vmatprep.subr.mxu0 0.0
  %1848 = vmatpush1.msra.mxu0 0.0
  %1849 = vmatprep.subr.mxu0 0.0
  %1850 = vmatpush1.msra.mxu0 0.0
  %1851 = vmatprep.subr.mxu0 0.0
  %1852 = vmatpush1.msra.mxu0 0.0
  %1853 = vmatprep.subr.mxu0 0.0
  %1854 = vmatpush1.msra.mxu0 0.0
  %1855 = vmatprep.mubr.f32.mxu0 0.0
  %1856 = vmatmul.mubr.f32.gmra.mrb[0].mxu0 %v1786
  %v1857 = vpop.f32.mrb[0].mxu0
  %v1858 = vadd.f32 0.0, %v1857
  %v1859 = vpop.f32.mrb[0].mxu0
  %1860 = vmatprep.mubr.f32.mxu0 0.0
  %1861 = vmatmul.mubr.f32.gmra.mrb[0].mxu0 %v1789
  %v1862 = vpop.f32.mrb[0].mxu0
  %v1863 = vadd.f32 0.0, %v1862
  %v1864 = vpop.f32.mrb[0].mxu0
  %1865 = vdwg.mxu0
  %v1866 = vmul.f32 %v1858, %v150
  %v1867 = vmul.f32 %v1863, %v155
  %v1868 = vsel %vm251, %v1866, 0.0
  %v1869 = vsel %vm251, %v1867, 0.0
  %v1870 = vadd.f32 %v1868, %v1869
  %v1871 = vrot.slane %v1870, 4
  %v1872 = vadd.f32 %v1870, %v1871
  %v1873 = vrot.slane %v1872, 2
  %v1874 = vadd.f32 %v1872, %v1873
  %v1875 = vrot.slane %v1874, 1
  %v1876 = vadd.f32 %v1874, %v1875
  %1877 = vst.msk [vmem:[#allocation2 + $0x6] sm:$0x1] %vm478, %v1876
  %v1878 = vlaneseq
  %v1879 = vshrl.u32 %v1878, 7
  %v1880 = vsub.s32 7, %v1879
  %v1881 = vrot.slane %v231, %v1880
  %v1882 = vadd.f32 %v1881, %v150
  %v1883 = vadd.f32 %v1881, %v155
  %vm1884 = vcmp.ge.f32.partialorder %v1882, 0.0
  %vm1885 = vcmp.ge.f32.partialorder %v1883, 0.0
  %v1886 = vmul.f32 %v1882, 0.2
  %v1887 = vmul.f32 %v1883, 0.2
  %v1888 = vsel %vm1884, %v1882, %v1886
  %v1889 = vsel %vm1885, %v1883, %v1887
  %v1891 = vsel %vm251, %v1888, 0
  %v1894 = vsel %vm251, %v1889, 0
  %1896 = vmatprep.subr.mxu0 0.0
  %1897 = vmatpush1.msra.mxu0 %v61
  %1898 = vmatprep.subr.mxu0 0.0
  %1899 = vmatpush1.msra.mxu0 %v62
  %1900 = vmatprep.subr.mxu0 0.0
  %1901 = vmatpush1.msra.mxu0 %v63
  %1902 = vmatprep.subr.mxu0 0.0
  %1903 = vmatpush1.msra.mxu0 %v64
  %1904 = vmatprep.subr.mxu0 0.0
  %1905 = vmatpush1.msra.mxu0 %v65
  %1906 = vmatprep.subr.mxu0 0.0
  %1907 = vmatpush1.msra.mxu0 %v66
  %1908 = vmatprep.subr.mxu0 0.0
  %1909 = vmatpush1.msra.mxu0 %v67
  %1910 = vmatprep.subr.mxu0 0.0
  %1911 = vmatpush1.msra.mxu0 %v68
  %1912 = vmatprep.subr.mxu0 0.0
  %1913 = vmatpush1.msra.mxu0 0.0
  %1914 = vmatprep.subr.mxu0 0.0
  %1915 = vmatpush1.msra.mxu0 0.0
  %1916 = vmatprep.subr.mxu0 0.0
  %1917 = vmatpush1.msra.mxu0 0.0
  %1918 = vmatprep.subr.mxu0 0.0
  %1919 = vmatpush1.msra.mxu0 0.0
  %1920 = vmatprep.subr.mxu0 0.0
  %1921 = vmatpush1.msra.mxu0 0.0
  %1922 = vmatprep.subr.mxu0 0.0
  %1923 = vmatpush1.msra.mxu0 0.0
  %1924 = vmatprep.subr.mxu0 0.0
  %1925 = vmatpush1.msra.mxu0 0.0
  %1926 = vmatprep.subr.mxu0 0.0
  %1927 = vmatpush1.msra.mxu0 0.0
  %1928 = vmatprep.subr.mxu0 0.0
  %1929 = vmatpush1.msra.mxu0 0.0
  %1930 = vmatprep.subr.mxu0 0.0
  %1931 = vmatpush1.msra.mxu0 0.0
  %1932 = vmatprep.subr.mxu0 0.0
  %1933 = vmatpush1.msra.mxu0 0.0
  %1934 = vmatprep.subr.mxu0 0.0
  %1935 = vmatpush1.msra.mxu0 0.0
  %1936 = vmatprep.subr.mxu0 0.0
  %1937 = vmatpush1.msra.mxu0 0.0
  %1938 = vmatprep.subr.mxu0 0.0
  %1939 = vmatpush1.msra.mxu0 0.0
  %1940 = vmatprep.subr.mxu0 0.0
  %1941 = vmatpush1.msra.mxu0 0.0
  %1942 = vmatprep.subr.mxu0 0.0
  %1943 = vmatpush1.msra.mxu0 0.0
  %1944 = vmatprep.subr.mxu0 0.0
  %1945 = vmatpush1.msra.mxu0 0.0
  %1946 = vmatprep.subr.mxu0 0.0
  %1947 = vmatpush1.msra.mxu0 0.0
  %1948 = vmatprep.subr.mxu0 0.0
  %1949 = vmatpush1.msra.mxu0 0.0
  %1950 = vmatprep.subr.mxu0 0.0
  %1951 = vmatpush1.msra.mxu0 0.0
  %1952 = vmatprep.subr.mxu0 0.0
  %1953 = vmatpush1.msra.mxu0 0.0
  %1954 = vmatprep.subr.mxu0 0.0
  %1955 = vmatpush1.msra.mxu0 0.0
  %1956 = vmatprep.subr.mxu0 0.0
  %1957 = vmatpush1.msra.mxu0 0.0
  %1958 = vmatprep.subr.mxu0 0.0
  %1959 = vmatpush1.msra.mxu0 0.0
  %1960 = vmatprep.mubr.f32.mxu0 0.0
  %1961 = vmatmul.mubr.f32.gmra.mrb[0].mxu0 %v1891
  %v1962 = vpop.f32.mrb[0].mxu0
  %v1963 = vadd.f32 0.0, %v1962
  %v1964 = vpop.f32.mrb[0].mxu0
  %1965 = vmatprep.mubr.f32.mxu0 0.0
  %1966 = vmatmul.mubr.f32.gmra.mrb[0].mxu0 %v1894
  %v1967 = vpop.f32.mrb[0].mxu0
  %v1968 = vadd.f32 0.0, %v1967
  %v1969 = vpop.f32.mrb[0].mxu0
  %1970 = vdwg.mxu0
  %1971 = vset.pattern.permute.xlu0 7
  %1972 = vperm.xlu0 %1971, %v335
  %v1973 = vpop.permute.xlu0 %1972
  %1974 = vset.pattern.permute.xlu0 7
  %1975 = vperm.xlu0 %1974, %v336
  %v1976 = vpop.permute.xlu0 %1975
  %vm1977 = vcmp.eq.s32.totalorder %v1973, 1
  %vm1978 = vcmp.eq.s32.totalorder %v1976, 1
  %v1979 = vsel %vm1977, %v1963, -1e+30
  %v1980 = vsel %vm1978, %v1968, -1e+30
  %v1981 = vsel %vm76, %v1979, -inf
  %v1982 = vsel %vm76, %v1980, -inf
  %v1983 = vmax.f32 %v1981, %v1982
  %v1984 = vrot.slane %v1983, 4
  %v1985 = vmax.f32 %v1983, %v1984
  %v1986 = vrot.slane %v1985, 2
  %v1987 = vmax.f32 %v1985, %v1986
  %v1988 = vrot.slane %v1987, 1
  %v1989 = vmax.f32 %v1987, %v1988
  %v1990 = vsub.f32 %v1979, %v1989
  %v1991 = vsub.f32 %v1980, %v1989
  %v1992 = vmul.f32 %v1990, 1.442695
  %v1993 = vpow.pop %v1992
  %v1994 = vmul.f32 %v1991, 1.442695
  %v1995 = vpow.pop %v1994
  %1996 = vset.pattern.permute.xlu0 7
  %1997 = vperm.xlu0 %1996, %v53
  %v1998 = vpop.permute.xlu0 %1997
  %2000 = vset.pattern.permute.xlu0 7
  %2001 = vperm.xlu0 %2000, %v54
  %v2002 = vpop.permute.xlu0 %2001
  %v2004 = vmul.f32 %v1993, %v1998
  %v2005 = vmul.f32 %v1995, %v2002
  %v2006 = vsel %vm76, %v2004, 0.0
  %v2007 = vsel %vm76, %v2005, 0.0
  %v2008 = vadd.f32 %v2006, %v2007
  %v2009 = vrot.slane %v2008, 4
  %v2010 = vadd.f32 %v2008, %v2009
  %v2011 = vrot.slane %v2010, 2
  %v2012 = vadd.f32 %v2010, %v2011
  %v2013 = vrot.slane %v2012, 1
  %v2014 = vadd.f32 %v2012, %v2013
  %v2015 = vrcp.pop %v2014
  %v2016 = vmul.f32 %v2004, %v2015
  %v2017 = vmul.f32 %v2005, %v2015
  %v2019 = vsel %vm76, %v2016, 0
  %v2022 = vsel %vm76, %v2017, 0
  %2024 = vmatprep.subr.mxu0 0.0
  %2025 = vmatpush1.msra.mxu0 %v69
  %2026 = vmatprep.subr.mxu0 0.0
  %2027 = vmatpush1.msra.mxu0 0.0
  %2028 = vmatprep.subr.mxu0 0.0
  %2029 = vmatpush1.msra.mxu0 0.0
  %2030 = vmatprep.subr.mxu0 0.0
  %2031 = vmatpush1.msra.mxu0 0.0
  %2032 = vmatprep.subr.mxu0 0.0
  %2033 = vmatpush1.msra.mxu0 0.0
  %2034 = vmatprep.subr.mxu0 0.0
  %2035 = vmatpush1.msra.mxu0 0.0
  %2036 = vmatprep.subr.mxu0 0.0
  %2037 = vmatpush1.msra.mxu0 0.0
  %2038 = vmatprep.subr.mxu0 0.0
  %2039 = vmatpush1.msra.mxu0 0.0
  %2040 = vmatprep.subr.mxu0 0.0
  %2041 = vmatpush1.msra.mxu0 0.0
  %2042 = vmatprep.subr.mxu0 0.0
  %2043 = vmatpush1.msra.mxu0 0.0
  %2044 = vmatprep.subr.mxu0 0.0
  %2045 = vmatpush1.msra.mxu0 0.0
  %2046 = vmatprep.subr.mxu0 0.0
  %2047 = vmatpush1.msra.mxu0 0.0
  %2048 = vmatprep.subr.mxu0 0.0
  %2049 = vmatpush1.msra.mxu0 0.0
  %2050 = vmatprep.subr.mxu0 0.0
  %2051 = vmatpush1.msra.mxu0 0.0
  %2052 = vmatprep.subr.mxu0 0.0
  %2053 = vmatpush1.msra.mxu0 0.0
  %2054 = vmatprep.subr.mxu0 0.0
  %2055 = vmatpush1.msra.mxu0 0.0
  %2056 = vmatprep.subr.mxu0 0.0
  %2057 = vmatpush1.msra.mxu0 0.0
  %2058 = vmatprep.subr.mxu0 0.0
  %2059 = vmatpush1.msra.mxu0 0.0
  %2060 = vmatprep.subr.mxu0 0.0
  %2061 = vmatpush1.msra.mxu0 0.0
  %2062 = vmatprep.subr.mxu0 0.0
  %2063 = vmatpush1.msra.mxu0 0.0
  %2064 = vmatprep.subr.mxu0 0.0
  %2065 = vmatpush1.msra.mxu0 0.0
  %2066 = vmatprep.subr.mxu0 0.0
  %2067 = vmatpush1.msra.mxu0 0.0
  %2068 = vmatprep.subr.mxu0 0.0
  %2069 = vmatpush1.msra.mxu0 0.0
  %2070 = vmatprep.subr.mxu0 0.0
  %2071 = vmatpush1.msra.mxu0 0.0
  %2072 = vmatprep.subr.mxu0 0.0
  %2073 = vmatpush1.msra.mxu0 0.0
  %2074 = vmatprep.subr.mxu0 0.0
  %2075 = vmatpush1.msra.mxu0 0.0
  %2076 = vmatprep.subr.mxu0 0.0
  %2077 = vmatpush1.msra.mxu0 0.0
  %2078 = vmatprep.subr.mxu0 0.0
  %2079 = vmatpush1.msra.mxu0 0.0
  %2080 = vmatprep.subr.mxu0 0.0
  %2081 = vmatpush1.msra.mxu0 0.0
  %2082 = vmatprep.subr.mxu0 0.0
  %2083 = vmatpush1.msra.mxu0 0.0
  %2084 = vmatprep.subr.mxu0 0.0
  %2085 = vmatpush1.msra.mxu0 0.0
  %2086 = vmatprep.subr.mxu0 0.0
  %2087 = vmatpush1.msra.mxu0 0.0
  %2088 = vmatprep.mubr.f32.mxu0 0.0
  %2089 = vmatmul.mubr.f32.gmra.mrb[0].mxu0 %v2019
  %v2090 = vpop.f32.mrb[0].mxu0
  %v2091 = vadd.f32 0.0, %v2090
  %v2092 = vpop.f32.mrb[0].mxu0
  %2093 = vmatprep.mubr.f32.mxu0 0.0
  %2094 = vmatmul.mubr.f32.gmra.mrb[0].mxu0 %v2022
  %v2095 = vpop.f32.mrb[0].mxu0
  %v2096 = vadd.f32 0.0, %v2095
  %v2097 = vpop.f32.mrb[0].mxu0
  %2098 = vdwg.mxu0
  %v2099 = vmul.f32 %v2091, %v150
  %v2100 = vmul.f32 %v2096, %v155
  %v2101 = vsel %vm251, %v2099, 0.0
  %v2102 = vsel %vm251, %v2100, 0.0
  %v2103 = vadd.f32 %v2101, %v2102
  %v2104 = vrot.slane %v2103, 4
  %v2105 = vadd.f32 %v2103, %v2104
  %v2106 = vrot.slane %v2105, 2
  %v2107 = vadd.f32 %v2105, %v2106
  %v2108 = vrot.slane %v2107, 1
  %v2109 = vadd.f32 %v2107, %v2108
  %2110 = vst.msk [vmem:[#allocation2 + $0x7] sm:$0x1] %vm478, %v2109
  %v2111 = vlaneseq
  %v2112 = vshrl.u32 %v2111, 7
  %v2113 = vsub.s32 0, %v2112
  %v2114 = vrot.slane %v236, %v2113
  %v2115 = vadd.f32 %v2114, %v150
  %v2116 = vadd.f32 %v2114, %v155
  %vm2117 = vcmp.ge.f32.partialorder %v2115, 0.0
  %vm2118 = vcmp.ge.f32.partialorder %v2116, 0.0
  %v2119 = vmul.f32 %v2115, 0.2
  %v2120 = vmul.f32 %v2116, 0.2
  %v2121 = vsel %vm2117, %v2115, %v2119
  %v2122 = vsel %vm2118, %v2116, %v2120
  %v2124 = vsel %vm251, %v2121, 0
  %v2127 = vsel %vm251, %v2122, 0
  %2129 = vmatprep.subr.mxu0 0.0
  %2130 = vmatpush1.msra.mxu0 %v61
  %2131 = vmatprep.subr.mxu0 0.0
  %2132 = vmatpush1.msra.mxu0 %v62
  %2133 = vmatprep.subr.mxu0 0.0
  %2134 = vmatpush1.msra.mxu0 %v63
  %2135 = vmatprep.subr.mxu0 0.0
  %2136 = vmatpush1.msra.mxu0 %v64
  %2137 = vmatprep.subr.mxu0 0.0
  %2138 = vmatpush1.msra.mxu0 %v65
  %2139 = vmatprep.subr.mxu0 0.0
  %2140 = vmatpush1.msra.mxu0 %v66
  %2141 = vmatprep.subr.mxu0 0.0
  %2142 = vmatpush1.msra.mxu0 %v67
  %2143 = vmatprep.subr.mxu0 0.0
  %2144 = vmatpush1.msra.mxu0 %v68
  %2145 = vmatprep.subr.mxu0 0.0
  %2146 = vmatpush1.msra.mxu0 0.0
  %2147 = vmatprep.subr.mxu0 0.0
  %2148 = vmatpush1.msra.mxu0 0.0
  %2149 = vmatprep.subr.mxu0 0.0
  %2150 = vmatpush1.msra.mxu0 0.0
  %2151 = vmatprep.subr.mxu0 0.0
  %2152 = vmatpush1.msra.mxu0 0.0
  %2153 = vmatprep.subr.mxu0 0.0
  %2154 = vmatpush1.msra.mxu0 0.0
  %2155 = vmatprep.subr.mxu0 0.0
  %2156 = vmatpush1.msra.mxu0 0.0
  %2157 = vmatprep.subr.mxu0 0.0
  %2158 = vmatpush1.msra.mxu0 0.0
  %2159 = vmatprep.subr.mxu0 0.0
  %2160 = vmatpush1.msra.mxu0 0.0
  %2161 = vmatprep.subr.mxu0 0.0
  %2162 = vmatpush1.msra.mxu0 0.0
  %2163 = vmatprep.subr.mxu0 0.0
  %2164 = vmatpush1.msra.mxu0 0.0
  %2165 = vmatprep.subr.mxu0 0.0
  %2166 = vmatpush1.msra.mxu0 0.0
  %2167 = vmatprep.subr.mxu0 0.0
  %2168 = vmatpush1.msra.mxu0 0.0
  %2169 = vmatprep.subr.mxu0 0.0
  %2170 = vmatpush1.msra.mxu0 0.0
  %2171 = vmatprep.subr.mxu0 0.0
  %2172 = vmatpush1.msra.mxu0 0.0
  %2173 = vmatprep.subr.mxu0 0.0
  %2174 = vmatpush1.msra.mxu0 0.0
  %2175 = vmatprep.subr.mxu0 0.0
  %2176 = vmatpush1.msra.mxu0 0.0
  %2177 = vmatprep.subr.mxu0 0.0
  %2178 = vmatpush1.msra.mxu0 0.0
  %2179 = vmatprep.subr.mxu0 0.0
  %2180 = vmatpush1.msra.mxu0 0.0
  %2181 = vmatprep.subr.mxu0 0.0
  %2182 = vmatpush1.msra.mxu0 0.0
  %2183 = vmatprep.subr.mxu0 0.0
  %2184 = vmatpush1.msra.mxu0 0.0
  %2185 = vmatprep.subr.mxu0 0.0
  %2186 = vmatpush1.msra.mxu0 0.0
  %2187 = vmatprep.subr.mxu0 0.0
  %2188 = vmatpush1.msra.mxu0 0.0
  %2189 = vmatprep.subr.mxu0 0.0
  %2190 = vmatpush1.msra.mxu0 0.0
  %2191 = vmatprep.subr.mxu0 0.0
  %2192 = vmatpush1.msra.mxu0 0.0
  %2193 = vmatprep.mubr.f32.mxu0 0.0
  %2194 = vmatmul.mubr.f32.gmra.mrb[0].mxu0 %v2124
  %v2195 = vpop.f32.mrb[0].mxu0
  %v2196 = vadd.f32 0.0, %v2195
  %v2197 = vpop.f32.mrb[0].mxu0
  %2198 = vmatprep.mubr.f32.mxu0 0.0
  %2199 = vmatmul.mubr.f32.gmra.mrb[0].mxu0 %v2127
  %v2200 = vpop.f32.mrb[0].mxu0
  %v2201 = vadd.f32 0.0, %v2200
  %v2202 = vpop.f32.mrb[0].mxu0
  %2203 = vdwg.mxu0
  %2204 = vset.pattern.permute.xlu0 8
  %2205 = vperm.xlu0 %2204, %v335
  %v2206 = vpop.permute.xlu0 %2205
  %2207 = vset.pattern.permute.xlu0 8
  %2208 = vperm.xlu0 %2207, %v336
  %v2209 = vpop.permute.xlu0 %2208
  %vm2210 = vcmp.eq.s32.totalorder %v2206, 1
  %vm2211 = vcmp.eq.s32.totalorder %v2209, 1
  %v2212 = vsel %vm2210, %v2196, -1e+30
  %v2213 = vsel %vm2211, %v2201, -1e+30
  %v2214 = vsel %vm76, %v2212, -inf
  %v2215 = vsel %vm76, %v2213, -inf
  %v2216 = vmax.f32 %v2214, %v2215
  %v2217 = vrot.slane %v2216, 4
  %v2218 = vmax.f32 %v2216, %v2217
  %v2219 = vrot.slane %v2218, 2
  %v2220 = vmax.f32 %v2218, %v2219
  %v2221 = vrot.slane %v2220, 1
  %v2222 = vmax.f32 %v2220, %v2221
  %v2223 = vsub.f32 %v2212, %v2222
  %v2224 = vsub.f32 %v2213, %v2222
  %v2225 = vmul.f32 %v2223, 1.442695
  %v2226 = vpow.pop %v2225
  %v2227 = vmul.f32 %v2224, 1.442695
  %v2228 = vpow.pop %v2227
  %2229 = vset.pattern.permute.xlu0 8
  %2230 = vperm.xlu0 %2229, %v53
  %v2231 = vpop.permute.xlu0 %2230
  %2233 = vset.pattern.permute.xlu0 8
  %2234 = vperm.xlu0 %2233, %v54
  %v2235 = vpop.permute.xlu0 %2234
  %v2237 = vmul.f32 %v2226, %v2231
  %v2238 = vmul.f32 %v2228, %v2235
  %v2239 = vsel %vm76, %v2237, 0.0
  %v2240 = vsel %vm76, %v2238, 0.0
  %v2241 = vadd.f32 %v2239, %v2240
  %v2242 = vrot.slane %v2241, 4
  %v2243 = vadd.f32 %v2241, %v2242
  %v2244 = vrot.slane %v2243, 2
  %v2245 = vadd.f32 %v2243, %v2244
  %v2246 = vrot.slane %v2245, 1
  %v2247 = vadd.f32 %v2245, %v2246
  %v2248 = vrcp.pop %v2247
  %v2249 = vmul.f32 %v2237, %v2248
  %v2250 = vmul.f32 %v2238, %v2248
  %v2252 = vsel %vm76, %v2249, 0
  %v2255 = vsel %vm76, %v2250, 0
  %2257 = vmatprep.subr.mxu0 0.0
  %2258 = vmatpush1.msra.mxu0 %v69
  %2259 = vmatprep.subr.mxu0 0.0
  %2260 = vmatpush1.msra.mxu0 0.0
  %2261 = vmatprep.subr.mxu0 0.0
  %2262 = vmatpush1.msra.mxu0 0.0
  %2263 = vmatprep.subr.mxu0 0.0
  %2264 = vmatpush1.msra.mxu0 0.0
  %2265 = vmatprep.subr.mxu0 0.0
  %2266 = vmatpush1.msra.mxu0 0.0
  %2267 = vmatprep.subr.mxu0 0.0
  %2268 = vmatpush1.msra.mxu0 0.0
  %2269 = vmatprep.subr.mxu0 0.0
  %2270 = vmatpush1.msra.mxu0 0.0
  %2271 = vmatprep.subr.mxu0 0.0
  %2272 = vmatpush1.msra.mxu0 0.0
  %2273 = vmatprep.subr.mxu0 0.0
  %2274 = vmatpush1.msra.mxu0 0.0
  %2275 = vmatprep.subr.mxu0 0.0
  %2276 = vmatpush1.msra.mxu0 0.0
  %2277 = vmatprep.subr.mxu0 0.0
  %2278 = vmatpush1.msra.mxu0 0.0
  %2279 = vmatprep.subr.mxu0 0.0
  %2280 = vmatpush1.msra.mxu0 0.0
  %2281 = vmatprep.subr.mxu0 0.0
  %2282 = vmatpush1.msra.mxu0 0.0
  %2283 = vmatprep.subr.mxu0 0.0
  %2284 = vmatpush1.msra.mxu0 0.0
  %2285 = vmatprep.subr.mxu0 0.0
  %2286 = vmatpush1.msra.mxu0 0.0
  %2287 = vmatprep.subr.mxu0 0.0
  %2288 = vmatpush1.msra.mxu0 0.0
  %2289 = vmatprep.subr.mxu0 0.0
  %2290 = vmatpush1.msra.mxu0 0.0
  %2291 = vmatprep.subr.mxu0 0.0
  %2292 = vmatpush1.msra.mxu0 0.0
  %2293 = vmatprep.subr.mxu0 0.0
  %2294 = vmatpush1.msra.mxu0 0.0
  %2295 = vmatprep.subr.mxu0 0.0
  %2296 = vmatpush1.msra.mxu0 0.0
  %2297 = vmatprep.subr.mxu0 0.0
  %2298 = vmatpush1.msra.mxu0 0.0
  %2299 = vmatprep.subr.mxu0 0.0
  %2300 = vmatpush1.msra.mxu0 0.0
  %2301 = vmatprep.subr.mxu0 0.0
  %2302 = vmatpush1.msra.mxu0 0.0
  %2303 = vmatprep.subr.mxu0 0.0
  %2304 = vmatpush1.msra.mxu0 0.0
  %2305 = vmatprep.subr.mxu0 0.0
  %2306 = vmatpush1.msra.mxu0 0.0
  %2307 = vmatprep.subr.mxu0 0.0
  %2308 = vmatpush1.msra.mxu0 0.0
  %2309 = vmatprep.subr.mxu0 0.0
  %2310 = vmatpush1.msra.mxu0 0.0
  %2311 = vmatprep.subr.mxu0 0.0
  %2312 = vmatpush1.msra.mxu0 0.0
  %2313 = vmatprep.subr.mxu0 0.0
  %2314 = vmatpush1.msra.mxu0 0.0
  %2315 = vmatprep.subr.mxu0 0.0
  %2316 = vmatpush1.msra.mxu0 0.0
  %2317 = vmatprep.subr.mxu0 0.0
  %2318 = vmatpush1.msra.mxu0 0.0
  %2319 = vmatprep.subr.mxu0 0.0
  %2320 = vmatpush1.msra.mxu0 0.0
  %2321 = vmatprep.mubr.f32.mxu0 0.0
  %2322 = vmatmul.mubr.f32.gmra.mrb[0].mxu0 %v2252
  %v2323 = vpop.f32.mrb[0].mxu0
  %v2324 = vadd.f32 0.0, %v2323
  %v2325 = vpop.f32.mrb[0].mxu0
  %2326 = vmatprep.mubr.f32.mxu0 0.0
  %2327 = vmatmul.mubr.f32.gmra.mrb[0].mxu0 %v2255
  %v2328 = vpop.f32.mrb[0].mxu0
  %v2329 = vadd.f32 0.0, %v2328
  %v2330 = vpop.f32.mrb[0].mxu0
  %2331 = vdwg.mxu0
  %v2332 = vmul.f32 %v2324, %v150
  %v2333 = vmul.f32 %v2329, %v155
  %v2334 = vsel %vm251, %v2332, 0.0
  %v2335 = vsel %vm251, %v2333, 0.0
  %v2336 = vadd.f32 %v2334, %v2335
  %v2337 = vrot.slane %v2336, 4
  %v2338 = vadd.f32 %v2336, %v2337
  %v2339 = vrot.slane %v2338, 2
  %v2340 = vadd.f32 %v2338, %v2339
  %v2341 = vrot.slane %v2340, 1
  %v2342 = vadd.f32 %v2340, %v2341
  %2343 = vst.msk [vmem:[#allocation2 + $0x8] sm:$0x1] %vm478, %v2342
  %v2344 = vlaneseq
  %v2345 = vshrl.u32 %v2344, 7
  %v2346 = vsub.s32 1, %v2345
  %v2347 = vrot.slane %v236, %v2346
  %v2348 = vadd.f32 %v2347, %v150
  %v2349 = vadd.f32 %v2347, %v155
  %vm2350 = vcmp.ge.f32.partialorder %v2348, 0.0
  %vm2351 = vcmp.ge.f32.partialorder %v2349, 0.0
  %v2352 = vmul.f32 %v2348, 0.2
  %v2353 = vmul.f32 %v2349, 0.2
  %v2354 = vsel %vm2350, %v2348, %v2352
  %v2355 = vsel %vm2351, %v2349, %v2353
  %v2357 = vsel %vm251, %v2354, 0
  %v2360 = vsel %vm251, %v2355, 0
  %2362 = vmatprep.subr.mxu0 0.0
  %2363 = vmatpush1.msra.mxu0 %v61
  %2364 = vmatprep.subr.mxu0 0.0
  %2365 = vmatpush1.msra.mxu0 %v62
  %2366 = vmatprep.subr.mxu0 0.0
  %2367 = vmatpush1.msra.mxu0 %v63
  %2368 = vmatprep.subr.mxu0 0.0
  %2369 = vmatpush1.msra.mxu0 %v64
  %2370 = vmatprep.subr.mxu0 0.0
  %2371 = vmatpush1.msra.mxu0 %v65
  %2372 = vmatprep.subr.mxu0 0.0
  %2373 = vmatpush1.msra.mxu0 %v66
  %2374 = vmatprep.subr.mxu0 0.0
  %2375 = vmatpush1.msra.mxu0 %v67
  %2376 = vmatprep.subr.mxu0 0.0
  %2377 = vmatpush1.msra.mxu0 %v68
  %2378 = vmatprep.subr.mxu0 0.0
  %2379 = vmatpush1.msra.mxu0 0.0
  %2380 = vmatprep.subr.mxu0 0.0
  %2381 = vmatpush1.msra.mxu0 0.0
  %2382 = vmatprep.subr.mxu0 0.0
  %2383 = vmatpush1.msra.mxu0 0.0
  %2384 = vmatprep.subr.mxu0 0.0
  %2385 = vmatpush1.msra.mxu0 0.0
  %2386 = vmatprep.subr.mxu0 0.0
  %2387 = vmatpush1.msra.mxu0 0.0
  %2388 = vmatprep.subr.mxu0 0.0
  %2389 = vmatpush1.msra.mxu0 0.0
  %2390 = vmatprep.subr.mxu0 0.0
  %2391 = vmatpush1.msra.mxu0 0.0
  %2392 = vmatprep.subr.mxu0 0.0
  %2393 = vmatpush1.msra.mxu0 0.0
  %2394 = vmatprep.subr.mxu0 0.0
  %2395 = vmatpush1.msra.mxu0 0.0
  %2396 = vmatprep.subr.mxu0 0.0
  %2397 = vmatpush1.msra.mxu0 0.0
  %2398 = vmatprep.subr.mxu0 0.0
  %2399 = vmatpush1.msra.mxu0 0.0
  %2400 = vmatprep.subr.mxu0 0.0
  %2401 = vmatpush1.msra.mxu0 0.0
  %2402 = vmatprep.subr.mxu0 0.0
  %2403 = vmatpush1.msra.mxu0 0.0
  %2404 = vmatprep.subr.mxu0 0.0
  %2405 = vmatpush1.msra.mxu0 0.0
  %2406 = vmatprep.subr.mxu0 0.0
  %2407 = vmatpush1.msra.mxu0 0.0
  %2408 = vmatprep.subr.mxu0 0.0
  %2409 = vmatpush1.msra.mxu0 0.0
  %2410 = vmatprep.subr.mxu0 0.0
  %2411 = vmatpush1.msra.mxu0 0.0
  %2412 = vmatprep.subr.mxu0 0.0
  %2413 = vmatpush1.msra.mxu0 0.0
  %2414 = vmatprep.subr.mxu0 0.0
  %2415 = vmatpush1.msra.mxu0 0.0
  %2416 = vmatprep.subr.mxu0 0.0
  %2417 = vmatpush1.msra.mxu0 0.0
  %2418 = vmatprep.subr.mxu0 0.0
  %2419 = vmatpush1.msra.mxu0 0.0
  %2420 = vmatprep.subr.mxu0 0.0
  %2421 = vmatpush1.msra.mxu0 0.0
  %2422 = vmatprep.subr.mxu0 0.0
  %2423 = vmatpush1.msra.mxu0 0.0
  %2424 = vmatprep.subr.mxu0 0.0
  %2425 = vmatpush1.msra.mxu0 0.0
  %2426 = vmatprep.mubr.f32.mxu0 0.0
  %2427 = vmatmul.mubr.f32.gmra.mrb[0].mxu0 %v2357
  %v2428 = vpop.f32.mrb[0].mxu0
  %v2429 = vadd.f32 0.0, %v2428
  %v2430 = vpop.f32.mrb[0].mxu0
  %2431 = vmatprep.mubr.f32.mxu0 0.0
  %2432 = vmatmul.mubr.f32.gmra.mrb[0].mxu0 %v2360
  %v2433 = vpop.f32.mrb[0].mxu0
  %v2434 = vadd.f32 0.0, %v2433
  %v2435 = vpop.f32.mrb[0].mxu0
  %2436 = vdwg.mxu0
  %2437 = vset.pattern.permute.xlu0 9
  %2438 = vperm.xlu0 %2437, %v335
  %v2439 = vpop.permute.xlu0 %2438
  %2440 = vset.pattern.permute.xlu0 9
  %2441 = vperm.xlu0 %2440, %v336
  %v2442 = vpop.permute.xlu0 %2441
  %vm2443 = vcmp.eq.s32.totalorder %v2439, 1
  %vm2444 = vcmp.eq.s32.totalorder %v2442, 1
  %v2445 = vsel %vm2443, %v2429, -1e+30
  %v2446 = vsel %vm2444, %v2434, -1e+30
  %v2447 = vsel %vm76, %v2445, -inf
  %v2448 = vsel %vm76, %v2446, -inf
  %v2449 = vmax.f32 %v2447, %v2448
  %v2450 = vrot.slane %v2449, 4
  %v2451 = vmax.f32 %v2449, %v2450
  %v2452 = vrot.slane %v2451, 2
  %v2453 = vmax.f32 %v2451, %v2452
  %v2454 = vrot.slane %v2453, 1
  %v2455 = vmax.f32 %v2453, %v2454
  %v2456 = vsub.f32 %v2445, %v2455
  %v2457 = vsub.f32 %v2446, %v2455
  %v2458 = vmul.f32 %v2456, 1.442695
  %v2459 = vpow.pop %v2458
  %v2460 = vmul.f32 %v2457, 1.442695
  %v2461 = vpow.pop %v2460
  %2462 = vset.pattern.permute.xlu0 9
  %2463 = vperm.xlu0 %2462, %v53
  %v2464 = vpop.permute.xlu0 %2463
  %2466 = vset.pattern.permute.xlu0 9
  %2467 = vperm.xlu0 %2466, %v54
  %v2468 = vpop.permute.xlu0 %2467
  %v2470 = vmul.f32 %v2459, %v2464
  %v2471 = vmul.f32 %v2461, %v2468
  %v2472 = vsel %vm76, %v2470, 0.0
  %v2473 = vsel %vm76, %v2471, 0.0
  %v2474 = vadd.f32 %v2472, %v2473
  %v2475 = vrot.slane %v2474, 4
  %v2476 = vadd.f32 %v2474, %v2475
  %v2477 = vrot.slane %v2476, 2
  %v2478 = vadd.f32 %v2476, %v2477
  %v2479 = vrot.slane %v2478, 1
  %v2480 = vadd.f32 %v2478, %v2479
  %v2481 = vrcp.pop %v2480
  %v2482 = vmul.f32 %v2470, %v2481
  %v2483 = vmul.f32 %v2471, %v2481
  %v2485 = vsel %vm76, %v2482, 0
  %v2488 = vsel %vm76, %v2483, 0
  %2490 = vmatprep.subr.mxu0 0.0
  %2491 = vmatpush1.msra.mxu0 %v69
  %2492 = vmatprep.subr.mxu0 0.0
  %2493 = vmatpush1.msra.mxu0 0.0
  %2494 = vmatprep.subr.mxu0 0.0
  %2495 = vmatpush1.msra.mxu0 0.0
  %2496 = vmatprep.subr.mxu0 0.0
  %2497 = vmatpush1.msra.mxu0 0.0
  %2498 = vmatprep.subr.mxu0 0.0
  %2499 = vmatpush1.msra.mxu0 0.0
  %2500 = vmatprep.subr.mxu0 0.0
  %2501 = vmatpush1.msra.mxu0 0.0
  %2502 = vmatprep.subr.mxu0 0.0
  %2503 = vmatpush1.msra.mxu0 0.0
  %2504 = vmatprep.subr.mxu0 0.0
  %2505 = vmatpush1.msra.mxu0 0.0
  %2506 = vmatprep.subr.mxu0 0.0
  %2507 = vmatpush1.msra.mxu0 0.0
  %2508 = vmatprep.subr.mxu0 0.0
  %2509 = vmatpush1.msra.mxu0 0.0
  %2510 = vmatprep.subr.mxu0 0.0
  %2511 = vmatpush1.msra.mxu0 0.0
  %2512 = vmatprep.subr.mxu0 0.0
  %2513 = vmatpush1.msra.mxu0 0.0
  %2514 = vmatprep.subr.mxu0 0.0
  %2515 = vmatpush1.msra.mxu0 0.0
  %2516 = vmatprep.subr.mxu0 0.0
  %2517 = vmatpush1.msra.mxu0 0.0
  %2518 = vmatprep.subr.mxu0 0.0
  %2519 = vmatpush1.msra.mxu0 0.0
  %2520 = vmatprep.subr.mxu0 0.0
  %2521 = vmatpush1.msra.mxu0 0.0
  %2522 = vmatprep.subr.mxu0 0.0
  %2523 = vmatpush1.msra.mxu0 0.0
  %2524 = vmatprep.subr.mxu0 0.0
  %2525 = vmatpush1.msra.mxu0 0.0
  %2526 = vmatprep.subr.mxu0 0.0
  %2527 = vmatpush1.msra.mxu0 0.0
  %2528 = vmatprep.subr.mxu0 0.0
  %2529 = vmatpush1.msra.mxu0 0.0
  %2530 = vmatprep.subr.mxu0 0.0
  %2531 = vmatpush1.msra.mxu0 0.0
  %2532 = vmatprep.subr.mxu0 0.0
  %2533 = vmatpush1.msra.mxu0 0.0
  %2534 = vmatprep.subr.mxu0 0.0
  %2535 = vmatpush1.msra.mxu0 0.0
  %2536 = vmatprep.subr.mxu0 0.0
  %2537 = vmatpush1.msra.mxu0 0.0
  %2538 = vmatprep.subr.mxu0 0.0
  %2539 = vmatpush1.msra.mxu0 0.0
  %2540 = vmatprep.subr.mxu0 0.0
  %2541 = vmatpush1.msra.mxu0 0.0
  %2542 = vmatprep.subr.mxu0 0.0
  %2543 = vmatpush1.msra.mxu0 0.0
  %2544 = vmatprep.subr.mxu0 0.0
  %2545 = vmatpush1.msra.mxu0 0.0
  %2546 = vmatprep.subr.mxu0 0.0
  %2547 = vmatpush1.msra.mxu0 0.0
  %2548 = vmatprep.subr.mxu0 0.0
  %2549 = vmatpush1.msra.mxu0 0.0
  %2550 = vmatprep.subr.mxu0 0.0
  %2551 = vmatpush1.msra.mxu0 0.0
  %2552 = vmatprep.subr.mxu0 0.0
  %2553 = vmatpush1.msra.mxu0 0.0
  %2554 = vmatprep.mubr.f32.mxu0 0.0
  %2555 = vmatmul.mubr.f32.gmra.mrb[0].mxu0 %v2485
  %v2556 = vpop.f32.mrb[0].mxu0
  %v2557 = vadd.f32 0.0, %v2556
  %v2558 = vpop.f32.mrb[0].mxu0
  %2559 = vmatprep.mubr.f32.mxu0 0.0
  %2560 = vmatmul.mubr.f32.gmra.mrb[0].mxu0 %v2488
  %v2561 = vpop.f32.mrb[0].mxu0
  %v2562 = vadd.f32 0.0, %v2561
  %v2563 = vpop.f32.mrb[0].mxu0
  %2564 = vdwg.mxu0
  %v2565 = vmul.f32 %v2557, %v150
  %v2566 = vmul.f32 %v2562, %v155
  %v2567 = vsel %vm251, %v2565, 0.0
  %v2568 = vsel %vm251, %v2566, 0.0
  %v2569 = vadd.f32 %v2567, %v2568
  %v2570 = vrot.slane %v2569, 4
  %v2571 = vadd.f32 %v2569, %v2570
  %v2572 = vrot.slane %v2571, 2
  %v2573 = vadd.f32 %v2571, %v2572
  %v2574 = vrot.slane %v2573, 1
  %v2575 = vadd.f32 %v2573, %v2574
  %2576 = vst.msk [vmem:[#allocation2 + $0x9] sm:$0x1] %vm478, %v2575
  %v2577 = vlaneseq
  %v2578 = vshrl.u32 %v2577, 7
  %v2579 = vsub.s32 2, %v2578
  %v2580 = vrot.slane %v236, %v2579
  %v2581 = vadd.f32 %v2580, %v150
  %v2582 = vadd.f32 %v2580, %v155
  %vm2583 = vcmp.ge.f32.partialorder %v2581, 0.0
  %vm2584 = vcmp.ge.f32.partialorder %v2582, 0.0
  %v2585 = vmul.f32 %v2581, 0.2
  %v2586 = vmul.f32 %v2582, 0.2
  %v2587 = vsel %vm2583, %v2581, %v2585
  %v2588 = vsel %vm2584, %v2582, %v2586
  %v2590 = vsel %vm251, %v2587, 0
  %v2593 = vsel %vm251, %v2588, 0
  %2595 = vmatprep.subr.mxu0 0.0
  %2596 = vmatpush1.msra.mxu0 %v61
  %2597 = vmatprep.subr.mxu0 0.0
  %2598 = vmatpush1.msra.mxu0 %v62
  %2599 = vmatprep.subr.mxu0 0.0
  %2600 = vmatpush1.msra.mxu0 %v63
  %2601 = vmatprep.subr.mxu0 0.0
  %2602 = vmatpush1.msra.mxu0 %v64
  %2603 = vmatprep.subr.mxu0 0.0
  %2604 = vmatpush1.msra.mxu0 %v65
  %2605 = vmatprep.subr.mxu0 0.0
  %2606 = vmatpush1.msra.mxu0 %v66
  %2607 = vmatprep.subr.mxu0 0.0
  %2608 = vmatpush1.msra.mxu0 %v67
  %2609 = vmatprep.subr.mxu0 0.0
  %2610 = vmatpush1.msra.mxu0 %v68
  %2611 = vmatprep.subr.mxu0 0.0
  %2612 = vmatpush1.msra.mxu0 0.0
  %2613 = vmatprep.subr.mxu0 0.0
  %2614 = vmatpush1.msra.mxu0 0.0
  %2615 = vmatprep.subr.mxu0 0.0
  %2616 = vmatpush1.msra.mxu0 0.0
  %2617 = vmatprep.subr.mxu0 0.0
  %2618 = vmatpush1.msra.mxu0 0.0
  %2619 = vmatprep.subr.mxu0 0.0
  %2620 = vmatpush1.msra.mxu0 0.0
  %2621 = vmatprep.subr.mxu0 0.0
  %2622 = vmatpush1.msra.mxu0 0.0
  %2623 = vmatprep.subr.mxu0 0.0
  %2624 = vmatpush1.msra.mxu0 0.0
  %2625 = vmatprep.subr.mxu0 0.0
  %2626 = vmatpush1.msra.mxu0 0.0
  %2627 = vmatprep.subr.mxu0 0.0
  %2628 = vmatpush1.msra.mxu0 0.0
  %2629 = vmatprep.subr.mxu0 0.0
  %2630 = vmatpush1.msra.mxu0 0.0
  %2631 = vmatprep.subr.mxu0 0.0
  %2632 = vmatpush1.msra.mxu0 0.0
  %2633 = vmatprep.subr.mxu0 0.0
  %2634 = vmatpush1.msra.mxu0 0.0
  %2635 = vmatprep.subr.mxu0 0.0
  %2636 = vmatpush1.msra.mxu0 0.0
  %2637 = vmatprep.subr.mxu0 0.0
  %2638 = vmatpush1.msra.mxu0 0.0
  %2639 = vmatprep.subr.mxu0 0.0
  %2640 = vmatpush1.msra.mxu0 0.0
  %2641 = vmatprep.subr.mxu0 0.0
  %2642 = vmatpush1.msra.mxu0 0.0
  %2643 = vmatprep.subr.mxu0 0.0
  %2644 = vmatpush1.msra.mxu0 0.0
  %2645 = vmatprep.subr.mxu0 0.0
  %2646 = vmatpush1.msra.mxu0 0.0
  %2647 = vmatprep.subr.mxu0 0.0
  %2648 = vmatpush1.msra.mxu0 0.0
  %2649 = vmatprep.subr.mxu0 0.0
  %2650 = vmatpush1.msra.mxu0 0.0
  %2651 = vmatprep.subr.mxu0 0.0
  %2652 = vmatpush1.msra.mxu0 0.0
  %2653 = vmatprep.subr.mxu0 0.0
  %2654 = vmatpush1.msra.mxu0 0.0
  %2655 = vmatprep.subr.mxu0 0.0
  %2656 = vmatpush1.msra.mxu0 0.0
  %2657 = vmatprep.subr.mxu0 0.0
  %2658 = vmatpush1.msra.mxu0 0.0
  %2659 = vmatprep.mubr.f32.mxu0 0.0
  %2660 = vmatmul.mubr.f32.gmra.mrb[0].mxu0 %v2590
  %v2661 = vpop.f32.mrb[0].mxu0
  %v2662 = vadd.f32 0.0, %v2661
  %v2663 = vpop.f32.mrb[0].mxu0
  %2664 = vmatprep.mubr.f32.mxu0 0.0
  %2665 = vmatmul.mubr.f32.gmra.mrb[0].mxu0 %v2593
  %v2666 = vpop.f32.mrb[0].mxu0
  %v2667 = vadd.f32 0.0, %v2666
  %v2668 = vpop.f32.mrb[0].mxu0
  %2669 = vdwg.mxu0
  %2670 = vset.pattern.permute.xlu0 10
  %2671 = vperm.xlu0 %2670, %v335
  %v2672 = vpop.permute.xlu0 %2671
  %2673 = vset.pattern.permute.xlu0 10
  %2674 = vperm.xlu0 %2673, %v336
  %v2675 = vpop.permute.xlu0 %2674
  %vm2676 = vcmp.eq.s32.totalorder %v2672, 1
  %vm2677 = vcmp.eq.s32.totalorder %v2675, 1
  %v2678 = vsel %vm2676, %v2662, -1e+30
  %v2679 = vsel %vm2677, %v2667, -1e+30
  %v2680 = vsel %vm76, %v2678, -inf
  %v2681 = vsel %vm76, %v2679, -inf
  %v2682 = vmax.f32 %v2680, %v2681
  %v2683 = vrot.slane %v2682, 4
  %v2684 = vmax.f32 %v2682, %v2683
  %v2685 = vrot.slane %v2684, 2
  %v2686 = vmax.f32 %v2684, %v2685
  %v2687 = vrot.slane %v2686, 1
  %v2688 = vmax.f32 %v2686, %v2687
  %v2689 = vsub.f32 %v2678, %v2688
  %v2690 = vsub.f32 %v2679, %v2688
  %v2691 = vmul.f32 %v2689, 1.442695
  %v2692 = vpow.pop %v2691
  %v2693 = vmul.f32 %v2690, 1.442695
  %v2694 = vpow.pop %v2693
  %2695 = vset.pattern.permute.xlu0 10
  %2696 = vperm.xlu0 %2695, %v53
  %v2697 = vpop.permute.xlu0 %2696
  %2699 = vset.pattern.permute.xlu0 10
  %2700 = vperm.xlu0 %2699, %v54
  %v2701 = vpop.permute.xlu0 %2700
  %v2703 = vmul.f32 %v2692, %v2697
  %v2704 = vmul.f32 %v2694, %v2701
  %v2705 = vsel %vm76, %v2703, 0.0
  %v2706 = vsel %vm76, %v2704, 0.0
  %v2707 = vadd.f32 %v2705, %v2706
  %v2708 = vrot.slane %v2707, 4
  %v2709 = vadd.f32 %v2707, %v2708
  %v2710 = vrot.slane %v2709, 2
  %v2711 = vadd.f32 %v2709, %v2710
  %v2712 = vrot.slane %v2711, 1
  %v2713 = vadd.f32 %v2711, %v2712
  %v2714 = vrcp.pop %v2713
  %v2715 = vmul.f32 %v2703, %v2714
  %v2716 = vmul.f32 %v2704, %v2714
  %v2718 = vsel %vm76, %v2715, 0
  %v2721 = vsel %vm76, %v2716, 0
  %2723 = vmatprep.subr.mxu0 0.0
  %2724 = vmatpush1.msra.mxu0 %v69
  %2725 = vmatprep.subr.mxu0 0.0
  %2726 = vmatpush1.msra.mxu0 0.0
  %2727 = vmatprep.subr.mxu0 0.0
  %2728 = vmatpush1.msra.mxu0 0.0
  %2729 = vmatprep.subr.mxu0 0.0
  %2730 = vmatpush1.msra.mxu0 0.0
  %2731 = vmatprep.subr.mxu0 0.0
  %2732 = vmatpush1.msra.mxu0 0.0
  %2733 = vmatprep.subr.mxu0 0.0
  %2734 = vmatpush1.msra.mxu0 0.0
  %2735 = vmatprep.subr.mxu0 0.0
  %2736 = vmatpush1.msra.mxu0 0.0
  %2737 = vmatprep.subr.mxu0 0.0
  %2738 = vmatpush1.msra.mxu0 0.0
  %2739 = vmatprep.subr.mxu0 0.0
  %2740 = vmatpush1.msra.mxu0 0.0
  %2741 = vmatprep.subr.mxu0 0.0
  %2742 = vmatpush1.msra.mxu0 0.0
  %2743 = vmatprep.subr.mxu0 0.0
  %2744 = vmatpush1.msra.mxu0 0.0
  %2745 = vmatprep.subr.mxu0 0.0
  %2746 = vmatpush1.msra.mxu0 0.0
  %2747 = vmatprep.subr.mxu0 0.0
  %2748 = vmatpush1.msra.mxu0 0.0
  %2749 = vmatprep.subr.mxu0 0.0
  %2750 = vmatpush1.msra.mxu0 0.0
  %2751 = vmatprep.subr.mxu0 0.0
  %2752 = vmatpush1.msra.mxu0 0.0
  %2753 = vmatprep.subr.mxu0 0.0
  %2754 = vmatpush1.msra.mxu0 0.0
  %2755 = vmatprep.subr.mxu0 0.0
  %2756 = vmatpush1.msra.mxu0 0.0
  %2757 = vmatprep.subr.mxu0 0.0
  %2758 = vmatpush1.msra.mxu0 0.0
  %2759 = vmatprep.subr.mxu0 0.0
  %2760 = vmatpush1.msra.mxu0 0.0
  %2761 = vmatprep.subr.mxu0 0.0
  %2762 = vmatpush1.msra.mxu0 0.0
  %2763 = vmatprep.subr.mxu0 0.0
  %2764 = vmatpush1.msra.mxu0 0.0
  %2765 = vmatprep.subr.mxu0 0.0
  %2766 = vmatpush1.msra.mxu0 0.0
  %2767 = vmatprep.subr.mxu0 0.0
  %2768 = vmatpush1.msra.mxu0 0.0
  %2769 = vmatprep.subr.mxu0 0.0
  %2770 = vmatpush1.msra.mxu0 0.0
  %2771 = vmatprep.subr.mxu0 0.0
  %2772 = vmatpush1.msra.mxu0 0.0
  %2773 = vmatprep.subr.mxu0 0.0
  %2774 = vmatpush1.msra.mxu0 0.0
  %2775 = vmatprep.subr.mxu0 0.0
  %2776 = vmatpush1.msra.mxu0 0.0
  %2777 = vmatprep.subr.mxu0 0.0
  %2778 = vmatpush1.msra.mxu0 0.0
  %2779 = vmatprep.subr.mxu0 0.0
  %2780 = vmatpush1.msra.mxu0 0.0
  %2781 = vmatprep.subr.mxu0 0.0
  %2782 = vmatpush1.msra.mxu0 0.0
  %2783 = vmatprep.subr.mxu0 0.0
  %2784 = vmatpush1.msra.mxu0 0.0
  %2785 = vmatprep.subr.mxu0 0.0
  %2786 = vmatpush1.msra.mxu0 0.0
  %2787 = vmatprep.mubr.f32.mxu0 0.0
  %2788 = vmatmul.mubr.f32.gmra.mrb[0].mxu0 %v2718
  %v2789 = vpop.f32.mrb[0].mxu0
  %v2790 = vadd.f32 0.0, %v2789
  %v2791 = vpop.f32.mrb[0].mxu0
  %2792 = vmatprep.mubr.f32.mxu0 0.0
  %2793 = vmatmul.mubr.f32.gmra.mrb[0].mxu0 %v2721
  %v2794 = vpop.f32.mrb[0].mxu0
  %v2795 = vadd.f32 0.0, %v2794
  %v2796 = vpop.f32.mrb[0].mxu0
  %2797 = vdwg.mxu0
  %v2798 = vmul.f32 %v2790, %v150
  %v2799 = vmul.f32 %v2795, %v155
  %v2800 = vsel %vm251, %v2798, 0.0
  %v2801 = vsel %vm251, %v2799, 0.0
  %v2802 = vadd.f32 %v2800, %v2801
  %v2803 = vrot.slane %v2802, 4
  %v2804 = vadd.f32 %v2802, %v2803
  %v2805 = vrot.slane %v2804, 2
  %v2806 = vadd.f32 %v2804, %v2805
  %v2807 = vrot.slane %v2806, 1
  %v2808 = vadd.f32 %v2806, %v2807
  %2809 = vst.msk [vmem:[#allocation2 + $0xa] sm:$0x1] %vm478, %v2808
  %v2810 = vlaneseq
  %v2811 = vshrl.u32 %v2810, 7
  %v2812 = vsub.s32 3, %v2811
  %v2813 = vrot.slane %v236, %v2812
  %v2814 = vadd.f32 %v2813, %v150
  %v2815 = vadd.f32 %v2813, %v155
  %vm2816 = vcmp.ge.f32.partialorder %v2814, 0.0
  %vm2817 = vcmp.ge.f32.partialorder %v2815, 0.0
  %v2818 = vmul.f32 %v2814, 0.2
  %v2819 = vmul.f32 %v2815, 0.2
  %v2820 = vsel %vm2816, %v2814, %v2818
  %v2821 = vsel %vm2817, %v2815, %v2819
  %v2823 = vsel %vm251, %v2820, 0
  %v2826 = vsel %vm251, %v2821, 0
  %2828 = vmatprep.subr.mxu0 0.0
  %2829 = vmatpush1.msra.mxu0 %v61
  %2830 = vmatprep.subr.mxu0 0.0
  %2831 = vmatpush1.msra.mxu0 %v62
  %2832 = vmatprep.subr.mxu0 0.0
  %2833 = vmatpush1.msra.mxu0 %v63
  %2834 = vmatprep.subr.mxu0 0.0
  %2835 = vmatpush1.msra.mxu0 %v64
  %2836 = vmatprep.subr.mxu0 0.0
  %2837 = vmatpush1.msra.mxu0 %v65
  %2838 = vmatprep.subr.mxu0 0.0
  %2839 = vmatpush1.msra.mxu0 %v66
  %2840 = vmatprep.subr.mxu0 0.0
  %2841 = vmatpush1.msra.mxu0 %v67
  %2842 = vmatprep.subr.mxu0 0.0
  %2843 = vmatpush1.msra.mxu0 %v68
  %2844 = vmatprep.subr.mxu0 0.0
  %2845 = vmatpush1.msra.mxu0 0.0
  %2846 = vmatprep.subr.mxu0 0.0
  %2847 = vmatpush1.msra.mxu0 0.0
  %2848 = vmatprep.subr.mxu0 0.0
  %2849 = vmatpush1.msra.mxu0 0.0
  %2850 = vmatprep.subr.mxu0 0.0
  %2851 = vmatpush1.msra.mxu0 0.0
  %2852 = vmatprep.subr.mxu0 0.0
  %2853 = vmatpush1.msra.mxu0 0.0
  %2854 = vmatprep.subr.mxu0 0.0
  %2855 = vmatpush1.msra.mxu0 0.0
  %2856 = vmatprep.subr.mxu0 0.0
  %2857 = vmatpush1.msra.mxu0 0.0
  %2858 = vmatprep.subr.mxu0 0.0
  %2859 = vmatpush1.msra.mxu0 0.0
  %2860 = vmatprep.subr.mxu0 0.0
  %2861 = vmatpush1.msra.mxu0 0.0
  %2862 = vmatprep.subr.mxu0 0.0
  %2863 = vmatpush1.msra.mxu0 0.0
  %2864 = vmatprep.subr.mxu0 0.0
  %2865 = vmatpush1.msra.mxu0 0.0
  %2866 = vmatprep.subr.mxu0 0.0
  %2867 = vmatpush1.msra.mxu0 0.0
  %2868 = vmatprep.subr.mxu0 0.0
  %2869 = vmatpush1.msra.mxu0 0.0
  %2870 = vmatprep.subr.mxu0 0.0
  %2871 = vmatpush1.msra.mxu0 0.0
  %2872 = vmatprep.subr.mxu0 0.0
  %2873 = vmatpush1.msra.mxu0 0.0
  %2874 = vmatprep.subr.mxu0 0.0
  %2875 = vmatpush1.msra.mxu0 0.0
  %2876 = vmatprep.subr.mxu0 0.0
  %2877 = vmatpush1.msra.mxu0 0.0
  %2878 = vmatprep.subr.mxu0 0.0
  %2879 = vmatpush1.msra.mxu0 0.0
  %2880 = vmatprep.subr.mxu0 0.0
  %2881 = vmatpush1.msra.mxu0 0.0
  %2882 = vmatprep.subr.mxu0 0.0
  %2883 = vmatpush1.msra.mxu0 0.0
  %2884 = vmatprep.subr.mxu0 0.0
  %2885 = vmatpush1.msra.mxu0 0.0
  %2886 = vmatprep.subr.mxu0 0.0
  %2887 = vmatpush1.msra.mxu0 0.0
  %2888 = vmatprep.subr.mxu0 0.0
  %2889 = vmatpush1.msra.mxu0 0.0
  %2890 = vmatprep.subr.mxu0 0.0
  %2891 = vmatpush1.msra.mxu0 0.0
  %2892 = vmatprep.mubr.f32.mxu0 0.0
  %2893 = vmatmul.mubr.f32.gmra.mrb[0].mxu0 %v2823
  %v2894 = vpop.f32.mrb[0].mxu0
  %v2895 = vadd.f32 0.0, %v2894
  %v2896 = vpop.f32.mrb[0].mxu0
  %2897 = vmatprep.mubr.f32.mxu0 0.0
  %2898 = vmatmul.mubr.f32.gmra.mrb[0].mxu0 %v2826
  %v2899 = vpop.f32.mrb[0].mxu0
  %v2900 = vadd.f32 0.0, %v2899
  %v2901 = vpop.f32.mrb[0].mxu0
  %2902 = vdwg.mxu0
  %2903 = vset.pattern.permute.xlu0 11
  %2904 = vperm.xlu0 %2903, %v335
  %v2905 = vpop.permute.xlu0 %2904
  %2906 = vset.pattern.permute.xlu0 11
  %2907 = vperm.xlu0 %2906, %v336
  %v2908 = vpop.permute.xlu0 %2907
  %vm2909 = vcmp.eq.s32.totalorder %v2905, 1
  %vm2910 = vcmp.eq.s32.totalorder %v2908, 1
  %v2911 = vsel %vm2909, %v2895, -1e+30
  %v2912 = vsel %vm2910, %v2900, -1e+30
  %v2913 = vsel %vm76, %v2911, -inf
  %v2914 = vsel %vm76, %v2912, -inf
  %v2915 = vmax.f32 %v2913, %v2914
  %v2916 = vrot.slane %v2915, 4
  %v2917 = vmax.f32 %v2915, %v2916
  %v2918 = vrot.slane %v2917, 2
  %v2919 = vmax.f32 %v2917, %v2918
  %v2920 = vrot.slane %v2919, 1
  %v2921 = vmax.f32 %v2919, %v2920
  %v2922 = vsub.f32 %v2911, %v2921
  %v2923 = vsub.f32 %v2912, %v2921
  %v2924 = vmul.f32 %v2922, 1.442695
  %v2925 = vpow.pop %v2924
  %v2926 = vmul.f32 %v2923, 1.442695
  %v2927 = vpow.pop %v2926
  %2928 = vset.pattern.permute.xlu0 11
  %2929 = vperm.xlu0 %2928, %v53
  %v2930 = vpop.permute.xlu0 %2929
  %2932 = vset.pattern.permute.xlu0 11
  %2933 = vperm.xlu0 %2932, %v54
  %v2934 = vpop.permute.xlu0 %2933
  %v2936 = vmul.f32 %v2925, %v2930
  %v2937 = vmul.f32 %v2927, %v2934
  %v2938 = vsel %vm76, %v2936, 0.0
  %v2939 = vsel %vm76, %v2937, 0.0
  %v2940 = vadd.f32 %v2938, %v2939
  %v2941 = vrot.slane %v2940, 4
  %v2942 = vadd.f32 %v2940, %v2941
  %v2943 = vrot.slane %v2942, 2
  %v2944 = vadd.f32 %v2942, %v2943
  %v2945 = vrot.slane %v2944, 1
  %v2946 = vadd.f32 %v2944, %v2945
  %v2947 = vrcp.pop %v2946
  %v2948 = vmul.f32 %v2936, %v2947
  %v2949 = vmul.f32 %v2937, %v2947
  %v2951 = vsel %vm76, %v2948, 0
  %v2954 = vsel %vm76, %v2949, 0
  %2956 = vmatprep.subr.mxu0 0.0
  %2957 = vmatpush1.msra.mxu0 %v69
  %2958 = vmatprep.subr.mxu0 0.0
  %2959 = vmatpush1.msra.mxu0 0.0
  %2960 = vmatprep.subr.mxu0 0.0
  %2961 = vmatpush1.msra.mxu0 0.0
  %2962 = vmatprep.subr.mxu0 0.0
  %2963 = vmatpush1.msra.mxu0 0.0
  %2964 = vmatprep.subr.mxu0 0.0
  %2965 = vmatpush1.msra.mxu0 0.0
  %2966 = vmatprep.subr.mxu0 0.0
  %2967 = vmatpush1.msra.mxu0 0.0
  %2968 = vmatprep.subr.mxu0 0.0
  %2969 = vmatpush1.msra.mxu0 0.0
  %2970 = vmatprep.subr.mxu0 0.0
  %2971 = vmatpush1.msra.mxu0 0.0
  %2972 = vmatprep.subr.mxu0 0.0
  %2973 = vmatpush1.msra.mxu0 0.0
  %2974 = vmatprep.subr.mxu0 0.0
  %2975 = vmatpush1.msra.mxu0 0.0
  %2976 = vmatprep.subr.mxu0 0.0
  %2977 = vmatpush1.msra.mxu0 0.0
  %2978 = vmatprep.subr.mxu0 0.0
  %2979 = vmatpush1.msra.mxu0 0.0
  %2980 = vmatprep.subr.mxu0 0.0
  %2981 = vmatpush1.msra.mxu0 0.0
  %2982 = vmatprep.subr.mxu0 0.0
  %2983 = vmatpush1.msra.mxu0 0.0
  %2984 = vmatprep.subr.mxu0 0.0
  %2985 = vmatpush1.msra.mxu0 0.0
  %2986 = vmatprep.subr.mxu0 0.0
  %2987 = vmatpush1.msra.mxu0 0.0
  %2988 = vmatprep.subr.mxu0 0.0
  %2989 = vmatpush1.msra.mxu0 0.0
  %2990 = vmatprep.subr.mxu0 0.0
  %2991 = vmatpush1.msra.mxu0 0.0
  %2992 = vmatprep.subr.mxu0 0.0
  %2993 = vmatpush1.msra.mxu0 0.0
  %2994 = vmatprep.subr.mxu0 0.0
  %2995 = vmatpush1.msra.mxu0 0.0
  %2996 = vmatprep.subr.mxu0 0.0
  %2997 = vmatpush1.msra.mxu0 0.0
  %2998 = vmatprep.subr.mxu0 0.0
  %2999 = vmatpush1.msra.mxu0 0.0
  %3000 = vmatprep.subr.mxu0 0.0
  %3001 = vmatpush1.msra.mxu0 0.0
  %3002 = vmatprep.subr.mxu0 0.0
  %3003 = vmatpush1.msra.mxu0 0.0
  %3004 = vmatprep.subr.mxu0 0.0
  %3005 = vmatpush1.msra.mxu0 0.0
  %3006 = vmatprep.subr.mxu0 0.0
  %3007 = vmatpush1.msra.mxu0 0.0
  %3008 = vmatprep.subr.mxu0 0.0
  %3009 = vmatpush1.msra.mxu0 0.0
  %3010 = vmatprep.subr.mxu0 0.0
  %3011 = vmatpush1.msra.mxu0 0.0
  %3012 = vmatprep.subr.mxu0 0.0
  %3013 = vmatpush1.msra.mxu0 0.0
  %3014 = vmatprep.subr.mxu0 0.0
  %3015 = vmatpush1.msra.mxu0 0.0
  %3016 = vmatprep.subr.mxu0 0.0
  %3017 = vmatpush1.msra.mxu0 0.0
  %3018 = vmatprep.subr.mxu0 0.0
  %3019 = vmatpush1.msra.mxu0 0.0
  %3020 = vmatprep.mubr.f32.mxu0 0.0
  %3021 = vmatmul.mubr.f32.gmra.mrb[0].mxu0 %v2951
  %v3022 = vpop.f32.mrb[0].mxu0
  %v3023 = vadd.f32 0.0, %v3022
  %v3024 = vpop.f32.mrb[0].mxu0
  %3025 = vmatprep.mubr.f32.mxu0 0.0
  %3026 = vmatmul.mubr.f32.gmra.mrb[0].mxu0 %v2954
  %v3027 = vpop.f32.mrb[0].mxu0
  %v3028 = vadd.f32 0.0, %v3027
  %v3029 = vpop.f32.mrb[0].mxu0
  %3030 = vdwg.mxu0
  %v3031 = vmul.f32 %v3023, %v150
  %v3032 = vmul.f32 %v3028, %v155
  %v3033 = vsel %vm251, %v3031, 0.0
  %v3034 = vsel %vm251, %v3032, 0.0
  %v3035 = vadd.f32 %v3033, %v3034
  %v3036 = vrot.slane %v3035, 4
  %v3037 = vadd.f32 %v3035, %v3036
  %v3038 = vrot.slane %v3037, 2
  %v3039 = vadd.f32 %v3037, %v3038
  %v3040 = vrot.slane %v3039, 1
  %v3041 = vadd.f32 %v3039, %v3040
  %3042 = vst.msk [vmem:[#allocation2 + $0xb] sm:$0x1] %vm478, %v3041
  %v3043 = vlaneseq
  %v3044 = vshrl.u32 %v3043, 7
  %v3045 = vsub.s32 4, %v3044
  %v3046 = vrot.slane %v236, %v3045
  %v3047 = vadd.f32 %v3046, %v150
  %v3048 = vadd.f32 %v3046, %v155
  %vm3049 = vcmp.ge.f32.partialorder %v3047, 0.0
  %vm3050 = vcmp.ge.f32.partialorder %v3048, 0.0
  %v3051 = vmul.f32 %v3047, 0.2
  %v3052 = vmul.f32 %v3048, 0.2
  %v3053 = vsel %vm3049, %v3047, %v3051
  %v3054 = vsel %vm3050, %v3048, %v3052
  %v3056 = vsel %vm251, %v3053, 0
  %v3059 = vsel %vm251, %v3054, 0
  %3061 = vmatprep.subr.mxu0 0.0
  %3062 = vmatpush1.msra.mxu0 %v61
  %3063 = vmatprep.subr.mxu0 0.0
  %3064 = vmatpush1.msra.mxu0 %v62
  %3065 = vmatprep.subr.mxu0 0.0
  %3066 = vmatpush1.msra.mxu0 %v63
  %3067 = vmatprep.subr.mxu0 0.0
  %3068 = vmatpush1.msra.mxu0 %v64
  %3069 = vmatprep.subr.mxu0 0.0
  %3070 = vmatpush1.msra.mxu0 %v65
  %3071 = vmatprep.subr.mxu0 0.0
  %3072 = vmatpush1.msra.mxu0 %v66
  %3073 = vmatprep.subr.mxu0 0.0
  %3074 = vmatpush1.msra.mxu0 %v67
  %3075 = vmatprep.subr.mxu0 0.0
  %3076 = vmatpush1.msra.mxu0 %v68
  %3077 = vmatprep.subr.mxu0 0.0
  %3078 = vmatpush1.msra.mxu0 0.0
  %3079 = vmatprep.subr.mxu0 0.0
  %3080 = vmatpush1.msra.mxu0 0.0
  %3081 = vmatprep.subr.mxu0 0.0
  %3082 = vmatpush1.msra.mxu0 0.0
  %3083 = vmatprep.subr.mxu0 0.0
  %3084 = vmatpush1.msra.mxu0 0.0
  %3085 = vmatprep.subr.mxu0 0.0
  %3086 = vmatpush1.msra.mxu0 0.0
  %3087 = vmatprep.subr.mxu0 0.0
  %3088 = vmatpush1.msra.mxu0 0.0
  %3089 = vmatprep.subr.mxu0 0.0
  %3090 = vmatpush1.msra.mxu0 0.0
  %3091 = vmatprep.subr.mxu0 0.0
  %3092 = vmatpush1.msra.mxu0 0.0
  %3093 = vmatprep.subr.mxu0 0.0
  %3094 = vmatpush1.msra.mxu0 0.0
  %3095 = vmatprep.subr.mxu0 0.0
  %3096 = vmatpush1.msra.mxu0 0.0
  %3097 = vmatprep.subr.mxu0 0.0
  %3098 = vmatpush1.msra.mxu0 0.0
  %3099 = vmatprep.subr.mxu0 0.0
  %3100 = vmatpush1.msra.mxu0 0.0
  %3101 = vmatprep.subr.mxu0 0.0
  %3102 = vmatpush1.msra.mxu0 0.0
  %3103 = vmatprep.subr.mxu0 0.0
  %3104 = vmatpush1.msra.mxu0 0.0
  %3105 = vmatprep.subr.mxu0 0.0
  %3106 = vmatpush1.msra.mxu0 0.0
  %3107 = vmatprep.subr.mxu0 0.0
  %3108 = vmatpush1.msra.mxu0 0.0
  %3109 = vmatprep.subr.mxu0 0.0
  %3110 = vmatpush1.msra.mxu0 0.0
  %3111 = vmatprep.subr.mxu0 0.0
  %3112 = vmatpush1.msra.mxu0 0.0
  %3113 = vmatprep.subr.mxu0 0.0
  %3114 = vmatpush1.msra.mxu0 0.0
  %3115 = vmatprep.subr.mxu0 0.0
  %3116 = vmatpush1.msra.mxu0 0.0
  %3117 = vmatprep.subr.mxu0 0.0
  %3118 = vmatpush1.msra.mxu0 0.0
  %3119 = vmatprep.subr.mxu0 0.0
  %3120 = vmatpush1.msra.mxu0 0.0
  %3121 = vmatprep.subr.mxu0 0.0
  %3122 = vmatpush1.msra.mxu0 0.0
  %3123 = vmatprep.subr.mxu0 0.0
  %3124 = vmatpush1.msra.mxu0 0.0
  %3125 = vmatprep.mubr.f32.mxu0 0.0
  %3126 = vmatmul.mubr.f32.gmra.mrb[0].mxu0 %v3056
  %v3127 = vpop.f32.mrb[0].mxu0
  %v3128 = vadd.f32 0.0, %v3127
  %v3129 = vpop.f32.mrb[0].mxu0
  %3130 = vmatprep.mubr.f32.mxu0 0.0
  %3131 = vmatmul.mubr.f32.gmra.mrb[0].mxu0 %v3059
  %v3132 = vpop.f32.mrb[0].mxu0
  %v3133 = vadd.f32 0.0, %v3132
  %v3134 = vpop.f32.mrb[0].mxu0
  %3135 = vdwg.mxu0
  %3136 = vset.pattern.permute.xlu0 12
  %3137 = vperm.xlu0 %3136, %v335
  %v3138 = vpop.permute.xlu0 %3137
  %3139 = vset.pattern.permute.xlu0 12
  %3140 = vperm.xlu0 %3139, %v336
  %v3141 = vpop.permute.xlu0 %3140
  %vm3142 = vcmp.eq.s32.totalorder %v3138, 1
  %vm3143 = vcmp.eq.s32.totalorder %v3141, 1
  %v3144 = vsel %vm3142, %v3128, -1e+30
  %v3145 = vsel %vm3143, %v3133, -1e+30
  %v3146 = vsel %vm76, %v3144, -inf
  %v3147 = vsel %vm76, %v3145, -inf
  %v3148 = vmax.f32 %v3146, %v3147
  %v3149 = vrot.slane %v3148, 4
  %v3150 = vmax.f32 %v3148, %v3149
  %v3151 = vrot.slane %v3150, 2
  %v3152 = vmax.f32 %v3150, %v3151
  %v3153 = vrot.slane %v3152, 1
  %v3154 = vmax.f32 %v3152, %v3153
  %v3155 = vsub.f32 %v3144, %v3154
  %v3156 = vsub.f32 %v3145, %v3154
  %v3157 = vmul.f32 %v3155, 1.442695
  %v3158 = vpow.pop %v3157
  %v3159 = vmul.f32 %v3156, 1.442695
  %v3160 = vpow.pop %v3159
  %3161 = vset.pattern.permute.xlu0 12
  %3162 = vperm.xlu0 %3161, %v53
  %v3163 = vpop.permute.xlu0 %3162
  %3165 = vset.pattern.permute.xlu0 12
  %3166 = vperm.xlu0 %3165, %v54
  %v3167 = vpop.permute.xlu0 %3166
  %v3169 = vmul.f32 %v3158, %v3163
  %v3170 = vmul.f32 %v3160, %v3167
  %v3171 = vsel %vm76, %v3169, 0.0
  %v3172 = vsel %vm76, %v3170, 0.0
  %v3173 = vadd.f32 %v3171, %v3172
  %v3174 = vrot.slane %v3173, 4
  %v3175 = vadd.f32 %v3173, %v3174
  %v3176 = vrot.slane %v3175, 2
  %v3177 = vadd.f32 %v3175, %v3176
  %v3178 = vrot.slane %v3177, 1
  %v3179 = vadd.f32 %v3177, %v3178
  %v3180 = vrcp.pop %v3179
  %v3181 = vmul.f32 %v3169, %v3180
  %v3182 = vmul.f32 %v3170, %v3180
  %v3184 = vsel %vm76, %v3181, 0
  %v3187 = vsel %vm76, %v3182, 0
  %3189 = vmatprep.subr.mxu0 0.0
  %3190 = vmatpush1.msra.mxu0 %v69
  %3191 = vmatprep.subr.mxu0 0.0
  %3192 = vmatpush1.msra.mxu0 0.0
  %3193 = vmatprep.subr.mxu0 0.0
  %3194 = vmatpush1.msra.mxu0 0.0
  %3195 = vmatprep.subr.mxu0 0.0
  %3196 = vmatpush1.msra.mxu0 0.0
  %3197 = vmatprep.subr.mxu0 0.0
  %3198 = vmatpush1.msra.mxu0 0.0
  %3199 = vmatprep.subr.mxu0 0.0
  %3200 = vmatpush1.msra.mxu0 0.0
  %3201 = vmatprep.subr.mxu0 0.0
  %3202 = vmatpush1.msra.mxu0 0.0
  %3203 = vmatprep.subr.mxu0 0.0
  %3204 = vmatpush1.msra.mxu0 0.0
  %3205 = vmatprep.subr.mxu0 0.0
  %3206 = vmatpush1.msra.mxu0 0.0
  %3207 = vmatprep.subr.mxu0 0.0
  %3208 = vmatpush1.msra.mxu0 0.0
  %3209 = vmatprep.subr.mxu0 0.0
  %3210 = vmatpush1.msra.mxu0 0.0
  %3211 = vmatprep.subr.mxu0 0.0
  %3212 = vmatpush1.msra.mxu0 0.0
  %3213 = vmatprep.subr.mxu0 0.0
  %3214 = vmatpush1.msra.mxu0 0.0
  %3215 = vmatprep.subr.mxu0 0.0
  %3216 = vmatpush1.msra.mxu0 0.0
  %3217 = vmatprep.subr.mxu0 0.0
  %3218 = vmatpush1.msra.mxu0 0.0
  %3219 = vmatprep.subr.mxu0 0.0
  %3220 = vmatpush1.msra.mxu0 0.0
  %3221 = vmatprep.subr.mxu0 0.0
  %3222 = vmatpush1.msra.mxu0 0.0
  %3223 = vmatprep.subr.mxu0 0.0
  %3224 = vmatpush1.msra.mxu0 0.0
  %3225 = vmatprep.subr.mxu0 0.0
  %3226 = vmatpush1.msra.mxu0 0.0
  %3227 = vmatprep.subr.mxu0 0.0
  %3228 = vmatpush1.msra.mxu0 0.0
  %3229 = vmatprep.subr.mxu0 0.0
  %3230 = vmatpush1.msra.mxu0 0.0
  %3231 = vmatprep.subr.mxu0 0.0
  %3232 = vmatpush1.msra.mxu0 0.0
  %3233 = vmatprep.subr.mxu0 0.0
  %3234 = vmatpush1.msra.mxu0 0.0
  %3235 = vmatprep.subr.mxu0 0.0
  %3236 = vmatpush1.msra.mxu0 0.0
  %3237 = vmatprep.subr.mxu0 0.0
  %3238 = vmatpush1.msra.mxu0 0.0
  %3239 = vmatprep.subr.mxu0 0.0
  %3240 = vmatpush1.msra.mxu0 0.0
  %3241 = vmatprep.subr.mxu0 0.0
  %3242 = vmatpush1.msra.mxu0 0.0
  %3243 = vmatprep.subr.mxu0 0.0
  %3244 = vmatpush1.msra.mxu0 0.0
  %3245 = vmatprep.subr.mxu0 0.0
  %3246 = vmatpush1.msra.mxu0 0.0
  %3247 = vmatprep.subr.mxu0 0.0
  %3248 = vmatpush1.msra.mxu0 0.0
  %3249 = vmatprep.subr.mxu0 0.0
  %3250 = vmatpush1.msra.mxu0 0.0
  %3251 = vmatprep.subr.mxu0 0.0
  %3252 = vmatpush1.msra.mxu0 0.0
  %3253 = vmatprep.mubr.f32.mxu0 0.0
  %3254 = vmatmul.mubr.f32.gmra.mrb[0].mxu0 %v3184
  %v3255 = vpop.f32.mrb[0].mxu0
  %v3256 = vadd.f32 0.0, %v3255
  %v3257 = vpop.f32.mrb[0].mxu0
  %3258 = vmatprep.mubr.f32.mxu0 0.0
  %3259 = vmatmul.mubr.f32.gmra.mrb[0].mxu0 %v3187
  %v3260 = vpop.f32.mrb[0].mxu0
  %v3261 = vadd.f32 0.0, %v3260
  %v3262 = vpop.f32.mrb[0].mxu0
  %3263 = vdwg.mxu0
  %v3264 = vmul.f32 %v3256, %v150
  %v3265 = vmul.f32 %v3261, %v155
  %v3266 = vsel %vm251, %v3264, 0.0
  %v3267 = vsel %vm251, %v3265, 0.0
  %v3268 = vadd.f32 %v3266, %v3267
  %v3269 = vrot.slane %v3268, 4
  %v3270 = vadd.f32 %v3268, %v3269
  %v3271 = vrot.slane %v3270, 2
  %v3272 = vadd.f32 %v3270, %v3271
  %v3273 = vrot.slane %v3272, 1
  %v3274 = vadd.f32 %v3272, %v3273
  %3275 = vst.msk [vmem:[#allocation2 + $0xc] sm:$0x1] %vm478, %v3274
  %v3276 = vlaneseq
  %v3277 = vshrl.u32 %v3276, 7
  %v3278 = vsub.s32 5, %v3277
  %v3279 = vrot.slane %v236, %v3278
  %v3280 = vadd.f32 %v3279, %v150
  %v3281 = vadd.f32 %v3279, %v155
  %vm3282 = vcmp.ge.f32.partialorder %v3280, 0.0
  %vm3283 = vcmp.ge.f32.partialorder %v3281, 0.0
  %v3284 = vmul.f32 %v3280, 0.2
  %v3285 = vmul.f32 %v3281, 0.2
  %v3286 = vsel %vm3282, %v3280, %v3284
  %v3287 = vsel %vm3283, %v3281, %v3285
  %v3289 = vsel %vm251, %v3286, 0
  %v3292 = vsel %vm251, %v3287, 0
  %3294 = vmatprep.subr.mxu0 0.0
  %3295 = vmatpush1.msra.mxu0 %v61
  %3296 = vmatprep.subr.mxu0 0.0
  %3297 = vmatpush1.msra.mxu0 %v62
  %3298 = vmatprep.subr.mxu0 0.0
  %3299 = vmatpush1.msra.mxu0 %v63
  %3300 = vmatprep.subr.mxu0 0.0
  %3301 = vmatpush1.msra.mxu0 %v64
  %3302 = vmatprep.subr.mxu0 0.0
  %3303 = vmatpush1.msra.mxu0 %v65
  %3304 = vmatprep.subr.mxu0 0.0
  %3305 = vmatpush1.msra.mxu0 %v66
  %3306 = vmatprep.subr.mxu0 0.0
  %3307 = vmatpush1.msra.mxu0 %v67
  %3308 = vmatprep.subr.mxu0 0.0
  %3309 = vmatpush1.msra.mxu0 %v68
  %3310 = vmatprep.subr.mxu0 0.0
  %3311 = vmatpush1.msra.mxu0 0.0
  %3312 = vmatprep.subr.mxu0 0.0
  %3313 = vmatpush1.msra.mxu0 0.0
  %3314 = vmatprep.subr.mxu0 0.0
  %3315 = vmatpush1.msra.mxu0 0.0
  %3316 = vmatprep.subr.mxu0 0.0
  %3317 = vmatpush1.msra.mxu0 0.0
  %3318 = vmatprep.subr.mxu0 0.0
  %3319 = vmatpush1.msra.mxu0 0.0
  %3320 = vmatprep.subr.mxu0 0.0
  %3321 = vmatpush1.msra.mxu0 0.0
  %3322 = vmatprep.subr.mxu0 0.0
  %3323 = vmatpush1.msra.mxu0 0.0
  %3324 = vmatprep.subr.mxu0 0.0
  %3325 = vmatpush1.msra.mxu0 0.0
  %3326 = vmatprep.subr.mxu0 0.0
  %3327 = vmatpush1.msra.mxu0 0.0
  %3328 = vmatprep.subr.mxu0 0.0
  %3329 = vmatpush1.msra.mxu0 0.0
  %3330 = vmatprep.subr.mxu0 0.0
  %3331 = vmatpush1.msra.mxu0 0.0
  %3332 = vmatprep.subr.mxu0 0.0
  %3333 = vmatpush1.msra.mxu0 0.0
  %3334 = vmatprep.subr.mxu0 0.0
  %3335 = vmatpush1.msra.mxu0 0.0
  %3336 = vmatprep.subr.mxu0 0.0
  %3337 = vmatpush1.msra.mxu0 0.0
  %3338 = vmatprep.subr.mxu0 0.0
  %3339 = vmatpush1.msra.mxu0 0.0
  %3340 = vmatprep.subr.mxu0 0.0
  %3341 = vmatpush1.msra.mxu0 0.0
  %3342 = vmatprep.subr.mxu0 0.0
  %3343 = vmatpush1.msra.mxu0 0.0
  %3344 = vmatprep.subr.mxu0 0.0
  %3345 = vmatpush1.msra.mxu0 0.0
  %3346 = vmatprep.subr.mxu0 0.0
  %3347 = vmatpush1.msra.mxu0 0.0
  %3348 = vmatprep.subr.mxu0 0.0
  %3349 = vmatpush1.msra.mxu0 0.0
  %3350 = vmatprep.subr.mxu0 0.0
  %3351 = vmatpush1.msra.mxu0 0.0
  %3352 = vmatprep.subr.mxu0 0.0
  %3353 = vmatpush1.msra.mxu0 0.0
  %3354 = vmatprep.subr.mxu0 0.0
  %3355 = vmatpush1.msra.mxu0 0.0
  %3356 = vmatprep.subr.mxu0 0.0
  %3357 = vmatpush1.msra.mxu0 0.0
  %3358 = vmatprep.mubr.f32.mxu0 0.0
  %3359 = vmatmul.mubr.f32.gmra.mrb[0].mxu0 %v3289
  %v3360 = vpop.f32.mrb[0].mxu0
  %v3361 = vadd.f32 0.0, %v3360
  %v3362 = vpop.f32.mrb[0].mxu0
  %3363 = vmatprep.mubr.f32.mxu0 0.0
  %3364 = vmatmul.mubr.f32.gmra.mrb[0].mxu0 %v3292
  %v3365 = vpop.f32.mrb[0].mxu0
  %v3366 = vadd.f32 0.0, %v3365
  %v3367 = vpop.f32.mrb[0].mxu0
  %3368 = vdwg.mxu0
  %3369 = vset.pattern.permute.xlu0 13
  %3370 = vperm.xlu0 %3369, %v335
  %v3371 = vpop.permute.xlu0 %3370
  %3372 = vset.pattern.permute.xlu0 13
  %3373 = vperm.xlu0 %3372, %v336
  %v3374 = vpop.permute.xlu0 %3373
  %vm3375 = vcmp.eq.s32.totalorder %v3371, 1
  %vm3376 = vcmp.eq.s32.totalorder %v3374, 1
  %v3377 = vsel %vm3375, %v3361, -1e+30
  %v3378 = vsel %vm3376, %v3366, -1e+30
  %v3379 = vsel %vm76, %v3377, -inf
  %v3380 = vsel %vm76, %v3378, -inf
  %v3381 = vmax.f32 %v3379, %v3380
  %v3382 = vrot.slane %v3381, 4
  %v3383 = vmax.f32 %v3381, %v3382
  %v3384 = vrot.slane %v3383, 2
  %v3385 = vmax.f32 %v3383, %v3384
  %v3386 = vrot.slane %v3385, 1
  %v3387 = vmax.f32 %v3385, %v3386
  %v3388 = vsub.f32 %v3377, %v3387
  %v3389 = vsub.f32 %v3378, %v3387
  %v3390 = vmul.f32 %v3388, 1.442695
  %v3391 = vpow.pop %v3390
  %v3392 = vmul.f32 %v3389, 1.442695
  %v3393 = vpow.pop %v3392
  %3394 = vset.pattern.permute.xlu0 13
  %3395 = vperm.xlu0 %3394, %v53
  %v3396 = vpop.permute.xlu0 %3395
  %3398 = vset.pattern.permute.xlu0 13
  %3399 = vperm.xlu0 %3398, %v54
  %v3400 = vpop.permute.xlu0 %3399
  %v3402 = vmul.f32 %v3391, %v3396
  %v3403 = vmul.f32 %v3393, %v3400
  %v3404 = vsel %vm76, %v3402, 0.0
  %v3405 = vsel %vm76, %v3403, 0.0
  %v3406 = vadd.f32 %v3404, %v3405
  %v3407 = vrot.slane %v3406, 4
  %v3408 = vadd.f32 %v3406, %v3407
  %v3409 = vrot.slane %v3408, 2
  %v3410 = vadd.f32 %v3408, %v3409
  %v3411 = vrot.slane %v3410, 1
  %v3412 = vadd.f32 %v3410, %v3411
  %v3413 = vrcp.pop %v3412
  %v3414 = vmul.f32 %v3402, %v3413
  %v3415 = vmul.f32 %v3403, %v3413
  %v3417 = vsel %vm76, %v3414, 0
  %v3420 = vsel %vm76, %v3415, 0
  %3422 = vmatprep.subr.mxu0 0.0
  %3423 = vmatpush1.msra.mxu0 %v69
  %3424 = vmatprep.subr.mxu0 0.0
  %3425 = vmatpush1.msra.mxu0 0.0
  %3426 = vmatprep.subr.mxu0 0.0
  %3427 = vmatpush1.msra.mxu0 0.0
  %3428 = vmatprep.subr.mxu0 0.0
  %3429 = vmatpush1.msra.mxu0 0.0
  %3430 = vmatprep.subr.mxu0 0.0
  %3431 = vmatpush1.msra.mxu0 0.0
  %3432 = vmatprep.subr.mxu0 0.0
  %3433 = vmatpush1.msra.mxu0 0.0
  %3434 = vmatprep.subr.mxu0 0.0
  %3435 = vmatpush1.msra.mxu0 0.0
  %3436 = vmatprep.subr.mxu0 0.0
  %3437 = vmatpush1.msra.mxu0 0.0
  %3438 = vmatprep.subr.mxu0 0.0
  %3439 = vmatpush1.msra.mxu0 0.0
  %3440 = vmatprep.subr.mxu0 0.0
  %3441 = vmatpush1.msra.mxu0 0.0
  %3442 = vmatprep.subr.mxu0 0.0
  %3443 = vmatpush1.msra.mxu0 0.0
  %3444 = vmatprep.subr.mxu0 0.0
  %3445 = vmatpush1.msra.mxu0 0.0
  %3446 = vmatprep.subr.mxu0 0.0
  %3447 = vmatpush1.msra.mxu0 0.0
  %3448 = vmatprep.subr.mxu0 0.0
  %3449 = vmatpush1.msra.mxu0 0.0
  %3450 = vmatprep.subr.mxu0 0.0
  %3451 = vmatpush1.msra.mxu0 0.0
  %3452 = vmatprep.subr.mxu0 0.0
  %3453 = vmatpush1.msra.mxu0 0.0
  %3454 = vmatprep.subr.mxu0 0.0
  %3455 = vmatpush1.msra.mxu0 0.0
  %3456 = vmatprep.subr.mxu0 0.0
  %3457 = vmatpush1.msra.mxu0 0.0
  %3458 = vmatprep.subr.mxu0 0.0
  %3459 = vmatpush1.msra.mxu0 0.0
  %3460 = vmatprep.subr.mxu0 0.0
  %3461 = vmatpush1.msra.mxu0 0.0
  %3462 = vmatprep.subr.mxu0 0.0
  %3463 = vmatpush1.msra.mxu0 0.0
  %3464 = vmatprep.subr.mxu0 0.0
  %3465 = vmatpush1.msra.mxu0 0.0
  %3466 = vmatprep.subr.mxu0 0.0
  %3467 = vmatpush1.msra.mxu0 0.0
  %3468 = vmatprep.subr.mxu0 0.0
  %3469 = vmatpush1.msra.mxu0 0.0
  %3470 = vmatprep.subr.mxu0 0.0
  %3471 = vmatpush1.msra.mxu0 0.0
  %3472 = vmatprep.subr.mxu0 0.0
  %3473 = vmatpush1.msra.mxu0 0.0
  %3474 = vmatprep.subr.mxu0 0.0
  %3475 = vmatpush1.msra.mxu0 0.0
  %3476 = vmatprep.subr.mxu0 0.0
  %3477 = vmatpush1.msra.mxu0 0.0
  %3478 = vmatprep.subr.mxu0 0.0
  %3479 = vmatpush1.msra.mxu0 0.0
  %3480 = vmatprep.subr.mxu0 0.0
  %3481 = vmatpush1.msra.mxu0 0.0
  %3482 = vmatprep.subr.mxu0 0.0
  %3483 = vmatpush1.msra.mxu0 0.0
  %3484 = vmatprep.subr.mxu0 0.0
  %3485 = vmatpush1.msra.mxu0 0.0
  %3486 = vmatprep.mubr.f32.mxu0 0.0
  %3487 = vmatmul.mubr.f32.gmra.mrb[0].mxu0 %v3417
  %v3488 = vpop.f32.mrb[0].mxu0
  %v3489 = vadd.f32 0.0, %v3488
  %v3490 = vpop.f32.mrb[0].mxu0
  %3491 = vmatprep.mubr.f32.mxu0 0.0
  %3492 = vmatmul.mubr.f32.gmra.mrb[0].mxu0 %v3420
  %v3493 = vpop.f32.mrb[0].mxu0
  %v3494 = vadd.f32 0.0, %v3493
  %v3495 = vpop.f32.mrb[0].mxu0
  %3496 = vdwg.mxu0
  %v3497 = vmul.f32 %v3489, %v150
  %v3498 = vmul.f32 %v3494, %v155
  %v3499 = vsel %vm251, %v3497, 0.0
  %v3500 = vsel %vm251, %v3498, 0.0
  %v3501 = vadd.f32 %v3499, %v3500
  %v3502 = vrot.slane %v3501, 4
  %v3503 = vadd.f32 %v3501, %v3502
  %v3504 = vrot.slane %v3503, 2
  %v3505 = vadd.f32 %v3503, %v3504
  %v3506 = vrot.slane %v3505, 1
  %v3507 = vadd.f32 %v3505, %v3506
  %3508 = vst.msk [vmem:[#allocation2 + $0xd] sm:$0x1] %vm478, %v3507
  %v3509 = vlaneseq
  %v3510 = vshrl.u32 %v3509, 7
  %v3511 = vsub.s32 6, %v3510
  %v3512 = vrot.slane %v236, %v3511
  %v3513 = vadd.f32 %v3512, %v150
  %v3514 = vadd.f32 %v3512, %v155
  %vm3515 = vcmp.ge.f32.partialorder %v3513, 0.0
  %vm3516 = vcmp.ge.f32.partialorder %v3514, 0.0
  %v3517 = vmul.f32 %v3513, 0.2
  %v3518 = vmul.f32 %v3514, 0.2
  %v3519 = vsel %vm3515, %v3513, %v3517
  %v3520 = vsel %vm3516, %v3514, %v3518
  %v3522 = vsel %vm251, %v3519, 0
  %v3525 = vsel %vm251, %v3520, 0
  %3527 = vmatprep.subr.mxu0 0.0
  %3528 = vmatpush1.msra.mxu0 %v61
  %3529 = vmatprep.subr.mxu0 0.0
  %3530 = vmatpush1.msra.mxu0 %v62
  %3531 = vmatprep.subr.mxu0 0.0
  %3532 = vmatpush1.msra.mxu0 %v63
  %3533 = vmatprep.subr.mxu0 0.0
  %3534 = vmatpush1.msra.mxu0 %v64
  %3535 = vmatprep.subr.mxu0 0.0
  %3536 = vmatpush1.msra.mxu0 %v65
  %3537 = vmatprep.subr.mxu0 0.0
  %3538 = vmatpush1.msra.mxu0 %v66
  %3539 = vmatprep.subr.mxu0 0.0
  %3540 = vmatpush1.msra.mxu0 %v67
  %3541 = vmatprep.subr.mxu0 0.0
  %3542 = vmatpush1.msra.mxu0 %v68
  %3543 = vmatprep.subr.mxu0 0.0
  %3544 = vmatpush1.msra.mxu0 0.0
  %3545 = vmatprep.subr.mxu0 0.0
  %3546 = vmatpush1.msra.mxu0 0.0
  %3547 = vmatprep.subr.mxu0 0.0
  %3548 = vmatpush1.msra.mxu0 0.0
  %3549 = vmatprep.subr.mxu0 0.0
  %3550 = vmatpush1.msra.mxu0 0.0
  %3551 = vmatprep.subr.mxu0 0.0
  %3552 = vmatpush1.msra.mxu0 0.0
  %3553 = vmatprep.subr.mxu0 0.0
  %3554 = vmatpush1.msra.mxu0 0.0
  %3555 = vmatprep.subr.mxu0 0.0
  %3556 = vmatpush1.msra.mxu0 0.0
  %3557 = vmatprep.subr.mxu0 0.0
  %3558 = vmatpush1.msra.mxu0 0.0
  %3559 = vmatprep.subr.mxu0 0.0
  %3560 = vmatpush1.msra.mxu0 0.0
  %3561 = vmatprep.subr.mxu0 0.0
  %3562 = vmatpush1.msra.mxu0 0.0
  %3563 = vmatprep.subr.mxu0 0.0
  %3564 = vmatpush1.msra.mxu0 0.0
  %3565 = vmatprep.subr.mxu0 0.0
  %3566 = vmatpush1.msra.mxu0 0.0
  %3567 = vmatprep.subr.mxu0 0.0
  %3568 = vmatpush1.msra.mxu0 0.0
  %3569 = vmatprep.subr.mxu0 0.0
  %3570 = vmatpush1.msra.mxu0 0.0
  %3571 = vmatprep.subr.mxu0 0.0
  %3572 = vmatpush1.msra.mxu0 0.0
  %3573 = vmatprep.subr.mxu0 0.0
  %3574 = vmatpush1.msra.mxu0 0.0
  %3575 = vmatprep.subr.mxu0 0.0
  %3576 = vmatpush1.msra.mxu0 0.0
  %3577 = vmatprep.subr.mxu0 0.0
  %3578 = vmatpush1.msra.mxu0 0.0
  %3579 = vmatprep.subr.mxu0 0.0
  %3580 = vmatpush1.msra.mxu0 0.0
  %3581 = vmatprep.subr.mxu0 0.0
  %3582 = vmatpush1.msra.mxu0 0.0
  %3583 = vmatprep.subr.mxu0 0.0
  %3584 = vmatpush1.msra.mxu0 0.0
  %3585 = vmatprep.subr.mxu0 0.0
  %3586 = vmatpush1.msra.mxu0 0.0
  %3587 = vmatprep.subr.mxu0 0.0
  %3588 = vmatpush1.msra.mxu0 0.0
  %3589 = vmatprep.subr.mxu0 0.0
  %3590 = vmatpush1.msra.mxu0 0.0
  %3591 = vmatprep.mubr.f32.mxu0 0.0
  %3592 = vmatmul.mubr.f32.gmra.mrb[0].mxu0 %v3522
  %v3593 = vpop.f32.mrb[0].mxu0
  %v3594 = vadd.f32 0.0, %v3593
  %v3595 = vpop.f32.mrb[0].mxu0
  %3596 = vmatprep.mubr.f32.mxu0 0.0
  %3597 = vmatmul.mubr.f32.gmra.mrb[0].mxu0 %v3525
  %v3598 = vpop.f32.mrb[0].mxu0
  %v3599 = vadd.f32 0.0, %v3598
  %v3600 = vpop.f32.mrb[0].mxu0
  %3601 = vdwg.mxu0
  %3602 = vset.pattern.permute.xlu0 14
  %3603 = vperm.xlu0 %3602, %v335
  %v3604 = vpop.permute.xlu0 %3603
  %3605 = vset.pattern.permute.xlu0 14
  %3606 = vperm.xlu0 %3605, %v336
  %v3607 = vpop.permute.xlu0 %3606
  %vm3608 = vcmp.eq.s32.totalorder %v3604, 1
  %vm3609 = vcmp.eq.s32.totalorder %v3607, 1
  %v3610 = vsel %vm3608, %v3594, -1e+30
  %v3611 = vsel %vm3609, %v3599, -1e+30
  %v3612 = vsel %vm76, %v3610, -inf
  %v3613 = vsel %vm76, %v3611, -inf
  %v3614 = vmax.f32 %v3612, %v3613
  %v3615 = vrot.slane %v3614, 4
  %v3616 = vmax.f32 %v3614, %v3615
  %v3617 = vrot.slane %v3616, 2
  %v3618 = vmax.f32 %v3616, %v3617
  %v3619 = vrot.slane %v3618, 1
  %v3620 = vmax.f32 %v3618, %v3619
  %v3621 = vsub.f32 %v3610, %v3620
  %v3622 = vsub.f32 %v3611, %v3620
  %v3623 = vmul.f32 %v3621, 1.442695
  %v3624 = vpow.pop %v3623
  %v3625 = vmul.f32 %v3622, 1.442695
  %v3626 = vpow.pop %v3625
  %3627 = vset.pattern.permute.xlu0 14
  %3628 = vperm.xlu0 %3627, %v53
  %v3629 = vpop.permute.xlu0 %3628
  %3631 = vset.pattern.permute.xlu0 14
  %3632 = vperm.xlu0 %3631, %v54
  %v3633 = vpop.permute.xlu0 %3632
  %v3635 = vmul.f32 %v3624, %v3629
  %v3636 = vmul.f32 %v3626, %v3633
  %v3637 = vsel %vm76, %v3635, 0.0
  %v3638 = vsel %vm76, %v3636, 0.0
  %v3639 = vadd.f32 %v3637, %v3638
  %v3640 = vrot.slane %v3639, 4
  %v3641 = vadd.f32 %v3639, %v3640
  %v3642 = vrot.slane %v3641, 2
  %v3643 = vadd.f32 %v3641, %v3642
  %v3644 = vrot.slane %v3643, 1
  %v3645 = vadd.f32 %v3643, %v3644
  %v3646 = vrcp.pop %v3645
  %v3647 = vmul.f32 %v3635, %v3646
  %v3648 = vmul.f32 %v3636, %v3646
  %v3650 = vsel %vm76, %v3647, 0
  %v3653 = vsel %vm76, %v3648, 0
  %3655 = vmatprep.subr.mxu0 0.0
  %3656 = vmatpush1.msra.mxu0 %v69
  %3657 = vmatprep.subr.mxu0 0.0
  %3658 = vmatpush1.msra.mxu0 0.0
  %3659 = vmatprep.subr.mxu0 0.0
  %3660 = vmatpush1.msra.mxu0 0.0
  %3661 = vmatprep.subr.mxu0 0.0
  %3662 = vmatpush1.msra.mxu0 0.0
  %3663 = vmatprep.subr.mxu0 0.0
  %3664 = vmatpush1.msra.mxu0 0.0
  %3665 = vmatprep.subr.mxu0 0.0
  %3666 = vmatpush1.msra.mxu0 0.0
  %3667 = vmatprep.subr.mxu0 0.0
  %3668 = vmatpush1.msra.mxu0 0.0
  %3669 = vmatprep.subr.mxu0 0.0
  %3670 = vmatpush1.msra.mxu0 0.0
  %3671 = vmatprep.subr.mxu0 0.0
  %3672 = vmatpush1.msra.mxu0 0.0
  %3673 = vmatprep.subr.mxu0 0.0
  %3674 = vmatpush1.msra.mxu0 0.0
  %3675 = vmatprep.subr.mxu0 0.0
  %3676 = vmatpush1.msra.mxu0 0.0
  %3677 = vmatprep.subr.mxu0 0.0
  %3678 = vmatpush1.msra.mxu0 0.0
  %3679 = vmatprep.subr.mxu0 0.0
  %3680 = vmatpush1.msra.mxu0 0.0
  %3681 = vmatprep.subr.mxu0 0.0
  %3682 = vmatpush1.msra.mxu0 0.0
  %3683 = vmatprep.subr.mxu0 0.0
  %3684 = vmatpush1.msra.mxu0 0.0
  %3685 = vmatprep.subr.mxu0 0.0
  %3686 = vmatpush1.msra.mxu0 0.0
  %3687 = vmatprep.subr.mxu0 0.0
  %3688 = vmatpush1.msra.mxu0 0.0
  %3689 = vmatprep.subr.mxu0 0.0
  %3690 = vmatpush1.msra.mxu0 0.0
  %3691 = vmatprep.subr.mxu0 0.0
  %3692 = vmatpush1.msra.mxu0 0.0
  %3693 = vmatprep.subr.mxu0 0.0
  %3694 = vmatpush1.msra.mxu0 0.0
  %3695 = vmatprep.subr.mxu0 0.0
  %3696 = vmatpush1.msra.mxu0 0.0
  %3697 = vmatprep.subr.mxu0 0.0
  %3698 = vmatpush1.msra.mxu0 0.0
  %3699 = vmatprep.subr.mxu0 0.0
  %3700 = vmatpush1.msra.mxu0 0.0
  %3701 = vmatprep.subr.mxu0 0.0
  %3702 = vmatpush1.msra.mxu0 0.0
  %3703 = vmatprep.subr.mxu0 0.0
  %3704 = vmatpush1.msra.mxu0 0.0
  %3705 = vmatprep.subr.mxu0 0.0
  %3706 = vmatpush1.msra.mxu0 0.0
  %3707 = vmatprep.subr.mxu0 0.0
  %3708 = vmatpush1.msra.mxu0 0.0
  %3709 = vmatprep.subr.mxu0 0.0
  %3710 = vmatpush1.msra.mxu0 0.0
  %3711 = vmatprep.subr.mxu0 0.0
  %3712 = vmatpush1.msra.mxu0 0.0
  %3713 = vmatprep.subr.mxu0 0.0
  %3714 = vmatpush1.msra.mxu0 0.0
  %3715 = vmatprep.subr.mxu0 0.0
  %3716 = vmatpush1.msra.mxu0 0.0
  %3717 = vmatprep.subr.mxu0 0.0
  %3718 = vmatpush1.msra.mxu0 0.0
  %3719 = vmatprep.mubr.f32.mxu0 0.0
  %3720 = vmatmul.mubr.f32.gmra.mrb[0].mxu0 %v3650
  %v3721 = vpop.f32.mrb[0].mxu0
  %v3722 = vadd.f32 0.0, %v3721
  %v3723 = vpop.f32.mrb[0].mxu0
  %3724 = vmatprep.mubr.f32.mxu0 0.0
  %3725 = vmatmul.mubr.f32.gmra.mrb[0].mxu0 %v3653
  %v3726 = vpop.f32.mrb[0].mxu0
  %v3727 = vadd.f32 0.0, %v3726
  %v3728 = vpop.f32.mrb[0].mxu0
  %3729 = vdwg.mxu0
  %v3730 = vmul.f32 %v3722, %v150
  %v3731 = vmul.f32 %v3727, %v155
  %v3732 = vsel %vm251, %v3730, 0.0
  %v3733 = vsel %vm251, %v3731, 0.0
  %v3734 = vadd.f32 %v3732, %v3733
  %v3735 = vrot.slane %v3734, 4
  %v3736 = vadd.f32 %v3734, %v3735
  %v3737 = vrot.slane %v3736, 2
  %v3738 = vadd.f32 %v3736, %v3737
  %v3739 = vrot.slane %v3738, 1
  %v3740 = vadd.f32 %v3738, %v3739
  %3741 = vst.msk [vmem:[#allocation2 + $0xe] sm:$0x1] %vm478, %v3740
  %v3742 = vlaneseq
  %v3743 = vshrl.u32 %v3742, 7
  %v3744 = vsub.s32 7, %v3743
  %v3745 = vrot.slane %v236, %v3744
  %v3746 = vadd.f32 %v3745, %v150
  %v3747 = vadd.f32 %v3745, %v155
  %vm3748 = vcmp.ge.f32.partialorder %v3746, 0.0
  %vm3749 = vcmp.ge.f32.partialorder %v3747, 0.0
  %v3750 = vmul.f32 %v3746, 0.2
  %v3751 = vmul.f32 %v3747, 0.2
  %v3752 = vsel %vm3748, %v3746, %v3750
  %v3753 = vsel %vm3749, %v3747, %v3751
  %v3755 = vsel %vm251, %v3752, 0
  %v3758 = vsel %vm251, %v3753, 0
  %3760 = vmatprep.subr.mxu0 0.0
  %3761 = vmatpush1.msra.mxu0 %v61
  %3762 = vmatprep.subr.mxu0 0.0
  %3763 = vmatpush1.msra.mxu0 %v62
  %3764 = vmatprep.subr.mxu0 0.0
  %3765 = vmatpush1.msra.mxu0 %v63
  %3766 = vmatprep.subr.mxu0 0.0
  %3767 = vmatpush1.msra.mxu0 %v64
  %3768 = vmatprep.subr.mxu0 0.0
  %3769 = vmatpush1.msra.mxu0 %v65
  %3770 = vmatprep.subr.mxu0 0.0
  %3771 = vmatpush1.msra.mxu0 %v66
  %3772 = vmatprep.subr.mxu0 0.0
  %3773 = vmatpush1.msra.mxu0 %v67
  %3774 = vmatprep.subr.mxu0 0.0
  %3775 = vmatpush1.msra.mxu0 %v68
  %3776 = vmatprep.subr.mxu0 0.0
  %3777 = vmatpush1.msra.mxu0 0.0
  %3778 = vmatprep.subr.mxu0 0.0
  %3779 = vmatpush1.msra.mxu0 0.0
  %3780 = vmatprep.subr.mxu0 0.0
  %3781 = vmatpush1.msra.mxu0 0.0
  %3782 = vmatprep.subr.mxu0 0.0
  %3783 = vmatpush1.msra.mxu0 0.0
  %3784 = vmatprep.subr.mxu0 0.0
  %3785 = vmatpush1.msra.mxu0 0.0
  %3786 = vmatprep.subr.mxu0 0.0
  %3787 = vmatpush1.msra.mxu0 0.0
  %3788 = vmatprep.subr.mxu0 0.0
  %3789 = vmatpush1.msra.mxu0 0.0
  %3790 = vmatprep.subr.mxu0 0.0
  %3791 = vmatpush1.msra.mxu0 0.0
  %3792 = vmatprep.subr.mxu0 0.0
  %3793 = vmatpush1.msra.mxu0 0.0
  %3794 = vmatprep.subr.mxu0 0.0
  %3795 = vmatpush1.msra.mxu0 0.0
  %3796 = vmatprep.subr.mxu0 0.0
  %3797 = vmatpush1.msra.mxu0 0.0
  %3798 = vmatprep.subr.mxu0 0.0
  %3799 = vmatpush1.msra.mxu0 0.0
  %3800 = vmatprep.subr.mxu0 0.0
  %3801 = vmatpush1.msra.mxu0 0.0
  %3802 = vmatprep.subr.mxu0 0.0
  %3803 = vmatpush1.msra.mxu0 0.0
  %3804 = vmatprep.subr.mxu0 0.0
  %3805 = vmatpush1.msra.mxu0 0.0
  %3806 = vmatprep.subr.mxu0 0.0
  %3807 = vmatpush1.msra.mxu0 0.0
  %3808 = vmatprep.subr.mxu0 0.0
  %3809 = vmatpush1.msra.mxu0 0.0
  %3810 = vmatprep.subr.mxu0 0.0
  %3811 = vmatpush1.msra.mxu0 0.0
  %3812 = vmatprep.subr.mxu0 0.0
  %3813 = vmatpush1.msra.mxu0 0.0
  %3814 = vmatprep.subr.mxu0 0.0
  %3815 = vmatpush1.msra.mxu0 0.0
  %3816 = vmatprep.subr.mxu0 0.0
  %3817 = vmatpush1.msra.mxu0 0.0
  %3818 = vmatprep.subr.mxu0 0.0
  %3819 = vmatpush1.msra.mxu0 0.0
  %3820 = vmatprep.subr.mxu0 0.0
  %3821 = vmatpush1.msra.mxu0 0.0
  %3822 = vmatprep.subr.mxu0 0.0
  %3823 = vmatpush1.msra.mxu0 0.0
  %3824 = vmatprep.mubr.f32.mxu0 0.0
  %3825 = vmatmul.mubr.f32.gmra.mrb[0].mxu0 %v3755
  %v3826 = vpop.f32.mrb[0].mxu0
  %v3827 = vadd.f32 0.0, %v3826
  %v3828 = vpop.f32.mrb[0].mxu0
  %3829 = vmatprep.mubr.f32.mxu0 0.0
  %3830 = vmatmul.mubr.f32.gmra.mrb[0].mxu0 %v3758
  %v3831 = vpop.f32.mrb[0].mxu0
  %v3832 = vadd.f32 0.0, %v3831
  %v3833 = vpop.f32.mrb[0].mxu0
  %3834 = vdwg.mxu0
  %3835 = vset.pattern.permute.xlu0 15
  %3836 = vperm.xlu0 %3835, %v335
  %v3837 = vpop.permute.xlu0 %3836
  %3838 = vset.pattern.permute.xlu0 15
  %3839 = vperm.xlu0 %3838, %v336
  %v3840 = vpop.permute.xlu0 %3839
  %vm3841 = vcmp.eq.s32.totalorder %v3837, 1
  %vm3842 = vcmp.eq.s32.totalorder %v3840, 1
  %v3843 = vsel %vm3841, %v3827, -1e+30
  %v3844 = vsel %vm3842, %v3832, -1e+30
  %v3845 = vsel %vm76, %v3843, -inf
  %v3846 = vsel %vm76, %v3844, -inf
  %v3847 = vmax.f32 %v3845, %v3846
  %v3848 = vrot.slane %v3847, 4
  %v3849 = vmax.f32 %v3847, %v3848
  %v3850 = vrot.slane %v3849, 2
  %v3851 = vmax.f32 %v3849, %v3850
  %v3852 = vrot.slane %v3851, 1
  %v3853 = vmax.f32 %v3851, %v3852
  %v3854 = vsub.f32 %v3843, %v3853
  %v3855 = vsub.f32 %v3844, %v3853
  %v3856 = vmul.f32 %v3854, 1.442695
  %v3857 = vpow.pop %v3856
  %v3858 = vmul.f32 %v3855, 1.442695
  %v3859 = vpow.pop %v3858
  %3860 = vset.pattern.permute.xlu0 15
  %3861 = vperm.xlu0 %3860, %v53
  %v3862 = vpop.permute.xlu0 %3861
  %3864 = vset.pattern.permute.xlu0 15
  %3865 = vperm.xlu0 %3864, %v54
  %v3866 = vpop.permute.xlu0 %3865
  %v3868 = vmul.f32 %v3857, %v3862
  %v3869 = vmul.f32 %v3859, %v3866
  %v3870 = vsel %vm76, %v3868, 0.0
  %v3871 = vsel %vm76, %v3869, 0.0
  %v3872 = vadd.f32 %v3870, %v3871
  %v3873 = vrot.slane %v3872, 4
  %v3874 = vadd.f32 %v3872, %v3873
  %v3875 = vrot.slane %v3874, 2
  %v3876 = vadd.f32 %v3874, %v3875
  %v3877 = vrot.slane %v3876, 1
  %v3878 = vadd.f32 %v3876, %v3877
  %v3879 = vrcp.pop %v3878
  %v3880 = vmul.f32 %v3868, %v3879
  %v3881 = vmul.f32 %v3869, %v3879
  %v3883 = vsel %vm76, %v3880, 0
  %v3886 = vsel %vm76, %v3881, 0
  %3888 = vmatprep.subr.mxu0 0.0
  %3889 = vmatpush1.msra.mxu0 %v69
  %3890 = vmatprep.subr.mxu0 0.0
  %3891 = vmatpush1.msra.mxu0 0.0
  %3892 = vmatprep.subr.mxu0 0.0
  %3893 = vmatpush1.msra.mxu0 0.0
  %3894 = vmatprep.subr.mxu0 0.0
  %3895 = vmatpush1.msra.mxu0 0.0
  %3896 = vmatprep.subr.mxu0 0.0
  %3897 = vmatpush1.msra.mxu0 0.0
  %3898 = vmatprep.subr.mxu0 0.0
  %3899 = vmatpush1.msra.mxu0 0.0
  %3900 = vmatprep.subr.mxu0 0.0
  %3901 = vmatpush1.msra.mxu0 0.0
  %3902 = vmatprep.subr.mxu0 0.0
  %3903 = vmatpush1.msra.mxu0 0.0
  %3904 = vmatprep.subr.mxu0 0.0
  %3905 = vmatpush1.msra.mxu0 0.0
  %3906 = vmatprep.subr.mxu0 0.0
  %3907 = vmatpush1.msra.mxu0 0.0
  %3908 = vmatprep.subr.mxu0 0.0
  %3909 = vmatpush1.msra.mxu0 0.0
  %3910 = vmatprep.subr.mxu0 0.0
  %3911 = vmatpush1.msra.mxu0 0.0
  %3912 = vmatprep.subr.mxu0 0.0
  %3913 = vmatpush1.msra.mxu0 0.0
  %3914 = vmatprep.subr.mxu0 0.0
  %3915 = vmatpush1.msra.mxu0 0.0
  %3916 = vmatprep.subr.mxu0 0.0
  %3917 = vmatpush1.msra.mxu0 0.0
  %3918 = vmatprep.subr.mxu0 0.0
  %3919 = vmatpush1.msra.mxu0 0.0
  %3920 = vmatprep.subr.mxu0 0.0
  %3921 = vmatpush1.msra.mxu0 0.0
  %3922 = vmatprep.subr.mxu0 0.0
  %3923 = vmatpush1.msra.mxu0 0.0
  %3924 = vmatprep.subr.mxu0 0.0
  %3925 = vmatpush1.msra.mxu0 0.0
  %3926 = vmatprep.subr.mxu0 0.0
  %3927 = vmatpush1.msra.mxu0 0.0
  %3928 = vmatprep.subr.mxu0 0.0
  %3929 = vmatpush1.msra.mxu0 0.0
  %3930 = vmatprep.subr.mxu0 0.0
  %3931 = vmatpush1.msra.mxu0 0.0
  %3932 = vmatprep.subr.mxu0 0.0
  %3933 = vmatpush1.msra.mxu0 0.0
  %3934 = vmatprep.subr.mxu0 0.0
  %3935 = vmatpush1.msra.mxu0 0.0
  %3936 = vmatprep.subr.mxu0 0.0
  %3937 = vmatpush1.msra.mxu0 0.0
  %3938 = vmatprep.subr.mxu0 0.0
  %3939 = vmatpush1.msra.mxu0 0.0
  %3940 = vmatprep.subr.mxu0 0.0
  %3941 = vmatpush1.msra.mxu0 0.0
  %3942 = vmatprep.subr.mxu0 0.0
  %3943 = vmatpush1.msra.mxu0 0.0
  %3944 = vmatprep.subr.mxu0 0.0
  %3945 = vmatpush1.msra.mxu0 0.0
  %3946 = vmatprep.subr.mxu0 0.0
  %3947 = vmatpush1.msra.mxu0 0.0
  %3948 = vmatprep.subr.mxu0 0.0
  %3949 = vmatpush1.msra.mxu0 0.0
  %3950 = vmatprep.subr.mxu0 0.0
  %3951 = vmatpush1.msra.mxu0 0.0
  %3952 = vmatprep.mubr.f32.mxu0 0.0
  %3953 = vmatmul.mubr.f32.gmra.mrb[0].mxu0 %v3883
  %v3954 = vpop.f32.mrb[0].mxu0
  %v3955 = vadd.f32 0.0, %v3954
  %v3956 = vpop.f32.mrb[0].mxu0
  %3957 = vmatprep.mubr.f32.mxu0 0.0
  %3958 = vmatmul.mubr.f32.gmra.mrb[0].mxu0 %v3886
  %v3959 = vpop.f32.mrb[0].mxu0
  %v3960 = vadd.f32 0.0, %v3959
  %v3961 = vpop.f32.mrb[0].mxu0
  %3962 = vdwg.mxu0
  %v3963 = vmul.f32 %v3955, %v150
  %v3964 = vmul.f32 %v3960, %v155
  %v3965 = vsel %vm251, %v3963, 0.0
  %v3966 = vsel %vm251, %v3964, 0.0
  %v3967 = vadd.f32 %v3965, %v3966
  %v3968 = vrot.slane %v3967, 4
  %v3969 = vadd.f32 %v3967, %v3968
  %v3970 = vrot.slane %v3969, 2
  %v3971 = vadd.f32 %v3969, %v3970
  %v3972 = vrot.slane %v3971, 1
  %v3973 = vadd.f32 %v3971, %v3972
  %3974 = vst.msk [vmem:[#allocation2 + $0xf] sm:$0x1] %vm478, %v3973
  %v3975 = vld [vmem:[#allocation2] sm:$0xff]
  %v3976 = vld [vmem:[#allocation2 + $0x8] sm:$0xff]
  %v3977 = vld [vmem:[%s8] sm:$0x1]
  %v3979 = vlaneseq
  %v3980 = vshrl.u32 %v3979, 7
  %v3981 = vsub.s32 0, %v3980
  %v3982 = vrot.slane %v3977, %v3981
  %v3984 = vadd.f32 %v3975, %v3982
  %v3985 = vadd.f32 %v3976, %v3982
  %v3986 = vmax.f32 %v3984, 0.0
  %v3987 = vmax.f32 %v3985, 0.0
  %v3988 = vld [vmem:[%s15] sm:$0x1]
  %v3989 = vld [vmem:[%s9] sm:$0xff]
  %v3990 = vld [vmem:[%s9 + $0x8] sm:$0xff]
  %v3991 = vld [vmem:[%s9 + $0x10] sm:$0xff]
  %v3992 = vld [vmem:[%s9 + $0x18] sm:$0xff]
  %v3993 = vld [vmem:[%s9 + $0x20] sm:$0xff]
  %v3994 = vld [vmem:[%s9 + $0x28] sm:$0xff]
  %v3995 = vld [vmem:[%s9 + $0x30] sm:$0xff]
  %v3996 = vld [vmem:[%s9 + $0x38] sm:$0xff]
  %v3997 = vld [vmem:[%s10] sm:$0x1]
  %v3998 = vld [vmem:[%s11] sm:$0xff]
  %v3999 = vld [vmem:[%s11 + $0x8] sm:$0xff]
  %v4000 = vld [vmem:[%s11 + $0x10] sm:$0xff]
  %v4001 = vld [vmem:[%s11 + $0x18] sm:$0xff]
  %v4002 = vld [vmem:[%s11 + $0x20] sm:$0xff]
  %v4003 = vld [vmem:[%s11 + $0x28] sm:$0xff]
  %v4004 = vld [vmem:[%s11 + $0x30] sm:$0xff]
  %v4005 = vld [vmem:[%s11 + $0x38] sm:$0xff]
  %v4006 = vld [vmem:[%s12] sm:$0x1]
  %v4007 = vld [vmem:[%s13] sm:$0xf]
  %v4008 = vld [vmem:[%s14] sm:$0x1]
  %v4010 = vlaneseq
  %v4011 = vshrl.u32 %v4010, 7
  %v4012 = vsub.s32 0, %v4011
  %v4013 = vrot.slane %v3997, %v4012
  %v4016 = vsel %vm251, %v3986, 0
  %v4019 = vsel %vm251, %v3987, 0
  %4021 = vmatprep.subr.mxu0 0.0
  %4022 = vmatpush1.msra.mxu0 %v3989
  %4023 = vmatprep.subr.mxu0 0.0
  %4024 = vmatpush1.msra.mxu0 %v3990
  %4025 = vmatprep.subr.mxu0 0.0
  %4026 = vmatpush1.msra.mxu0 %v3991
  %4027 = vmatprep.subr.mxu0 0.0
  %4028 = vmatpush1.msra.mxu0 %v3992
  %4029 = vmatprep.subr.mxu0 0.0
  %4030 = vmatpush1.msra.mxu0 %v3993
  %4031 = vmatprep.subr.mxu0 0.0
  %4032 = vmatpush1.msra.mxu0 %v3994
  %4033 = vmatprep.subr.mxu0 0.0
  %4034 = vmatpush1.msra.mxu0 %v3995
  %4035 = vmatprep.subr.mxu0 0.0
  %4036 = vmatpush1.msra.mxu0 %v3996
  %4037 = vmatprep.subr.mxu0 0.0
  %4038 = vmatpush1.msra.mxu0 0.0
  %4039 = vmatprep.subr.mxu0 0.0
  %4040 = vmatpush1.msra.mxu0 0.0
  %4041 = vmatprep.subr.mxu0 0.0
  %4042 = vmatpush1.msra.mxu0 0.0
  %4043 = vmatprep.subr.mxu0 0.0
  %4044 = vmatpush1.msra.mxu0 0.0
  %4045 = vmatprep.subr.mxu0 0.0
  %4046 = vmatpush1.msra.mxu0 0.0
  %4047 = vmatprep.subr.mxu0 0.0
  %4048 = vmatpush1.msra.mxu0 0.0
  %4049 = vmatprep.subr.mxu0 0.0
  %4050 = vmatpush1.msra.mxu0 0.0
  %4051 = vmatprep.subr.mxu0 0.0
  %4052 = vmatpush1.msra.mxu0 0.0
  %4053 = vmatprep.subr.mxu0 0.0
  %4054 = vmatpush1.msra.mxu0 0.0
  %4055 = vmatprep.subr.mxu0 0.0
  %4056 = vmatpush1.msra.mxu0 0.0
  %4057 = vmatprep.subr.mxu0 0.0
  %4058 = vmatpush1.msra.mxu0 0.0
  %4059 = vmatprep.subr.mxu0 0.0
  %4060 = vmatpush1.msra.mxu0 0.0
  %4061 = vmatprep.subr.mxu0 0.0
  %4062 = vmatpush1.msra.mxu0 0.0
  %4063 = vmatprep.subr.mxu0 0.0
  %4064 = vmatpush1.msra.mxu0 0.0
  %4065 = vmatprep.subr.mxu0 0.0
  %4066 = vmatpush1.msra.mxu0 0.0
  %4067 = vmatprep.subr.mxu0 0.0
  %4068 = vmatpush1.msra.mxu0 0.0
  %4069 = vmatprep.subr.mxu0 0.0
  %4070 = vmatpush1.msra.mxu0 0.0
  %4071 = vmatprep.subr.mxu0 0.0
  %4072 = vmatpush1.msra.mxu0 0.0
  %4073 = vmatprep.subr.mxu0 0.0
  %4074 = vmatpush1.msra.mxu0 0.0
  %4075 = vmatprep.subr.mxu0 0.0
  %4076 = vmatpush1.msra.mxu0 0.0
  %4077 = vmatprep.subr.mxu0 0.0
  %4078 = vmatpush1.msra.mxu0 0.0
  %4079 = vmatprep.subr.mxu0 0.0
  %4080 = vmatpush1.msra.mxu0 0.0
  %4081 = vmatprep.subr.mxu0 0.0
  %4082 = vmatpush1.msra.mxu0 0.0
  %4083 = vmatprep.subr.mxu0 0.0
  %4084 = vmatpush1.msra.mxu0 0.0
  %4085 = vmatprep.mubr.f32.mxu0 0.0
  %4086 = vmatmul.mubr.f32.gmra.mrb[0].mxu0 %v4016
  %v4087 = vpop.f32.mrb[0].mxu0
  %v4088 = vadd.f32 %v4013, %v4087
  %v4089 = vpop.f32.mrb[0].mxu0
  %4090 = vmatprep.mubr.f32.mxu0 0.0
  %4091 = vmatmul.mubr.f32.gmra.mrb[0].mxu0 %v4019
  %v4092 = vpop.f32.mrb[0].mxu0
  %v4093 = vadd.f32 %v4013, %v4092
  %v4094 = vpop.f32.mrb[0].mxu0
  %4095 = vdwg.mxu0
  %v4097 = vlaneseq
  %v4098 = vshrl.u32 %v4097, 7
  %v4099 = vsub.s32 0, %v4098
  %v4100 = vrot.slane %v4006, %v4099
  %4102 = vmatprep.subr.mxu0 0.0
  %4103 = vmatpush1.msra.mxu0 %v3998
  %4104 = vmatprep.subr.mxu0 0.0
  %4105 = vmatpush1.msra.mxu0 %v3999
  %4106 = vmatprep.subr.mxu0 0.0
  %4107 = vmatpush1.msra.mxu0 %v4000
  %4108 = vmatprep.subr.mxu0 0.0
  %4109 = vmatpush1.msra.mxu0 %v4001
  %4110 = vmatprep.subr.mxu0 0.0
  %4111 = vmatpush1.msra.mxu0 %v4002
  %4112 = vmatprep.subr.mxu0 0.0
  %4113 = vmatpush1.msra.mxu0 %v4003
  %4114 = vmatprep.subr.mxu0 0.0
  %4115 = vmatpush1.msra.mxu0 %v4004
  %4116 = vmatprep.subr.mxu0 0.0
  %4117 = vmatpush1.msra.mxu0 %v4005
  %4118 = vmatprep.subr.mxu0 0.0
  %4119 = vmatpush1.msra.mxu0 0.0
  %4120 = vmatprep.subr.mxu0 0.0
  %4121 = vmatpush1.msra.mxu0 0.0
  %4122 = vmatprep.subr.mxu0 0.0
  %4123 = vmatpush1.msra.mxu0 0.0
  %4124 = vmatprep.subr.mxu0 0.0
  %4125 = vmatpush1.msra.mxu0 0.0
  %4126 = vmatprep.subr.mxu0 0.0
  %4127 = vmatpush1.msra.mxu0 0.0
  %4128 = vmatprep.subr.mxu0 0.0
  %4129 = vmatpush1.msra.mxu0 0.0
  %4130 = vmatprep.subr.mxu0 0.0
  %4131 = vmatpush1.msra.mxu0 0.0
  %4132 = vmatprep.subr.mxu0 0.0
  %4133 = vmatpush1.msra.mxu0 0.0
  %4134 = vmatprep.subr.mxu0 0.0
  %4135 = vmatpush1.msra.mxu0 0.0
  %4136 = vmatprep.subr.mxu0 0.0
  %4137 = vmatpush1.msra.mxu0 0.0
  %4138 = vmatprep.subr.mxu0 0.0
  %4139 = vmatpush1.msra.mxu0 0.0
  %4140 = vmatprep.subr.mxu0 0.0
  %4141 = vmatpush1.msra.mxu0 0.0
  %4142 = vmatprep.subr.mxu0 0.0
  %4143 = vmatpush1.msra.mxu0 0.0
  %4144 = vmatprep.subr.mxu0 0.0
  %4145 = vmatpush1.msra.mxu0 0.0
  %4146 = vmatprep.subr.mxu0 0.0
  %4147 = vmatpush1.msra.mxu0 0.0
  %4148 = vmatprep.subr.mxu0 0.0
  %4149 = vmatpush1.msra.mxu0 0.0
  %4150 = vmatprep.subr.mxu0 0.0
  %4151 = vmatpush1.msra.mxu0 0.0
  %4152 = vmatprep.subr.mxu0 0.0
  %4153 = vmatpush1.msra.mxu0 0.0
  %4154 = vmatprep.subr.mxu0 0.0
  %4155 = vmatpush1.msra.mxu0 0.0
  %4156 = vmatprep.subr.mxu0 0.0
  %4157 = vmatpush1.msra.mxu0 0.0
  %4158 = vmatprep.subr.mxu0 0.0
  %4159 = vmatpush1.msra.mxu0 0.0
  %4160 = vmatprep.subr.mxu0 0.0
  %4161 = vmatpush1.msra.mxu0 0.0
  %4162 = vmatprep.subr.mxu0 0.0
  %4163 = vmatpush1.msra.mxu0 0.0
  %4164 = vmatprep.subr.mxu0 0.0
  %4165 = vmatpush1.msra.mxu0 0.0
  %4166 = vmatprep.mubr.f32.mxu0 0.0
  %4167 = vmatmul.mubr.f32.gmra.mrb[0].mxu0 %v4016
  %v4168 = vpop.f32.mrb[0].mxu0
  %v4169 = vadd.f32 %v4100, %v4168
  %v4170 = vpop.f32.mrb[0].mxu0
  %4171 = vmatprep.mubr.f32.mxu0 0.0
  %4172 = vmatmul.mubr.f32.gmra.mrb[0].mxu0 %v4019
  %v4173 = vpop.f32.mrb[0].mxu0
  %v4174 = vadd.f32 %v4100, %v4173
  %v4175 = vpop.f32.mrb[0].mxu0
  %4176 = vdwg.mxu0
  %v4177 = vlaneseq
  %v4178 = vshrl.u32 %v4177, 7
  %v4179 = vsub.s32 0, %v4178
  %v4180 = vrot.slane %v4169, %v4179
  %v4181 = vadd.f32 %v4180, %v4088
  %v4182 = vadd.f32 %v4180, %v4093
  %vm4183 = vcmp.ge.f32.partialorder %v4181, 0.0
  %vm4184 = vcmp.ge.f32.partialorder %v4182, 0.0
  %v4185 = vmul.f32 %v4181, 0.2
  %v4186 = vmul.f32 %v4182, 0.2
  %v4187 = vsel %vm4183, %v4181, %v4185
  %v4188 = vsel %vm4184, %v4182, %v4186
  %vm4189 = vcmask 31744
  %v4191 = vsel %vm4189, %v4187, 0
  %v4194 = vsel %vm4189, %v4188, 0
  %vm4196 = vcmask 1043456
  %v4198 = vsel %vm4196, %v4007, 0
  %4200 = vmatprep.subr.mxu0 0.0
  %4201 = vmatpush1.msra.mxu0 %v4198
  %4202 = vmatprep.subr.mxu0 0.0
  %4203 = vmatpush1.msra.mxu0 0.0
  %4204 = vmatprep.subr.mxu0 0.0
  %4205 = vmatpush1.msra.mxu0 0.0
  %4206 = vmatprep.subr.mxu0 0.0
  %4207 = vmatpush1.msra.mxu0 0.0
  %4208 = vmatprep.subr.mxu0 0.0
  %4209 = vmatpush1.msra.mxu0 0.0
  %4210 = vmatprep.subr.mxu0 0.0
  %4211 = vmatpush1.msra.mxu0 0.0
  %4212 = vmatprep.subr.mxu0 0.0
  %4213 = vmatpush1.msra.mxu0 0.0
  %4214 = vmatprep.subr.mxu0 0.0
  %4215 = vmatpush1.msra.mxu0 0.0
  %4216 = vmatprep.subr.mxu0 0.0
  %4217 = vmatpush1.msra.mxu0 0.0
  %4218 = vmatprep.subr.mxu0 0.0
  %4219 = vmatpush1.msra.mxu0 0.0
  %4220 = vmatprep.subr.mxu0 0.0
  %4221 = vmatpush1.msra.mxu0 0.0
  %4222 = vmatprep.subr.mxu0 0.0
  %4223 = vmatpush1.msra.mxu0 0.0
  %4224 = vmatprep.subr.mxu0 0.0
  %4225 = vmatpush1.msra.mxu0 0.0
  %4226 = vmatprep.subr.mxu0 0.0
  %4227 = vmatpush1.msra.mxu0 0.0
  %4228 = vmatprep.subr.mxu0 0.0
  %4229 = vmatpush1.msra.mxu0 0.0
  %4230 = vmatprep.subr.mxu0 0.0
  %4231 = vmatpush1.msra.mxu0 0.0
  %4232 = vmatprep.subr.mxu0 0.0
  %4233 = vmatpush1.msra.mxu0 0.0
  %4234 = vmatprep.subr.mxu0 0.0
  %4235 = vmatpush1.msra.mxu0 0.0
  %4236 = vmatprep.subr.mxu0 0.0
  %4237 = vmatpush1.msra.mxu0 0.0
  %4238 = vmatprep.subr.mxu0 0.0
  %4239 = vmatpush1.msra.mxu0 0.0
  %4240 = vmatprep.subr.mxu0 0.0
  %4241 = vmatpush1.msra.mxu0 0.0
  %4242 = vmatprep.subr.mxu0 0.0
  %4243 = vmatpush1.msra.mxu0 0.0
  %4244 = vmatprep.subr.mxu0 0.0
  %4245 = vmatpush1.msra.mxu0 0.0
  %4246 = vmatprep.subr.mxu0 0.0
  %4247 = vmatpush1.msra.mxu0 0.0
  %4248 = vmatprep.subr.mxu0 0.0
  %4249 = vmatpush1.msra.mxu0 0.0
  %4250 = vmatprep.subr.mxu0 0.0
  %4251 = vmatpush1.msra.mxu0 0.0
  %4252 = vmatprep.subr.mxu0 0.0
  %4253 = vmatpush1.msra.mxu0 0.0
  %4254 = vmatprep.subr.mxu0 0.0
  %4255 = vmatpush1.msra.mxu0 0.0
  %4256 = vmatprep.subr.mxu0 0.0
  %4257 = vmatpush1.msra.mxu0 0.0
  %4258 = vmatprep.subr.mxu0 0.0
  %4259 = vmatpush1.msra.mxu0 0.0
  %4260 = vmatprep.subr.mxu0 0.0
  %4261 = vmatpush1.msra.mxu0 0.0
  %4262 = vmatprep.subr.mxu0 0.0
  %4263 = vmatpush1.msra.mxu0 0.0
  %4264 = vmatprep.mubr.f32.mxu0 0.0
  %4265 = vmatmul.mubr.f32.gmra.mrb[0].mxu0 %v4191
  %v4266 = vpop.f32.mrb[0].mxu0
  %v4267 = vadd.f32 0.0, %v4266
  %v4268 = vpop.f32.mrb[0].mxu0
  %4269 = vmatprep.mubr.f32.mxu0 0.0
  %4270 = vmatmul.mubr.f32.gmra.mrb[0].mxu0 %v4194
  %v4271 = vpop.f32.mrb[0].mxu0
  %v4272 = vadd.f32 0.0, %v4271
  %v4273 = vpop.f32.mrb[0].mxu0
  %4274 = vdwg.mxu0
  %v4275 = vsel %vm333, %v4267, -1e+30
  %v4276 = vsel %vm334, %v4272, -1e+30
  %vm4277 = vcmask 7168
  %v4278 = vsel %vm4277, %v4275, -inf
  %v4279 = vsel %vm4277, %v4276, -inf
  %v4280 = vmax.f32 %v4278, %v4279
  %v4281 = vrot.slane %v4280, 4
  %v4282 = vmax.f32 %v4280, %v4281
  %v4283 = vrot.slane %v4282, 2
  %v4284 = vmax.f32 %v4282, %v4283
  %v4285 = vrot.slane %v4284, 1
  %v4286 = vmax.f32 %v4284, %v4285
  %v4287 = vsub.f32 %v4275, %v4286
  %v4288 = vsub.f32 %v4276, %v4286
  %v4289 = vmul.f32 %v4287, 1.442695
  %v4290 = vpow.pop %v4289
  %v4291 = vmul.f32 %v4288, 1.442695
  %v4292 = vpow.pop %v4291
  %v4293 = vmul.f32 %v4290, %v53
  %v4294 = vmul.f32 %v4292, %v54
  %v4295 = vsel %vm4277, %v4293, 0.0
  %v4296 = vsel %vm4277, %v4294, 0.0
  %v4297 = vadd.f32 %v4295, %v4296
  %v4298 = vrot.slane %v4297, 4
  %v4299 = vadd.f32 %v4297, %v4298
  %v4300 = vrot.slane %v4299, 2
  %v4301 = vadd.f32 %v4299, %v4300
  %v4302 = vrot.slane %v4301, 1
  %v4303 = vadd.f32 %v4301, %v4302
  %v4304 = vrcp.pop %v4303
  %v4305 = vmul.f32 %v4293, %v4304
  %v4306 = vmul.f32 %v4294, %v4304
  %v4308 = vsel %vm4277, %v4305, 0
  %v4311 = vsel %vm4277, %v4306, 0
  %vm4313 = vcmask 1040384
  %v4315 = vsel %vm4313, %v4008, 0
  %4317 = vmatprep.subr.mxu0 0.0
  %4318 = vmatpush1.msra.mxu0 %v4315
  %4319 = vmatprep.subr.mxu0 0.0
  %4320 = vmatpush1.msra.mxu0 0.0
  %4321 = vmatprep.subr.mxu0 0.0
  %4322 = vmatpush1.msra.mxu0 0.0
  %4323 = vmatprep.subr.mxu0 0.0
  %4324 = vmatpush1.msra.mxu0 0.0
  %4325 = vmatprep.subr.mxu0 0.0
  %4326 = vmatpush1.msra.mxu0 0.0
  %4327 = vmatprep.subr.mxu0 0.0
  %4328 = vmatpush1.msra.mxu0 0.0
  %4329 = vmatprep.subr.mxu0 0.0
  %4330 = vmatpush1.msra.mxu0 0.0
  %4331 = vmatprep.subr.mxu0 0.0
  %4332 = vmatpush1.msra.mxu0 0.0
  %4333 = vmatprep.subr.mxu0 0.0
  %4334 = vmatpush1.msra.mxu0 0.0
  %4335 = vmatprep.subr.mxu0 0.0
  %4336 = vmatpush1.msra.mxu0 0.0
  %4337 = vmatprep.subr.mxu0 0.0
  %4338 = vmatpush1.msra.mxu0 0.0
  %4339 = vmatprep.subr.mxu0 0.0
  %4340 = vmatpush1.msra.mxu0 0.0
  %4341 = vmatprep.subr.mxu0 0.0
  %4342 = vmatpush1.msra.mxu0 0.0
  %4343 = vmatprep.subr.mxu0 0.0
  %4344 = vmatpush1.msra.mxu0 0.0
  %4345 = vmatprep.subr.mxu0 0.0
  %4346 = vmatpush1.msra.mxu0 0.0
  %4347 = vmatprep.subr.mxu0 0.0
  %4348 = vmatpush1.msra.mxu0 0.0
  %4349 = vmatprep.subr.mxu0 0.0
  %4350 = vmatpush1.msra.mxu0 0.0
  %4351 = vmatprep.subr.mxu0 0.0
  %4352 = vmatpush1.msra.mxu0 0.0
  %4353 = vmatprep.subr.mxu0 0.0
  %4354 = vmatpush1.msra.mxu0 0.0
  %4355 = vmatprep.subr.mxu0 0.0
  %4356 = vmatpush1.msra.mxu0 0.0
  %4357 = vmatprep.subr.mxu0 0.0
  %4358 = vmatpush1.msra.mxu0 0.0
  %4359 = vmatprep.subr.mxu0 0.0
  %4360 = vmatpush1.msra.mxu0 0.0
  %4361 = vmatprep.subr.mxu0 0.0
  %4362 = vmatpush1.msra.mxu0 0.0
  %4363 = vmatprep.subr.mxu0 0.0
  %4364 = vmatpush1.msra.mxu0 0.0
  %4365 = vmatprep.subr.mxu0 0.0
  %4366 = vmatpush1.msra.mxu0 0.0
  %4367 = vmatprep.subr.mxu0 0.0
  %4368 = vmatpush1.msra.mxu0 0.0
  %4369 = vmatprep.subr.mxu0 0.0
  %4370 = vmatpush1.msra.mxu0 0.0
  %4371 = vmatprep.subr.mxu0 0.0
  %4372 = vmatpush1.msra.mxu0 0.0
  %4373 = vmatprep.subr.mxu0 0.0
  %4374 = vmatpush1.msra.mxu0 0.0
  %4375 = vmatprep.subr.mxu0 0.0
  %4376 = vmatpush1.msra.mxu0 0.0
  %4377 = vmatprep.subr.mxu0 0.0
  %4378 = vmatpush1.msra.mxu0 0.0
  %4379 = vmatprep.subr.mxu0 0.0
  %4380 = vmatpush1.msra.mxu0 0.0
  %4381 = vmatprep.mubr.f32.mxu0 0.0
  %4382 = vmatmul.mubr.f32.gmra.mrb[0].mxu0 %v4308
  %v4383 = vpop.f32.mrb[0].mxu0
  %v4384 = vadd.f32 0.0, %v4383
  %v4385 = vpop.f32.mrb[0].mxu0
  %4386 = vmatprep.mubr.f32.mxu0 0.0
  %4387 = vmatmul.mubr.f32.gmra.mrb[0].mxu0 %v4311
  %v4388 = vpop.f32.mrb[0].mxu0
  %v4389 = vadd.f32 0.0, %v4388
  %v4390 = vpop.f32.mrb[0].mxu0
  %4391 = vdwg.mxu0
  %v4392 = vmul.f32 %v4384, %v4088
  %v4393 = vmul.f32 %v4389, %v4093
  %v4394 = vsel %vm4189, %v4392, 0.0
  %v4395 = vsel %vm4189, %v4393, 0.0
  %v4396 = vadd.f32 %v4394, %v4395
  %v4397 = vrot.slane %v4396, 4
  %v4398 = vadd.f32 %v4396, %v4397
  %v4399 = vrot.slane %v4398, 2
  %v4400 = vadd.f32 %v4398, %v4399
  %v4401 = vrot.slane %v4400, 1
  %v4402 = vadd.f32 %v4400, %v4401
  %v4403 = vadd.f32 %v4402, %v3988
  %vm4404 = vcmask 24576
  %4405 = vst.msk [vmem:[%s16] sm:$0x1] %vm4404, %v4403
  %v4406 = vlaneseq
  %v4407 = vshrl.u32 %v4406, 7
  %v4408 = vsub.s32 1, %v4407
  %v4409 = vrot.slane %v4169, %v4408
  %v4410 = vadd.f32 %v4409, %v4088
  %v4411 = vadd.f32 %v4409, %v4093
  %vm4412 = vcmp.ge.f32.partialorder %v4410, 0.0
  %vm4413 = vcmp.ge.f32.partialorder %v4411, 0.0
  %v4414 = vmul.f32 %v4410, 0.2
  %v4415 = vmul.f32 %v4411, 0.2
  %v4416 = vsel %vm4412, %v4410, %v4414
  %v4417 = vsel %vm4413, %v4411, %v4415
  %v4419 = vsel %vm4189, %v4416, 0
  %v4422 = vsel %vm4189, %v4417, 0
  %4424 = vmatprep.subr.mxu0 0.0
  %4425 = vmatpush1.msra.mxu0 %v4198
  %4426 = vmatprep.subr.mxu0 0.0
  %4427 = vmatpush1.msra.mxu0 0.0
  %4428 = vmatprep.subr.mxu0 0.0
  %4429 = vmatpush1.msra.mxu0 0.0
  %4430 = vmatprep.subr.mxu0 0.0
  %4431 = vmatpush1.msra.mxu0 0.0
  %4432 = vmatprep.subr.mxu0 0.0
  %4433 = vmatpush1.msra.mxu0 0.0
  %4434 = vmatprep.subr.mxu0 0.0
  %4435 = vmatpush1.msra.mxu0 0.0
  %4436 = vmatprep.subr.mxu0 0.0
  %4437 = vmatpush1.msra.mxu0 0.0
  %4438 = vmatprep.subr.mxu0 0.0
  %4439 = vmatpush1.msra.mxu0 0.0
  %4440 = vmatprep.subr.mxu0 0.0
  %4441 = vmatpush1.msra.mxu0 0.0
  %4442 = vmatprep.subr.mxu0 0.0
  %4443 = vmatpush1.msra.mxu0 0.0
  %4444 = vmatprep.subr.mxu0 0.0
  %4445 = vmatpush1.msra.mxu0 0.0
  %4446 = vmatprep.subr.mxu0 0.0
  %4447 = vmatpush1.msra.mxu0 0.0
  %4448 = vmatprep.subr.mxu0 0.0
  %4449 = vmatpush1.msra.mxu0 0.0
  %4450 = vmatprep.subr.mxu0 0.0
  %4451 = vmatpush1.msra.mxu0 0.0
  %4452 = vmatprep.subr.mxu0 0.0
  %4453 = vmatpush1.msra.mxu0 0.0
  %4454 = vmatprep.subr.mxu0 0.0
  %4455 = vmatpush1.msra.mxu0 0.0
  %4456 = vmatprep.subr.mxu0 0.0
  %4457 = vmatpush1.msra.mxu0 0.0
  %4458 = vmatprep.subr.mxu0 0.0
  %4459 = vmatpush1.msra.mxu0 0.0
  %4460 = vmatprep.subr.mxu0 0.0
  %4461 = vmatpush1.msra.mxu0 0.0
  %4462 = vmatprep.subr.mxu0 0.0
  %4463 = vmatpush1.msra.mxu0 0.0
  %4464 = vmatprep.subr.mxu0 0.0
  %4465 = vmatpush1.msra.mxu0 0.0
  %4466 = vmatprep.subr.mxu0 0.0
  %4467 = vmatpush1.msra.mxu0 0.0
  %4468 = vmatprep.subr.mxu0 0.0
  %4469 = vmatpush1.msra.mxu0 0.0
  %4470 = vmatprep.subr.mxu0 0.0
  %4471 = vmatpush1.msra.mxu0 0.0
  %4472 = vmatprep.subr.mxu0 0.0
  %4473 = vmatpush1.msra.mxu0 0.0
  %4474 = vmatprep.subr.mxu0 0.0
  %4475 = vmatpush1.msra.mxu0 0.0
  %4476 = vmatprep.subr.mxu0 0.0
  %4477 = vmatpush1.msra.mxu0 0.0
  %4478 = vmatprep.subr.mxu0 0.0
  %4479 = vmatpush1.msra.mxu0 0.0
  %4480 = vmatprep.subr.mxu0 0.0
  %4481 = vmatpush1.msra.mxu0 0.0
  %4482 = vmatprep.subr.mxu0 0.0
  %4483 = vmatpush1.msra.mxu0 0.0
  %4484 = vmatprep.subr.mxu0 0.0
  %4485 = vmatpush1.msra.mxu0 0.0
  %4486 = vmatprep.subr.mxu0 0.0
  %4487 = vmatpush1.msra.mxu0 0.0
  %4488 = vmatprep.mubr.f32.mxu0 0.0
  %4489 = vmatmul.mubr.f32.gmra.mrb[0].mxu0 %v4419
  %v4490 = vpop.f32.mrb[0].mxu0
  %v4491 = vadd.f32 0.0, %v4490
  %v4492 = vpop.f32.mrb[0].mxu0
  %4493 = vmatprep.mubr.f32.mxu0 0.0
  %4494 = vmatmul.mubr.f32.gmra.mrb[0].mxu0 %v4422
  %v4495 = vpop.f32.mrb[0].mxu0
  %v4496 = vadd.f32 0.0, %v4495
  %v4497 = vpop.f32.mrb[0].mxu0
  %4498 = vdwg.mxu0
  %4501 = vrot.lane.b32.xlu0 %v4491, 1
  %v4502 = vpop.permute.xlu0 %4501
  %4503 = vrot.lane.b32.xlu0 %v4496, 1
  %v4504 = vpop.permute.xlu0 %4503
  %v4507 = vsel %vm333, %v4502, -1e+30
  %v4508 = vsel %vm334, %v4504, -1e+30
  %vm4509 = vcmask 15368
  %v4510 = vsel %vm4509, %v4507, -inf
  %v4511 = vsel %vm4509, %v4508, -inf
  %v4512 = vmax.f32 %v4510, %v4511
  %v4513 = vrot.slane %v4512, 4
  %v4514 = vmax.f32 %v4512, %v4513
  %v4515 = vrot.slane %v4514, 2
  %v4516 = vmax.f32 %v4514, %v4515
  %v4517 = vrot.slane %v4516, 1
  %v4518 = vmax.f32 %v4516, %v4517
  %v4519 = vsub.f32 %v4507, %v4518
  %v4520 = vsub.f32 %v4508, %v4518
  %v4521 = vmul.f32 %v4519, 1.442695
  %v4522 = vpow.pop %v4521
  %v4523 = vmul.f32 %v4520, 1.442695
  %v4524 = vpow.pop %v4523
  %v4525 = vmul.f32 %v4522, %v53
  %v4526 = vmul.f32 %v4524, %v54
  %v4527 = vsel %vm4509, %v4525, 0.0
  %v4528 = vsel %vm4509, %v4526, 0.0
  %v4529 = vadd.f32 %v4527, %v4528
  %v4530 = vrot.slane %v4529, 4
  %v4531 = vadd.f32 %v4529, %v4530
  %v4532 = vrot.slane %v4531, 2
  %v4533 = vadd.f32 %v4531, %v4532
  %v4534 = vrot.slane %v4533, 1
  %v4535 = vadd.f32 %v4533, %v4534
  %v4536 = vrcp.pop %v4535
  %v4537 = vmul.f32 %v4525, %v4536
  %v4538 = vmul.f32 %v4526, %v4536
  %4541 = vrot.lane.b32.xlu0 %v4537, 127
  %v4542 = vpop.permute.xlu0 %4541
  %4543 = vrot.lane.b32.xlu0 %v4538, 127
  %v4544 = vpop.permute.xlu0 %4543
  %v4545 = vsel %vm4277, %v4542, 0
  %v4547 = vsel %vm4277, %v4544, 0
  %4549 = vmatprep.subr.mxu0 0.0
  %4550 = vmatpush1.msra.mxu0 %v4315
  %4551 = vmatprep.subr.mxu0 0.0
  %4552 = vmatpush1.msra.mxu0 0.0
  %4553 = vmatprep.subr.mxu0 0.0
  %4554 = vmatpush1.msra.mxu0 0.0
  %4555 = vmatprep.subr.mxu0 0.0
  %4556 = vmatpush1.msra.mxu0 0.0
  %4557 = vmatprep.subr.mxu0 0.0
  %4558 = vmatpush1.msra.mxu0 0.0
  %4559 = vmatprep.subr.mxu0 0.0
  %4560 = vmatpush1.msra.mxu0 0.0
  %4561 = vmatprep.subr.mxu0 0.0
  %4562 = vmatpush1.msra.mxu0 0.0
  %4563 = vmatprep.subr.mxu0 0.0
  %4564 = vmatpush1.msra.mxu0 0.0
  %4565 = vmatprep.subr.mxu0 0.0
  %4566 = vmatpush1.msra.mxu0 0.0
  %4567 = vmatprep.subr.mxu0 0.0
  %4568 = vmatpush1.msra.mxu0 0.0
  %4569 = vmatprep.subr.mxu0 0.0
  %4570 = vmatpush1.msra.mxu0 0.0
  %4571 = vmatprep.subr.mxu0 0.0
  %4572 = vmatpush1.msra.mxu0 0.0
  %4573 = vmatprep.subr.mxu0 0.0
  %4574 = vmatpush1.msra.mxu0 0.0
  %4575 = vmatprep.subr.mxu0 0.0
  %4576 = vmatpush1.msra.mxu0 0.0
  %4577 = vmatprep.subr.mxu0 0.0
  %4578 = vmatpush1.msra.mxu0 0.0
  %4579 = vmatprep.subr.mxu0 0.0
  %4580 = vmatpush1.msra.mxu0 0.0
  %4581 = vmatprep.subr.mxu0 0.0
  %4582 = vmatpush1.msra.mxu0 0.0
  %4583 = vmatprep.subr.mxu0 0.0
  %4584 = vmatpush1.msra.mxu0 0.0
  %4585 = vmatprep.subr.mxu0 0.0
  %4586 = vmatpush1.msra.mxu0 0.0
  %4587 = vmatprep.subr.mxu0 0.0
  %4588 = vmatpush1.msra.mxu0 0.0
  %4589 = vmatprep.subr.mxu0 0.0
  %4590 = vmatpush1.msra.mxu0 0.0
  %4591 = vmatprep.subr.mxu0 0.0
  %4592 = vmatpush1.msra.mxu0 0.0
  %4593 = vmatprep.subr.mxu0 0.0
  %4594 = vmatpush1.msra.mxu0 0.0
  %4595 = vmatprep.subr.mxu0 0.0
  %4596 = vmatpush1.msra.mxu0 0.0
  %4597 = vmatprep.subr.mxu0 0.0
  %4598 = vmatpush1.msra.mxu0 0.0
  %4599 = vmatprep.subr.mxu0 0.0
  %4600 = vmatpush1.msra.mxu0 0.0
  %4601 = vmatprep.subr.mxu0 0.0
  %4602 = vmatpush1.msra.mxu0 0.0
  %4603 = vmatprep.subr.mxu0 0.0
  %4604 = vmatpush1.msra.mxu0 0.0
  %4605 = vmatprep.subr.mxu0 0.0
  %4606 = vmatpush1.msra.mxu0 0.0
  %4607 = vmatprep.subr.mxu0 0.0
  %4608 = vmatpush1.msra.mxu0 0.0
  %4609 = vmatprep.subr.mxu0 0.0
  %4610 = vmatpush1.msra.mxu0 0.0
  %4611 = vmatprep.subr.mxu0 0.0
  %4612 = vmatpush1.msra.mxu0 0.0
  %4613 = vmatprep.mubr.f32.mxu0 0.0
  %4614 = vmatmul.mubr.f32.gmra.mrb[0].mxu0 %v4545
  %v4615 = vpop.f32.mrb[0].mxu0
  %v4616 = vadd.f32 0.0, %v4615
  %v4617 = vpop.f32.mrb[0].mxu0
  %4618 = vmatprep.mubr.f32.mxu0 0.0
  %4619 = vmatmul.mubr.f32.gmra.mrb[0].mxu0 %v4547
  %v4620 = vpop.f32.mrb[0].mxu0
  %v4621 = vadd.f32 0.0, %v4620
  %v4622 = vpop.f32.mrb[0].mxu0
  %4623 = vdwg.mxu0
  %v4624 = vmul.f32 %v4616, %v4088
  %v4625 = vmul.f32 %v4621, %v4093
  %v4626 = vsel %vm4189, %v4624, 0.0
  %v4627 = vsel %vm4189, %v4625, 0.0
  %v4628 = vadd.f32 %v4626, %v4627
  %v4629 = vrot.slane %v4628, 4
  %v4630 = vadd.f32 %v4628, %v4629
  %v4631 = vrot.slane %v4630, 2
  %v4632 = vadd.f32 %v4630, %v4631
  %v4633 = vrot.slane %v4632, 1
  %v4634 = vadd.f32 %v4632, %v4633
  %v4635 = vadd.f32 %v4634, %v3988
  %4636 = vst.msk [vmem:[%s16 + $0x1] sm:$0x1] %vm4404, %v4635
  %v4637 = vlaneseq
  %v4638 = vshrl.u32 %v4637, 7
  %v4639 = vsub.s32 2, %v4638
  %v4640 = vrot.slane %v4169, %v4639
  %v4641 = vadd.f32 %v4640, %v4088
  %v4642 = vadd.f32 %v4640, %v4093
  %vm4643 = vcmp.ge.f32.partialorder %v4641, 0.0
  %vm4644 = vcmp.ge.f32.partialorder %v4642, 0.0
  %v4645 = vmul.f32 %v4641, 0.2
  %v4646 = vmul.f32 %v4642, 0.2
  %v4647 = vsel %vm4643, %v4641, %v4645
  %v4648 = vsel %vm4644, %v4642, %v4646
  %v4650 = vsel %vm4189, %v4647, 0
  %v4653 = vsel %vm4189, %v4648, 0
  %4655 = vmatprep.subr.mxu0 0.0
  %4656 = vmatpush1.msra.mxu0 %v4198
  %4657 = vmatprep.subr.mxu0 0.0
  %4658 = vmatpush1.msra.mxu0 0.0
  %4659 = vmatprep.subr.mxu0 0.0
  %4660 = vmatpush1.msra.mxu0 0.0
  %4661 = vmatprep.subr.mxu0 0.0
  %4662 = vmatpush1.msra.mxu0 0.0
  %4663 = vmatprep.subr.mxu0 0.0
  %4664 = vmatpush1.msra.mxu0 0.0
  %4665 = vmatprep.subr.mxu0 0.0
  %4666 = vmatpush1.msra.mxu0 0.0
  %4667 = vmatprep.subr.mxu0 0.0
  %4668 = vmatpush1.msra.mxu0 0.0
  %4669 = vmatprep.subr.mxu0 0.0
  %4670 = vmatpush1.msra.mxu0 0.0
  %4671 = vmatprep.subr.mxu0 0.0
  %4672 = vmatpush1.msra.mxu0 0.0
  %4673 = vmatprep.subr.mxu0 0.0
  %4674 = vmatpush1.msra.mxu0 0.0
  %4675 = vmatprep.subr.mxu0 0.0
  %4676 = vmatpush1.msra.mxu0 0.0
  %4677 = vmatprep.subr.mxu0 0.0
  %4678 = vmatpush1.msra.mxu0 0.0
  %4679 = vmatprep.subr.mxu0 0.0
  %4680 = vmatpush1.msra.mxu0 0.0
  %4681 = vmatprep.subr.mxu0 0.0
  %4682 = vmatpush1.msra.mxu0 0.0
  %4683 = vmatprep.subr.mxu0 0.0
  %4684 = vmatpush1.msra.mxu0 0.0
  %4685 = vmatprep.subr.mxu0 0.0
  %4686 = vmatpush1.msra.mxu0 0.0
  %4687 = vmatprep.subr.mxu0 0.0
  %4688 = vmatpush1.msra.mxu0 0.0
  %4689 = vmatprep.subr.mxu0 0.0
  %4690 = vmatpush1.msra.mxu0 0.0
  %4691 = vmatprep.subr.mxu0 0.0
  %4692 = vmatpush1.msra.mxu0 0.0
  %4693 = vmatprep.subr.mxu0 0.0
  %4694 = vmatpush1.msra.mxu0 0.0
  %4695 = vmatprep.subr.mxu0 0.0
  %4696 = vmatpush1.msra.mxu0 0.0
  %4697 = vmatprep.subr.mxu0 0.0
  %4698 = vmatpush1.msra.mxu0 0.0
  %4699 = vmatprep.subr.mxu0 0.0
  %4700 = vmatpush1.msra.mxu0 0.0
  %4701 = vmatprep.subr.mxu0 0.0
  %4702 = vmatpush1.msra.mxu0 0.0
  %4703 = vmatprep.subr.mxu0 0.0
  %4704 = vmatpush1.msra.mxu0 0.0
  %4705 = vmatprep.subr.mxu0 0.0
  %4706 = vmatpush1.msra.mxu0 0.0
  %4707 = vmatprep.subr.mxu0 0.0
  %4708 = vmatpush1.msra.mxu0 0.0
  %4709 = vmatprep.subr.mxu0 0.0
  %4710 = vmatpush1.msra.mxu0 0.0
  %4711 = vmatprep.subr.mxu0 0.0
  %4712 = vmatpush1.msra.mxu0 0.0
  %4713 = vmatprep.subr.mxu0 0.0
  %4714 = vmatpush1.msra.mxu0 0.0
  %4715 = vmatprep.subr.mxu0 0.0
  %4716 = vmatpush1.msra.mxu0 0.0
  %4717 = vmatprep.subr.mxu0 0.0
  %4718 = vmatpush1.msra.mxu0 0.0
  %4719 = vmatprep.mubr.f32.mxu0 0.0
  %4720 = vmatmul.mubr.f32.gmra.mrb[0].mxu0 %v4650
  %v4721 = vpop.f32.mrb[0].mxu0
  %v4722 = vadd.f32 0.0, %v4721
  %v4723 = vpop.f32.mrb[0].mxu0
  %4724 = vmatprep.mubr.f32.mxu0 0.0
  %4725 = vmatmul.mubr.f32.gmra.mrb[0].mxu0 %v4653
  %v4726 = vpop.f32.mrb[0].mxu0
  %v4727 = vadd.f32 0.0, %v4726
  %v4728 = vpop.f32.mrb[0].mxu0
  %4729 = vdwg.mxu0
  %4732 = vrot.lane.b32.xlu0 %v4722, 2
  %v4733 = vpop.permute.xlu0 %4732
  %4734 = vrot.lane.b32.xlu0 %v4727, 2
  %v4735 = vpop.permute.xlu0 %4734
  %v4738 = vsel %vm333, %v4733, -1e+30
  %v4739 = vsel %vm334, %v4735, -1e+30
  %vm4740 = vcmask 23568
  %v4741 = vsel %vm4740, %v4738, -inf
  %v4742 = vsel %vm4740, %v4739, -inf
  %v4743 = vmax.f32 %v4741, %v4742
  %v4744 = vrot.slane %v4743, 4
  %v4745 = vmax.f32 %v4743, %v4744
  %v4746 = vrot.slane %v4745, 2
  %v4747 = vmax.f32 %v4745, %v4746
  %v4748 = vrot.slane %v4747, 1
  %v4749 = vmax.f32 %v4747, %v4748
  %v4750 = vsub.f32 %v4738, %v4749
  %v4751 = vsub.f32 %v4739, %v4749
  %v4752 = vmul.f32 %v4750, 1.442695
  %v4753 = vpow.pop %v4752
  %v4754 = vmul.f32 %v4751, 1.442695
  %v4755 = vpow.pop %v4754
  %v4756 = vmul.f32 %v4753, %v53
  %v4757 = vmul.f32 %v4755, %v54
  %v4758 = vsel %vm4740, %v4756, 0.0
  %v4759 = vsel %vm4740, %v4757, 0.0
  %v4760 = vadd.f32 %v4758, %v4759
  %v4761 = vrot.slane %v4760, 4
  %v4762 = vadd.f32 %v4760, %v4761
  %v4763 = vrot.slane %v4762, 2
  %v4764 = vadd.f32 %v4762, %v4763
  %v4765 = vrot.slane %v4764, 1
  %v4766 = vadd.f32 %v4764, %v4765
  %v4767 = vrcp.pop %v4766
  %v4768 = vmul.f32 %v4756, %v4767
  %v4769 = vmul.f32 %v4757, %v4767
  %4772 = vrot.lane.b32.xlu0 %v4768, 126
  %v4773 = vpop.permute.xlu0 %4772
  %4774 = vrot.lane.b32.xlu0 %v4769, 126
  %v4775 = vpop.permute.xlu0 %4774
  %v4776 = vsel %vm4277, %v4773, 0
  %v4778 = vsel %vm4277, %v4775, 0
  %4780 = vmatprep.subr.mxu0 0.0
  %4781 = vmatpush1.msra.mxu0 %v4315
  %4782 = vmatprep.subr.mxu0 0.0
  %4783 = vmatpush1.msra.mxu0 0.0
  %4784 = vmatprep.subr.mxu0 0.0
  %4785 = vmatpush1.msra.mxu0 0.0
  %4786 = vmatprep.subr.mxu0 0.0
  %4787 = vmatpush1.msra.mxu0 0.0
  %4788 = vmatprep.subr.mxu0 0.0
  %4789 = vmatpush1.msra.mxu0 0.0
  %4790 = vmatprep.subr.mxu0 0.0
  %4791 = vmatpush1.msra.mxu0 0.0
  %4792 = vmatprep.subr.mxu0 0.0
  %4793 = vmatpush1.msra.mxu0 0.0
  %4794 = vmatprep.subr.mxu0 0.0
  %4795 = vmatpush1.msra.mxu0 0.0
  %4796 = vmatprep.subr.mxu0 0.0
  %4797 = vmatpush1.msra.mxu0 0.0
  %4798 = vmatprep.subr.mxu0 0.0
  %4799 = vmatpush1.msra.mxu0 0.0
  %4800 = vmatprep.subr.mxu0 0.0
  %4801 = vmatpush1.msra.mxu0 0.0
  %4802 = vmatprep.subr.mxu0 0.0
  %4803 = vmatpush1.msra.mxu0 0.0
  %4804 = vmatprep.subr.mxu0 0.0
  %4805 = vmatpush1.msra.mxu0 0.0
  %4806 = vmatprep.subr.mxu0 0.0
  %4807 = vmatpush1.msra.mxu0 0.0
  %4808 = vmatprep.subr.mxu0 0.0
  %4809 = vmatpush1.msra.mxu0 0.0
  %4810 = vmatprep.subr.mxu0 0.0
  %4811 = vmatpush1.msra.mxu0 0.0
  %4812 = vmatprep.subr.mxu0 0.0
  %4813 = vmatpush1.msra.mxu0 0.0
  %4814 = vmatprep.subr.mxu0 0.0
  %4815 = vmatpush1.msra.mxu0 0.0
  %4816 = vmatprep.subr.mxu0 0.0
  %4817 = vmatpush1.msra.mxu0 0.0
  %4818 = vmatprep.subr.mxu0 0.0
  %4819 = vmatpush1.msra.mxu0 0.0
  %4820 = vmatprep.subr.mxu0 0.0
  %4821 = vmatpush1.msra.mxu0 0.0
  %4822 = vmatprep.subr.mxu0 0.0
  %4823 = vmatpush1.msra.mxu0 0.0
  %4824 = vmatprep.subr.mxu0 0.0
  %4825 = vmatpush1.msra.mxu0 0.0
  %4826 = vmatprep.subr.mxu0 0.0
  %4827 = vmatpush1.msra.mxu0 0.0
  %4828 = vmatprep.subr.mxu0 0.0
  %4829 = vmatpush1.msra.mxu0 0.0
  %4830 = vmatprep.subr.mxu0 0.0
  %4831 = vmatpush1.msra.mxu0 0.0
  %4832 = vmatprep.subr.mxu0 0.0
  %4833 = vmatpush1.msra.mxu0 0.0
  %4834 = vmatprep.subr.mxu0 0.0
  %4835 = vmatpush1.msra.mxu0 0.0
  %4836 = vmatprep.subr.mxu0 0.0
  %4837 = vmatpush1.msra.mxu0 0.0
  %4838 = vmatprep.subr.mxu0 0.0
  %4839 = vmatpush1.msra.mxu0 0.0
  %4840 = vmatprep.subr.mxu0 0.0
  %4841 = vmatpush1.msra.mxu0 0.0
  %4842 = vmatprep.subr.mxu0 0.0
  %4843 = vmatpush1.msra.mxu0 0.0
  %4844 = vmatprep.mubr.f32.mxu0 0.0
  %4845 = vmatmul.mubr.f32.gmra.mrb[0].mxu0 %v4776
  %v4846 = vpop.f32.mrb[0].mxu0
  %v4847 = vadd.f32 0.0, %v4846
  %v4848 = vpop.f32.mrb[0].mxu0
  %4849 = vmatprep.mubr.f32.mxu0 0.0
  %4850 = vmatmul.mubr.f32.gmra.mrb[0].mxu0 %v4778
  %v4851 = vpop.f32.mrb[0].mxu0
  %v4852 = vadd.f32 0.0, %v4851
  %v4853 = vpop.f32.mrb[0].mxu0
  %4854 = vdwg.mxu0
  %v4855 = vmul.f32 %v4847, %v4088
  %v4856 = vmul.f32 %v4852, %v4093
  %v4857 = vsel %vm4189, %v4855, 0.0
  %v4858 = vsel %vm4189, %v4856, 0.0
  %v4859 = vadd.f32 %v4857, %v4858
  %v4860 = vrot.slane %v4859, 4
  %v4861 = vadd.f32 %v4859, %v4860
  %v4862 = vrot.slane %v4861, 2
  %v4863 = vadd.f32 %v4861, %v4862
  %v4864 = vrot.slane %v4863, 1
  %v4865 = vadd.f32 %v4863, %v4864
  %v4866 = vadd.f32 %v4865, %v3988
  %4867 = vst.msk [vmem:[%s16 + $0x2] sm:$0x1] %vm4404, %v4866
  %v4868 = vlaneseq
  %v4869 = vshrl.u32 %v4868, 7
  %v4870 = vsub.s32 3, %v4869
  %v4871 = vrot.slane %v4169, %v4870
  %v4872 = vadd.f32 %v4871, %v4088
  %v4873 = vadd.f32 %v4871, %v4093
  %vm4874 = vcmp.ge.f32.partialorder %v4872, 0.0
  %vm4875 = vcmp.ge.f32.partialorder %v4873, 0.0
  %v4876 = vmul.f32 %v4872, 0.2
  %v4877 = vmul.f32 %v4873, 0.2
  %v4878 = vsel %vm4874, %v4872, %v4876
  %v4879 = vsel %vm4875, %v4873, %v4877
  %v4881 = vsel %vm4189, %v4878, 0
  %v4884 = vsel %vm4189, %v4879, 0
  %4886 = vmatprep.subr.mxu0 0.0
  %4887 = vmatpush1.msra.mxu0 %v4198
  %4888 = vmatprep.subr.mxu0 0.0
  %4889 = vmatpush1.msra.mxu0 0.0
  %4890 = vmatprep.subr.mxu0 0.0
  %4891 = vmatpush1.msra.mxu0 0.0
  %4892 = vmatprep.subr.mxu0 0.0
  %4893 = vmatpush1.msra.mxu0 0.0
  %4894 = vmatprep.subr.mxu0 0.0
  %4895 = vmatpush1.msra.mxu0 0.0
  %4896 = vmatprep.subr.mxu0 0.0
  %4897 = vmatpush1.msra.mxu0 0.0
  %4898 = vmatprep.subr.mxu0 0.0
  %4899 = vmatpush1.msra.mxu0 0.0
  %4900 = vmatprep.subr.mxu0 0.0
  %4901 = vmatpush1.msra.mxu0 0.0
  %4902 = vmatprep.subr.mxu0 0.0
  %4903 = vmatpush1.msra.mxu0 0.0
  %4904 = vmatprep.subr.mxu0 0.0
  %4905 = vmatpush1.msra.mxu0 0.0
  %4906 = vmatprep.subr.mxu0 0.0
  %4907 = vmatpush1.msra.mxu0 0.0
  %4908 = vmatprep.subr.mxu0 0.0
  %4909 = vmatpush1.msra.mxu0 0.0
  %4910 = vmatprep.subr.mxu0 0.0
  %4911 = vmatpush1.msra.mxu0 0.0
  %4912 = vmatprep.subr.mxu0 0.0
  %4913 = vmatpush1.msra.mxu0 0.0
  %4914 = vmatprep.subr.mxu0 0.0
  %4915 = vmatpush1.msra.mxu0 0.0
  %4916 = vmatprep.subr.mxu0 0.0
  %4917 = vmatpush1.msra.mxu0 0.0
  %4918 = vmatprep.subr.mxu0 0.0
  %4919 = vmatpush1.msra.mxu0 0.0
  %4920 = vmatprep.subr.mxu0 0.0
  %4921 = vmatpush1.msra.mxu0 0.0
  %4922 = vmatprep.subr.mxu0 0.0
  %4923 = vmatpush1.msra.mxu0 0.0
  %4924 = vmatprep.subr.mxu0 0.0
  %4925 = vmatpush1.msra.mxu0 0.0
  %4926 = vmatprep.subr.mxu0 0.0
  %4927 = vmatpush1.msra.mxu0 0.0
  %4928 = vmatprep.subr.mxu0 0.0
  %4929 = vmatpush1.msra.mxu0 0.0
  %4930 = vmatprep.subr.mxu0 0.0
  %4931 = vmatpush1.msra.mxu0 0.0
  %4932 = vmatprep.subr.mxu0 0.0
  %4933 = vmatpush1.msra.mxu0 0.0
  %4934 = vmatprep.subr.mxu0 0.0
  %4935 = vmatpush1.msra.mxu0 0.0
  %4936 = vmatprep.subr.mxu0 0.0
  %4937 = vmatpush1.msra.mxu0 0.0
  %4938 = vmatprep.subr.mxu0 0.0
  %4939 = vmatpush1.msra.mxu0 0.0
  %4940 = vmatprep.subr.mxu0 0.0
  %4941 = vmatpush1.msra.mxu0 0.0
  %4942 = vmatprep.subr.mxu0 0.0
  %4943 = vmatpush1.msra.mxu0 0.0
  %4944 = vmatprep.subr.mxu0 0.0
  %4945 = vmatpush1.msra.mxu0 0.0
  %4946 = vmatprep.subr.mxu0 0.0
  %4947 = vmatpush1.msra.mxu0 0.0
  %4948 = vmatprep.subr.mxu0 0.0
  %4949 = vmatpush1.msra.mxu0 0.0
  %4950 = vmatprep.mubr.f32.mxu0 0.0
  %4951 = vmatmul.mubr.f32.gmra.mrb[0].mxu0 %v4881
  %v4952 = vpop.f32.mrb[0].mxu0
  %v4953 = vadd.f32 0.0, %v4952
  %v4954 = vpop.f32.mrb[0].mxu0
  %4955 = vmatprep.mubr.f32.mxu0 0.0
  %4956 = vmatmul.mubr.f32.gmra.mrb[0].mxu0 %v4884
  %v4957 = vpop.f32.mrb[0].mxu0
  %v4958 = vadd.f32 0.0, %v4957
  %v4959 = vpop.f32.mrb[0].mxu0
  %4960 = vdwg.mxu0
  %4963 = vrot.lane.b32.xlu0 %v4953, 3
  %v4964 = vpop.permute.xlu0 %4963
  %4965 = vrot.lane.b32.xlu0 %v4958, 3
  %v4966 = vpop.permute.xlu0 %4965
  %v4969 = vsel %vm333, %v4964, -1e+30
  %v4970 = vsel %vm334, %v4966, -1e+30
  %vm4971 = vcmask 31768
  %v4972 = vsel %vm4971, %v4969, -inf
  %v4973 = vsel %vm4971, %v4970, -inf
  %v4974 = vmax.f32 %v4972, %v4973
  %v4975 = vrot.slane %v4974, 4
  %v4976 = vmax.f32 %v4974, %v4975
  %v4977 = vrot.slane %v4976, 2
  %v4978 = vmax.f32 %v4976, %v4977
  %v4979 = vrot.slane %v4978, 1
  %v4980 = vmax.f32 %v4978, %v4979
  %v4981 = vsub.f32 %v4969, %v4980
  %v4982 = vsub.f32 %v4970, %v4980
  %v4983 = vmul.f32 %v4981, 1.442695
  %v4984 = vpow.pop %v4983
  %v4985 = vmul.f32 %v4982, 1.442695
  %v4986 = vpow.pop %v4985
  %v4987 = vmul.f32 %v4984, %v53
  %v4988 = vmul.f32 %v4986, %v54
  %v4989 = vsel %vm4971, %v4987, 0.0
  %v4990 = vsel %vm4971, %v4988, 0.0
  %v4991 = vadd.f32 %v4989, %v4990
  %v4992 = vrot.slane %v4991, 4
  %v4993 = vadd.f32 %v4991, %v4992
  %v4994 = vrot.slane %v4993, 2
  %v4995 = vadd.f32 %v4993, %v4994
  %v4996 = vrot.slane %v4995, 1
  %v4997 = vadd.f32 %v4995, %v4996
  %v4998 = vrcp.pop %v4997
  %v4999 = vmul.f32 %v4987, %v4998
  %v5000 = vmul.f32 %v4988, %v4998
  %5003 = vrot.lane.b32.xlu0 %v4999, 125
  %v5004 = vpop.permute.xlu0 %5003
  %5005 = vrot.lane.b32.xlu0 %v5000, 125
  %v5006 = vpop.permute.xlu0 %5005
  %v5007 = vsel %vm4277, %v5004, 0
  %v5009 = vsel %vm4277, %v5006, 0
  %5011 = vmatprep.subr.mxu0 0.0
  %5012 = vmatpush1.msra.mxu0 %v4315
  %5013 = vmatprep.subr.mxu0 0.0
  %5014 = vmatpush1.msra.mxu0 0.0
  %5015 = vmatprep.subr.mxu0 0.0
  %5016 = vmatpush1.msra.mxu0 0.0
  %5017 = vmatprep.subr.mxu0 0.0
  %5018 = vmatpush1.msra.mxu0 0.0
  %5019 = vmatprep.subr.mxu0 0.0
  %5020 = vmatpush1.msra.mxu0 0.0
  %5021 = vmatprep.subr.mxu0 0.0
  %5022 = vmatpush1.msra.mxu0 0.0
  %5023 = vmatprep.subr.mxu0 0.0
  %5024 = vmatpush1.msra.mxu0 0.0
  %5025 = vmatprep.subr.mxu0 0.0
  %5026 = vmatpush1.msra.mxu0 0.0
  %5027 = vmatprep.subr.mxu0 0.0
  %5028 = vmatpush1.msra.mxu0 0.0
  %5029 = vmatprep.subr.mxu0 0.0
  %5030 = vmatpush1.msra.mxu0 0.0
  %5031 = vmatprep.subr.mxu0 0.0
  %5032 = vmatpush1.msra.mxu0 0.0
  %5033 = vmatprep.subr.mxu0 0.0
  %5034 = vmatpush1.msra.mxu0 0.0
  %5035 = vmatprep.subr.mxu0 0.0
  %5036 = vmatpush1.msra.mxu0 0.0
  %5037 = vmatprep.subr.mxu0 0.0
  %5038 = vmatpush1.msra.mxu0 0.0
  %5039 = vmatprep.subr.mxu0 0.0
  %5040 = vmatpush1.msra.mxu0 0.0
  %5041 = vmatprep.subr.mxu0 0.0
  %5042 = vmatpush1.msra.mxu0 0.0
  %5043 = vmatprep.subr.mxu0 0.0
  %5044 = vmatpush1.msra.mxu0 0.0
  %5045 = vmatprep.subr.mxu0 0.0
  %5046 = vmatpush1.msra.mxu0 0.0
  %5047 = vmatprep.subr.mxu0 0.0
  %5048 = vmatpush1.msra.mxu0 0.0
  %5049 = vmatprep.subr.mxu0 0.0
  %5050 = vmatpush1.msra.mxu0 0.0
  %5051 = vmatprep.subr.mxu0 0.0
  %5052 = vmatpush1.msra.mxu0 0.0
  %5053 = vmatprep.subr.mxu0 0.0
  %5054 = vmatpush1.msra.mxu0 0.0
  %5055 = vmatprep.subr.mxu0 0.0
  %5056 = vmatpush1.msra.mxu0 0.0
  %5057 = vmatprep.subr.mxu0 0.0
  %5058 = vmatpush1.msra.mxu0 0.0
  %5059 = vmatprep.subr.mxu0 0.0
  %5060 = vmatpush1.msra.mxu0 0.0
  %5061 = vmatprep.subr.mxu0 0.0
  %5062 = vmatpush1.msra.mxu0 0.0
  %5063 = vmatprep.subr.mxu0 0.0
  %5064 = vmatpush1.msra.mxu0 0.0
  %5065 = vmatprep.subr.mxu0 0.0
  %5066 = vmatpush1.msra.mxu0 0.0
  %5067 = vmatprep.subr.mxu0 0.0
  %5068 = vmatpush1.msra.mxu0 0.0
  %5069 = vmatprep.subr.mxu0 0.0
  %5070 = vmatpush1.msra.mxu0 0.0
  %5071 = vmatprep.subr.mxu0 0.0
  %5072 = vmatpush1.msra.mxu0 0.0
  %5073 = vmatprep.subr.mxu0 0.0
  %5074 = vmatpush1.msra.mxu0 0.0
  %5075 = vmatprep.mubr.f32.mxu0 0.0
  %5076 = vmatmul.mubr.f32.gmra.mrb[0].mxu0 %v5007
  %v5077 = vpop.f32.mrb[0].mxu0
  %v5078 = vadd.f32 0.0, %v5077
  %v5079 = vpop.f32.mrb[0].mxu0
  %5080 = vmatprep.mubr.f32.mxu0 0.0
  %5081 = vmatmul.mubr.f32.gmra.mrb[0].mxu0 %v5009
  %v5082 = vpop.f32.mrb[0].mxu0
  %v5083 = vadd.f32 0.0, %v5082
  %v5084 = vpop.f32.mrb[0].mxu0
  %5085 = vdwg.mxu0
  %v5086 = vmul.f32 %v5078, %v4088
  %v5087 = vmul.f32 %v5083, %v4093
  %v5088 = vsel %vm4189, %v5086, 0.0
  %v5089 = vsel %vm4189, %v5087, 0.0
  %v5090 = vadd.f32 %v5088, %v5089
  %v5091 = vrot.slane %v5090, 4
  %v5092 = vadd.f32 %v5090, %v5091
  %v5093 = vrot.slane %v5092, 2
  %v5094 = vadd.f32 %v5092, %v5093
  %v5095 = vrot.slane %v5094, 1
  %v5096 = vadd.f32 %v5094, %v5095
  %v5097 = vadd.f32 %v5096, %v3988
  %5098 = vst.msk [vmem:[%s16 + $0x3] sm:$0x1] %vm4404, %v5097
  %v5099 = vlaneseq
  %v5100 = vshrl.u32 %v5099, 7
  %v5101 = vsub.s32 4, %v5100
  %v5102 = vrot.slane %v4169, %v5101
  %v5103 = vadd.f32 %v5102, %v4088
  %v5104 = vadd.f32 %v5102, %v4093
  %vm5105 = vcmp.ge.f32.partialorder %v5103, 0.0
  %vm5106 = vcmp.ge.f32.partialorder %v5104, 0.0
  %v5107 = vmul.f32 %v5103, 0.2
  %v5108 = vmul.f32 %v5104, 0.2
  %v5109 = vsel %vm5105, %v5103, %v5107
  %v5110 = vsel %vm5106, %v5104, %v5108
  %v5112 = vsel %vm4189, %v5109, 0
  %v5115 = vsel %vm4189, %v5110, 0
  %5117 = vmatprep.subr.mxu0 0.0
  %5118 = vmatpush1.msra.mxu0 %v4198
  %5119 = vmatprep.subr.mxu0 0.0
  %5120 = vmatpush1.msra.mxu0 0.0
  %5121 = vmatprep.subr.mxu0 0.0
  %5122 = vmatpush1.msra.mxu0 0.0
  %5123 = vmatprep.subr.mxu0 0.0
  %5124 = vmatpush1.msra.mxu0 0.0
  %5125 = vmatprep.subr.mxu0 0.0
  %5126 = vmatpush1.msra.mxu0 0.0
  %5127 = vmatprep.subr.mxu0 0.0
  %5128 = vmatpush1.msra.mxu0 0.0
  %5129 = vmatprep.subr.mxu0 0.0
  %5130 = vmatpush1.msra.mxu0 0.0
  %5131 = vmatprep.subr.mxu0 0.0
  %5132 = vmatpush1.msra.mxu0 0.0
  %5133 = vmatprep.subr.mxu0 0.0
  %5134 = vmatpush1.msra.mxu0 0.0
  %5135 = vmatprep.subr.mxu0 0.0
  %5136 = vmatpush1.msra.mxu0 0.0
  %5137 = vmatprep.subr.mxu0 0.0
  %5138 = vmatpush1.msra.mxu0 0.0
  %5139 = vmatprep.subr.mxu0 0.0
  %5140 = vmatpush1.msra.mxu0 0.0
  %5141 = vmatprep.subr.mxu0 0.0
  %5142 = vmatpush1.msra.mxu0 0.0
  %5143 = vmatprep.subr.mxu0 0.0
  %5144 = vmatpush1.msra.mxu0 0.0
  %5145 = vmatprep.subr.mxu0 0.0
  %5146 = vmatpush1.msra.mxu0 0.0
  %5147 = vmatprep.subr.mxu0 0.0
  %5148 = vmatpush1.msra.mxu0 0.0
  %5149 = vmatprep.subr.mxu0 0.0
  %5150 = vmatpush1.msra.mxu0 0.0
  %5151 = vmatprep.subr.mxu0 0.0
  %5152 = vmatpush1.msra.mxu0 0.0
  %5153 = vmatprep.subr.mxu0 0.0
  %5154 = vmatpush1.msra.mxu0 0.0
  %5155 = vmatprep.subr.mxu0 0.0
  %5156 = vmatpush1.msra.mxu0 0.0
  %5157 = vmatprep.subr.mxu0 0.0
  %5158 = vmatpush1.msra.mxu0 0.0
  %5159 = vmatprep.subr.mxu0 0.0
  %5160 = vmatpush1.msra.mxu0 0.0
  %5161 = vmatprep.subr.mxu0 0.0
  %5162 = vmatpush1.msra.mxu0 0.0
  %5163 = vmatprep.subr.mxu0 0.0
  %5164 = vmatpush1.msra.mxu0 0.0
  %5165 = vmatprep.subr.mxu0 0.0
  %5166 = vmatpush1.msra.mxu0 0.0
  %5167 = vmatprep.subr.mxu0 0.0
  %5168 = vmatpush1.msra.mxu0 0.0
  %5169 = vmatprep.subr.mxu0 0.0
  %5170 = vmatpush1.msra.mxu0 0.0
  %5171 = vmatprep.subr.mxu0 0.0
  %5172 = vmatpush1.msra.mxu0 0.0
  %5173 = vmatprep.subr.mxu0 0.0
  %5174 = vmatpush1.msra.mxu0 0.0
  %5175 = vmatprep.subr.mxu0 0.0
  %5176 = vmatpush1.msra.mxu0 0.0
  %5177 = vmatprep.subr.mxu0 0.0
  %5178 = vmatpush1.msra.mxu0 0.0
  %5179 = vmatprep.subr.mxu0 0.0
  %5180 = vmatpush1.msra.mxu0 0.0
  %5181 = vmatprep.mubr.f32.mxu0 0.0
  %5182 = vmatmul.mubr.f32.gmra.mrb[0].mxu0 %v5112
  %v5183 = vpop.f32.mrb[0].mxu0
  %v5184 = vadd.f32 0.0, %v5183
  %v5185 = vpop.f32.mrb[0].mxu0
  %5186 = vmatprep.mubr.f32.mxu0 0.0
  %5187 = vmatmul.mubr.f32.gmra.mrb[0].mxu0 %v5115
  %v5188 = vpop.f32.mrb[0].mxu0
  %v5189 = vadd.f32 0.0, %v5188
  %v5190 = vpop.f32.mrb[0].mxu0
  %5191 = vdwg.mxu0
  %5194 = vrot.lane.b32.xlu0 %v5184, 4
  %v5195 = vpop.permute.xlu0 %5194
  %5196 = vrot.lane.b32.xlu0 %v5189, 4
  %v5197 = vpop.permute.xlu0 %5196
  %v5200 = vsel %vm333, %v5195, -1e+30
  %v5201 = vsel %vm334, %v5197, -1e+30
  %vm5202 = vcmask 39968
  %v5203 = vsel %vm5202, %v5200, -inf
  %v5204 = vsel %vm5202, %v5201, -inf
  %v5205 = vmax.f32 %v5203, %v5204
  %v5206 = vrot.slane %v5205, 4
  %v5207 = vmax.f32 %v5205, %v5206
  %v5208 = vrot.slane %v5207, 2
  %v5209 = vmax.f32 %v5207, %v5208
  %v5210 = vrot.slane %v5209, 1
  %v5211 = vmax.f32 %v5209, %v5210
  %v5212 = vsub.f32 %v5200, %v5211
  %v5213 = vsub.f32 %v5201, %v5211
  %v5214 = vmul.f32 %v5212, 1.442695
  %v5215 = vpow.pop %v5214
  %v5216 = vmul.f32 %v5213, 1.442695
  %v5217 = vpow.pop %v5216
  %v5218 = vmul.f32 %v5215, %v53
  %v5219 = vmul.f32 %v5217, %v54
  %v5220 = vsel %vm5202, %v5218, 0.0
  %v5221 = vsel %vm5202, %v5219, 0.0
  %v5222 = vadd.f32 %v5220, %v5221
  %v5223 = vrot.slane %v5222, 4
  %v5224 = vadd.f32 %v5222, %v5223
  %v5225 = vrot.slane %v5224, 2
  %v5226 = vadd.f32 %v5224, %v5225
  %v5227 = vrot.slane %v5226, 1
  %v5228 = vadd.f32 %v5226, %v5227
  %v5229 = vrcp.pop %v5228
  %v5230 = vmul.f32 %v5218, %v5229
  %v5231 = vmul.f32 %v5219, %v5229
  %5234 = vrot.lane.b32.xlu0 %v5230, 124
  %v5235 = vpop.permute.xlu0 %5234
  %5236 = vrot.lane.b32.xlu0 %v5231, 124
  %v5237 = vpop.permute.xlu0 %5236
  %v5238 = vsel %vm4277, %v5235, 0
  %v5240 = vsel %vm4277, %v5237, 0
  %5242 = vmatprep.subr.mxu0 0.0
  %5243 = vmatpush1.msra.mxu0 %v4315
  %5244 = vmatprep.subr.mxu0 0.0
  %5245 = vmatpush1.msra.mxu0 0.0
  %5246 = vmatprep.subr.mxu0 0.0
  %5247 = vmatpush1.msra.mxu0 0.0
  %5248 = vmatprep.subr.mxu0 0.0
  %5249 = vmatpush1.msra.mxu0 0.0
  %5250 = vmatprep.subr.mxu0 0.0
  %5251 = vmatpush1.msra.mxu0 0.0
  %5252 = vmatprep.subr.mxu0 0.0
  %5253 = vmatpush1.msra.mxu0 0.0
  %5254 = vmatprep.subr.mxu0 0.0
  %5255 = vmatpush1.msra.mxu0 0.0
  %5256 = vmatprep.subr.mxu0 0.0
  %5257 = vmatpush1.msra.mxu0 0.0
  %5258 = vmatprep.subr.mxu0 0.0
  %5259 = vmatpush1.msra.mxu0 0.0
  %5260 = vmatprep.subr.mxu0 0.0
  %5261 = vmatpush1.msra.mxu0 0.0
  %5262 = vmatprep.subr.mxu0 0.0
  %5263 = vmatpush1.msra.mxu0 0.0
  %5264 = vmatprep.subr.mxu0 0.0
  %5265 = vmatpush1.msra.mxu0 0.0
  %5266 = vmatprep.subr.mxu0 0.0
  %5267 = vmatpush1.msra.mxu0 0.0
  %5268 = vmatprep.subr.mxu0 0.0
  %5269 = vmatpush1.msra.mxu0 0.0
  %5270 = vmatprep.subr.mxu0 0.0
  %5271 = vmatpush1.msra.mxu0 0.0
  %5272 = vmatprep.subr.mxu0 0.0
  %5273 = vmatpush1.msra.mxu0 0.0
  %5274 = vmatprep.subr.mxu0 0.0
  %5275 = vmatpush1.msra.mxu0 0.0
  %5276 = vmatprep.subr.mxu0 0.0
  %5277 = vmatpush1.msra.mxu0 0.0
  %5278 = vmatprep.subr.mxu0 0.0
  %5279 = vmatpush1.msra.mxu0 0.0
  %5280 = vmatprep.subr.mxu0 0.0
  %5281 = vmatpush1.msra.mxu0 0.0
  %5282 = vmatprep.subr.mxu0 0.0
  %5283 = vmatpush1.msra.mxu0 0.0
  %5284 = vmatprep.subr.mxu0 0.0
  %5285 = vmatpush1.msra.mxu0 0.0
  %5286 = vmatprep.subr.mxu0 0.0
  %5287 = vmatpush1.msra.mxu0 0.0
  %5288 = vmatprep.subr.mxu0 0.0
  %5289 = vmatpush1.msra.mxu0 0.0
  %5290 = vmatprep.subr.mxu0 0.0
  %5291 = vmatpush1.msra.mxu0 0.0
  %5292 = vmatprep.subr.mxu0 0.0
  %5293 = vmatpush1.msra.mxu0 0.0
  %5294 = vmatprep.subr.mxu0 0.0
  %5295 = vmatpush1.msra.mxu0 0.0
  %5296 = vmatprep.subr.mxu0 0.0
  %5297 = vmatpush1.msra.mxu0 0.0
  %5298 = vmatprep.subr.mxu0 0.0
  %5299 = vmatpush1.msra.mxu0 0.0
  %5300 = vmatprep.subr.mxu0 0.0
  %5301 = vmatpush1.msra.mxu0 0.0
  %5302 = vmatprep.subr.mxu0 0.0
  %5303 = vmatpush1.msra.mxu0 0.0
  %5304 = vmatprep.subr.mxu0 0.0
  %5305 = vmatpush1.msra.mxu0 0.0
  %5306 = vmatprep.mubr.f32.mxu0 0.0
  %5307 = vmatmul.mubr.f32.gmra.mrb[0].mxu0 %v5238
  %v5308 = vpop.f32.mrb[0].mxu0
  %v5309 = vadd.f32 0.0, %v5308
  %v5310 = vpop.f32.mrb[0].mxu0
  %5311 = vmatprep.mubr.f32.mxu0 0.0
  %5312 = vmatmul.mubr.f32.gmra.mrb[0].mxu0 %v5240
  %v5313 = vpop.f32.mrb[0].mxu0
  %v5314 = vadd.f32 0.0, %v5313
  %v5315 = vpop.f32.mrb[0].mxu0
  %5316 = vdwg.mxu0
  %v5317 = vmul.f32 %v5309, %v4088
  %v5318 = vmul.f32 %v5314, %v4093
  %v5319 = vsel %vm4189, %v5317, 0.0
  %v5320 = vsel %vm4189, %v5318, 0.0
  %v5321 = vadd.f32 %v5319, %v5320
  %v5322 = vrot.slane %v5321, 4
  %v5323 = vadd.f32 %v5321, %v5322
  %v5324 = vrot.slane %v5323, 2
  %v5325 = vadd.f32 %v5323, %v5324
  %v5326 = vrot.slane %v5325, 1
  %v5327 = vadd.f32 %v5325, %v5326
  %v5328 = vadd.f32 %v5327, %v3988
  %5329 = vst.msk [vmem:[%s16 + $0x4] sm:$0x1] %vm4404, %v5328
  %v5330 = vlaneseq
  %v5331 = vshrl.u32 %v5330, 7
  %v5332 = vsub.s32 5, %v5331
  %v5333 = vrot.slane %v4169, %v5332
  %v5334 = vadd.f32 %v5333, %v4088
  %v5335 = vadd.f32 %v5333, %v4093
  %vm5336 = vcmp.ge.f32.partialorder %v5334, 0.0
  %vm5337 = vcmp.ge.f32.partialorder %v5335, 0.0
  %v5338 = vmul.f32 %v5334, 0.2
  %v5339 = vmul.f32 %v5335, 0.2
  %v5340 = vsel %vm5336, %v5334, %v5338
  %v5341 = vsel %vm5337, %v5335, %v5339
  %v5343 = vsel %vm4189, %v5340, 0
  %v5346 = vsel %vm4189, %v5341, 0
  %5348 = vmatprep.subr.mxu0 0.0
  %5349 = vmatpush1.msra.mxu0 %v4198
  %5350 = vmatprep.subr.mxu0 0.0
  %5351 = vmatpush1.msra.mxu0 0.0
  %5352 = vmatprep.subr.mxu0 0.0
  %5353 = vmatpush1.msra.mxu0 0.0
  %5354 = vmatprep.subr.mxu0 0.0
  %5355 = vmatpush1.msra.mxu0 0.0
  %5356 = vmatprep.subr.mxu0 0.0
  %5357 = vmatpush1.msra.mxu0 0.0
  %5358 = vmatprep.subr.mxu0 0.0
  %5359 = vmatpush1.msra.mxu0 0.0
  %5360 = vmatprep.subr.mxu0 0.0
  %5361 = vmatpush1.msra.mxu0 0.0
  %5362 = vmatprep.subr.mxu0 0.0
  %5363 = vmatpush1.msra.mxu0 0.0
  %5364 = vmatprep.subr.mxu0 0.0
  %5365 = vmatpush1.msra.mxu0 0.0
  %5366 = vmatprep.subr.mxu0 0.0
  %5367 = vmatpush1.msra.mxu0 0.0
  %5368 = vmatprep.subr.mxu0 0.0
  %5369 = vmatpush1.msra.mxu0 0.0
  %5370 = vmatprep.subr.mxu0 0.0
  %5371 = vmatpush1.msra.mxu0 0.0
  %5372 = vmatprep.subr.mxu0 0.0
  %5373 = vmatpush1.msra.mxu0 0.0
  %5374 = vmatprep.subr.mxu0 0.0
  %5375 = vmatpush1.msra.mxu0 0.0
  %5376 = vmatprep.subr.mxu0 0.0
  %5377 = vmatpush1.msra.mxu0 0.0
  %5378 = vmatprep.subr.mxu0 0.0
  %5379 = vmatpush1.msra.mxu0 0.0
  %5380 = vmatprep.subr.mxu0 0.0
  %5381 = vmatpush1.msra.mxu0 0.0
  %5382 = vmatprep.subr.mxu0 0.0
  %5383 = vmatpush1.msra.mxu0 0.0
  %5384 = vmatprep.subr.mxu0 0.0
  %5385 = vmatpush1.msra.mxu0 0.0
  %5386 = vmatprep.subr.mxu0 0.0
  %5387 = vmatpush1.msra.mxu0 0.0
  %5388 = vmatprep.subr.mxu0 0.0
  %5389 = vmatpush1.msra.mxu0 0.0
  %5390 = vmatprep.subr.mxu0 0.0
  %5391 = vmatpush1.msra.mxu0 0.0
  %5392 = vmatprep.subr.mxu0 0.0
  %5393 = vmatpush1.msra.mxu0 0.0
  %5394 = vmatprep.subr.mxu0 0.0
  %5395 = vmatpush1.msra.mxu0 0.0
  %5396 = vmatprep.subr.mxu0 0.0
  %5397 = vmatpush1.msra.mxu0 0.0
  %5398 = vmatprep.subr.mxu0 0.0
  %5399 = vmatpush1.msra.mxu0 0.0
  %5400 = vmatprep.subr.mxu0 0.0
  %5401 = vmatpush1.msra.mxu0 0.0
  %5402 = vmatprep.subr.mxu0 0.0
  %5403 = vmatpush1.msra.mxu0 0.0
  %5404 = vmatprep.subr.mxu0 0.0
  %5405 = vmatpush1.msra.mxu0 0.0
  %5406 = vmatprep.subr.mxu0 0.0
  %5407 = vmatpush1.msra.mxu0 0.0
  %5408 = vmatprep.subr.mxu0 0.0
  %5409 = vmatpush1.msra.mxu0 0.0
  %5410 = vmatprep.subr.mxu0 0.0
  %5411 = vmatpush1.msra.mxu0 0.0
  %5412 = vmatprep.mubr.f32.mxu0 0.0
  %5413 = vmatmul.mubr.f32.gmra.mrb[0].mxu0 %v5343
  %v5414 = vpop.f32.mrb[0].mxu0
  %v5415 = vadd.f32 0.0, %v5414
  %v5416 = vpop.f32.mrb[0].mxu0
  %5417 = vmatprep.mubr.f32.mxu0 0.0
  %5418 = vmatmul.mubr.f32.gmra.mrb[0].mxu0 %v5346
  %v5419 = vpop.f32.mrb[0].mxu0
  %v5420 = vadd.f32 0.0, %v5419
  %v5421 = vpop.f32.mrb[0].mxu0
  %5422 = vdwg.mxu0
  %5425 = vrot.lane.b32.xlu0 %v5415, 5
  %v5426 = vpop.permute.xlu0 %5425
  %5427 = vrot.lane.b32.xlu0 %v5420, 5
  %v5428 = vpop.permute.xlu0 %5427
  %v5431 = vsel %vm333, %v5426, -1e+30
  %v5432 = vsel %vm334, %v5428, -1e+30
  %vm5433 = vcmask 48168
  %v5434 = vsel %vm5433, %v5431, -inf
  %v5435 = vsel %vm5433, %v5432, -inf
  %v5436 = vmax.f32 %v5434, %v5435
  %v5437 = vrot.slane %v5436, 4
  %v5438 = vmax.f32 %v5436, %v5437
  %v5439 = vrot.slane %v5438, 2
  %v5440 = vmax.f32 %v5438, %v5439
  %v5441 = vrot.slane %v5440, 1
  %v5442 = vmax.f32 %v5440, %v5441
  %v5443 = vsub.f32 %v5431, %v5442
  %v5444 = vsub.f32 %v5432, %v5442
  %v5445 = vmul.f32 %v5443, 1.442695
  %v5446 = vpow.pop %v5445
  %v5447 = vmul.f32 %v5444, 1.442695
  %v5448 = vpow.pop %v5447
  %v5449 = vmul.f32 %v5446, %v53
  %v5450 = vmul.f32 %v5448, %v54
  %v5451 = vsel %vm5433, %v5449, 0.0
  %v5452 = vsel %vm5433, %v5450, 0.0
  %v5453 = vadd.f32 %v5451, %v5452
  %v5454 = vrot.slane %v5453, 4
  %v5455 = vadd.f32 %v5453, %v5454
  %v5456 = vrot.slane %v5455, 2
  %v5457 = vadd.f32 %v5455, %v5456
  %v5458 = vrot.slane %v5457, 1
  %v5459 = vadd.f32 %v5457, %v5458
  %v5460 = vrcp.pop %v5459
  %v5461 = vmul.f32 %v5449, %v5460
  %v5462 = vmul.f32 %v5450, %v5460
  %5465 = vrot.lane.b32.xlu0 %v5461, 123
  %v5466 = vpop.permute.xlu0 %5465
  %5467 = vrot.lane.b32.xlu0 %v5462, 123
  %v5468 = vpop.permute.xlu0 %5467
  %v5469 = vsel %vm4277, %v5466, 0
  %v5471 = vsel %vm4277, %v5468, 0
  %5473 = vmatprep.subr.mxu0 0.0
  %5474 = vmatpush1.msra.mxu0 %v4315
  %5475 = vmatprep.subr.mxu0 0.0
  %5476 = vmatpush1.msra.mxu0 0.0
  %5477 = vmatprep.subr.mxu0 0.0
  %5478 = vmatpush1.msra.mxu0 0.0
  %5479 = vmatprep.subr.mxu0 0.0
  %5480 = vmatpush1.msra.mxu0 0.0
  %5481 = vmatprep.subr.mxu0 0.0
  %5482 = vmatpush1.msra.mxu0 0.0
  %5483 = vmatprep.subr.mxu0 0.0
  %5484 = vmatpush1.msra.mxu0 0.0
  %5485 = vmatprep.subr.mxu0 0.0
  %5486 = vmatpush1.msra.mxu0 0.0
  %5487 = vmatprep.subr.mxu0 0.0
  %5488 = vmatpush1.msra.mxu0 0.0
  %5489 = vmatprep.subr.mxu0 0.0
  %5490 = vmatpush1.msra.mxu0 0.0
  %5491 = vmatprep.subr.mxu0 0.0
  %5492 = vmatpush1.msra.mxu0 0.0
  %5493 = vmatprep.subr.mxu0 0.0
  %5494 = vmatpush1.msra.mxu0 0.0
  %5495 = vmatprep.subr.mxu0 0.0
  %5496 = vmatpush1.msra.mxu0 0.0
  %5497 = vmatprep.subr.mxu0 0.0
  %5498 = vmatpush1.msra.mxu0 0.0
  %5499 = vmatprep.subr.mxu0 0.0
  %5500 = vmatpush1.msra.mxu0 0.0
  %5501 = vmatprep.subr.mxu0 0.0
  %5502 = vmatpush1.msra.mxu0 0.0
  %5503 = vmatprep.subr.mxu0 0.0
  %5504 = vmatpush1.msra.mxu0 0.0
  %5505 = vmatprep.subr.mxu0 0.0
  %5506 = vmatpush1.msra.mxu0 0.0
  %5507 = vmatprep.subr.mxu0 0.0
  %5508 = vmatpush1.msra.mxu0 0.0
  %5509 = vmatprep.subr.mxu0 0.0
  %5510 = vmatpush1.msra.mxu0 0.0
  %5511 = vmatprep.subr.mxu0 0.0
  %5512 = vmatpush1.msra.mxu0 0.0
  %5513 = vmatprep.subr.mxu0 0.0
  %5514 = vmatpush1.msra.mxu0 0.0
  %5515 = vmatprep.subr.mxu0 0.0
  %5516 = vmatpush1.msra.mxu0 0.0
  %5517 = vmatprep.subr.mxu0 0.0
  %5518 = vmatpush1.msra.mxu0 0.0
  %5519 = vmatprep.subr.mxu0 0.0
  %5520 = vmatpush1.msra.mxu0 0.0
  %5521 = vmatprep.subr.mxu0 0.0
  %5522 = vmatpush1.msra.mxu0 0.0
  %5523 = vmatprep.subr.mxu0 0.0
  %5524 = vmatpush1.msra.mxu0 0.0
  %5525 = vmatprep.subr.mxu0 0.0
  %5526 = vmatpush1.msra.mxu0 0.0
  %5527 = vmatprep.subr.mxu0 0.0
  %5528 = vmatpush1.msra.mxu0 0.0
  %5529 = vmatprep.subr.mxu0 0.0
  %5530 = vmatpush1.msra.mxu0 0.0
  %5531 = vmatprep.subr.mxu0 0.0
  %5532 = vmatpush1.msra.mxu0 0.0
  %5533 = vmatprep.subr.mxu0 0.0
  %5534 = vmatpush1.msra.mxu0 0.0
  %5535 = vmatprep.subr.mxu0 0.0
  %5536 = vmatpush1.msra.mxu0 0.0
  %5537 = vmatprep.mubr.f32.mxu0 0.0
  %5538 = vmatmul.mubr.f32.gmra.mrb[0].mxu0 %v5469
  %v5539 = vpop.f32.mrb[0].mxu0
  %v5540 = vadd.f32 0.0, %v5539
  %v5541 = vpop.f32.mrb[0].mxu0
  %5542 = vmatprep.mubr.f32.mxu0 0.0
  %5543 = vmatmul.mubr.f32.gmra.mrb[0].mxu0 %v5471
  %v5544 = vpop.f32.mrb[0].mxu0
  %v5545 = vadd.f32 0.0, %v5544
  %v5546 = vpop.f32.mrb[0].mxu0
  %5547 = vdwg.mxu0
  %v5548 = vmul.f32 %v5540, %v4088
  %v5549 = vmul.f32 %v5545, %v4093
  %v5550 = vsel %vm4189, %v5548, 0.0
  %v5551 = vsel %vm4189, %v5549, 0.0
  %v5552 = vadd.f32 %v5550, %v5551
  %v5553 = vrot.slane %v5552, 4
  %v5554 = vadd.f32 %v5552, %v5553
  %v5555 = vrot.slane %v5554, 2
  %v5556 = vadd.f32 %v5554, %v5555
  %v5557 = vrot.slane %v5556, 1
  %v5558 = vadd.f32 %v5556, %v5557
  %v5559 = vadd.f32 %v5558, %v3988
  %5560 = vst.msk [vmem:[%s16 + $0x5] sm:$0x1] %vm4404, %v5559
  %v5561 = vlaneseq
  %v5562 = vshrl.u32 %v5561, 7
  %v5563 = vsub.s32 6, %v5562
  %v5564 = vrot.slane %v4169, %v5563
  %v5565 = vadd.f32 %v5564, %v4088
  %v5566 = vadd.f32 %v5564, %v4093
  %vm5567 = vcmp.ge.f32.partialorder %v5565, 0.0
  %vm5568 = vcmp.ge.f32.partialorder %v5566, 0.0
  %v5569 = vmul.f32 %v5565, 0.2
  %v5570 = vmul.f32 %v5566, 0.2
  %v5571 = vsel %vm5567, %v5565, %v5569
  %v5572 = vsel %vm5568, %v5566, %v5570
  %v5574 = vsel %vm4189, %v5571, 0
  %v5577 = vsel %vm4189, %v5572, 0
  %5579 = vmatprep.subr.mxu0 0.0
  %5580 = vmatpush1.msra.mxu0 %v4198
  %5581 = vmatprep.subr.mxu0 0.0
  %5582 = vmatpush1.msra.mxu0 0.0
  %5583 = vmatprep.subr.mxu0 0.0
  %5584 = vmatpush1.msra.mxu0 0.0
  %5585 = vmatprep.subr.mxu0 0.0
  %5586 = vmatpush1.msra.mxu0 0.0
  %5587 = vmatprep.subr.mxu0 0.0
  %5588 = vmatpush1.msra.mxu0 0.0
  %5589 = vmatprep.subr.mxu0 0.0
  %5590 = vmatpush1.msra.mxu0 0.0
  %5591 = vmatprep.subr.mxu0 0.0
  %5592 = vmatpush1.msra.mxu0 0.0
  %5593 = vmatprep.subr.mxu0 0.0
  %5594 = vmatpush1.msra.mxu0 0.0
  %5595 = vmatprep.subr.mxu0 0.0
  %5596 = vmatpush1.msra.mxu0 0.0
  %5597 = vmatprep.subr.mxu0 0.0
  %5598 = vmatpush1.msra.mxu0 0.0
  %5599 = vmatprep.subr.mxu0 0.0
  %5600 = vmatpush1.msra.mxu0 0.0
  %5601 = vmatprep.subr.mxu0 0.0
  %5602 = vmatpush1.msra.mxu0 0.0
  %5603 = vmatprep.subr.mxu0 0.0
  %5604 = vmatpush1.msra.mxu0 0.0
  %5605 = vmatprep.subr.mxu0 0.0
  %5606 = vmatpush1.msra.mxu0 0.0
  %5607 = vmatprep.subr.mxu0 0.0
  %5608 = vmatpush1.msra.mxu0 0.0
  %5609 = vmatprep.subr.mxu0 0.0
  %5610 = vmatpush1.msra.mxu0 0.0
  %5611 = vmatprep.subr.mxu0 0.0
  %5612 = vmatpush1.msra.mxu0 0.0
  %5613 = vmatprep.subr.mxu0 0.0
  %5614 = vmatpush1.msra.mxu0 0.0
  %5615 = vmatprep.subr.mxu0 0.0
  %5616 = vmatpush1.msra.mxu0 0.0
  %5617 = vmatprep.subr.mxu0 0.0
  %5618 = vmatpush1.msra.mxu0 0.0
  %5619 = vmatprep.subr.mxu0 0.0
  %5620 = vmatpush1.msra.mxu0 0.0
  %5621 = vmatprep.subr.mxu0 0.0
  %5622 = vmatpush1.msra.mxu0 0.0
  %5623 = vmatprep.subr.mxu0 0.0
  %5624 = vmatpush1.msra.mxu0 0.0
  %5625 = vmatprep.subr.mxu0 0.0
  %5626 = vmatpush1.msra.mxu0 0.0
  %5627 = vmatprep.subr.mxu0 0.0
  %5628 = vmatpush1.msra.mxu0 0.0
  %5629 = vmatprep.subr.mxu0 0.0
  %5630 = vmatpush1.msra.mxu0 0.0
  %5631 = vmatprep.subr.mxu0 0.0
  %5632 = vmatpush1.msra.mxu0 0.0
  %5633 = vmatprep.subr.mxu0 0.0
  %5634 = vmatpush1.msra.mxu0 0.0
  %5635 = vmatprep.subr.mxu0 0.0
  %5636 = vmatpush1.msra.mxu0 0.0
  %5637 = vmatprep.subr.mxu0 0.0
  %5638 = vmatpush1.msra.mxu0 0.0
  %5639 = vmatprep.subr.mxu0 0.0
  %5640 = vmatpush1.msra.mxu0 0.0
  %5641 = vmatprep.subr.mxu0 0.0
  %5642 = vmatpush1.msra.mxu0 0.0
  %5643 = vmatprep.mubr.f32.mxu0 0.0
  %5644 = vmatmul.mubr.f32.gmra.mrb[0].mxu0 %v5574
  %v5645 = vpop.f32.mrb[0].mxu0
  %v5646 = vadd.f32 0.0, %v5645
  %v5647 = vpop.f32.mrb[0].mxu0
  %5648 = vmatprep.mubr.f32.mxu0 0.0
  %5649 = vmatmul.mubr.f32.gmra.mrb[0].mxu0 %v5577
  %v5650 = vpop.f32.mrb[0].mxu0
  %v5651 = vadd.f32 0.0, %v5650
  %v5652 = vpop.f32.mrb[0].mxu0
  %5653 = vdwg.mxu0
  %5656 = vrot.lane.b32.xlu0 %v5646, 6
  %v5657 = vpop.permute.xlu0 %5656
  %5658 = vrot.lane.b32.xlu0 %v5651, 6
  %v5659 = vpop.permute.xlu0 %5658
  %v5662 = vsel %vm333, %v5657, -1e+30
  %v5663 = vsel %vm334, %v5659, -1e+30
  %vm5664 = vcmask 56368
  %v5665 = vsel %vm5664, %v5662, -inf
  %v5666 = vsel %vm5664, %v5663, -inf
  %v5667 = vmax.f32 %v5665, %v5666
  %v5668 = vrot.slane %v5667, 4
  %v5669 = vmax.f32 %v5667, %v5668
  %v5670 = vrot.slane %v5669, 2
  %v5671 = vmax.f32 %v5669, %v5670
  %v5672 = vrot.slane %v5671, 1
  %v5673 = vmax.f32 %v5671, %v5672
  %v5674 = vsub.f32 %v5662, %v5673
  %v5675 = vsub.f32 %v5663, %v5673
  %v5676 = vmul.f32 %v5674, 1.442695
  %v5677 = vpow.pop %v5676
  %v5678 = vmul.f32 %v5675, 1.442695
  %v5679 = vpow.pop %v5678
  %v5680 = vmul.f32 %v5677, %v53
  %v5681 = vmul.f32 %v5679, %v54
  %v5682 = vsel %vm5664, %v5680, 0.0
  %v5683 = vsel %vm5664, %v5681, 0.0
  %v5684 = vadd.f32 %v5682, %v5683
  %v5685 = vrot.slane %v5684, 4
  %v5686 = vadd.f32 %v5684, %v5685
  %v5687 = vrot.slane %v5686, 2
  %v5688 = vadd.f32 %v5686, %v5687
  %v5689 = vrot.slane %v5688, 1
  %v5690 = vadd.f32 %v5688, %v5689
  %v5691 = vrcp.pop %v5690
  %v5692 = vmul.f32 %v5680, %v5691
  %v5693 = vmul.f32 %v5681, %v5691
  %5696 = vrot.lane.b32.xlu0 %v5692, 122
  %v5697 = vpop.permute.xlu0 %5696
  %5698 = vrot.lane.b32.xlu0 %v5693, 122
  %v5699 = vpop.permute.xlu0 %5698
  %v5700 = vsel %vm4277, %v5697, 0
  %v5702 = vsel %vm4277, %v5699, 0
  %5704 = vmatprep.subr.mxu0 0.0
  %5705 = vmatpush1.msra.mxu0 %v4315
  %5706 = vmatprep.subr.mxu0 0.0
  %5707 = vmatpush1.msra.mxu0 0.0
  %5708 = vmatprep.subr.mxu0 0.0
  %5709 = vmatpush1.msra.mxu0 0.0
  %5710 = vmatprep.subr.mxu0 0.0
  %5711 = vmatpush1.msra.mxu0 0.0
  %5712 = vmatprep.subr.mxu0 0.0
  %5713 = vmatpush1.msra.mxu0 0.0
  %5714 = vmatprep.subr.mxu0 0.0
  %5715 = vmatpush1.msra.mxu0 0.0
  %5716 = vmatprep.subr.mxu0 0.0
  %5717 = vmatpush1.msra.mxu0 0.0
  %5718 = vmatprep.subr.mxu0 0.0
  %5719 = vmatpush1.msra.mxu0 0.0
  %5720 = vmatprep.subr.mxu0 0.0
  %5721 = vmatpush1.msra.mxu0 0.0
  %5722 = vmatprep.subr.mxu0 0.0
  %5723 = vmatpush1.msra.mxu0 0.0
  %5724 = vmatprep.subr.mxu0 0.0
  %5725 = vmatpush1.msra.mxu0 0.0
  %5726 = vmatprep.subr.mxu0 0.0
  %5727 = vmatpush1.msra.mxu0 0.0
  %5728 = vmatprep.subr.mxu0 0.0
  %5729 = vmatpush1.msra.mxu0 0.0
  %5730 = vmatprep.subr.mxu0 0.0
  %5731 = vmatpush1.msra.mxu0 0.0
  %5732 = vmatprep.subr.mxu0 0.0
  %5733 = vmatpush1.msra.mxu0 0.0
  %5734 = vmatprep.subr.mxu0 0.0
  %5735 = vmatpush1.msra.mxu0 0.0
  %5736 = vmatprep.subr.mxu0 0.0
  %5737 = vmatpush1.msra.mxu0 0.0
  %5738 = vmatprep.subr.mxu0 0.0
  %5739 = vmatpush1.msra.mxu0 0.0
  %5740 = vmatprep.subr.mxu0 0.0
  %5741 = vmatpush1.msra.mxu0 0.0
  %5742 = vmatprep.subr.mxu0 0.0
  %5743 = vmatpush1.msra.mxu0 0.0
  %5744 = vmatprep.subr.mxu0 0.0
  %5745 = vmatpush1.msra.mxu0 0.0
  %5746 = vmatprep.subr.mxu0 0.0
  %5747 = vmatpush1.msra.mxu0 0.0
  %5748 = vmatprep.subr.mxu0 0.0
  %5749 = vmatpush1.msra.mxu0 0.0
  %5750 = vmatprep.subr.mxu0 0.0
  %5751 = vmatpush1.msra.mxu0 0.0
  %5752 = vmatprep.subr.mxu0 0.0
  %5753 = vmatpush1.msra.mxu0 0.0
  %5754 = vmatprep.subr.mxu0 0.0
  %5755 = vmatpush1.msra.mxu0 0.0
  %5756 = vmatprep.subr.mxu0 0.0
  %5757 = vmatpush1.msra.mxu0 0.0
  %5758 = vmatprep.subr.mxu0 0.0
  %5759 = vmatpush1.msra.mxu0 0.0
  %5760 = vmatprep.subr.mxu0 0.0
  %5761 = vmatpush1.msra.mxu0 0.0
  %5762 = vmatprep.subr.mxu0 0.0
  %5763 = vmatpush1.msra.mxu0 0.0
  %5764 = vmatprep.subr.mxu0 0.0
  %5765 = vmatpush1.msra.mxu0 0.0
  %5766 = vmatprep.subr.mxu0 0.0
  %5767 = vmatpush1.msra.mxu0 0.0
  %5768 = vmatprep.mubr.f32.mxu0 0.0
  %5769 = vmatmul.mubr.f32.gmra.mrb[0].mxu0 %v5700
  %v5770 = vpop.f32.mrb[0].mxu0
  %v5771 = vadd.f32 0.0, %v5770
  %v5772 = vpop.f32.mrb[0].mxu0
  %5773 = vmatprep.mubr.f32.mxu0 0.0
  %5774 = vmatmul.mubr.f32.gmra.mrb[0].mxu0 %v5702
  %v5775 = vpop.f32.mrb[0].mxu0
  %v5776 = vadd.f32 0.0, %v5775
  %v5777 = vpop.f32.mrb[0].mxu0
  %5778 = vdwg.mxu0
  %v5779 = vmul.f32 %v5771, %v4088
  %v5780 = vmul.f32 %v5776, %v4093
  %v5781 = vsel %vm4189, %v5779, 0.0
  %v5782 = vsel %vm4189, %v5780, 0.0
  %v5783 = vadd.f32 %v5781, %v5782
  %v5784 = vrot.slane %v5783, 4
  %v5785 = vadd.f32 %v5783, %v5784
  %v5786 = vrot.slane %v5785, 2
  %v5787 = vadd.f32 %v5785, %v5786
  %v5788 = vrot.slane %v5787, 1
  %v5789 = vadd.f32 %v5787, %v5788
  %v5790 = vadd.f32 %v5789, %v3988
  %5791 = vst.msk [vmem:[%s16 + $0x6] sm:$0x1] %vm4404, %v5790
  %v5792 = vlaneseq
  %v5793 = vshrl.u32 %v5792, 7
  %v5794 = vsub.s32 7, %v5793
  %v5795 = vrot.slane %v4169, %v5794
  %v5796 = vadd.f32 %v5795, %v4088
  %v5797 = vadd.f32 %v5795, %v4093
  %vm5798 = vcmp.ge.f32.partialorder %v5796, 0.0
  %vm5799 = vcmp.ge.f32.partialorder %v5797, 0.0
  %v5800 = vmul.f32 %v5796, 0.2
  %v5801 = vmul.f32 %v5797, 0.2
  %v5802 = vsel %vm5798, %v5796, %v5800
  %v5803 = vsel %vm5799, %v5797, %v5801
  %v5805 = vsel %vm4189, %v5802, 0
  %v5808 = vsel %vm4189, %v5803, 0
  %5810 = vmatprep.subr.mxu0 0.0
  %5811 = vmatpush1.msra.mxu0 %v4198
  %5812 = vmatprep.subr.mxu0 0.0
  %5813 = vmatpush1.msra.mxu0 0.0
  %5814 = vmatprep.subr.mxu0 0.0
  %5815 = vmatpush1.msra.mxu0 0.0
  %5816 = vmatprep.subr.mxu0 0.0
  %5817 = vmatpush1.msra.mxu0 0.0
  %5818 = vmatprep.subr.mxu0 0.0
  %5819 = vmatpush1.msra.mxu0 0.0
  %5820 = vmatprep.subr.mxu0 0.0
  %5821 = vmatpush1.msra.mxu0 0.0
  %5822 = vmatprep.subr.mxu0 0.0
  %5823 = vmatpush1.msra.mxu0 0.0
  %5824 = vmatprep.subr.mxu0 0.0
  %5825 = vmatpush1.msra.mxu0 0.0
  %5826 = vmatprep.subr.mxu0 0.0
  %5827 = vmatpush1.msra.mxu0 0.0
  %5828 = vmatprep.subr.mxu0 0.0
  %5829 = vmatpush1.msra.mxu0 0.0
  %5830 = vmatprep.subr.mxu0 0.0
  %5831 = vmatpush1.msra.mxu0 0.0
  %5832 = vmatprep.subr.mxu0 0.0
  %5833 = vmatpush1.msra.mxu0 0.0
  %5834 = vmatprep.subr.mxu0 0.0
  %5835 = vmatpush1.msra.mxu0 0.0
  %5836 = vmatprep.subr.mxu0 0.0
  %5837 = vmatpush1.msra.mxu0 0.0
  %5838 = vmatprep.subr.mxu0 0.0
  %5839 = vmatpush1.msra.mxu0 0.0
  %5840 = vmatprep.subr.mxu0 0.0
  %5841 = vmatpush1.msra.mxu0 0.0
  %5842 = vmatprep.subr.mxu0 0.0
  %5843 = vmatpush1.msra.mxu0 0.0
  %5844 = vmatprep.subr.mxu0 0.0
  %5845 = vmatpush1.msra.mxu0 0.0
  %5846 = vmatprep.subr.mxu0 0.0
  %5847 = vmatpush1.msra.mxu0 0.0
  %5848 = vmatprep.subr.mxu0 0.0
  %5849 = vmatpush1.msra.mxu0 0.0
  %5850 = vmatprep.subr.mxu0 0.0
  %5851 = vmatpush1.msra.mxu0 0.0
  %5852 = vmatprep.subr.mxu0 0.0
  %5853 = vmatpush1.msra.mxu0 0.0
  %5854 = vmatprep.subr.mxu0 0.0
  %5855 = vmatpush1.msra.mxu0 0.0
  %5856 = vmatprep.subr.mxu0 0.0
  %5857 = vmatpush1.msra.mxu0 0.0
  %5858 = vmatprep.subr.mxu0 0.0
  %5859 = vmatpush1.msra.mxu0 0.0
  %5860 = vmatprep.subr.mxu0 0.0
  %5861 = vmatpush1.msra.mxu0 0.0
  %5862 = vmatprep.subr.mxu0 0.0
  %5863 = vmatpush1.msra.mxu0 0.0
  %5864 = vmatprep.subr.mxu0 0.0
  %5865 = vmatpush1.msra.mxu0 0.0
  %5866 = vmatprep.subr.mxu0 0.0
  %5867 = vmatpush1.msra.mxu0 0.0
  %5868 = vmatprep.subr.mxu0 0.0
  %5869 = vmatpush1.msra.mxu0 0.0
  %5870 = vmatprep.subr.mxu0 0.0
  %5871 = vmatpush1.msra.mxu0 0.0
  %5872 = vmatprep.subr.mxu0 0.0
  %5873 = vmatpush1.msra.mxu0 0.0
  %5874 = vmatprep.mubr.f32.mxu0 0.0
  %5875 = vmatmul.mubr.f32.gmra.mrb[0].mxu0 %v5805
  %v5876 = vpop.f32.mrb[0].mxu0
  %v5877 = vadd.f32 0.0, %v5876
  %v5878 = vpop.f32.mrb[0].mxu0
  %5879 = vmatprep.mubr.f32.mxu0 0.0
  %5880 = vmatmul.mubr.f32.gmra.mrb[0].mxu0 %v5808
  %v5881 = vpop.f32.mrb[0].mxu0
  %v5882 = vadd.f32 0.0, %v5881
  %v5883 = vpop.f32.mrb[0].mxu0
  %5884 = vdwg.mxu0
  %5887 = vrot.lane.b32.xlu0 %v5877, 7
  %v5888 = vpop.permute.xlu0 %5887
  %5889 = vrot.lane.b32.xlu0 %v5882, 7
  %v5890 = vpop.permute.xlu0 %5889
  %v5893 = vsel %vm333, %v5888, -1e+30
  %v5894 = vsel %vm334, %v5890, -1e+30
  %vm5895 = vcmask 64568
  %v5896 = vsel %vm5895, %v5893, -inf
  %v5897 = vsel %vm5895, %v5894, -inf
  %v5898 = vmax.f32 %v5896, %v5897
  %v5899 = vrot.slane %v5898, 4
  %v5900 = vmax.f32 %v5898, %v5899
  %v5901 = vrot.slane %v5900, 2
  %v5902 = vmax.f32 %v5900, %v5901
  %v5903 = vrot.slane %v5902, 1
  %v5904 = vmax.f32 %v5902, %v5903
  %v5905 = vsub.f32 %v5893, %v5904
  %v5906 = vsub.f32 %v5894, %v5904
  %v5907 = vmul.f32 %v5905, 1.442695
  %v5908 = vpow.pop %v5907
  %v5909 = vmul.f32 %v5906, 1.442695
  %v5910 = vpow.pop %v5909
  %v5911 = vmul.f32 %v5908, %v53
  %v5912 = vmul.f32 %v5910, %v54
  %v5913 = vsel %vm5895, %v5911, 0.0
  %v5914 = vsel %vm5895, %v5912, 0.0
  %v5915 = vadd.f32 %v5913, %v5914
  %v5916 = vrot.slane %v5915, 4
  %v5917 = vadd.f32 %v5915, %v5916
  %v5918 = vrot.slane %v5917, 2
  %v5919 = vadd.f32 %v5917, %v5918
  %v5920 = vrot.slane %v5919, 1
  %v5921 = vadd.f32 %v5919, %v5920
  %v5922 = vrcp.pop %v5921
  %v5923 = vmul.f32 %v5911, %v5922
  %v5924 = vmul.f32 %v5912, %v5922
  %5927 = vrot.lane.b32.xlu0 %v5923, 121
  %v5928 = vpop.permute.xlu0 %5927
  %5929 = vrot.lane.b32.xlu0 %v5924, 121
  %v5930 = vpop.permute.xlu0 %5929
  %v5931 = vsel %vm4277, %v5928, 0
  %v5933 = vsel %vm4277, %v5930, 0
  %5935 = vmatprep.subr.mxu0 0.0
  %5936 = vmatpush1.msra.mxu0 %v4315
  %5937 = vmatprep.subr.mxu0 0.0
  %5938 = vmatpush1.msra.mxu0 0.0
  %5939 = vmatprep.subr.mxu0 0.0
  %5940 = vmatpush1.msra.mxu0 0.0
  %5941 = vmatprep.subr.mxu0 0.0
  %5942 = vmatpush1.msra.mxu0 0.0
  %5943 = vmatprep.subr.mxu0 0.0
  %5944 = vmatpush1.msra.mxu0 0.0
  %5945 = vmatprep.subr.mxu0 0.0
  %5946 = vmatpush1.msra.mxu0 0.0
  %5947 = vmatprep.subr.mxu0 0.0
  %5948 = vmatpush1.msra.mxu0 0.0
  %5949 = vmatprep.subr.mxu0 0.0
  %5950 = vmatpush1.msra.mxu0 0.0
  %5951 = vmatprep.subr.mxu0 0.0
  %5952 = vmatpush1.msra.mxu0 0.0
  %5953 = vmatprep.subr.mxu0 0.0
  %5954 = vmatpush1.msra.mxu0 0.0
  %5955 = vmatprep.subr.mxu0 0.0
  %5956 = vmatpush1.msra.mxu0 0.0
  %5957 = vmatprep.subr.mxu0 0.0
  %5958 = vmatpush1.msra.mxu0 0.0
  %5959 = vmatprep.subr.mxu0 0.0
  %5960 = vmatpush1.msra.mxu0 0.0
  %5961 = vmatprep.subr.mxu0 0.0
  %5962 = vmatpush1.msra.mxu0 0.0
  %5963 = vmatprep.subr.mxu0 0.0
  %5964 = vmatpush1.msra.mxu0 0.0
  %5965 = vmatprep.subr.mxu0 0.0
  %5966 = vmatpush1.msra.mxu0 0.0
  %5967 = vmatprep.subr.mxu0 0.0
  %5968 = vmatpush1.msra.mxu0 0.0
  %5969 = vmatprep.subr.mxu0 0.0
  %5970 = vmatpush1.msra.mxu0 0.0
  %5971 = vmatprep.subr.mxu0 0.0
  %5972 = vmatpush1.msra.mxu0 0.0
  %5973 = vmatprep.subr.mxu0 0.0
  %5974 = vmatpush1.msra.mxu0 0.0
  %5975 = vmatprep.subr.mxu0 0.0
  %5976 = vmatpush1.msra.mxu0 0.0
  %5977 = vmatprep.subr.mxu0 0.0
  %5978 = vmatpush1.msra.mxu0 0.0
  %5979 = vmatprep.subr.mxu0 0.0
  %5980 = vmatpush1.msra.mxu0 0.0
  %5981 = vmatprep.subr.mxu0 0.0
  %5982 = vmatpush1.msra.mxu0 0.0
  %5983 = vmatprep.subr.mxu0 0.0
  %5984 = vmatpush1.msra.mxu0 0.0
  %5985 = vmatprep.subr.mxu0 0.0
  %5986 = vmatpush1.msra.mxu0 0.0
  %5987 = vmatprep.subr.mxu0 0.0
  %5988 = vmatpush1.msra.mxu0 0.0
  %5989 = vmatprep.subr.mxu0 0.0
  %5990 = vmatpush1.msra.mxu0 0.0
  %5991 = vmatprep.subr.mxu0 0.0
  %5992 = vmatpush1.msra.mxu0 0.0
  %5993 = vmatprep.subr.mxu0 0.0
  %5994 = vmatpush1.msra.mxu0 0.0
  %5995 = vmatprep.subr.mxu0 0.0
  %5996 = vmatpush1.msra.mxu0 0.0
  %5997 = vmatprep.subr.mxu0 0.0
  %5998 = vmatpush1.msra.mxu0 0.0
  %5999 = vmatprep.mubr.f32.mxu0 0.0
  %6000 = vmatmul.mubr.f32.gmra.mrb[0].mxu0 %v5931
  %v6001 = vpop.f32.mrb[0].mxu0
  %v6002 = vadd.f32 0.0, %v6001
  %v6003 = vpop.f32.mrb[0].mxu0
  %6004 = vmatprep.mubr.f32.mxu0 0.0
  %6005 = vmatmul.mubr.f32.gmra.mrb[0].mxu0 %v5933
  %v6006 = vpop.f32.mrb[0].mxu0
  %v6007 = vadd.f32 0.0, %v6006
  %v6008 = vpop.f32.mrb[0].mxu0
  %6009 = vdwg.mxu0
  %v6010 = vmul.f32 %v6002, %v4088
  %v6011 = vmul.f32 %v6007, %v4093
  %v6012 = vsel %vm4189, %v6010, 0.0
  %v6013 = vsel %vm4189, %v6011, 0.0
  %v6014 = vadd.f32 %v6012, %v6013
  %v6015 = vrot.slane %v6014, 4
  %v6016 = vadd.f32 %v6014, %v6015
  %v6017 = vrot.slane %v6016, 2
  %v6018 = vadd.f32 %v6016, %v6017
  %v6019 = vrot.slane %v6018, 1
  %v6020 = vadd.f32 %v6018, %v6019
  %v6021 = vadd.f32 %v6020, %v3988
  %6022 = vst.msk [vmem:[%s16 + $0x7] sm:$0x1] %vm4404, %v6021
  %v6023 = vlaneseq
  %v6024 = vshrl.u32 %v6023, 7
  %v6025 = vsub.s32 0, %v6024
  %v6026 = vrot.slane %v4174, %v6025
  %v6027 = vadd.f32 %v6026, %v4088
  %v6028 = vadd.f32 %v6026, %v4093
  %vm6029 = vcmp.ge.f32.partialorder %v6027, 0.0
  %vm6030 = vcmp.ge.f32.partialorder %v6028, 0.0
  %v6031 = vmul.f32 %v6027, 0.2
  %v6032 = vmul.f32 %v6028, 0.2
  %v6033 = vsel %vm6029, %v6027, %v6031
  %v6034 = vsel %vm6030, %v6028, %v6032
  %v6036 = vsel %vm4189, %v6033, 0
  %v6039 = vsel %vm4189, %v6034, 0
  %6041 = vmatprep.subr.mxu0 0.0
  %6042 = vmatpush1.msra.mxu0 %v4198
  %6043 = vmatprep.subr.mxu0 0.0
  %6044 = vmatpush1.msra.mxu0 0.0
  %6045 = vmatprep.subr.mxu0 0.0
  %6046 = vmatpush1.msra.mxu0 0.0
  %6047 = vmatprep.subr.mxu0 0.0
  %6048 = vmatpush1.msra.mxu0 0.0
  %6049 = vmatprep.subr.mxu0 0.0
  %6050 = vmatpush1.msra.mxu0 0.0
  %6051 = vmatprep.subr.mxu0 0.0
  %6052 = vmatpush1.msra.mxu0 0.0
  %6053 = vmatprep.subr.mxu0 0.0
  %6054 = vmatpush1.msra.mxu0 0.0
  %6055 = vmatprep.subr.mxu0 0.0
  %6056 = vmatpush1.msra.mxu0 0.0
  %6057 = vmatprep.subr.mxu0 0.0
  %6058 = vmatpush1.msra.mxu0 0.0
  %6059 = vmatprep.subr.mxu0 0.0
  %6060 = vmatpush1.msra.mxu0 0.0
  %6061 = vmatprep.subr.mxu0 0.0
  %6062 = vmatpush1.msra.mxu0 0.0
  %6063 = vmatprep.subr.mxu0 0.0
  %6064 = vmatpush1.msra.mxu0 0.0
  %6065 = vmatprep.subr.mxu0 0.0
  %6066 = vmatpush1.msra.mxu0 0.0
  %6067 = vmatprep.subr.mxu0 0.0
  %6068 = vmatpush1.msra.mxu0 0.0
  %6069 = vmatprep.subr.mxu0 0.0
  %6070 = vmatpush1.msra.mxu0 0.0
  %6071 = vmatprep.subr.mxu0 0.0
  %6072 = vmatpush1.msra.mxu0 0.0
  %6073 = vmatprep.subr.mxu0 0.0
  %6074 = vmatpush1.msra.mxu0 0.0
  %6075 = vmatprep.subr.mxu0 0.0
  %6076 = vmatpush1.msra.mxu0 0.0
  %6077 = vmatprep.subr.mxu0 0.0
  %6078 = vmatpush1.msra.mxu0 0.0
  %6079 = vmatprep.subr.mxu0 0.0
  %6080 = vmatpush1.msra.mxu0 0.0
  %6081 = vmatprep.subr.mxu0 0.0
  %6082 = vmatpush1.msra.mxu0 0.0
  %6083 = vmatprep.subr.mxu0 0.0
  %6084 = vmatpush1.msra.mxu0 0.0
  %6085 = vmatprep.subr.mxu0 0.0
  %6086 = vmatpush1.msra.mxu0 0.0
  %6087 = vmatprep.subr.mxu0 0.0
  %6088 = vmatpush1.msra.mxu0 0.0
  %6089 = vmatprep.subr.mxu0 0.0
  %6090 = vmatpush1.msra.mxu0 0.0
  %6091 = vmatprep.subr.mxu0 0.0
  %6092 = vmatpush1.msra.mxu0 0.0
  %6093 = vmatprep.subr.mxu0 0.0
  %6094 = vmatpush1.msra.mxu0 0.0
  %6095 = vmatprep.subr.mxu0 0.0
  %6096 = vmatpush1.msra.mxu0 0.0
  %6097 = vmatprep.subr.mxu0 0.0
  %6098 = vmatpush1.msra.mxu0 0.0
  %6099 = vmatprep.subr.mxu0 0.0
  %6100 = vmatpush1.msra.mxu0 0.0
  %6101 = vmatprep.subr.mxu0 0.0
  %6102 = vmatpush1.msra.mxu0 0.0
  %6103 = vmatprep.subr.mxu0 0.0
  %6104 = vmatpush1.msra.mxu0 0.0
  %6105 = vmatprep.mubr.f32.mxu0 0.0
  %6106 = vmatmul.mubr.f32.gmra.mrb[0].mxu0 %v6036
  %v6107 = vpop.f32.mrb[0].mxu0
  %v6108 = vadd.f32 0.0, %v6107
  %v6109 = vpop.f32.mrb[0].mxu0
  %6110 = vmatprep.mubr.f32.mxu0 0.0
  %6111 = vmatmul.mubr.f32.gmra.mrb[0].mxu0 %v6039
  %v6112 = vpop.f32.mrb[0].mxu0
  %v6113 = vadd.f32 0.0, %v6112
  %v6114 = vpop.f32.mrb[0].mxu0
  %6115 = vdwg.mxu0
  %6118 = vrot.lane.b32.xlu0 %v6108, 8
  %v6119 = vpop.permute.xlu0 %6118
  %6120 = vrot.lane.b32.xlu0 %v6113, 8
  %v6121 = vpop.permute.xlu0 %6120
  %v6124 = vsel %vm333, %v6119, -1e+30
  %v6125 = vsel %vm334, %v6121, -1e+30
  %vm6126 = vcmask 72768
  %v6127 = vsel %vm6126, %v6124, -inf
  %v6128 = vsel %vm6126, %v6125, -inf
  %v6129 = vmax.f32 %v6127, %v6128
  %v6130 = vrot.slane %v6129, 4
  %v6131 = vmax.f32 %v6129, %v6130
  %v6132 = vrot.slane %v6131, 2
  %v6133 = vmax.f32 %v6131, %v6132
  %v6134 = vrot.slane %v6133, 1
  %v6135 = vmax.f32 %v6133, %v6134
  %v6136 = vsub.f32 %v6124, %v6135
  %v6137 = vsub.f32 %v6125, %v6135
  %v6138 = vmul.f32 %v6136, 1.442695
  %v6139 = vpow.pop %v6138
  %v6140 = vmul.f32 %v6137, 1.442695
  %v6141 = vpow.pop %v6140
  %v6142 = vmul.f32 %v6139, %v53
  %v6143 = vmul.f32 %v6141, %v54
  %v6144 = vsel %vm6126, %v6142, 0.0
  %v6145 = vsel %vm6126, %v6143, 0.0
  %v6146 = vadd.f32 %v6144, %v6145
  %v6147 = vrot.slane %v6146, 4
  %v6148 = vadd.f32 %v6146, %v6147
  %v6149 = vrot.slane %v6148, 2
  %v6150 = vadd.f32 %v6148, %v6149
  %v6151 = vrot.slane %v6150, 1
  %v6152 = vadd.f32 %v6150, %v6151
  %v6153 = vrcp.pop %v6152
  %v6154 = vmul.f32 %v6142, %v6153
  %v6155 = vmul.f32 %v6143, %v6153
  %6158 = vrot.lane.b32.xlu0 %v6154, 120
  %v6159 = vpop.permute.xlu0 %6158
  %6160 = vrot.lane.b32.xlu0 %v6155, 120
  %v6161 = vpop.permute.xlu0 %6160
  %v6162 = vsel %vm4277, %v6159, 0
  %v6164 = vsel %vm4277, %v6161, 0
  %6166 = vmatprep.subr.mxu0 0.0
  %6167 = vmatpush1.msra.mxu0 %v4315
  %6168 = vmatprep.subr.mxu0 0.0
  %6169 = vmatpush1.msra.mxu0 0.0
  %6170 = vmatprep.subr.mxu0 0.0
  %6171 = vmatpush1.msra.mxu0 0.0
  %6172 = vmatprep.subr.mxu0 0.0
  %6173 = vmatpush1.msra.mxu0 0.0
  %6174 = vmatprep.subr.mxu0 0.0
  %6175 = vmatpush1.msra.mxu0 0.0
  %6176 = vmatprep.subr.mxu0 0.0
  %6177 = vmatpush1.msra.mxu0 0.0
  %6178 = vmatprep.subr.mxu0 0.0
  %6179 = vmatpush1.msra.mxu0 0.0
  %6180 = vmatprep.subr.mxu0 0.0
  %6181 = vmatpush1.msra.mxu0 0.0
  %6182 = vmatprep.subr.mxu0 0.0
  %6183 = vmatpush1.msra.mxu0 0.0
  %6184 = vmatprep.subr.mxu0 0.0
  %6185 = vmatpush1.msra.mxu0 0.0
  %6186 = vmatprep.subr.mxu0 0.0
  %6187 = vmatpush1.msra.mxu0 0.0
  %6188 = vmatprep.subr.mxu0 0.0
  %6189 = vmatpush1.msra.mxu0 0.0
  %6190 = vmatprep.subr.mxu0 0.0
  %6191 = vmatpush1.msra.mxu0 0.0
  %6192 = vmatprep.subr.mxu0 0.0
  %6193 = vmatpush1.msra.mxu0 0.0
  %6194 = vmatprep.subr.mxu0 0.0
  %6195 = vmatpush1.msra.mxu0 0.0
  %6196 = vmatprep.subr.mxu0 0.0
  %6197 = vmatpush1.msra.mxu0 0.0
  %6198 = vmatprep.subr.mxu0 0.0
  %6199 = vmatpush1.msra.mxu0 0.0
  %6200 = vmatprep.subr.mxu0 0.0
  %6201 = vmatpush1.msra.mxu0 0.0
  %6202 = vmatprep.subr.mxu0 0.0
  %6203 = vmatpush1.msra.mxu0 0.0
  %6204 = vmatprep.subr.mxu0 0.0
  %6205 = vmatpush1.msra.mxu0 0.0
  %6206 = vmatprep.subr.mxu0 0.0
  %6207 = vmatpush1.msra.mxu0 0.0
  %6208 = vmatprep.subr.mxu0 0.0
  %6209 = vmatpush1.msra.mxu0 0.0
  %6210 = vmatprep.subr.mxu0 0.0
  %6211 = vmatpush1.msra.mxu0 0.0
  %6212 = vmatprep.subr.mxu0 0.0
  %6213 = vmatpush1.msra.mxu0 0.0
  %6214 = vmatprep.subr.mxu0 0.0
  %6215 = vmatpush1.msra.mxu0 0.0
  %6216 = vmatprep.subr.mxu0 0.0
  %6217 = vmatpush1.msra.mxu0 0.0
  %6218 = vmatprep.subr.mxu0 0.0
  %6219 = vmatpush1.msra.mxu0 0.0
  %6220 = vmatprep.subr.mxu0 0.0
  %6221 = vmatpush1.msra.mxu0 0.0
  %6222 = vmatprep.subr.mxu0 0.0
  %6223 = vmatpush1.msra.mxu0 0.0
  %6224 = vmatprep.subr.mxu0 0.0
  %6225 = vmatpush1.msra.mxu0 0.0
  %6226 = vmatprep.subr.mxu0 0.0
  %6227 = vmatpush1.msra.mxu0 0.0
  %6228 = vmatprep.subr.mxu0 0.0
  %6229 = vmatpush1.msra.mxu0 0.0
  %6230 = vmatprep.mubr.f32.mxu0 0.0
  %6231 = vmatmul.mubr.f32.gmra.mrb[0].mxu0 %v6162
  %v6232 = vpop.f32.mrb[0].mxu0
  %v6233 = vadd.f32 0.0, %v6232
  %v6234 = vpop.f32.mrb[0].mxu0
  %6235 = vmatprep.mubr.f32.mxu0 0.0
  %6236 = vmatmul.mubr.f32.gmra.mrb[0].mxu0 %v6164
  %v6237 = vpop.f32.mrb[0].mxu0
  %v6238 = vadd.f32 0.0, %v6237
  %v6239 = vpop.f32.mrb[0].mxu0
  %6240 = vdwg.mxu0
  %v6241 = vmul.f32 %v6233, %v4088
  %v6242 = vmul.f32 %v6238, %v4093
  %v6243 = vsel %vm4189, %v6241, 0.0
  %v6244 = vsel %vm4189, %v6242, 0.0
  %v6245 = vadd.f32 %v6243, %v6244
  %v6246 = vrot.slane %v6245, 4
  %v6247 = vadd.f32 %v6245, %v6246
  %v6248 = vrot.slane %v6247, 2
  %v6249 = vadd.f32 %v6247, %v6248
  %v6250 = vrot.slane %v6249, 1
  %v6251 = vadd.f32 %v6249, %v6250
  %v6252 = vadd.f32 %v6251, %v3988
  %6253 = vst.msk [vmem:[%s16 + $0x8] sm:$0x1] %vm4404, %v6252
  %v6254 = vlaneseq
  %v6255 = vshrl.u32 %v6254, 7
  %v6256 = vsub.s32 1, %v6255
  %v6257 = vrot.slane %v4174, %v6256
  %v6258 = vadd.f32 %v6257, %v4088
  %v6259 = vadd.f32 %v6257, %v4093
  %vm6260 = vcmp.ge.f32.partialorder %v6258, 0.0
  %vm6261 = vcmp.ge.f32.partialorder %v6259, 0.0
  %v6262 = vmul.f32 %v6258, 0.2
  %v6263 = vmul.f32 %v6259, 0.2
  %v6264 = vsel %vm6260, %v6258, %v6262
  %v6265 = vsel %vm6261, %v6259, %v6263
  %v6267 = vsel %vm4189, %v6264, 0
  %v6270 = vsel %vm4189, %v6265, 0
  %6272 = vmatprep.subr.mxu0 0.0
  %6273 = vmatpush1.msra.mxu0 %v4198
  %6274 = vmatprep.subr.mxu0 0.0
  %6275 = vmatpush1.msra.mxu0 0.0
  %6276 = vmatprep.subr.mxu0 0.0
  %6277 = vmatpush1.msra.mxu0 0.0
  %6278 = vmatprep.subr.mxu0 0.0
  %6279 = vmatpush1.msra.mxu0 0.0
  %6280 = vmatprep.subr.mxu0 0.0
  %6281 = vmatpush1.msra.mxu0 0.0
  %6282 = vmatprep.subr.mxu0 0.0
  %6283 = vmatpush1.msra.mxu0 0.0
  %6284 = vmatprep.subr.mxu0 0.0
  %6285 = vmatpush1.msra.mxu0 0.0
  %6286 = vmatprep.subr.mxu0 0.0
  %6287 = vmatpush1.msra.mxu0 0.0
  %6288 = vmatprep.subr.mxu0 0.0
  %6289 = vmatpush1.msra.mxu0 0.0
  %6290 = vmatprep.subr.mxu0 0.0
  %6291 = vmatpush1.msra.mxu0 0.0
  %6292 = vmatprep.subr.mxu0 0.0
  %6293 = vmatpush1.msra.mxu0 0.0
  %6294 = vmatprep.subr.mxu0 0.0
  %6295 = vmatpush1.msra.mxu0 0.0
  %6296 = vmatprep.subr.mxu0 0.0
  %6297 = vmatpush1.msra.mxu0 0.0
  %6298 = vmatprep.subr.mxu0 0.0
  %6299 = vmatpush1.msra.mxu0 0.0
  %6300 = vmatprep.subr.mxu0 0.0
  %6301 = vmatpush1.msra.mxu0 0.0
  %6302 = vmatprep.subr.mxu0 0.0
  %6303 = vmatpush1.msra.mxu0 0.0
  %6304 = vmatprep.subr.mxu0 0.0
  %6305 = vmatpush1.msra.mxu0 0.0
  %6306 = vmatprep.subr.mxu0 0.0
  %6307 = vmatpush1.msra.mxu0 0.0
  %6308 = vmatprep.subr.mxu0 0.0
  %6309 = vmatpush1.msra.mxu0 0.0
  %6310 = vmatprep.subr.mxu0 0.0
  %6311 = vmatpush1.msra.mxu0 0.0
  %6312 = vmatprep.subr.mxu0 0.0
  %6313 = vmatpush1.msra.mxu0 0.0
  %6314 = vmatprep.subr.mxu0 0.0
  %6315 = vmatpush1.msra.mxu0 0.0
  %6316 = vmatprep.subr.mxu0 0.0
  %6317 = vmatpush1.msra.mxu0 0.0
  %6318 = vmatprep.subr.mxu0 0.0
  %6319 = vmatpush1.msra.mxu0 0.0
  %6320 = vmatprep.subr.mxu0 0.0
  %6321 = vmatpush1.msra.mxu0 0.0
  %6322 = vmatprep.subr.mxu0 0.0
  %6323 = vmatpush1.msra.mxu0 0.0
  %6324 = vmatprep.subr.mxu0 0.0
  %6325 = vmatpush1.msra.mxu0 0.0
  %6326 = vmatprep.subr.mxu0 0.0
  %6327 = vmatpush1.msra.mxu0 0.0
  %6328 = vmatprep.subr.mxu0 0.0
  %6329 = vmatpush1.msra.mxu0 0.0
  %6330 = vmatprep.subr.mxu0 0.0
  %6331 = vmatpush1.msra.mxu0 0.0
  %6332 = vmatprep.subr.mxu0 0.0
  %6333 = vmatpush1.msra.mxu0 0.0
  %6334 = vmatprep.subr.mxu0 0.0
  %6335 = vmatpush1.msra.mxu0 0.0
  %6336 = vmatprep.mubr.f32.mxu0 0.0
  %6337 = vmatmul.mubr.f32.gmra.mrb[0].mxu0 %v6267
  %v6338 = vpop.f32.mrb[0].mxu0
  %v6339 = vadd.f32 0.0, %v6338
  %v6340 = vpop.f32.mrb[0].mxu0
  %6341 = vmatprep.mubr.f32.mxu0 0.0
  %6342 = vmatmul.mubr.f32.gmra.mrb[0].mxu0 %v6270
  %v6343 = vpop.f32.mrb[0].mxu0
  %v6344 = vadd.f32 0.0, %v6343
  %v6345 = vpop.f32.mrb[0].mxu0
  %6346 = vdwg.mxu0
  %6349 = vrot.lane.b32.xlu0 %v6339, 9
  %v6350 = vpop.permute.xlu0 %6349
  %6351 = vrot.lane.b32.xlu0 %v6344, 9
  %v6352 = vpop.permute.xlu0 %6351
  %v6355 = vsel %vm333, %v6350, -1e+30
  %v6356 = vsel %vm334, %v6352, -1e+30
  %vm6357 = vcmask 80968
  %v6358 = vsel %vm6357, %v6355, -inf
  %v6359 = vsel %vm6357, %v6356, -inf
  %v6360 = vmax.f32 %v6358, %v6359
  %v6361 = vrot.slane %v6360, 4
  %v6362 = vmax.f32 %v6360, %v6361
  %v6363 = vrot.slane %v6362, 2
  %v6364 = vmax.f32 %v6362, %v6363
  %v6365 = vrot.slane %v6364, 1
  %v6366 = vmax.f32 %v6364, %v6365
  %v6367 = vsub.f32 %v6355, %v6366
  %v6368 = vsub.f32 %v6356, %v6366
  %v6369 = vmul.f32 %v6367, 1.442695
  %v6370 = vpow.pop %v6369
  %v6371 = vmul.f32 %v6368, 1.442695
  %v6372 = vpow.pop %v6371
  %v6373 = vmul.f32 %v6370, %v53
  %v6374 = vmul.f32 %v6372, %v54
  %v6375 = vsel %vm6357, %v6373, 0.0
  %v6376 = vsel %vm6357, %v6374, 0.0
  %v6377 = vadd.f32 %v6375, %v6376
  %v6378 = vrot.slane %v6377, 4
  %v6379 = vadd.f32 %v6377, %v6378
  %v6380 = vrot.slane %v6379, 2
  %v6381 = vadd.f32 %v6379, %v6380
  %v6382 = vrot.slane %v6381, 1
  %v6383 = vadd.f32 %v6381, %v6382
  %v6384 = vrcp.pop %v6383
  %v6385 = vmul.f32 %v6373, %v6384
  %v6386 = vmul.f32 %v6374, %v6384
  %6389 = vrot.lane.b32.xlu0 %v6385, 119
  %v6390 = vpop.permute.xlu0 %6389
  %6391 = vrot.lane.b32.xlu0 %v6386, 119
  %v6392 = vpop.permute.xlu0 %6391
  %v6393 = vsel %vm4277, %v6390, 0
  %v6395 = vsel %vm4277, %v6392, 0
  %6397 = vmatprep.subr.mxu0 0.0
  %6398 = vmatpush1.msra.mxu0 %v4315
  %6399 = vmatprep.subr.mxu0 0.0
  %6400 = vmatpush1.msra.mxu0 0.0
  %6401 = vmatprep.subr.mxu0 0.0
  %6402 = vmatpush1.msra.mxu0 0.0
  %6403 = vmatprep.subr.mxu0 0.0
  %6404 = vmatpush1.msra.mxu0 0.0
  %6405 = vmatprep.subr.mxu0 0.0
  %6406 = vmatpush1.msra.mxu0 0.0
  %6407 = vmatprep.subr.mxu0 0.0
  %6408 = vmatpush1.msra.mxu0 0.0
  %6409 = vmatprep.subr.mxu0 0.0
  %6410 = vmatpush1.msra.mxu0 0.0
  %6411 = vmatprep.subr.mxu0 0.0
  %6412 = vmatpush1.msra.mxu0 0.0
  %6413 = vmatprep.subr.mxu0 0.0
  %6414 = vmatpush1.msra.mxu0 0.0
  %6415 = vmatprep.subr.mxu0 0.0
  %6416 = vmatpush1.msra.mxu0 0.0
  %6417 = vmatprep.subr.mxu0 0.0
  %6418 = vmatpush1.msra.mxu0 0.0
  %6419 = vmatprep.subr.mxu0 0.0
  %6420 = vmatpush1.msra.mxu0 0.0
  %6421 = vmatprep.subr.mxu0 0.0
  %6422 = vmatpush1.msra.mxu0 0.0
  %6423 = vmatprep.subr.mxu0 0.0
  %6424 = vmatpush1.msra.mxu0 0.0
  %6425 = vmatprep.subr.mxu0 0.0
  %6426 = vmatpush1.msra.mxu0 0.0
  %6427 = vmatprep.subr.mxu0 0.0
  %6428 = vmatpush1.msra.mxu0 0.0
  %6429 = vmatprep.subr.mxu0 0.0
  %6430 = vmatpush1.msra.mxu0 0.0
  %6431 = vmatprep.subr.mxu0 0.0
  %6432 = vmatpush1.msra.mxu0 0.0
  %6433 = vmatprep.subr.mxu0 0.0
  %6434 = vmatpush1.msra.mxu0 0.0
  %6435 = vmatprep.subr.mxu0 0.0
  %6436 = vmatpush1.msra.mxu0 0.0
  %6437 = vmatprep.subr.mxu0 0.0
  %6438 = vmatpush1.msra.mxu0 0.0
  %6439 = vmatprep.subr.mxu0 0.0
  %6440 = vmatpush1.msra.mxu0 0.0
  %6441 = vmatprep.subr.mxu0 0.0
  %6442 = vmatpush1.msra.mxu0 0.0
  %6443 = vmatprep.subr.mxu0 0.0
  %6444 = vmatpush1.msra.mxu0 0.0
  %6445 = vmatprep.subr.mxu0 0.0
  %6446 = vmatpush1.msra.mxu0 0.0
  %6447 = vmatprep.subr.mxu0 0.0
  %6448 = vmatpush1.msra.mxu0 0.0
  %6449 = vmatprep.subr.mxu0 0.0
  %6450 = vmatpush1.msra.mxu0 0.0
  %6451 = vmatprep.subr.mxu0 0.0
  %6452 = vmatpush1.msra.mxu0 0.0
  %6453 = vmatprep.subr.mxu0 0.0
  %6454 = vmatpush1.msra.mxu0 0.0
  %6455 = vmatprep.subr.mxu0 0.0
  %6456 = vmatpush1.msra.mxu0 0.0
  %6457 = vmatprep.subr.mxu0 0.0
  %6458 = vmatpush1.msra.mxu0 0.0
  %6459 = vmatprep.subr.mxu0 0.0
  %6460 = vmatpush1.msra.mxu0 0.0
  %6461 = vmatprep.mubr.f32.mxu0 0.0
  %6462 = vmatmul.mubr.f32.gmra.mrb[0].mxu0 %v6393
  %v6463 = vpop.f32.mrb[0].mxu0
  %v6464 = vadd.f32 0.0, %v6463
  %v6465 = vpop.f32.mrb[0].mxu0
  %6466 = vmatprep.mubr.f32.mxu0 0.0
  %6467 = vmatmul.mubr.f32.gmra.mrb[0].mxu0 %v6395
  %v6468 = vpop.f32.mrb[0].mxu0
  %v6469 = vadd.f32 0.0, %v6468
  %v6470 = vpop.f32.mrb[0].mxu0
  %6471 = vdwg.mxu0
  %v6472 = vmul.f32 %v6464, %v4088
  %v6473 = vmul.f32 %v6469, %v4093
  %v6474 = vsel %vm4189, %v6472, 0.0
  %v6475 = vsel %vm4189, %v6473, 0.0
  %v6476 = vadd.f32 %v6474, %v6475
  %v6477 = vrot.slane %v6476, 4
  %v6478 = vadd.f32 %v6476, %v6477
  %v6479 = vrot.slane %v6478, 2
  %v6480 = vadd.f32 %v6478, %v6479
  %v6481 = vrot.slane %v6480, 1
  %v6482 = vadd.f32 %v6480, %v6481
  %v6483 = vadd.f32 %v6482, %v3988
  %6484 = vst.msk [vmem:[%s16 + $0x9] sm:$0x1] %vm4404, %v6483
  %v6485 = vlaneseq
  %v6486 = vshrl.u32 %v6485, 7
  %v6487 = vsub.s32 2, %v6486
  %v6488 = vrot.slane %v4174, %v6487
  %v6489 = vadd.f32 %v6488, %v4088
  %v6490 = vadd.f32 %v6488, %v4093
  %vm6491 = vcmp.ge.f32.partialorder %v6489, 0.0
  %vm6492 = vcmp.ge.f32.partialorder %v6490, 0.0
  %v6493 = vmul.f32 %v6489, 0.2
  %v6494 = vmul.f32 %v6490, 0.2
  %v6495 = vsel %vm6491, %v6489, %v6493
  %v6496 = vsel %vm6492, %v6490, %v6494
  %v6498 = vsel %vm4189, %v6495, 0
  %v6501 = vsel %vm4189, %v6496, 0
  %6503 = vmatprep.subr.mxu0 0.0
  %6504 = vmatpush1.msra.mxu0 %v4198
  %6505 = vmatprep.subr.mxu0 0.0
  %6506 = vmatpush1.msra.mxu0 0.0
  %6507 = vmatprep.subr.mxu0 0.0
  %6508 = vmatpush1.msra.mxu0 0.0
  %6509 = vmatprep.subr.mxu0 0.0
  %6510 = vmatpush1.msra.mxu0 0.0
  %6511 = vmatprep.subr.mxu0 0.0
  %6512 = vmatpush1.msra.mxu0 0.0
  %6513 = vmatprep.subr.mxu0 0.0
  %6514 = vmatpush1.msra.mxu0 0.0
  %6515 = vmatprep.subr.mxu0 0.0
  %6516 = vmatpush1.msra.mxu0 0.0
  %6517 = vmatprep.subr.mxu0 0.0
  %6518 = vmatpush1.msra.mxu0 0.0
  %6519 = vmatprep.subr.mxu0 0.0
  %6520 = vmatpush1.msra.mxu0 0.0
  %6521 = vmatprep.subr.mxu0 0.0
  %6522 = vmatpush1.msra.mxu0 0.0
  %6523 = vmatprep.subr.mxu0 0.0
  %6524 = vmatpush1.msra.mxu0 0.0
  %6525 = vmatprep.subr.mxu0 0.0
  %6526 = vmatpush1.msra.mxu0 0.0
  %6527 = vmatprep.subr.mxu0 0.0
  %6528 = vmatpush1.msra.mxu0 0.0
  %6529 = vmatprep.subr.mxu0 0.0
  %6530 = vmatpush1.msra.mxu0 0.0
  %6531 = vmatprep.subr.mxu0 0.0
  %6532 = vmatpush1.msra.mxu0 0.0
  %6533 = vmatprep.subr.mxu0 0.0
  %6534 = vmatpush1.msra.mxu0 0.0
  %6535 = vmatprep.subr.mxu0 0.0
  %6536 = vmatpush1.msra.mxu0 0.0
  %6537 = vmatprep.subr.mxu0 0.0
  %6538 = vmatpush1.msra.mxu0 0.0
  %6539 = vmatprep.subr.mxu0 0.0
  %6540 = vmatpush1.msra.mxu0 0.0
  %6541 = vmatprep.subr.mxu0 0.0
  %6542 = vmatpush1.msra.mxu0 0.0
  %6543 = vmatprep.subr.mxu0 0.0
  %6544 = vmatpush1.msra.mxu0 0.0
  %6545 = vmatprep.subr.mxu0 0.0
  %6546 = vmatpush1.msra.mxu0 0.0
  %6547 = vmatprep.subr.mxu0 0.0
  %6548 = vmatpush1.msra.mxu0 0.0
  %6549 = vmatprep.subr.mxu0 0.0
  %6550 = vmatpush1.msra.mxu0 0.0
  %6551 = vmatprep.subr.mxu0 0.0
  %6552 = vmatpush1.msra.mxu0 0.0
  %6553 = vmatprep.subr.mxu0 0.0
  %6554 = vmatpush1.msra.mxu0 0.0
  %6555 = vmatprep.subr.mxu0 0.0
  %6556 = vmatpush1.msra.mxu0 0.0
  %6557 = vmatprep.subr.mxu0 0.0
  %6558 = vmatpush1.msra.mxu0 0.0
  %6559 = vmatprep.subr.mxu0 0.0
  %6560 = vmatpush1.msra.mxu0 0.0
  %6561 = vmatprep.subr.mxu0 0.0
  %6562 = vmatpush1.msra.mxu0 0.0
  %6563 = vmatprep.subr.mxu0 0.0
  %6564 = vmatpush1.msra.mxu0 0.0
  %6565 = vmatprep.subr.mxu0 0.0
  %6566 = vmatpush1.msra.mxu0 0.0
  %6567 = vmatprep.mubr.f32.mxu0 0.0
  %6568 = vmatmul.mubr.f32.gmra.mrb[0].mxu0 %v6498
  %v6569 = vpop.f32.mrb[0].mxu0
  %v6570 = vadd.f32 0.0, %v6569
  %v6571 = vpop.f32.mrb[0].mxu0
  %6572 = vmatprep.mubr.f32.mxu0 0.0
  %6573 = vmatmul.mubr.f32.gmra.mrb[0].mxu0 %v6501
  %v6574 = vpop.f32.mrb[0].mxu0
  %v6575 = vadd.f32 0.0, %v6574
  %v6576 = vpop.f32.mrb[0].mxu0
  %6577 = vdwg.mxu0
  %6580 = vrot.lane.b32.xlu0 %v6570, 10
  %v6581 = vpop.permute.xlu0 %6580
  %6582 = vrot.lane.b32.xlu0 %v6575, 10
  %v6583 = vpop.permute.xlu0 %6582
  %v6586 = vsel %vm333, %v6581, -1e+30
  %v6587 = vsel %vm334, %v6583, -1e+30
  %vm6588 = vcmask 89168
  %v6589 = vsel %vm6588, %v6586, -inf
  %v6590 = vsel %vm6588, %v6587, -inf
  %v6591 = vmax.f32 %v6589, %v6590
  %v6592 = vrot.slane %v6591, 4
  %v6593 = vmax.f32 %v6591, %v6592
  %v6594 = vrot.slane %v6593, 2
  %v6595 = vmax.f32 %v6593, %v6594
  %v6596 = vrot.slane %v6595, 1
  %v6597 = vmax.f32 %v6595, %v6596
  %v6598 = vsub.f32 %v6586, %v6597
  %v6599 = vsub.f32 %v6587, %v6597
  %v6600 = vmul.f32 %v6598, 1.442695
  %v6601 = vpow.pop %v6600
  %v6602 = vmul.f32 %v6599, 1.442695
  %v6603 = vpow.pop %v6602
  %v6604 = vmul.f32 %v6601, %v53
  %v6605 = vmul.f32 %v6603, %v54
  %v6606 = vsel %vm6588, %v6604, 0.0
  %v6607 = vsel %vm6588, %v6605, 0.0
  %v6608 = vadd.f32 %v6606, %v6607
  %v6609 = vrot.slane %v6608, 4
  %v6610 = vadd.f32 %v6608, %v6609
  %v6611 = vrot.slane %v6610, 2
  %v6612 = vadd.f32 %v6610, %v6611
  %v6613 = vrot.slane %v6612, 1
  %v6614 = vadd.f32 %v6612, %v6613
  %v6615 = vrcp.pop %v6614
  %v6616 = vmul.f32 %v6604, %v6615
  %v6617 = vmul.f32 %v6605, %v6615
  %6620 = vrot.lane.b32.xlu0 %v6616, 118
  %v6621 = vpop.permute.xlu0 %6620
  %6622 = vrot.lane.b32.xlu0 %v6617, 118
  %v6623 = vpop.permute.xlu0 %6622
  %v6624 = vsel %vm4277, %v6621, 0
  %v6626 = vsel %vm4277, %v6623, 0
  %6628 = vmatprep.subr.mxu0 0.0
  %6629 = vmatpush1.msra.mxu0 %v4315
  %6630 = vmatprep.subr.mxu0 0.0
  %6631 = vmatpush1.msra.mxu0 0.0
  %6632 = vmatprep.subr.mxu0 0.0
  %6633 = vmatpush1.msra.mxu0 0.0
  %6634 = vmatprep.subr.mxu0 0.0
  %6635 = vmatpush1.msra.mxu0 0.0
  %6636 = vmatprep.subr.mxu0 0.0
  %6637 = vmatpush1.msra.mxu0 0.0
  %6638 = vmatprep.subr.mxu0 0.0
  %6639 = vmatpush1.msra.mxu0 0.0
  %6640 = vmatprep.subr.mxu0 0.0
  %6641 = vmatpush1.msra.mxu0 0.0
  %6642 = vmatprep.subr.mxu0 0.0
  %6643 = vmatpush1.msra.mxu0 0.0
  %6644 = vmatprep.subr.mxu0 0.0
  %6645 = vmatpush1.msra.mxu0 0.0
  %6646 = vmatprep.subr.mxu0 0.0
  %6647 = vmatpush1.msra.mxu0 0.0
  %6648 = vmatprep.subr.mxu0 0.0
  %6649 = vmatpush1.msra.mxu0 0.0
  %6650 = vmatprep.subr.mxu0 0.0
  %6651 = vmatpush1.msra.mxu0 0.0
  %6652 = vmatprep.subr.mxu0 0.0
  %6653 = vmatpush1.msra.mxu0 0.0
  %6654 = vmatprep.subr.mxu0 0.0
  %6655 = vmatpush1.msra.mxu0 0.0
  %6656 = vmatprep.subr.mxu0 0.0
  %6657 = vmatpush1.msra.mxu0 0.0
  %6658 = vmatprep.subr.mxu0 0.0
  %6659 = vmatpush1.msra.mxu0 0.0
  %6660 = vmatprep.subr.mxu0 0.0
  %6661 = vmatpush1.msra.mxu0 0.0
  %6662 = vmatprep.subr.mxu0 0.0
  %6663 = vmatpush1.msra.mxu0 0.0
  %6664 = vmatprep.subr.mxu0 0.0
  %6665 = vmatpush1.msra.mxu0 0.0
  %6666 = vmatprep.subr.mxu0 0.0
  %6667 = vmatpush1.msra.mxu0 0.0
  %6668 = vmatprep.subr.mxu0 0.0
  %6669 = vmatpush1.msra.mxu0 0.0
  %6670 = vmatprep.subr.mxu0 0.0
  %6671 = vmatpush1.msra.mxu0 0.0
  %6672 = vmatprep.subr.mxu0 0.0
  %6673 = vmatpush1.msra.mxu0 0.0
  %6674 = vmatprep.subr.mxu0 0.0
  %6675 = vmatpush1.msra.mxu0 0.0
  %6676 = vmatprep.subr.mxu0 0.0
  %6677 = vmatpush1.msra.mxu0 0.0
  %6678 = vmatprep.subr.mxu0 0.0
  %6679 = vmatpush1.msra.mxu0 0.0
  %6680 = vmatprep.subr.mxu0 0.0
  %6681 = vmatpush1.msra.mxu0 0.0
  %6682 = vmatprep.subr.mxu0 0.0
  %6683 = vmatpush1.msra.mxu0 0.0
  %6684 = vmatprep.subr.mxu0 0.0
  %6685 = vmatpush1.msra.mxu0 0.0
  %6686 = vmatprep.subr.mxu0 0.0
  %6687 = vmatpush1.msra.mxu0 0.0
  %6688 = vmatprep.subr.mxu0 0.0
  %6689 = vmatpush1.msra.mxu0 0.0
  %6690 = vmatprep.subr.mxu0 0.0
  %6691 = vmatpush1.msra.mxu0 0.0
  %6692 = vmatprep.mubr.f32.mxu0 0.0
  %6693 = vmatmul.mubr.f32.gmra.mrb[0].mxu0 %v6624
  %v6694 = vpop.f32.mrb[0].mxu0
  %v6695 = vadd.f32 0.0, %v6694
  %v6696 = vpop.f32.mrb[0].mxu0
  %6697 = vmatprep.mubr.f32.mxu0 0.0
  %6698 = vmatmul.mubr.f32.gmra.mrb[0].mxu0 %v6626
  %v6699 = vpop.f32.mrb[0].mxu0
  %v6700 = vadd.f32 0.0, %v6699
  %v6701 = vpop.f32.mrb[0].mxu0
  %6702 = vdwg.mxu0
  %v6703 = vmul.f32 %v6695, %v4088
  %v6704 = vmul.f32 %v6700, %v4093
  %v6705 = vsel %vm4189, %v6703, 0.0
  %v6706 = vsel %vm4189, %v6704, 0.0
  %v6707 = vadd.f32 %v6705, %v6706
  %v6708 = vrot.slane %v6707, 4
  %v6709 = vadd.f32 %v6707, %v6708
  %v6710 = vrot.slane %v6709, 2
  %v6711 = vadd.f32 %v6709, %v6710
  %v6712 = vrot.slane %v6711, 1
  %v6713 = vadd.f32 %v6711, %v6712
  %v6714 = vadd.f32 %v6713, %v3988
  %6715 = vst.msk [vmem:[%s16 + $0xa] sm:$0x1] %vm4404, %v6714
  %v6716 = vlaneseq
  %v6717 = vshrl.u32 %v6716, 7
  %v6718 = vsub.s32 3, %v6717
  %v6719 = vrot.slane %v4174, %v6718
  %v6720 = vadd.f32 %v6719, %v4088
  %v6721 = vadd.f32 %v6719, %v4093
  %vm6722 = vcmp.ge.f32.partialorder %v6720, 0.0
  %vm6723 = vcmp.ge.f32.partialorder %v6721, 0.0
  %v6724 = vmul.f32 %v6720, 0.2
  %v6725 = vmul.f32 %v6721, 0.2
  %v6726 = vsel %vm6722, %v6720, %v6724
  %v6727 = vsel %vm6723, %v6721, %v6725
  %v6729 = vsel %vm4189, %v6726, 0
  %v6732 = vsel %vm4189, %v6727, 0
  %6734 = vmatprep.subr.mxu0 0.0
  %6735 = vmatpush1.msra.mxu0 %v4198
  %6736 = vmatprep.subr.mxu0 0.0
  %6737 = vmatpush1.msra.mxu0 0.0
  %6738 = vmatprep.subr.mxu0 0.0
  %6739 = vmatpush1.msra.mxu0 0.0
  %6740 = vmatprep.subr.mxu0 0.0
  %6741 = vmatpush1.msra.mxu0 0.0
  %6742 = vmatprep.subr.mxu0 0.0
  %6743 = vmatpush1.msra.mxu0 0.0
  %6744 = vmatprep.subr.mxu0 0.0
  %6745 = vmatpush1.msra.mxu0 0.0
  %6746 = vmatprep.subr.mxu0 0.0
  %6747 = vmatpush1.msra.mxu0 0.0
  %6748 = vmatprep.subr.mxu0 0.0
  %6749 = vmatpush1.msra.mxu0 0.0
  %6750 = vmatprep.subr.mxu0 0.0
  %6751 = vmatpush1.msra.mxu0 0.0
  %6752 = vmatprep.subr.mxu0 0.0
  %6753 = vmatpush1.msra.mxu0 0.0
  %6754 = vmatprep.subr.mxu0 0.0
  %6755 = vmatpush1.msra.mxu0 0.0
  %6756 = vmatprep.subr.mxu0 0.0
  %6757 = vmatpush1.msra.mxu0 0.0
  %6758 = vmatprep.subr.mxu0 0.0
  %6759 = vmatpush1.msra.mxu0 0.0
  %6760 = vmatprep.subr.mxu0 0.0
  %6761 = vmatpush1.msra.mxu0 0.0
  %6762 = vmatprep.subr.mxu0 0.0
  %6763 = vmatpush1.msra.mxu0 0.0
  %6764 = vmatprep.subr.mxu0 0.0
  %6765 = vmatpush1.msra.mxu0 0.0
  %6766 = vmatprep.subr.mxu0 0.0
  %6767 = vmatpush1.msra.mxu0 0.0
  %6768 = vmatprep.subr.mxu0 0.0
  %6769 = vmatpush1.msra.mxu0 0.0
  %6770 = vmatprep.subr.mxu0 0.0
  %6771 = vmatpush1.msra.mxu0 0.0
  %6772 = vmatprep.subr.mxu0 0.0
  %6773 = vmatpush1.msra.mxu0 0.0
  %6774 = vmatprep.subr.mxu0 0.0
  %6775 = vmatpush1.msra.mxu0 0.0
  %6776 = vmatprep.subr.mxu0 0.0
  %6777 = vmatpush1.msra.mxu0 0.0
  %6778 = vmatprep.subr.mxu0 0.0
  %6779 = vmatpush1.msra.mxu0 0.0
  %6780 = vmatprep.subr.mxu0 0.0
  %6781 = vmatpush1.msra.mxu0 0.0
  %6782 = vmatprep.subr.mxu0 0.0
  %6783 = vmatpush1.msra.mxu0 0.0
  %6784 = vmatprep.subr.mxu0 0.0
  %6785 = vmatpush1.msra.mxu0 0.0
  %6786 = vmatprep.subr.mxu0 0.0
  %6787 = vmatpush1.msra.mxu0 0.0
  %6788 = vmatprep.subr.mxu0 0.0
  %6789 = vmatpush1.msra.mxu0 0.0
  %6790 = vmatprep.subr.mxu0 0.0
  %6791 = vmatpush1.msra.mxu0 0.0
  %6792 = vmatprep.subr.mxu0 0.0
  %6793 = vmatpush1.msra.mxu0 0.0
  %6794 = vmatprep.subr.mxu0 0.0
  %6795 = vmatpush1.msra.mxu0 0.0
  %6796 = vmatprep.subr.mxu0 0.0
  %6797 = vmatpush1.msra.mxu0 0.0
  %6798 = vmatprep.mubr.f32.mxu0 0.0
  %6799 = vmatmul.mubr.f32.gmra.mrb[0].mxu0 %v6729
  %v6800 = vpop.f32.mrb[0].mxu0
  %v6801 = vadd.f32 0.0, %v6800
  %v6802 = vpop.f32.mrb[0].mxu0
  %6803 = vmatprep.mubr.f32.mxu0 0.0
  %6804 = vmatmul.mubr.f32.gmra.mrb[0].mxu0 %v6732
  %v6805 = vpop.f32.mrb[0].mxu0
  %v6806 = vadd.f32 0.0, %v6805
  %v6807 = vpop.f32.mrb[0].mxu0
  %6808 = vdwg.mxu0
  %6811 = vrot.lane.b32.xlu0 %v6801, 11
  %v6812 = vpop.permute.xlu0 %6811
  %6813 = vrot.lane.b32.xlu0 %v6806, 11
  %v6814 = vpop.permute.xlu0 %6813
  %v6817 = vsel %vm333, %v6812, -1e+30
  %v6818 = vsel %vm334, %v6814, -1e+30
  %vm6819 = vcmask 97368
  %v6820 = vsel %vm6819, %v6817, -inf
  %v6821 = vsel %vm6819, %v6818, -inf
  %v6822 = vmax.f32 %v6820, %v6821
  %v6823 = vrot.slane %v6822, 4
  %v6824 = vmax.f32 %v6822, %v6823
  %v6825 = vrot.slane %v6824, 2
  %v6826 = vmax.f32 %v6824, %v6825
  %v6827 = vrot.slane %v6826, 1
  %v6828 = vmax.f32 %v6826, %v6827
  %v6829 = vsub.f32 %v6817, %v6828
  %v6830 = vsub.f32 %v6818, %v6828
  %v6831 = vmul.f32 %v6829, 1.442695
  %v6832 = vpow.pop %v6831
  %v6833 = vmul.f32 %v6830, 1.442695
  %v6834 = vpow.pop %v6833
  %v6835 = vmul.f32 %v6832, %v53
  %v6836 = vmul.f32 %v6834, %v54
  %v6837 = vsel %vm6819, %v6835, 0.0
  %v6838 = vsel %vm6819, %v6836, 0.0
  %v6839 = vadd.f32 %v6837, %v6838
  %v6840 = vrot.slane %v6839, 4
  %v6841 = vadd.f32 %v6839, %v6840
  %v6842 = vrot.slane %v6841, 2
  %v6843 = vadd.f32 %v6841, %v6842
  %v6844 = vrot.slane %v6843, 1
  %v6845 = vadd.f32 %v6843, %v6844
  %v6846 = vrcp.pop %v6845
  %v6847 = vmul.f32 %v6835, %v6846
  %v6848 = vmul.f32 %v6836, %v6846
  %6851 = vrot.lane.b32.xlu0 %v6847, 117
  %v6852 = vpop.permute.xlu0 %6851
  %6853 = vrot.lane.b32.xlu0 %v6848, 117
  %v6854 = vpop.permute.xlu0 %6853
  %v6855 = vsel %vm4277, %v6852, 0
  %v6857 = vsel %vm4277, %v6854, 0
  %6859 = vmatprep.subr.mxu0 0.0
  %6860 = vmatpush1.msra.mxu0 %v4315
  %6861 = vmatprep.subr.mxu0 0.0
  %6862 = vmatpush1.msra.mxu0 0.0
  %6863 = vmatprep.subr.mxu0 0.0
  %6864 = vmatpush1.msra.mxu0 0.0
  %6865 = vmatprep.subr.mxu0 0.0
  %6866 = vmatpush1.msra.mxu0 0.0
  %6867 = vmatprep.subr.mxu0 0.0
  %6868 = vmatpush1.msra.mxu0 0.0
  %6869 = vmatprep.subr.mxu0 0.0
  %6870 = vmatpush1.msra.mxu0 0.0
  %6871 = vmatprep.subr.mxu0 0.0
  %6872 = vmatpush1.msra.mxu0 0.0
  %6873 = vmatprep.subr.mxu0 0.0
  %6874 = vmatpush1.msra.mxu0 0.0
  %6875 = vmatprep.subr.mxu0 0.0
  %6876 = vmatpush1.msra.mxu0 0.0
  %6877 = vmatprep.subr.mxu0 0.0
  %6878 = vmatpush1.msra.mxu0 0.0
  %6879 = vmatprep.subr.mxu0 0.0
  %6880 = vmatpush1.msra.mxu0 0.0
  %6881 = vmatprep.subr.mxu0 0.0
  %6882 = vmatpush1.msra.mxu0 0.0
  %6883 = vmatprep.subr.mxu0 0.0
  %6884 = vmatpush1.msra.mxu0 0.0
  %6885 = vmatprep.subr.mxu0 0.0
  %6886 = vmatpush1.msra.mxu0 0.0
  %6887 = vmatprep.subr.mxu0 0.0
  %6888 = vmatpush1.msra.mxu0 0.0
  %6889 = vmatprep.subr.mxu0 0.0
  %6890 = vmatpush1.msra.mxu0 0.0
  %6891 = vmatprep.subr.mxu0 0.0
  %6892 = vmatpush1.msra.mxu0 0.0
  %6893 = vmatprep.subr.mxu0 0.0
  %6894 = vmatpush1.msra.mxu0 0.0
  %6895 = vmatprep.subr.mxu0 0.0
  %6896 = vmatpush1.msra.mxu0 0.0
  %6897 = vmatprep.subr.mxu0 0.0
  %6898 = vmatpush1.msra.mxu0 0.0
  %6899 = vmatprep.subr.mxu0 0.0
  %6900 = vmatpush1.msra.mxu0 0.0
  %6901 = vmatprep.subr.mxu0 0.0
  %6902 = vmatpush1.msra.mxu0 0.0
  %6903 = vmatprep.subr.mxu0 0.0
  %6904 = vmatpush1.msra.mxu0 0.0
  %6905 = vmatprep.subr.mxu0 0.0
  %6906 = vmatpush1.msra.mxu0 0.0
  %6907 = vmatprep.subr.mxu0 0.0
  %6908 = vmatpush1.msra.mxu0 0.0
  %6909 = vmatprep.subr.mxu0 0.0
  %6910 = vmatpush1.msra.mxu0 0.0
  %6911 = vmatprep.subr.mxu0 0.0
  %6912 = vmatpush1.msra.mxu0 0.0
  %6913 = vmatprep.subr.mxu0 0.0
  %6914 = vmatpush1.msra.mxu0 0.0
  %6915 = vmatprep.subr.mxu0 0.0
  %6916 = vmatpush1.msra.mxu0 0.0
  %6917 = vmatprep.subr.mxu0 0.0
  %6918 = vmatpush1.msra.mxu0 0.0
  %6919 = vmatprep.subr.mxu0 0.0
  %6920 = vmatpush1.msra.mxu0 0.0
  %6921 = vmatprep.subr.mxu0 0.0
  %6922 = vmatpush1.msra.mxu0 0.0
  %6923 = vmatprep.mubr.f32.mxu0 0.0
  %6924 = vmatmul.mubr.f32.gmra.mrb[0].mxu0 %v6855
  %v6925 = vpop.f32.mrb[0].mxu0
  %v6926 = vadd.f32 0.0, %v6925
  %v6927 = vpop.f32.mrb[0].mxu0
  %6928 = vmatprep.mubr.f32.mxu0 0.0
  %6929 = vmatmul.mubr.f32.gmra.mrb[0].mxu0 %v6857
  %v6930 = vpop.f32.mrb[0].mxu0
  %v6931 = vadd.f32 0.0, %v6930
  %v6932 = vpop.f32.mrb[0].mxu0
  %6933 = vdwg.mxu0
  %v6934 = vmul.f32 %v6926, %v4088
  %v6935 = vmul.f32 %v6931, %v4093
  %v6936 = vsel %vm4189, %v6934, 0.0
  %v6937 = vsel %vm4189, %v6935, 0.0
  %v6938 = vadd.f32 %v6936, %v6937
  %v6939 = vrot.slane %v6938, 4
  %v6940 = vadd.f32 %v6938, %v6939
  %v6941 = vrot.slane %v6940, 2
  %v6942 = vadd.f32 %v6940, %v6941
  %v6943 = vrot.slane %v6942, 1
  %v6944 = vadd.f32 %v6942, %v6943
  %v6945 = vadd.f32 %v6944, %v3988
  %6946 = vst.msk [vmem:[%s16 + $0xb] sm:$0x1] %vm4404, %v6945
  %v6947 = vlaneseq
  %v6948 = vshrl.u32 %v6947, 7
  %v6949 = vsub.s32 4, %v6948
  %v6950 = vrot.slane %v4174, %v6949
  %v6951 = vadd.f32 %v6950, %v4088
  %v6952 = vadd.f32 %v6950, %v4093
  %vm6953 = vcmp.ge.f32.partialorder %v6951, 0.0
  %vm6954 = vcmp.ge.f32.partialorder %v6952, 0.0
  %v6955 = vmul.f32 %v6951, 0.2
  %v6956 = vmul.f32 %v6952, 0.2
  %v6957 = vsel %vm6953, %v6951, %v6955
  %v6958 = vsel %vm6954, %v6952, %v6956
  %v6960 = vsel %vm4189, %v6957, 0
  %v6963 = vsel %vm4189, %v6958, 0
  %6965 = vmatprep.subr.mxu0 0.0
  %6966 = vmatpush1.msra.mxu0 %v4198
  %6967 = vmatprep.subr.mxu0 0.0
  %6968 = vmatpush1.msra.mxu0 0.0
  %6969 = vmatprep.subr.mxu0 0.0
  %6970 = vmatpush1.msra.mxu0 0.0
  %6971 = vmatprep.subr.mxu0 0.0
  %6972 = vmatpush1.msra.mxu0 0.0
  %6973 = vmatprep.subr.mxu0 0.0
  %6974 = vmatpush1.msra.mxu0 0.0
  %6975 = vmatprep.subr.mxu0 0.0
  %6976 = vmatpush1.msra.mxu0 0.0
  %6977 = vmatprep.subr.mxu0 0.0
  %6978 = vmatpush1.msra.mxu0 0.0
  %6979 = vmatprep.subr.mxu0 0.0
  %6980 = vmatpush1.msra.mxu0 0.0
  %6981 = vmatprep.subr.mxu0 0.0
  %6982 = vmatpush1.msra.mxu0 0.0
  %6983 = vmatprep.subr.mxu0 0.0
  %6984 = vmatpush1.msra.mxu0 0.0
  %6985 = vmatprep.subr.mxu0 0.0
  %6986 = vmatpush1.msra.mxu0 0.0
  %6987 = vmatprep.subr.mxu0 0.0
  %6988 = vmatpush1.msra.mxu0 0.0
  %6989 = vmatprep.subr.mxu0 0.0
  %6990 = vmatpush1.msra.mxu0 0.0
  %6991 = vmatprep.subr.mxu0 0.0
  %6992 = vmatpush1.msra.mxu0 0.0
  %6993 = vmatprep.subr.mxu0 0.0
  %6994 = vmatpush1.msra.mxu0 0.0
  %6995 = vmatprep.subr.mxu0 0.0
  %6996 = vmatpush1.msra.mxu0 0.0
  %6997 = vmatprep.subr.mxu0 0.0
  %6998 = vmatpush1.msra.mxu0 0.0
  %6999 = vmatprep.subr.mxu0 0.0
  %7000 = vmatpush1.msra.mxu0 0.0
  %7001 = vmatprep.subr.mxu0 0.0
  %7002 = vmatpush1.msra.mxu0 0.0
  %7003 = vmatprep.subr.mxu0 0.0
  %7004 = vmatpush1.msra.mxu0 0.0
  %7005 = vmatprep.subr.mxu0 0.0
  %7006 = vmatpush1.msra.mxu0 0.0
  %7007 = vmatprep.subr.mxu0 0.0
  %7008 = vmatpush1.msra.mxu0 0.0
  %7009 = vmatprep.subr.mxu0 0.0
  %7010 = vmatpush1.msra.mxu0 0.0
  %7011 = vmatprep.subr.mxu0 0.0
  %7012 = vmatpush1.msra.mxu0 0.0
  %7013 = vmatprep.subr.mxu0 0.0
  %7014 = vmatpush1.msra.mxu0 0.0
  %7015 = vmatprep.subr.mxu0 0.0
  %7016 = vmatpush1.msra.mxu0 0.0
  %7017 = vmatprep.subr.mxu0 0.0
  %7018 = vmatpush1.msra.mxu0 0.0
  %7019 = vmatprep.subr.mxu0 0.0
  %7020 = vmatpush1.msra.mxu0 0.0
  %7021 = vmatprep.subr.mxu0 0.0
  %7022 = vmatpush1.msra.mxu0 0.0
  %7023 = vmatprep.subr.mxu0 0.0
  %7024 = vmatpush1.msra.mxu0 0.0
  %7025 = vmatprep.subr.mxu0 0.0
  %7026 = vmatpush1.msra.mxu0 0.0
  %7027 = vmatprep.subr.mxu0 0.0
  %7028 = vmatpush1.msra.mxu0 0.0
  %7029 = vmatprep.mubr.f32.mxu0 0.0
  %7030 = vmatmul.mubr.f32.gmra.mrb[0].mxu0 %v6960
  %v7031 = vpop.f32.mrb[0].mxu0
  %v7032 = vadd.f32 0.0, %v7031
  %v7033 = vpop.f32.mrb[0].mxu0
  %7034 = vmatprep.mubr.f32.mxu0 0.0
  %7035 = vmatmul.mubr.f32.gmra.mrb[0].mxu0 %v6963
  %v7036 = vpop.f32.mrb[0].mxu0
  %v7037 = vadd.f32 0.0, %v7036
  %v7038 = vpop.f32.mrb[0].mxu0
  %7039 = vdwg.mxu0
  %7042 = vrot.lane.b32.xlu0 %v7032, 12
  %v7043 = vpop.permute.xlu0 %7042
  %7044 = vrot.lane.b32.xlu0 %v7037, 12
  %v7045 = vpop.permute.xlu0 %7044
  %v7048 = vsel %vm333, %v7043, -1e+30
  %v7049 = vsel %vm334, %v7045, -1e+30
  %vm7050 = vcmask 105568
  %v7051 = vsel %vm7050, %v7048, -inf
  %v7052 = vsel %vm7050, %v7049, -inf
  %v7053 = vmax.f32 %v7051, %v7052
  %v7054 = vrot.slane %v7053, 4
  %v7055 = vmax.f32 %v7053, %v7054
  %v7056 = vrot.slane %v7055, 2
  %v7057 = vmax.f32 %v7055, %v7056
  %v7058 = vrot.slane %v7057, 1
  %v7059 = vmax.f32 %v7057, %v7058
  %v7060 = vsub.f32 %v7048, %v7059
  %v7061 = vsub.f32 %v7049, %v7059
  %v7062 = vmul.f32 %v7060, 1.442695
  %v7063 = vpow.pop %v7062
  %v7064 = vmul.f32 %v7061, 1.442695
  %v7065 = vpow.pop %v7064
  %v7066 = vmul.f32 %v7063, %v53
  %v7067 = vmul.f32 %v7065, %v54
  %v7068 = vsel %vm7050, %v7066, 0.0
  %v7069 = vsel %vm7050, %v7067, 0.0
  %v7070 = vadd.f32 %v7068, %v7069
  %v7071 = vrot.slane %v7070, 4
  %v7072 = vadd.f32 %v7070, %v7071
  %v7073 = vrot.slane %v7072, 2
  %v7074 = vadd.f32 %v7072, %v7073
  %v7075 = vrot.slane %v7074, 1
  %v7076 = vadd.f32 %v7074, %v7075
  %v7077 = vrcp.pop %v7076
  %v7078 = vmul.f32 %v7066, %v7077
  %v7079 = vmul.f32 %v7067, %v7077
  %7082 = vrot.lane.b32.xlu0 %v7078, 116
  %v7083 = vpop.permute.xlu0 %7082
  %7084 = vrot.lane.b32.xlu0 %v7079, 116
  %v7085 = vpop.permute.xlu0 %7084
  %v7086 = vsel %vm4277, %v7083, 0
  %v7088 = vsel %vm4277, %v7085, 0
  %7090 = vmatprep.subr.mxu0 0.0
  %7091 = vmatpush1.msra.mxu0 %v4315
  %7092 = vmatprep.subr.mxu0 0.0
  %7093 = vmatpush1.msra.mxu0 0.0
  %7094 = vmatprep.subr.mxu0 0.0
  %7095 = vmatpush1.msra.mxu0 0.0
  %7096 = vmatprep.subr.mxu0 0.0
  %7097 = vmatpush1.msra.mxu0 0.0
  %7098 = vmatprep.subr.mxu0 0.0
  %7099 = vmatpush1.msra.mxu0 0.0
  %7100 = vmatprep.subr.mxu0 0.0
  %7101 = vmatpush1.msra.mxu0 0.0
  %7102 = vmatprep.subr.mxu0 0.0
  %7103 = vmatpush1.msra.mxu0 0.0
  %7104 = vmatprep.subr.mxu0 0.0
  %7105 = vmatpush1.msra.mxu0 0.0
  %7106 = vmatprep.subr.mxu0 0.0
  %7107 = vmatpush1.msra.mxu0 0.0
  %7108 = vmatprep.subr.mxu0 0.0
  %7109 = vmatpush1.msra.mxu0 0.0
  %7110 = vmatprep.subr.mxu0 0.0
  %7111 = vmatpush1.msra.mxu0 0.0
  %7112 = vmatprep.subr.mxu0 0.0
  %7113 = vmatpush1.msra.mxu0 0.0
  %7114 = vmatprep.subr.mxu0 0.0
  %7115 = vmatpush1.msra.mxu0 0.0
  %7116 = vmatprep.subr.mxu0 0.0
  %7117 = vmatpush1.msra.mxu0 0.0
  %7118 = vmatprep.subr.mxu0 0.0
  %7119 = vmatpush1.msra.mxu0 0.0
  %7120 = vmatprep.subr.mxu0 0.0
  %7121 = vmatpush1.msra.mxu0 0.0
  %7122 = vmatprep.subr.mxu0 0.0
  %7123 = vmatpush1.msra.mxu0 0.0
  %7124 = vmatprep.subr.mxu0 0.0
  %7125 = vmatpush1.msra.mxu0 0.0
  %7126 = vmatprep.subr.mxu0 0.0
  %7127 = vmatpush1.msra.mxu0 0.0
  %7128 = vmatprep.subr.mxu0 0.0
  %7129 = vmatpush1.msra.mxu0 0.0
  %7130 = vmatprep.subr.mxu0 0.0
  %7131 = vmatpush1.msra.mxu0 0.0
  %7132 = vmatprep.subr.mxu0 0.0
  %7133 = vmatpush1.msra.mxu0 0.0
  %7134 = vmatprep.subr.mxu0 0.0
  %7135 = vmatpush1.msra.mxu0 0.0
  %7136 = vmatprep.subr.mxu0 0.0
  %7137 = vmatpush1.msra.mxu0 0.0
  %7138 = vmatprep.subr.mxu0 0.0
  %7139 = vmatpush1.msra.mxu0 0.0
  %7140 = vmatprep.subr.mxu0 0.0
  %7141 = vmatpush1.msra.mxu0 0.0
  %7142 = vmatprep.subr.mxu0 0.0
  %7143 = vmatpush1.msra.mxu0 0.0
  %7144 = vmatprep.subr.mxu0 0.0
  %7145 = vmatpush1.msra.mxu0 0.0
  %7146 = vmatprep.subr.mxu0 0.0
  %7147 = vmatpush1.msra.mxu0 0.0
  %7148 = vmatprep.subr.mxu0 0.0
  %7149 = vmatpush1.msra.mxu0 0.0
  %7150 = vmatprep.subr.mxu0 0.0
  %7151 = vmatpush1.msra.mxu0 0.0
  %7152 = vmatprep.subr.mxu0 0.0
  %7153 = vmatpush1.msra.mxu0 0.0
  %7154 = vmatprep.mubr.f32.mxu0 0.0
  %7155 = vmatmul.mubr.f32.gmra.mrb[0].mxu0 %v7086
  %v7156 = vpop.f32.mrb[0].mxu0
  %v7157 = vadd.f32 0.0, %v7156
  %v7158 = vpop.f32.mrb[0].mxu0
  %7159 = vmatprep.mubr.f32.mxu0 0.0
  %7160 = vmatmul.mubr.f32.gmra.mrb[0].mxu0 %v7088
  %v7161 = vpop.f32.mrb[0].mxu0
  %v7162 = vadd.f32 0.0, %v7161
  %v7163 = vpop.f32.mrb[0].mxu0
  %7164 = vdwg.mxu0
  %v7165 = vmul.f32 %v7157, %v4088
  %v7166 = vmul.f32 %v7162, %v4093
  %v7167 = vsel %vm4189, %v7165, 0.0
  %v7168 = vsel %vm4189, %v7166, 0.0
  %v7169 = vadd.f32 %v7167, %v7168
  %v7170 = vrot.slane %v7169, 4
  %v7171 = vadd.f32 %v7169, %v7170
  %v7172 = vrot.slane %v7171, 2
  %v7173 = vadd.f32 %v7171, %v7172
  %v7174 = vrot.slane %v7173, 1
  %v7175 = vadd.f32 %v7173, %v7174
  %v7176 = vadd.f32 %v7175, %v3988
  %7177 = vst.msk [vmem:[%s16 + $0xc] sm:$0x1] %vm4404, %v7176
  %v7178 = vlaneseq
  %v7179 = vshrl.u32 %v7178, 7
  %v7180 = vsub.s32 5, %v7179
  %v7181 = vrot.slane %v4174, %v7180
  %v7182 = vadd.f32 %v7181, %v4088
  %v7183 = vadd.f32 %v7181, %v4093
  %vm7184 = vcmp.ge.f32.partialorder %v7182, 0.0
  %vm7185 = vcmp.ge.f32.partialorder %v7183, 0.0
  %v7186 = vmul.f32 %v7182, 0.2
  %v7187 = vmul.f32 %v7183, 0.2
  %v7188 = vsel %vm7184, %v7182, %v7186
  %v7189 = vsel %vm7185, %v7183, %v7187
  %v7191 = vsel %vm4189, %v7188, 0
  %v7194 = vsel %vm4189, %v7189, 0
  %7196 = vmatprep.subr.mxu0 0.0
  %7197 = vmatpush1.msra.mxu0 %v4198
  %7198 = vmatprep.subr.mxu0 0.0
  %7199 = vmatpush1.msra.mxu0 0.0
  %7200 = vmatprep.subr.mxu0 0.0
  %7201 = vmatpush1.msra.mxu0 0.0
  %7202 = vmatprep.subr.mxu0 0.0
  %7203 = vmatpush1.msra.mxu0 0.0
  %7204 = vmatprep.subr.mxu0 0.0
  %7205 = vmatpush1.msra.mxu0 0.0
  %7206 = vmatprep.subr.mxu0 0.0
  %7207 = vmatpush1.msra.mxu0 0.0
  %7208 = vmatprep.subr.mxu0 0.0
  %7209 = vmatpush1.msra.mxu0 0.0
  %7210 = vmatprep.subr.mxu0 0.0
  %7211 = vmatpush1.msra.mxu0 0.0
  %7212 = vmatprep.subr.mxu0 0.0
  %7213 = vmatpush1.msra.mxu0 0.0
  %7214 = vmatprep.subr.mxu0 0.0
  %7215 = vmatpush1.msra.mxu0 0.0
  %7216 = vmatprep.subr.mxu0 0.0
  %7217 = vmatpush1.msra.mxu0 0.0
  %7218 = vmatprep.subr.mxu0 0.0
  %7219 = vmatpush1.msra.mxu0 0.0
  %7220 = vmatprep.subr.mxu0 0.0
  %7221 = vmatpush1.msra.mxu0 0.0
  %7222 = vmatprep.subr.mxu0 0.0
  %7223 = vmatpush1.msra.mxu0 0.0
  %7224 = vmatprep.subr.mxu0 0.0
  %7225 = vmatpush1.msra.mxu0 0.0
  %7226 = vmatprep.subr.mxu0 0.0
  %7227 = vmatpush1.msra.mxu0 0.0
  %7228 = vmatprep.subr.mxu0 0.0
  %7229 = vmatpush1.msra.mxu0 0.0
  %7230 = vmatprep.subr.mxu0 0.0
  %7231 = vmatpush1.msra.mxu0 0.0
  %7232 = vmatprep.subr.mxu0 0.0
  %7233 = vmatpush1.msra.mxu0 0.0
  %7234 = vmatprep.subr.mxu0 0.0
  %7235 = vmatpush1.msra.mxu0 0.0
  %7236 = vmatprep.subr.mxu0 0.0
  %7237 = vmatpush1.msra.mxu0 0.0
  %7238 = vmatprep.subr.mxu0 0.0
  %7239 = vmatpush1.msra.mxu0 0.0
  %7240 = vmatprep.subr.mxu0 0.0
  %7241 = vmatpush1.msra.mxu0 0.0
  %7242 = vmatprep.subr.mxu0 0.0
  %7243 = vmatpush1.msra.mxu0 0.0
  %7244 = vmatprep.subr.mxu0 0.0
  %7245 = vmatpush1.msra.mxu0 0.0
  %7246 = vmatprep.subr.mxu0 0.0
  %7247 = vmatpush1.msra.mxu0 0.0
  %7248 = vmatprep.subr.mxu0 0.0
  %7249 = vmatpush1.msra.mxu0 0.0
  %7250 = vmatprep.subr.mxu0 0.0
  %7251 = vmatpush1.msra.mxu0 0.0
  %7252 = vmatprep.subr.mxu0 0.0
  %7253 = vmatpush1.msra.mxu0 0.0
  %7254 = vmatprep.subr.mxu0 0.0
  %7255 = vmatpush1.msra.mxu0 0.0
  %7256 = vmatprep.subr.mxu0 0.0
  %7257 = vmatpush1.msra.mxu0 0.0
  %7258 = vmatprep.subr.mxu0 0.0
  %7259 = vmatpush1.msra.mxu0 0.0
  %7260 = vmatprep.mubr.f32.mxu0 0.0
  %7261 = vmatmul.mubr.f32.gmra.mrb[0].mxu0 %v7191
  %v7262 = vpop.f32.mrb[0].mxu0
  %v7263 = vadd.f32 0.0, %v7262
  %v7264 = vpop.f32.mrb[0].mxu0
  %7265 = vmatprep.mubr.f32.mxu0 0.0
  %7266 = vmatmul.mubr.f32.gmra.mrb[0].mxu0 %v7194
  %v7267 = vpop.f32.mrb[0].mxu0
  %v7268 = vadd.f32 0.0, %v7267
  %v7269 = vpop.f32.mrb[0].mxu0
  %7270 = vdwg.mxu0
  %7273 = vrot.lane.b32.xlu0 %v7263, 13
  %v7274 = vpop.permute.xlu0 %7273
  %7275 = vrot.lane.b32.xlu0 %v7268, 13
  %v7276 = vpop.permute.xlu0 %7275
  %v7279 = vsel %vm333, %v7274, -1e+30
  %v7280 = vsel %vm334, %v7276, -1e+30
  %vm7281 = vcmask 113768
  %v7282 = vsel %vm7281, %v7279, -inf
  %v7283 = vsel %vm7281, %v7280, -inf
  %v7284 = vmax.f32 %v7282, %v7283
  %v7285 = vrot.slane %v7284, 4
  %v7286 = vmax.f32 %v7284, %v7285
  %v7287 = vrot.slane %v7286, 2
  %v7288 = vmax.f32 %v7286, %v7287
  %v7289 = vrot.slane %v7288, 1
  %v7290 = vmax.f32 %v7288, %v7289
  %v7291 = vsub.f32 %v7279, %v7290
  %v7292 = vsub.f32 %v7280, %v7290
  %v7293 = vmul.f32 %v7291, 1.442695
  %v7294 = vpow.pop %v7293
  %v7295 = vmul.f32 %v7292, 1.442695
  %v7296 = vpow.pop %v7295
  %v7297 = vmul.f32 %v7294, %v53
  %v7298 = vmul.f32 %v7296, %v54
  %v7299 = vsel %vm7281, %v7297, 0.0
  %v7300 = vsel %vm7281, %v7298, 0.0
  %v7301 = vadd.f32 %v7299, %v7300
  %v7302 = vrot.slane %v7301, 4
  %v7303 = vadd.f32 %v7301, %v7302
  %v7304 = vrot.slane %v7303, 2
  %v7305 = vadd.f32 %v7303, %v7304
  %v7306 = vrot.slane %v7305, 1
  %v7307 = vadd.f32 %v7305, %v7306
  %v7308 = vrcp.pop %v7307
  %v7309 = vmul.f32 %v7297, %v7308
  %v7310 = vmul.f32 %v7298, %v7308
  %7313 = vrot.lane.b32.xlu0 %v7309, 115
  %v7314 = vpop.permute.xlu0 %7313
  %7315 = vrot.lane.b32.xlu0 %v7310, 115
  %v7316 = vpop.permute.xlu0 %7315
  %v7317 = vsel %vm4277, %v7314, 0
  %v7319 = vsel %vm4277, %v7316, 0
  %7321 = vmatprep.subr.mxu0 0.0
  %7322 = vmatpush1.msra.mxu0 %v4315
  %7323 = vmatprep.subr.mxu0 0.0
  %7324 = vmatpush1.msra.mxu0 0.0
  %7325 = vmatprep.subr.mxu0 0.0
  %7326 = vmatpush1.msra.mxu0 0.0
  %7327 = vmatprep.subr.mxu0 0.0
  %7328 = vmatpush1.msra.mxu0 0.0
  %7329 = vmatprep.subr.mxu0 0.0
  %7330 = vmatpush1.msra.mxu0 0.0
  %7331 = vmatprep.subr.mxu0 0.0
  %7332 = vmatpush1.msra.mxu0 0.0
  %7333 = vmatprep.subr.mxu0 0.0
  %7334 = vmatpush1.msra.mxu0 0.0
  %7335 = vmatprep.subr.mxu0 0.0
  %7336 = vmatpush1.msra.mxu0 0.0
  %7337 = vmatprep.subr.mxu0 0.0
  %7338 = vmatpush1.msra.mxu0 0.0
  %7339 = vmatprep.subr.mxu0 0.0
  %7340 = vmatpush1.msra.mxu0 0.0
  %7341 = vmatprep.subr.mxu0 0.0
  %7342 = vmatpush1.msra.mxu0 0.0
  %7343 = vmatprep.subr.mxu0 0.0
  %7344 = vmatpush1.msra.mxu0 0.0
  %7345 = vmatprep.subr.mxu0 0.0
  %7346 = vmatpush1.msra.mxu0 0.0
  %7347 = vmatprep.subr.mxu0 0.0
  %7348 = vmatpush1.msra.mxu0 0.0
  %7349 = vmatprep.subr.mxu0 0.0
  %7350 = vmatpush1.msra.mxu0 0.0
  %7351 = vmatprep.subr.mxu0 0.0
  %7352 = vmatpush1.msra.mxu0 0.0
  %7353 = vmatprep.subr.mxu0 0.0
  %7354 = vmatpush1.msra.mxu0 0.0
  %7355 = vmatprep.subr.mxu0 0.0
  %7356 = vmatpush1.msra.mxu0 0.0
  %7357 = vmatprep.subr.mxu0 0.0
  %7358 = vmatpush1.msra.mxu0 0.0
  %7359 = vmatprep.subr.mxu0 0.0
  %7360 = vmatpush1.msra.mxu0 0.0
  %7361 = vmatprep.subr.mxu0 0.0
  %7362 = vmatpush1.msra.mxu0 0.0
  %7363 = vmatprep.subr.mxu0 0.0
  %7364 = vmatpush1.msra.mxu0 0.0
  %7365 = vmatprep.subr.mxu0 0.0
  %7366 = vmatpush1.msra.mxu0 0.0
  %7367 = vmatprep.subr.mxu0 0.0
  %7368 = vmatpush1.msra.mxu0 0.0
  %7369 = vmatprep.subr.mxu0 0.0
  %7370 = vmatpush1.msra.mxu0 0.0
  %7371 = vmatprep.subr.mxu0 0.0
  %7372 = vmatpush1.msra.mxu0 0.0
  %7373 = vmatprep.subr.mxu0 0.0
  %7374 = vmatpush1.msra.mxu0 0.0
  %7375 = vmatprep.subr.mxu0 0.0
  %7376 = vmatpush1.msra.mxu0 0.0
  %7377 = vmatprep.subr.mxu0 0.0
  %7378 = vmatpush1.msra.mxu0 0.0
  %7379 = vmatprep.subr.mxu0 0.0
  %7380 = vmatpush1.msra.mxu0 0.0
  %7381 = vmatprep.subr.mxu0 0.0
  %7382 = vmatpush1.msra.mxu0 0.0
  %7383 = vmatprep.subr.mxu0 0.0
  %7384 = vmatpush1.msra.mxu0 0.0
  %7385 = vmatprep.mubr.f32.mxu0 0.0
  %7386 = vmatmul.mubr.f32.gmra.mrb[0].mxu0 %v7317
  %v7387 = vpop.f32.mrb[0].mxu0
  %v7388 = vadd.f32 0.0, %v7387
  %v7389 = vpop.f32.mrb[0].mxu0
  %7390 = vmatprep.mubr.f32.mxu0 0.0
  %7391 = vmatmul.mubr.f32.gmra.mrb[0].mxu0 %v7319
  %v7392 = vpop.f32.mrb[0].mxu0
  %v7393 = vadd.f32 0.0, %v7392
  %v7394 = vpop.f32.mrb[0].mxu0
  %7395 = vdwg.mxu0
  %v7396 = vmul.f32 %v7388, %v4088
  %v7397 = vmul.f32 %v7393, %v4093
  %v7398 = vsel %vm4189, %v7396, 0.0
  %v7399 = vsel %vm4189, %v7397, 0.0
  %v7400 = vadd.f32 %v7398, %v7399
  %v7401 = vrot.slane %v7400, 4
  %v7402 = vadd.f32 %v7400, %v7401
  %v7403 = vrot.slane %v7402, 2
  %v7404 = vadd.f32 %v7402, %v7403
  %v7405 = vrot.slane %v7404, 1
  %v7406 = vadd.f32 %v7404, %v7405
  %v7407 = vadd.f32 %v7406, %v3988
  %7408 = vst.msk [vmem:[%s16 + $0xd] sm:$0x1] %vm4404, %v7407
  %v7409 = vlaneseq
  %v7410 = vshrl.u32 %v7409, 7
  %v7411 = vsub.s32 6, %v7410
  %v7412 = vrot.slane %v4174, %v7411
  %v7413 = vadd.f32 %v7412, %v4088
  %v7414 = vadd.f32 %v7412, %v4093
  %vm7415 = vcmp.ge.f32.partialorder %v7413, 0.0
  %vm7416 = vcmp.ge.f32.partialorder %v7414, 0.0
  %v7417 = vmul.f32 %v7413, 0.2
  %v7418 = vmul.f32 %v7414, 0.2
  %v7419 = vsel %vm7415, %v7413, %v7417
  %v7420 = vsel %vm7416, %v7414, %v7418
  %v7422 = vsel %vm4189, %v7419, 0
  %v7425 = vsel %vm4189, %v7420, 0
  %7427 = vmatprep.subr.mxu0 0.0
  %7428 = vmatpush1.msra.mxu0 %v4198
  %7429 = vmatprep.subr.mxu0 0.0
  %7430 = vmatpush1.msra.mxu0 0.0
  %7431 = vmatprep.subr.mxu0 0.0
  %7432 = vmatpush1.msra.mxu0 0.0
  %7433 = vmatprep.subr.mxu0 0.0
  %7434 = vmatpush1.msra.mxu0 0.0
  %7435 = vmatprep.subr.mxu0 0.0
  %7436 = vmatpush1.msra.mxu0 0.0
  %7437 = vmatprep.subr.mxu0 0.0
  %7438 = vmatpush1.msra.mxu0 0.0
  %7439 = vmatprep.subr.mxu0 0.0
  %7440 = vmatpush1.msra.mxu0 0.0
  %7441 = vmatprep.subr.mxu0 0.0
  %7442 = vmatpush1.msra.mxu0 0.0
  %7443 = vmatprep.subr.mxu0 0.0
  %7444 = vmatpush1.msra.mxu0 0.0
  %7445 = vmatprep.subr.mxu0 0.0
  %7446 = vmatpush1.msra.mxu0 0.0
  %7447 = vmatprep.subr.mxu0 0.0
  %7448 = vmatpush1.msra.mxu0 0.0
  %7449 = vmatprep.subr.mxu0 0.0
  %7450 = vmatpush1.msra.mxu0 0.0
  %7451 = vmatprep.subr.mxu0 0.0
  %7452 = vmatpush1.msra.mxu0 0.0
  %7453 = vmatprep.subr.mxu0 0.0
  %7454 = vmatpush1.msra.mxu0 0.0
  %7455 = vmatprep.subr.mxu0 0.0
  %7456 = vmatpush1.msra.mxu0 0.0
  %7457 = vmatprep.subr.mxu0 0.0
  %7458 = vmatpush1.msra.mxu0 0.0
  %7459 = vmatprep.subr.mxu0 0.0
  %7460 = vmatpush1.msra.mxu0 0.0
  %7461 = vmatprep.subr.mxu0 0.0
  %7462 = vmatpush1.msra.mxu0 0.0
  %7463 = vmatprep.subr.mxu0 0.0
  %7464 = vmatpush1.msra.mxu0 0.0
  %7465 = vmatprep.subr.mxu0 0.0
  %7466 = vmatpush1.msra.mxu0 0.0
  %7467 = vmatprep.subr.mxu0 0.0
  %7468 = vmatpush1.msra.mxu0 0.0
  %7469 = vmatprep.subr.mxu0 0.0
  %7470 = vmatpush1.msra.mxu0 0.0
  %7471 = vmatprep.subr.mxu0 0.0
  %7472 = vmatpush1.msra.mxu0 0.0
  %7473 = vmatprep.subr.mxu0 0.0
  %7474 = vmatpush1.msra.mxu0 0.0
  %7475 = vmatprep.subr.mxu0 0.0
  %7476 = vmatpush1.msra.mxu0 0.0
  %7477 = vmatprep.subr.mxu0 0.0
  %7478 = vmatpush1.msra.mxu0 0.0
  %7479 = vmatprep.subr.mxu0 0.0
  %7480 = vmatpush1.msra.mxu0 0.0
  %7481 = vmatprep.subr.mxu0 0.0
  %7482 = vmatpush1.msra.mxu0 0.0
  %7483 = vmatprep.subr.mxu0 0.0
  %7484 = vmatpush1.msra.mxu0 0.0
  %7485 = vmatprep.subr.mxu0 0.0
  %7486 = vmatpush1.msra.mxu0 0.0
  %7487 = vmatprep.subr.mxu0 0.0
  %7488 = vmatpush1.msra.mxu0 0.0
  %7489 = vmatprep.subr.mxu0 0.0
  %7490 = vmatpush1.msra.mxu0 0.0
  %7491 = vmatprep.mubr.f32.mxu0 0.0
  %7492 = vmatmul.mubr.f32.gmra.mrb[0].mxu0 %v7422
  %v7493 = vpop.f32.mrb[0].mxu0
  %v7494 = vadd.f32 0.0, %v7493
  %v7495 = vpop.f32.mrb[0].mxu0
  %7496 = vmatprep.mubr.f32.mxu0 0.0
  %7497 = vmatmul.mubr.f32.gmra.mrb[0].mxu0 %v7425
  %v7498 = vpop.f32.mrb[0].mxu0
  %v7499 = vadd.f32 0.0, %v7498
  %v7500 = vpop.f32.mrb[0].mxu0
  %7501 = vdwg.mxu0
  %7504 = vrot.lane.b32.xlu0 %v7494, 14
  %v7505 = vpop.permute.xlu0 %7504
  %7506 = vrot.lane.b32.xlu0 %v7499, 14
  %v7507 = vpop.permute.xlu0 %7506
  %v7510 = vsel %vm333, %v7505, -1e+30
  %v7511 = vsel %vm334, %v7507, -1e+30
  %vm7512 = vcmask 121968
  %v7513 = vsel %vm7512, %v7510, -inf
  %v7514 = vsel %vm7512, %v7511, -inf
  %v7515 = vmax.f32 %v7513, %v7514
  %v7516 = vrot.slane %v7515, 4
  %v7517 = vmax.f32 %v7515, %v7516
  %v7518 = vrot.slane %v7517, 2
  %v7519 = vmax.f32 %v7517, %v7518
  %v7520 = vrot.slane %v7519, 1
  %v7521 = vmax.f32 %v7519, %v7520
  %v7522 = vsub.f32 %v7510, %v7521
  %v7523 = vsub.f32 %v7511, %v7521
  %v7524 = vmul.f32 %v7522, 1.442695
  %v7525 = vpow.pop %v7524
  %v7526 = vmul.f32 %v7523, 1.442695
  %v7527 = vpow.pop %v7526
  %v7528 = vmul.f32 %v7525, %v53
  %v7529 = vmul.f32 %v7527, %v54
  %v7530 = vsel %vm7512, %v7528, 0.0
  %v7531 = vsel %vm7512, %v7529, 0.0
  %v7532 = vadd.f32 %v7530, %v7531
  %v7533 = vrot.slane %v7532, 4
  %v7534 = vadd.f32 %v7532, %v7533
  %v7535 = vrot.slane %v7534, 2
  %v7536 = vadd.f32 %v7534, %v7535
  %v7537 = vrot.slane %v7536, 1
  %v7538 = vadd.f32 %v7536, %v7537
  %v7539 = vrcp.pop %v7538
  %v7540 = vmul.f32 %v7528, %v7539
  %v7541 = vmul.f32 %v7529, %v7539
  %7544 = vrot.lane.b32.xlu0 %v7540, 114
  %v7545 = vpop.permute.xlu0 %7544
  %7546 = vrot.lane.b32.xlu0 %v7541, 114
  %v7547 = vpop.permute.xlu0 %7546
  %v7548 = vsel %vm4277, %v7545, 0
  %v7550 = vsel %vm4277, %v7547, 0
  %7552 = vmatprep.subr.mxu0 0.0
  %7553 = vmatpush1.msra.mxu0 %v4315
  %7554 = vmatprep.subr.mxu0 0.0
  %7555 = vmatpush1.msra.mxu0 0.0
  %7556 = vmatprep.subr.mxu0 0.0
  %7557 = vmatpush1.msra.mxu0 0.0
  %7558 = vmatprep.subr.mxu0 0.0
  %7559 = vmatpush1.msra.mxu0 0.0
  %7560 = vmatprep.subr.mxu0 0.0
  %7561 = vmatpush1.msra.mxu0 0.0
  %7562 = vmatprep.subr.mxu0 0.0
  %7563 = vmatpush1.msra.mxu0 0.0
  %7564 = vmatprep.subr.mxu0 0.0
  %7565 = vmatpush1.msra.mxu0 0.0
  %7566 = vmatprep.subr.mxu0 0.0
  %7567 = vmatpush1.msra.mxu0 0.0
  %7568 = vmatprep.subr.mxu0 0.0
  %7569 = vmatpush1.msra.mxu0 0.0
  %7570 = vmatprep.subr.mxu0 0.0
  %7571 = vmatpush1.msra.mxu0 0.0
  %7572 = vmatprep.subr.mxu0 0.0
  %7573 = vmatpush1.msra.mxu0 0.0
  %7574 = vmatprep.subr.mxu0 0.0
  %7575 = vmatpush1.msra.mxu0 0.0
  %7576 = vmatprep.subr.mxu0 0.0
  %7577 = vmatpush1.msra.mxu0 0.0
  %7578 = vmatprep.subr.mxu0 0.0
  %7579 = vmatpush1.msra.mxu0 0.0
  %7580 = vmatprep.subr.mxu0 0.0
  %7581 = vmatpush1.msra.mxu0 0.0
  %7582 = vmatprep.subr.mxu0 0.0
  %7583 = vmatpush1.msra.mxu0 0.0
  %7584 = vmatprep.subr.mxu0 0.0
  %7585 = vmatpush1.msra.mxu0 0.0
  %7586 = vmatprep.subr.mxu0 0.0
  %7587 = vmatpush1.msra.mxu0 0.0
  %7588 = vmatprep.subr.mxu0 0.0
  %7589 = vmatpush1.msra.mxu0 0.0
  %7590 = vmatprep.subr.mxu0 0.0
  %7591 = vmatpush1.msra.mxu0 0.0
  %7592 = vmatprep.subr.mxu0 0.0
  %7593 = vmatpush1.msra.mxu0 0.0
  %7594 = vmatprep.subr.mxu0 0.0
  %7595 = vmatpush1.msra.mxu0 0.0
  %7596 = vmatprep.subr.mxu0 0.0
  %7597 = vmatpush1.msra.mxu0 0.0
  %7598 = vmatprep.subr.mxu0 0.0
  %7599 = vmatpush1.msra.mxu0 0.0
  %7600 = vmatprep.subr.mxu0 0.0
  %7601 = vmatpush1.msra.mxu0 0.0
  %7602 = vmatprep.subr.mxu0 0.0
  %7603 = vmatpush1.msra.mxu0 0.0
  %7604 = vmatprep.subr.mxu0 0.0
  %7605 = vmatpush1.msra.mxu0 0.0
  %7606 = vmatprep.subr.mxu0 0.0
  %7607 = vmatpush1.msra.mxu0 0.0
  %7608 = vmatprep.subr.mxu0 0.0
  %7609 = vmatpush1.msra.mxu0 0.0
  %7610 = vmatprep.subr.mxu0 0.0
  %7611 = vmatpush1.msra.mxu0 0.0
  %7612 = vmatprep.subr.mxu0 0.0
  %7613 = vmatpush1.msra.mxu0 0.0
  %7614 = vmatprep.subr.mxu0 0.0
  %7615 = vmatpush1.msra.mxu0 0.0
  %7616 = vmatprep.mubr.f32.mxu0 0.0
  %7617 = vmatmul.mubr.f32.gmra.mrb[0].mxu0 %v7548
  %v7618 = vpop.f32.mrb[0].mxu0
  %v7619 = vadd.f32 0.0, %v7618
  %v7620 = vpop.f32.mrb[0].mxu0
  %7621 = vmatprep.mubr.f32.mxu0 0.0
  %7622 = vmatmul.mubr.f32.gmra.mrb[0].mxu0 %v7550
  %v7623 = vpop.f32.mrb[0].mxu0
  %v7624 = vadd.f32 0.0, %v7623
  %v7625 = vpop.f32.mrb[0].mxu0
  %7626 = vdwg.mxu0
  %v7627 = vmul.f32 %v7619, %v4088
  %v7628 = vmul.f32 %v7624, %v4093
  %v7629 = vsel %vm4189, %v7627, 0.0
  %v7630 = vsel %vm4189, %v7628, 0.0
  %v7631 = vadd.f32 %v7629, %v7630
  %v7632 = vrot.slane %v7631, 4
  %v7633 = vadd.f32 %v7631, %v7632
  %v7634 = vrot.slane %v7633, 2
  %v7635 = vadd.f32 %v7633, %v7634
  %v7636 = vrot.slane %v7635, 1
  %v7637 = vadd.f32 %v7635, %v7636
  %v7638 = vadd.f32 %v7637, %v3988
  %7639 = vst.msk [vmem:[%s16 + $0xe] sm:$0x1] %vm4404, %v7638
  %v7640 = vlaneseq
  %v7641 = vshrl.u32 %v7640, 7
  %v7642 = vsub.s32 7, %v7641
  %v7643 = vrot.slane %v4174, %v7642
  %v7644 = vadd.f32 %v7643, %v4088
  %v7645 = vadd.f32 %v7643, %v4093
  %vm7646 = vcmp.ge.f32.partialorder %v7644, 0.0
  %vm7647 = vcmp.ge.f32.partialorder %v7645, 0.0
  %v7648 = vmul.f32 %v7644, 0.2
  %v7649 = vmul.f32 %v7645, 0.2
  %v7650 = vsel %vm7646, %v7644, %v7648
  %v7651 = vsel %vm7647, %v7645, %v7649
  %v7653 = vsel %vm4189, %v7650, 0
  %v7656 = vsel %vm4189, %v7651, 0
  %7658 = vmatprep.subr.mxu0 0.0
  %7659 = vmatpush1.msra.mxu0 %v4198
  %7660 = vmatprep.subr.mxu0 0.0
  %7661 = vmatpush1.msra.mxu0 0.0
  %7662 = vmatprep.subr.mxu0 0.0
  %7663 = vmatpush1.msra.mxu0 0.0
  %7664 = vmatprep.subr.mxu0 0.0
  %7665 = vmatpush1.msra.mxu0 0.0
  %7666 = vmatprep.subr.mxu0 0.0
  %7667 = vmatpush1.msra.mxu0 0.0
  %7668 = vmatprep.subr.mxu0 0.0
  %7669 = vmatpush1.msra.mxu0 0.0
  %7670 = vmatprep.subr.mxu0 0.0
  %7671 = vmatpush1.msra.mxu0 0.0
  %7672 = vmatprep.subr.mxu0 0.0
  %7673 = vmatpush1.msra.mxu0 0.0
  %7674 = vmatprep.subr.mxu0 0.0
  %7675 = vmatpush1.msra.mxu0 0.0
  %7676 = vmatprep.subr.mxu0 0.0
  %7677 = vmatpush1.msra.mxu0 0.0
  %7678 = vmatprep.subr.mxu0 0.0
  %7679 = vmatpush1.msra.mxu0 0.0
  %7680 = vmatprep.subr.mxu0 0.0
  %7681 = vmatpush1.msra.mxu0 0.0
  %7682 = vmatprep.subr.mxu0 0.0
  %7683 = vmatpush1.msra.mxu0 0.0
  %7684 = vmatprep.subr.mxu0 0.0
  %7685 = vmatpush1.msra.mxu0 0.0
  %7686 = vmatprep.subr.mxu0 0.0
  %7687 = vmatpush1.msra.mxu0 0.0
  %7688 = vmatprep.subr.mxu0 0.0
  %7689 = vmatpush1.msra.mxu0 0.0
  %7690 = vmatprep.subr.mxu0 0.0
  %7691 = vmatpush1.msra.mxu0 0.0
  %7692 = vmatprep.subr.mxu0 0.0
  %7693 = vmatpush1.msra.mxu0 0.0
  %7694 = vmatprep.subr.mxu0 0.0
  %7695 = vmatpush1.msra.mxu0 0.0
  %7696 = vmatprep.subr.mxu0 0.0
  %7697 = vmatpush1.msra.mxu0 0.0
  %7698 = vmatprep.subr.mxu0 0.0
  %7699 = vmatpush1.msra.mxu0 0.0
  %7700 = vmatprep.subr.mxu0 0.0
  %7701 = vmatpush1.msra.mxu0 0.0
  %7702 = vmatprep.subr.mxu0 0.0
  %7703 = vmatpush1.msra.mxu0 0.0
  %7704 = vmatprep.subr.mxu0 0.0
  %7705 = vmatpush1.msra.mxu0 0.0
  %7706 = vmatprep.subr.mxu0 0.0
  %7707 = vmatpush1.msra.mxu0 0.0
  %7708 = vmatprep.subr.mxu0 0.0
  %7709 = vmatpush1.msra.mxu0 0.0
  %7710 = vmatprep.subr.mxu0 0.0
  %7711 = vmatpush1.msra.mxu0 0.0
  %7712 = vmatprep.subr.mxu0 0.0
  %7713 = vmatpush1.msra.mxu0 0.0
  %7714 = vmatprep.subr.mxu0 0.0
  %7715 = vmatpush1.msra.mxu0 0.0
  %7716 = vmatprep.subr.mxu0 0.0
  %7717 = vmatpush1.msra.mxu0 0.0
  %7718 = vmatprep.subr.mxu0 0.0
  %7719 = vmatpush1.msra.mxu0 0.0
  %7720 = vmatprep.subr.mxu0 0.0
  %7721 = vmatpush1.msra.mxu0 0.0
  %7722 = vmatprep.mubr.f32.mxu0 0.0
  %7723 = vmatmul.mubr.f32.gmra.mrb[0].mxu0 %v7653
  %v7724 = vpop.f32.mrb[0].mxu0
  %v7725 = vadd.f32 0.0, %v7724
  %v7726 = vpop.f32.mrb[0].mxu0
  %7727 = vmatprep.mubr.f32.mxu0 0.0
  %7728 = vmatmul.mubr.f32.gmra.mrb[0].mxu0 %v7656
  %v7729 = vpop.f32.mrb[0].mxu0
  %v7730 = vadd.f32 0.0, %v7729
  %v7731 = vpop.f32.mrb[0].mxu0
  %7732 = vdwg.mxu0
  %7735 = vrot.lane.b32.xlu0 %v7725, 15
  %v7736 = vpop.permute.xlu0 %7735
  %7737 = vrot.lane.b32.xlu0 %v7730, 15
  %v7738 = vpop.permute.xlu0 %7737
  %v7741 = vsel %vm333, %v7736, -1e+30
  %v7742 = vsel %vm334, %v7738, -1e+30
  %vm7743 = vcmask 130168
  %v7744 = vsel %vm7743, %v7741, -inf
  %v7745 = vsel %vm7743, %v7742, -inf
  %v7746 = vmax.f32 %v7744, %v7745
  %v7747 = vrot.slane %v7746, 4
  %v7748 = vmax.f32 %v7746, %v7747
  %v7749 = vrot.slane %v7748, 2
  %v7750 = vmax.f32 %v7748, %v7749
  %v7751 = vrot.slane %v7750, 1
  %v7752 = vmax.f32 %v7750, %v7751
  %v7753 = vsub.f32 %v7741, %v7752
  %v7754 = vsub.f32 %v7742, %v7752
  %v7755 = vmul.f32 %v7753, 1.442695
  %v7756 = vpow.pop %v7755
  %v7757 = vmul.f32 %v7754, 1.442695
  %v7758 = vpow.pop %v7757
  %v7759 = vmul.f32 %v7756, %v53
  %v7760 = vmul.f32 %v7758, %v54
  %v7761 = vsel %vm7743, %v7759, 0.0
  %v7762 = vsel %vm7743, %v7760, 0.0
  %v7763 = vadd.f32 %v7761, %v7762
  %v7764 = vrot.slane %v7763, 4
  %v7765 = vadd.f32 %v7763, %v7764
  %v7766 = vrot.slane %v7765, 2
  %v7767 = vadd.f32 %v7765, %v7766
  %v7768 = vrot.slane %v7767, 1
  %v7769 = vadd.f32 %v7767, %v7768
  %v7770 = vrcp.pop %v7769
  %v7771 = vmul.f32 %v7759, %v7770
  %v7772 = vmul.f32 %v7760, %v7770
  %7775 = vrot.lane.b32.xlu0 %v7771, 113
  %v7776 = vpop.permute.xlu0 %7775
  %7777 = vrot.lane.b32.xlu0 %v7772, 113
  %v7778 = vpop.permute.xlu0 %7777
  %v7779 = vsel %vm4277, %v7776, 0
  %v7781 = vsel %vm4277, %v7778, 0
  %7783 = vmatprep.subr.mxu0 0.0
  %7784 = vmatpush1.msra.mxu0 %v4315
  %7785 = vmatprep.subr.mxu0 0.0
  %7786 = vmatpush1.msra.mxu0 0.0
  %7787 = vmatprep.subr.mxu0 0.0
  %7788 = vmatpush1.msra.mxu0 0.0
  %7789 = vmatprep.subr.mxu0 0.0
  %7790 = vmatpush1.msra.mxu0 0.0
  %7791 = vmatprep.subr.mxu0 0.0
  %7792 = vmatpush1.msra.mxu0 0.0
  %7793 = vmatprep.subr.mxu0 0.0
  %7794 = vmatpush1.msra.mxu0 0.0
  %7795 = vmatprep.subr.mxu0 0.0
  %7796 = vmatpush1.msra.mxu0 0.0
  %7797 = vmatprep.subr.mxu0 0.0
  %7798 = vmatpush1.msra.mxu0 0.0
  %7799 = vmatprep.subr.mxu0 0.0
  %7800 = vmatpush1.msra.mxu0 0.0
  %7801 = vmatprep.subr.mxu0 0.0
  %7802 = vmatpush1.msra.mxu0 0.0
  %7803 = vmatprep.subr.mxu0 0.0
  %7804 = vmatpush1.msra.mxu0 0.0
  %7805 = vmatprep.subr.mxu0 0.0
  %7806 = vmatpush1.msra.mxu0 0.0
  %7807 = vmatprep.subr.mxu0 0.0
  %7808 = vmatpush1.msra.mxu0 0.0
  %7809 = vmatprep.subr.mxu0 0.0
  %7810 = vmatpush1.msra.mxu0 0.0
  %7811 = vmatprep.subr.mxu0 0.0
  %7812 = vmatpush1.msra.mxu0 0.0
  %7813 = vmatprep.subr.mxu0 0.0
  %7814 = vmatpush1.msra.mxu0 0.0
  %7815 = vmatprep.subr.mxu0 0.0
  %7816 = vmatpush1.msra.mxu0 0.0
  %7817 = vmatprep.subr.mxu0 0.0
  %7818 = vmatpush1.msra.mxu0 0.0
  %7819 = vmatprep.subr.mxu0 0.0
  %7820 = vmatpush1.msra.mxu0 0.0
  %7821 = vmatprep.subr.mxu0 0.0
  %7822 = vmatpush1.msra.mxu0 0.0
  %7823 = vmatprep.subr.mxu0 0.0
  %7824 = vmatpush1.msra.mxu0 0.0
  %7825 = vmatprep.subr.mxu0 0.0
  %7826 = vmatpush1.msra.mxu0 0.0
  %7827 = vmatprep.subr.mxu0 0.0
  %7828 = vmatpush1.msra.mxu0 0.0
  %7829 = vmatprep.subr.mxu0 0.0
  %7830 = vmatpush1.msra.mxu0 0.0
  %7831 = vmatprep.subr.mxu0 0.0
  %7832 = vmatpush1.msra.mxu0 0.0
  %7833 = vmatprep.subr.mxu0 0.0
  %7834 = vmatpush1.msra.mxu0 0.0
  %7835 = vmatprep.subr.mxu0 0.0
  %7836 = vmatpush1.msra.mxu0 0.0
  %7837 = vmatprep.subr.mxu0 0.0
  %7838 = vmatpush1.msra.mxu0 0.0
  %7839 = vmatprep.subr.mxu0 0.0
  %7840 = vmatpush1.msra.mxu0 0.0
  %7841 = vmatprep.subr.mxu0 0.0
  %7842 = vmatpush1.msra.mxu0 0.0
  %7843 = vmatprep.subr.mxu0 0.0
  %7844 = vmatpush1.msra.mxu0 0.0
  %7845 = vmatprep.subr.mxu0 0.0
  %7846 = vmatpush1.msra.mxu0 0.0
  %7847 = vmatprep.mubr.f32.mxu0 0.0
  %7848 = vmatmul.mubr.f32.gmra.mrb[0].mxu0 %v7779
  %v7849 = vpop.f32.mrb[0].mxu0
  %v7850 = vadd.f32 0.0, %v7849
  %v7851 = vpop.f32.mrb[0].mxu0
  %7852 = vmatprep.mubr.f32.mxu0 0.0
  %7853 = vmatmul.mubr.f32.gmra.mrb[0].mxu0 %v7781
  %v7854 = vpop.f32.mrb[0].mxu0
  %v7855 = vadd.f32 0.0, %v7854
  %v7856 = vpop.f32.mrb[0].mxu0
  %7857 = vdwg.mxu0
  %v7858 = vmul.f32 %v7850, %v4088
  %v7859 = vmul.f32 %v7855, %v4093
  %v7860 = vsel %vm4189, %v7858, 0.0
  %v7861 = vsel %vm4189, %v7859, 0.0
  %v7862 = vadd.f32 %v7860, %v7861
  %v7863 = vrot.slane %v7862, 4
  %v7864 = vadd.f32 %v7862, %v7863
  %v7865 = vrot.slane %v7864, 2
  %v7866 = vadd.f32 %v7864, %v7865
  %v7867 = vrot.slane %v7866, 1
  %v7868 = vadd.f32 %v7866, %v7867
  %v7869 = vadd.f32 %v7868, %v3988
  %7870 = vst.msk [vmem:[%s16 + $0xf] sm:$0x1] %vm4404, %v7869
  // Predicated region
  $region66: #{tpu_custom_call.1} parent=0 // pred_check
    _
  $region67: #{tpu_custom_call.1} parent=0 // pred_check_branch
    %7872 = sbr.rel (0) target = $region69
  $region68: #{tpu_custom_call.1} parent=0 // pred_region
    _
  $region69: #{tpu_custom_call.1} parent=0 // pred_fallthru
    _
  // Predicated region
  $region70: #{tpu_custom_call.1} parent=0 // pred_check
    _
  $region71: #{tpu_custom_call.1} parent=0 // pred_check_branch
    %7874 = sbr.rel (0) target = $region73
  $region72: #{tpu_custom_call.1} parent=0 // pred_region
    _
  $region73: #{tpu_custom_call.1} parent=0 // pred_fallthru
    _

</llo_original>
